<compile_context>
chip_gen: v6e
topology: v6e:2x2x1
jax: 0.10.0
libtpu: 0.0.40
codegen_flags: <defaults>
</compile_context>

<pallas_src>
import functools

import jax
import jax.numpy as jnp
from jax.experimental import pallas as pl
from jax.experimental.pallas import tpu as pltpu


def _decoder_block_kernel(x_ref, w1_ref, w2_ref, b_ref, o_ref, xpad_s, midp_s,
                          *, im2col_s1, im2col_s2):
    # x_ref : (1, Cin, H*W)         one batch element, spatial flattened onto lanes
    # w1_ref: (Cmid, 9*Cin)         3x3 conv weights, columns ordered (kh, kw, ci)
    # w2_ref: (4, Cout, 4*Cmid)     per-parity deconv weights, columns ordered (d, e, ci)
    # b_ref : (Cout, 1)             deconv bias (f32)
    # o_ref : (1, 4, Cout, H*W)     parity-major output, spatial flattened onto lanes
    # xpad_s: (Cin,  H+2, W+2)      VMEM scratch: 1-px zero-padded input
    # midp_s: (Cmid, H+2, W+2)      VMEM scratch: 1-px zero-padded ReLU(conv3x3) result
    Cin, Hp, Wp = xpad_s.shape
    H, W = Hp - 2, Wp - 2
    Cmid = midp_s.shape[0]
    Cout = o_ref.shape[2]
    HW = H * W
    cdt = w1_ref.dtype                 # matmul operand dtype (f32 or bf16)
    sdt = xpad_s.dtype                 # scratch / activation-copy dtype

    # ---- zero ONLY the 1-px halo border; the interior is fully rewritten below ----
    xpad_s[:, 0:1, :] = jnp.zeros((Cin, 1, Wp), sdt)
    xpad_s[:, H + 1:H + 2, :] = jnp.zeros((Cin, 1, Wp), sdt)
    xpad_s[:, :, 0:1] = jnp.zeros((Cin, Hp, 1), sdt)
    xpad_s[:, :, W + 1:W + 2] = jnp.zeros((Cin, Hp, 1), sdt)
    midp_s[:, 0:1, :] = jnp.zeros((Cmid, 1, Wp), sdt)
    midp_s[:, H + 1:H + 2, :] = jnp.zeros((Cmid, 1, Wp), sdt)
    midp_s[:, :, 0:1] = jnp.zeros((Cmid, Hp, 1), sdt)
    midp_s[:, :, W + 1:W + 2] = jnp.zeros((Cmid, Hp, 1), sdt)

    # ---- 1-px halo interior built in VMEM (input arrived lane-dense, un-flatten here) ----
    xpad_s[:, 1:H + 1, 1:W + 1] = x_ref[0].reshape(Cin, H, W).astype(sdt)

    # ---- stage 1: 3x3 "same" conv + ReLU ----
    if im2col_s1:
        slabs = [xpad_s[:, kh:kh + H, kw:kw + W].reshape(Cin, HW)
                 for kh in range(3) for kw in range(3)]
        patch1 = jnp.concatenate(slabs, axis=0).astype(cdt)                  # (9*Cin, HW)
        mid = jnp.dot(w1_ref[...], patch1, preferred_element_type=jnp.float32)
    else:
        # Accumulating per-tap dots: no (9*Cin, HW) buffer materialized.
        w1 = w1_ref[...]
        mid = jnp.zeros((Cmid, HW), jnp.float32)
        t = 0
        for kh in range(3):
            for kw in range(3):
                slab = xpad_s[:, kh:kh + H, kw:kw + W].reshape(Cin, HW).astype(cdt)
                mid = mid + jnp.dot(w1[:, t * Cin:(t + 1) * Cin], slab,
                                    preferred_element_type=jnp.float32)
                t += 1
    mid = jnp.maximum(mid, 0.0)                                              # (Cmid, HW) f32

    # ---- intermediate stays in VMEM, zero-padded by 1 for the polyphase step ----
    midp_s[:, 1:H + 1, 1:W + 1] = mid.reshape(Cmid, H, W).astype(sdt)

    # ---- stage 2: ConvTranspose2d(k=4, s=2, p=1) + bias + ReLU, polyphase form ----
    # parity (r, s):  out[2a+r, 2b+s] = sum_{d,e} midp[a+r+d, b+s+e] . Wt[:, :, 3-r-2d, 3-s-2e]
    bias = b_ref[...]                                   # (Cout, 1) broadcasts over lanes
    for r in range(2):
        for s in range(2):
            w2p = w2_ref[2 * r + s]                     # (Cout, 4*Cmid)
            if im2col_s2:
                taps = [midp_s[:, r + d:r + d + H, s + e:s + e + W].reshape(Cmid, HW)
                        for d in range(2) for e in range(2)]
                patch2 = jnp.concatenate(taps, axis=0).astype(cdt)           # (4*Cmid, HW)
                acc = jnp.dot(w2p, patch2, preferred_element_type=jnp.float32)
            else:
                acc = jnp.zeros((Cout, HW), jnp.float32)
                t = 0
                for d in range(2):
                    for e in range(2):
                        tap = midp_s[:, r + d:r + d + H,
                                     s + e:s + e + W].reshape(Cmid, HW).astype(cdt)
                        acc = acc + jnp.dot(w2p[:, t * Cmid:(t + 1) * Cmid], tap,
                                            preferred_element_type=jnp.float32)
                        t += 1
            o_ref[0, 2 * r + s] = jnp.maximum(acc + bias, 0.0).astype(o_ref.dtype)


def decoder_block_v2_forward(x_nchw, conv_w, deconv_w, deconv_b, *,
                             matmul_dtype=None, im2col_threshold=512):
    """DecoderBlockV2(is_deconv=True) forward.

    x_nchw  : (N, Cin, H, W)
    conv_w  : (Cmid, Cin, 3, 3)   torch Conv2d OIHW weight (bias=False)
    deconv_w: (Cmid, Cout, 4, 4)  torch ConvTranspose2d IOHW weight
    deconv_b: (Cout,)             ConvTranspose2d bias
    returns : (N, Cout, 2H, 2W)
    """
    N, Cin, H, W = x_nchw.shape
    Cmid = conv_w.shape[0]
    Cout = deconv_w.shape[1]
    HW = H * W
    dtype = x_nchw.dtype
    cdt = jnp.dtype(matmul_dtype) if matmul_dtype is not None else jnp.dtype(dtype)
    # bf16 scratch halves VMEM + copy traffic when matmuls run in bf16 (v6e/v7x);
    # keep f32 scratch otherwise (v5e VPU has no bf16 elementwise path).
    sdt = jnp.bfloat16 if cdt == jnp.dtype(jnp.bfloat16) else jnp.float32

    # Stage-1 weights as one (Cmid, 9*Cin) matrix, column order (kh, kw, ci).
    w1 = jnp.transpose(conv_w, (0, 2, 3, 1)).reshape(Cmid, 9 * Cin).astype(cdt)

    # Stage-2 polyphase weights: one (Cout, 4*Cmid) matrix per output parity (r, s);
    # tap (d, e) of parity (r, s) uses kernel element (3 - r - 2d, 3 - s - 2e).
    phases = []
    for r in range(2):
        for s in range(2):
            taps = [deconv_w[:, :, 3 - r - 2 * d, 3 - s - 2 * e].T            # (Cout, Cmid)
                    for d in range(2) for e in range(2)]
            phases.append(jnp.concatenate(taps, axis=1))                      # (Cout, 4*Cmid)
    w2 = jnp.stack(phases, axis=0).astype(cdt)                                # (4, Cout, 4*Cmid)
    b2 = deconv_b.reshape(Cout, 1).astype(jnp.float32)

    # Lane-dense input: flatten spatial so the HBM->VMEM DMA last dim is H*W (>=128).
    x_flat = x_nchw.reshape(N, Cin, HW)

    # im2col (one big dot) only when the contraction dim would otherwise starve the MXU.
    im2col_s1 = (9 * Cin) <= im2col_threshold
    im2col_s2 = (4 * Cmid) <= im2col_threshold
    kernel = functools.partial(_decoder_block_kernel,
                               im2col_s1=im2col_s1, im2col_s2=im2col_s2)

    # Cost estimate (per whole call) + VMEM budget with headroom, capped below v7x physical.
    itemsize = jnp.dtype(dtype).itemsize
    citem = jnp.dtype(cdt).itemsize
    sitem = jnp.dtype(sdt).itemsize
    flops = 2 * N * HW * (Cmid * 9 * Cin + 4 * Cout * 4 * Cmid)
    bytes_accessed = ((x_flat.size + N * 4 * Cout * HW) * itemsize
                      + (w1.size + w2.size) * citem + b2.size * 4)
    lane_pad = 128 * ((W + 2 + 127) // 128)
    vmem_need = (2 * Cin * HW * itemsize                     # double-buffered input block
                 + 2 * 4 * Cout * HW * itemsize              # double-buffered output block
                 + 2 * (w1.size + w2.size) * citem + 2 * b2.size * 4
                 + (Cin + Cmid) * (H + 2) * lane_pad * sitem  # padded scratches
                 + (9 * Cin + 4 * Cmid + 2 * Cmid + 2 * Cout) * HW * 4)  # temporaries
    vmem_limit = int(min(56 * 1024 * 1024, max(2 * vmem_need, 16 * 1024 * 1024)))

    out_phases = pl.pallas_call(
        kernel,
        out_shape=jax.ShapeDtypeStruct((N, 4, Cout, HW), dtype),
        grid=(N,),
        in_specs=[
            pl.BlockSpec((1, Cin, HW), lambda n: (n, 0, 0)),
            pl.BlockSpec((Cmid, 9 * Cin), lambda n: (0, 0)),
            pl.BlockSpec((4, Cout, 4 * Cmid), lambda n: (0, 0, 0)),
            pl.BlockSpec((Cout, 1), lambda n: (0, 0)),
        ],
        out_specs=pl.BlockSpec((1, 4, Cout, HW), lambda n: (n, 0, 0, 0)),
        scratch_shapes=[
            pltpu.VMEM((Cin, H + 2, W + 2), sdt),
            pltpu.VMEM((Cmid, H + 2, W + 2), sdt),
        ],
        compiler_params=pltpu.CompilerParams(
            dimension_semantics=("parallel",),
            vmem_limit_bytes=vmem_limit),
        cost_estimate=pl.CostEstimate(flops=flops, transcendentals=0,
                                      bytes_accessed=bytes_accessed),
    )(x_flat, w1, w2, b2)

    # Interleave the 4 parities (wrapper-side layout plumbing): (N, r, s, Cout, H, W) -> NCHW.
    out = out_phases.reshape(N, 2, 2, Cout, H, W)
    out = jnp.transpose(out, (0, 3, 4, 1, 5, 2)).reshape(N, Cout, 2 * H, 2 * W)
    return out


def _reference(x_nchw, conv_w, deconv_w, deconv_b):
    """Pure-JAX reference mirroring the PyTorch module (NCHW)."""
    y = jax.lax.conv_general_dilated(
        x_nchw, conv_w, window_strides=(1, 1), padding=((1, 1), (1, 1)),
        dimension_numbers=('NCHW', 'OIHW', 'NCHW'))
    y = jnp.maximum(y, 0.0)
    w_oihw = jnp.transpose(deconv_w[:, :, ::-1, ::-1], (1, 0, 2, 3))
    z = jax.lax.conv_general_dilated(
        y, w_oihw, window_strides=(1, 1), padding=((2, 2), (2, 2)),
        lhs_dilation=(2, 2), dimension_numbers=('NCHW', 'OIHW', 'NCHW'))
    z = z + deconv_b[None, :, None, None]
    return jnp.maximum(z, 0.0)


if __name__ == "__main__":
    N, Cin, Cmid, Cout, H, W = 2, 4, 8, 4, 16, 16

    key = jax.random.PRNGKey(0)
    k1, k2, k3, k4 = jax.random.split(key, 4)
    x = jax.random.normal(k1, (N, Cin, H, W), jnp.float32)
    conv_w = jax.random.normal(k2, (Cmid, Cin, 3, 3), jnp.float32) * 0.1
    deconv_w = jax.random.normal(k3, (Cmid, Cout, 4, 4), jnp.float32) * 0.1
    deconv_b = jax.random.normal(k4, (Cout,), jnp.float32) * 0.1

    ref = jax.block_until_ready(_reference(x, conv_w, deconv_w, deconv_b))

    # Default path (im2col matmuls, f32 operands — exact vs. XLA reference).
    out = jax.block_until_ready(decoder_block_v2_forward(x, conv_w, deconv_w, deconv_b))
    assert out.shape == (N, Cout, 2 * H, 2 * W), out.shape
    assert jnp.allclose(out, ref, rtol=1e-4, atol=1e-4), float(jnp.max(jnp.abs(out - ref)))

    # Also exercise the accumulating-dot path used at production channel counts.
    out_acc = jax.block_until_ready(
        decoder_block_v2_forward(x, conv_w, deconv_w, deconv_b, im2col_threshold=0))
    assert jnp.allclose(out_acc, ref, rtol=1e-4, atol=1e-4), \
        float(jnp.max(jnp.abs(out_acc - ref)))

    print("KERNEL_OK")
</pallas_src>

<mosaic_0001>
module attributes {stable_mosaic.version = 11 : i64} {
  func.func @_decoder_block_kernel(%arg0: i32, %arg1: memref<1x4x256xf32, #tpu.memory_space<vmem>>, %arg2: memref<8x36xf32, #tpu.memory_space<vmem>>, %arg3: memref<4x4x32xf32, #tpu.memory_space<vmem>>, %arg4: memref<4x1xf32, #tpu.memory_space<vmem>>, %arg5: memref<1x4x4x256xf32, #tpu.memory_space<vmem>>, %arg6: memref<4x18x18xf32, #tpu.memory_space<vmem>>, %arg7: memref<8x18x18xf32, #tpu.memory_space<vmem>>) attributes {dimension_semantics = [#tpu.dimension_semantics<parallel>], iteration_bounds = array<i64: 2>, scalar_prefetch = 0 : i64, scratch_operands = 2 : i64, tpu.core_type = #tpu.core_type<tc>, window_params = [{transform_indices = @transform_0, window_bounds = array<i64: 1, 4, 256>}, {pipeline_mode = #tpu.pipeline_mode<synchronous>, transform_indices = @transform_1, window_bounds = array<i64: 8, 36>}, {pipeline_mode = #tpu.pipeline_mode<synchronous>, transform_indices = @transform_2, window_bounds = array<i64: 4, 4, 32>}, {pipeline_mode = #tpu.pipeline_mode<synchronous>, transform_indices = @transform_3, window_bounds = array<i64: 4, 1>}, {transform_indices = @transform_4, window_bounds = array<i64: 1, 4, 4, 256>}]} {
    %cst = arith.constant 0.000000e+00 : f32
    %0 = vector.broadcast %cst : f32 to vector<4x1x18xf32>
    %c0 = arith.constant 0 : index
    %c0_0 = arith.constant 0 : index
    %c0_1 = arith.constant 0 : index
    %1 = vector.load %arg6[%c0, %c0_0, %c0_1] : memref<4x18x18xf32, #tpu.memory_space<vmem>>, vector<4x1x18xf32>
    tpu.vector_store %arg6[%c0, %c0_0, %c0_1], %0 {strides = array<i32>} : memref<4x18x18xf32, #tpu.memory_space<vmem>>, vector<4x1x18xf32>,
    %cst_2 = arith.constant 0.000000e+00 : f32
    %2 = vector.broadcast %cst_2 : f32 to vector<4x1x18xf32>
    %c0_3 = arith.constant 0 : index
    %c17 = arith.constant 17 : index
    %c0_4 = arith.constant 0 : index
    %3 = vector.load %arg6[%c0_3, %c17, %c0_4] : memref<4x18x18xf32, #tpu.memory_space<vmem>>, vector<4x1x18xf32>
    tpu.vector_store %arg6[%c0_3, %c17, %c0_4], %2 {strides = array<i32>} : memref<4x18x18xf32, #tpu.memory_space<vmem>>, vector<4x1x18xf32>,
    %cst_5 = arith.constant 0.000000e+00 : f32
    %4 = vector.broadcast %cst_5 : f32 to vector<4x18x1xf32>
    %c0_6 = arith.constant 0 : index
    %c0_7 = arith.constant 0 : index
    %c0_8 = arith.constant 0 : index
    %5 = vector.load %arg6[%c0_6, %c0_7, %c0_8] : memref<4x18x18xf32, #tpu.memory_space<vmem>>, vector<4x18x1xf32>
    tpu.vector_store %arg6[%c0_6, %c0_7, %c0_8], %4 {strides = array<i32>} : memref<4x18x18xf32, #tpu.memory_space<vmem>>, vector<4x18x1xf32>,
    %cst_9 = arith.constant 0.000000e+00 : f32
    %6 = vector.broadcast %cst_9 : f32 to vector<4x18x1xf32>
    %c0_10 = arith.constant 0 : index
    %c0_11 = arith.constant 0 : index
    %c17_12 = arith.constant 17 : index
    %7 = vector.load %arg6[%c0_10, %c0_11, %c17_12] : memref<4x18x18xf32, #tpu.memory_space<vmem>>, vector<4x18x1xf32>
    tpu.vector_store %arg6[%c0_10, %c0_11, %c17_12], %6 {strides = array<i32>} : memref<4x18x18xf32, #tpu.memory_space<vmem>>, vector<4x18x1xf32>,
    %cst_13 = arith.constant 0.000000e+00 : f32
    %8 = vector.broadcast %cst_13 : f32 to vector<8x1x18xf32>
    %c0_14 = arith.constant 0 : index
    %c0_15 = arith.constant 0 : index
    %c0_16 = arith.constant 0 : index
    %9 = vector.load %arg7[%c0_14, %c0_15, %c0_16] : memref<8x18x18xf32, #tpu.memory_space<vmem>>, vector<8x1x18xf32>
    tpu.vector_store %arg7[%c0_14, %c0_15, %c0_16], %8 {strides = array<i32>} : memref<8x18x18xf32, #tpu.memory_space<vmem>>, vector<8x1x18xf32>,
    %cst_17 = arith.constant 0.000000e+00 : f32
    %10 = vector.broadcast %cst_17 : f32 to vector<8x1x18xf32>
    %c0_18 = arith.constant 0 : index
    %c17_19 = arith.constant 17 : index
    %c0_20 = arith.constant 0 : index
    %11 = vector.load %arg7[%c0_18, %c17_19, %c0_20] : memref<8x18x18xf32, #tpu.memory_space<vmem>>, vector<8x1x18xf32>
    tpu.vector_store %arg7[%c0_18, %c17_19, %c0_20], %10 {strides = array<i32>} : memref<8x18x18xf32, #tpu.memory_space<vmem>>, vector<8x1x18xf32>,
    %cst_21 = arith.constant 0.000000e+00 : f32
    %12 = vector.broadcast %cst_21 : f32 to vector<8x18x1xf32>
    %c0_22 = arith.constant 0 : index
    %c0_23 = arith.constant 0 : index
    %c0_24 = arith.constant 0 : index
    %13 = vector.load %arg7[%c0_22, %c0_23, %c0_24] : memref<8x18x18xf32, #tpu.memory_space<vmem>>, vector<8x18x1xf32>
    tpu.vector_store %arg7[%c0_22, %c0_23, %c0_24], %12 {strides = array<i32>} : memref<8x18x18xf32, #tpu.memory_space<vmem>>, vector<8x18x1xf32>,
    %cst_25 = arith.constant 0.000000e+00 : f32
    %14 = vector.broadcast %cst_25 : f32 to vector<8x18x1xf32>
    %c0_26 = arith.constant 0 : index
    %c0_27 = arith.constant 0 : index
    %c17_28 = arith.constant 17 : index
    %15 = vector.load %arg7[%c0_26, %c0_27, %c17_28] : memref<8x18x18xf32, #tpu.memory_space<vmem>>, vector<8x18x1xf32>
    tpu.vector_store %arg7[%c0_26, %c0_27, %c17_28], %14 {strides = array<i32>} : memref<8x18x18xf32, #tpu.memory_space<vmem>>, vector<8x18x1xf32>,
    %c0_29 = arith.constant 0 : index
    %c0_30 = arith.constant 0 : index
    %c0_31 = arith.constant 0 : index
    %16 = vector.load %arg1[%c0_29, %c0_30, %c0_31] : memref<1x4x256xf32, #tpu.memory_space<vmem>>, vector<1x4x256xf32>
    %17 = vector.shape_cast %16 : vector<1x4x256xf32> to vector<4x256xf32>
    %18 = vector.shape_cast %17 : vector<4x256xf32> to vector<4x16x16xf32>
    %c0_32 = arith.constant 0 : index
    %c1 = arith.constant 1 : index
    %c1_33 = arith.constant 1 : index
    %19 = vector.load %arg6[%c0_32, %c1, %c1_33] : memref<4x18x18xf32, #tpu.memory_space<vmem>>, vector<4x16x16xf32>
    tpu.vector_store %arg6[%c0_32, %c1, %c1_33], %18 {strides = array<i32>} : memref<4x18x18xf32, #tpu.memory_space<vmem>>, vector<4x16x16xf32>,
    %c0_34 = arith.constant 0 : index
    %c0_35 = arith.constant 0 : index
    %c0_36 = arith.constant 0 : index
    %20 = vector.load %arg6[%c0_34, %c0_35, %c0_36] : memref<4x18x18xf32, #tpu.memory_space<vmem>>, vector<4x16x16xf32>
    %21 = vector.shape_cast %20 : vector<4x16x16xf32> to vector<4x256xf32>
    %c0_37 = arith.constant 0 : index
    %c0_38 = arith.constant 0 : index
    %c1_39 = arith.constant 1 : index
    %22 = vector.load %arg6[%c0_37, %c0_38, %c1_39] : memref<4x18x18xf32, #tpu.memory_space<vmem>>, vector<4x16x16xf32>
    %23 = vector.shape_cast %22 : vector<4x16x16xf32> to vector<4x256xf32>
    %c0_40 = arith.constant 0 : index
    %c0_41 = arith.constant 0 : index
    %c2 = arith.constant 2 : index
    %24 = vector.load %arg6[%c0_40, %c0_41, %c2] : memref<4x18x18xf32, #tpu.memory_space<vmem>>, vector<4x16x16xf32>
    %25 = vector.shape_cast %24 : vector<4x16x16xf32> to vector<4x256xf32>
    %c0_42 = arith.constant 0 : index
    %c1_43 = arith.constant 1 : index
    %c0_44 = arith.constant 0 : index
    %26 = vector.load %arg6[%c0_42, %c1_43, %c0_44] : memref<4x18x18xf32, #tpu.memory_space<vmem>>, vector<4x16x16xf32>
    %27 = vector.shape_cast %26 : vector<4x16x16xf32> to vector<4x256xf32>
    %c0_45 = arith.constant 0 : index
    %c1_46 = arith.constant 1 : index
    %c1_47 = arith.constant 1 : index
    %28 = vector.load %arg6[%c0_45, %c1_46, %c1_47] : memref<4x18x18xf32, #tpu.memory_space<vmem>>, vector<4x16x16xf32>
    %29 = vector.shape_cast %28 : vector<4x16x16xf32> to vector<4x256xf32>
    %c0_48 = arith.constant 0 : index
    %c1_49 = arith.constant 1 : index
    %c2_50 = arith.constant 2 : index
    %30 = vector.load %arg6[%c0_48, %c1_49, %c2_50] : memref<4x18x18xf32, #tpu.memory_space<vmem>>, vector<4x16x16xf32>
    %31 = vector.shape_cast %30 : vector<4x16x16xf32> to vector<4x256xf32>
    %c0_51 = arith.constant 0 : index
    %c2_52 = arith.constant 2 : index
    %c0_53 = arith.constant 0 : index
    %32 = vector.load %arg6[%c0_51, %c2_52, %c0_53] : memref<4x18x18xf32, #tpu.memory_space<vmem>>, vector<4x16x16xf32>
    %33 = vector.shape_cast %32 : vector<4x16x16xf32> to vector<4x256xf32>
    %c0_54 = arith.constant 0 : index
    %c2_55 = arith.constant 2 : index
    %c1_56 = arith.constant 1 : index
    %34 = vector.load %arg6[%c0_54, %c2_55, %c1_56] : memref<4x18x18xf32, #tpu.memory_space<vmem>>, vector<4x16x16xf32>
    %35 = vector.shape_cast %34 : vector<4x16x16xf32> to vector<4x256xf32>
    %c0_57 = arith.constant 0 : index
    %c2_58 = arith.constant 2 : index
    %c2_59 = arith.constant 2 : index
    %36 = vector.load %arg6[%c0_57, %c2_58, %c2_59] : memref<4x18x18xf32, #tpu.memory_space<vmem>>, vector<4x16x16xf32>
    %37 = vector.shape_cast %36 : vector<4x16x16xf32> to vector<4x256xf32>
    %38 = tpu.concatenate %21, %23, %25, %27, %29, %31, %33, %35, %37 in 0 : vector<4x256xf32>, vector<4x256xf32>, vector<4x256xf32>, vector<4x256xf32>, vector<4x256xf32>, vector<4x256xf32>, vector<4x256xf32>, vector<4x256xf32>, vector<4x256xf32> -> vector<36x256xf32>
    %c0_60 = arith.constant 0 : index
    %c0_61 = arith.constant 0 : index
    %39 = vector.load %arg2[%c0_60, %c0_61] : memref<8x36xf32, #tpu.memory_space<vmem>>, vector<8x36xf32>
    %cst_62 = arith.constant dense<0.000000e+00> : vector<8x256xf32>
    %40 = tpu.matmul %39, %38, %cst_62 {dimension_numbers = #tpu.dot_dimension_numbers<[1], [0], [0], [1], [0, 0, 1, 1], [], []>} : vector<8x36xf32>, vector<36x256xf32>, vector<8x256xf32> -> vector<8x256xf32>
    %cst_63 = arith.constant 0.000000e+00 : f32
    %41 = vector.broadcast %cst_63 : f32 to vector<8x256xf32>
    %42 = arith.maximumf %40, %41 : vector<8x256xf32>
    %43 = vector.shape_cast %42 : vector<8x256xf32> to vector<8x16x16xf32>
    %c0_64 = arith.constant 0 : index
    %c1_65 = arith.constant 1 : index
    %c1_66 = arith.constant 1 : index
    %44 = vector.load %arg7[%c0_64, %c1_65, %c1_66] : memref<8x18x18xf32, #tpu.memory_space<vmem>>, vector<8x16x16xf32>
    tpu.vector_store %arg7[%c0_64, %c1_65, %c1_66], %43 {strides = array<i32>} : memref<8x18x18xf32, #tpu.memory_space<vmem>>, vector<8x16x16xf32>,
    %c0_67 = arith.constant 0 : index
    %c0_68 = arith.constant 0 : index
    %45 = vector.load %arg4[%c0_67, %c0_68] : memref<4x1xf32, #tpu.memory_space<vmem>>, vector<4x1xf32>
    %c0_69 = arith.constant 0 : index
    %c0_70 = arith.constant 0 : index
    %c0_71 = arith.constant 0 : index
    %46 = vector.load %arg3[%c0_69, %c0_70, %c0_71] : memref<4x4x32xf32, #tpu.memory_space<vmem>>, vector<1x4x32xf32>
    %47 = vector.shape_cast %46 : vector<1x4x32xf32> to vector<4x32xf32>
    %c0_72 = arith.constant 0 : index
    %c0_73 = arith.constant 0 : index
    %c0_74 = arith.constant 0 : index
    %48 = vector.load %arg7[%c0_72, %c0_73, %c0_74] : memref<8x18x18xf32, #tpu.memory_space<vmem>>, vector<8x16x16xf32>
    %49 = vector.shape_cast %48 : vector<8x16x16xf32> to vector<8x256xf32>
    %c0_75 = arith.constant 0 : index
    %c0_76 = arith.constant 0 : index
    %c1_77 = arith.constant 1 : index
    %50 = vector.load %arg7[%c0_75, %c0_76, %c1_77] : memref<8x18x18xf32, #tpu.memory_space<vmem>>, vector<8x16x16xf32>
    %51 = vector.shape_cast %50 : vector<8x16x16xf32> to vector<8x256xf32>
    %c0_78 = arith.constant 0 : index
    %c1_79 = arith.constant 1 : index
    %c0_80 = arith.constant 0 : index
    %52 = vector.load %arg7[%c0_78, %c1_79, %c0_80] : memref<8x18x18xf32, #tpu.memory_space<vmem>>, vector<8x16x16xf32>
    %53 = vector.shape_cast %52 : vector<8x16x16xf32> to vector<8x256xf32>
    %c0_81 = arith.constant 0 : index
    %c1_82 = arith.constant 1 : index
    %c1_83 = arith.constant 1 : index
    %54 = vector.load %arg7[%c0_81, %c1_82, %c1_83] : memref<8x18x18xf32, #tpu.memory_space<vmem>>, vector<8x16x16xf32>
    %55 = vector.shape_cast %54 : vector<8x16x16xf32> to vector<8x256xf32>
    %56 = tpu.concatenate %49, %51, %53, %55 in 0 : vector<8x256xf32>, vector<8x256xf32>, vector<8x256xf32>, vector<8x256xf32> -> vector<32x256xf32>
    %cst_84 = arith.constant dense<0.000000e+00> : vector<4x256xf32>
    %57 = tpu.matmul %47, %56, %cst_84 {dimension_numbers = #tpu.dot_dimension_numbers<[1], [0], [0], [1], [0, 0, 1, 1], [], []>} : vector<4x32xf32>, vector<32x256xf32>, vector<4x256xf32> -> vector<4x256xf32>
    %58 = vector.broadcast %45 : vector<4x1xf32> to vector<4x256xf32>
    %59 = arith.addf %57, %58 : vector<4x256xf32>
    %cst_85 = arith.constant 0.000000e+00 : f32
    %60 = vector.broadcast %cst_85 : f32 to vector<4x256xf32>
    %61 = arith.maximumf %59, %60 : vector<4x256xf32>
    %c0_86 = arith.constant 0 : index
    %c0_87 = arith.constant 0 : index
    %c0_88 = arith.constant 0 : index
    %c0_89 = arith.constant 0 : index
    %62 = vector.load %arg5[%c0_86, %c0_87, %c0_88, %c0_89] : memref<1x4x4x256xf32, #tpu.memory_space<vmem>>, vector<1x1x4x256xf32>
    %63 = vector.shape_cast %62 : vector<1x1x4x256xf32> to vector<4x256xf32>
    %64 = vector.shape_cast %61 : vector<4x256xf32> to vector<1x1x4x256xf32>
    tpu.vector_store %arg5[%c0_86, %c0_87, %c0_88, %c0_89], %64 {strides = array<i32>} : memref<1x4x4x256xf32, #tpu.memory_space<vmem>>, vector<1x1x4x256xf32>,
    %c1_90 = arith.constant 1 : index
    %c0_91 = arith.constant 0 : index
    %c0_92 = arith.constant 0 : index
    %65 = vector.load %arg3[%c1_90, %c0_91, %c0_92] : memref<4x4x32xf32, #tpu.memory_space<vmem>>, vector<1x4x32xf32>
    %66 = vector.shape_cast %65 : vector<1x4x32xf32> to vector<4x32xf32>
    %c0_93 = arith.constant 0 : index
    %c0_94 = arith.constant 0 : index
    %c1_95 = arith.constant 1 : index
    %67 = vector.load %arg7[%c0_93, %c0_94, %c1_95] : memref<8x18x18xf32, #tpu.memory_space<vmem>>, vector<8x16x16xf32>
    %68 = vector.shape_cast %67 : vector<8x16x16xf32> to vector<8x256xf32>
    %c0_96 = arith.constant 0 : index
    %c0_97 = arith.constant 0 : index
    %c2_98 = arith.constant 2 : index
    %69 = vector.load %arg7[%c0_96, %c0_97, %c2_98] : memref<8x18x18xf32, #tpu.memory_space<vmem>>, vector<8x16x16xf32>
    %70 = vector.shape_cast %69 : vector<8x16x16xf32> to vector<8x256xf32>
    %c0_99 = arith.constant 0 : index
    %c1_100 = arith.constant 1 : index
    %c1_101 = arith.constant 1 : index
    %71 = vector.load %arg7[%c0_99, %c1_100, %c1_101] : memref<8x18x18xf32, #tpu.memory_space<vmem>>, vector<8x16x16xf32>
    %72 = vector.shape_cast %71 : vector<8x16x16xf32> to vector<8x256xf32>
    %c0_102 = arith.constant 0 : index
    %c1_103 = arith.constant 1 : index
    %c2_104 = arith.constant 2 : index
    %73 = vector.load %arg7[%c0_102, %c1_103, %c2_104] : memref<8x18x18xf32, #tpu.memory_space<vmem>>, vector<8x16x16xf32>
    %74 = vector.shape_cast %73 : vector<8x16x16xf32> to vector<8x256xf32>
    %75 = tpu.concatenate %68, %70, %72, %74 in 0 : vector<8x256xf32>, vector<8x256xf32>, vector<8x256xf32>, vector<8x256xf32> -> vector<32x256xf32>
    %cst_105 = arith.constant dense<0.000000e+00> : vector<4x256xf32>
    %76 = tpu.matmul %66, %75, %cst_105 {dimension_numbers = #tpu.dot_dimension_numbers<[1], [0], [0], [1], [0, 0, 1, 1], [], []>} : vector<4x32xf32>, vector<32x256xf32>, vector<4x256xf32> -> vector<4x256xf32>
    %77 = vector.broadcast %45 : vector<4x1xf32> to vector<4x256xf32>
    %78 = arith.addf %76, %77 : vector<4x256xf32>
    %cst_106 = arith.constant 0.000000e+00 : f32
    %79 = vector.broadcast %cst_106 : f32 to vector<4x256xf32>
    %80 = arith.maximumf %78, %79 : vector<4x256xf32>
    %c0_107 = arith.constant 0 : index
    %c1_108 = arith.constant 1 : index
    %c0_109 = arith.constant 0 : index
    %c0_110 = arith.constant 0 : index
    %81 = vector.load %arg5[%c0_107, %c1_108, %c0_109, %c0_110] : memref<1x4x4x256xf32, #tpu.memory_space<vmem>>, vector<1x1x4x256xf32>
    %82 = vector.shape_cast %81 : vector<1x1x4x256xf32> to vector<4x256xf32>
    %83 = vector.shape_cast %80 : vector<4x256xf32> to vector<1x1x4x256xf32>
    tpu.vector_store %arg5[%c0_107, %c1_108, %c0_109, %c0_110], %83 {strides = array<i32>} : memref<1x4x4x256xf32, #tpu.memory_space<vmem>>, vector<1x1x4x256xf32>,
    %c2_111 = arith.constant 2 : index
    %c0_112 = arith.constant 0 : index
    %c0_113 = arith.constant 0 : index
    %84 = vector.load %arg3[%c2_111, %c0_112, %c0_113] : memref<4x4x32xf32, #tpu.memory_space<vmem>>, vector<1x4x32xf32>
    %85 = vector.shape_cast %84 : vector<1x4x32xf32> to vector<4x32xf32>
    %c0_114 = arith.constant 0 : index
    %c1_115 = arith.constant 1 : index
    %c0_116 = arith.constant 0 : index
    %86 = vector.load %arg7[%c0_114, %c1_115, %c0_116] : memref<8x18x18xf32, #tpu.memory_space<vmem>>, vector<8x16x16xf32>
    %87 = vector.shape_cast %86 : vector<8x16x16xf32> to vector<8x256xf32>
    %c0_117 = arith.constant 0 : index
    %c1_118 = arith.constant 1 : index
    %c1_119 = arith.constant 1 : index
    %88 = vector.load %arg7[%c0_117, %c1_118, %c1_119] : memref<8x18x18xf32, #tpu.memory_space<vmem>>, vector<8x16x16xf32>
    %89 = vector.shape_cast %88 : vector<8x16x16xf32> to vector<8x256xf32>
    %c0_120 = arith.constant 0 : index
    %c2_121 = arith.constant 2 : index
    %c0_122 = arith.constant 0 : index
    %90 = vector.load %arg7[%c0_120, %c2_121, %c0_122] : memref<8x18x18xf32, #tpu.memory_space<vmem>>, vector<8x16x16xf32>
    %91 = vector.shape_cast %90 : vector<8x16x16xf32> to vector<8x256xf32>
    %c0_123 = arith.constant 0 : index
    %c2_124 = arith.constant 2 : index
    %c1_125 = arith.constant 1 : index
    %92 = vector.load %arg7[%c0_123, %c2_124, %c1_125] : memref<8x18x18xf32, #tpu.memory_space<vmem>>, vector<8x16x16xf32>
    %93 = vector.shape_cast %92 : vector<8x16x16xf32> to vector<8x256xf32>
    %94 = tpu.concatenate %87, %89, %91, %93 in 0 : vector<8x256xf32>, vector<8x256xf32>, vector<8x256xf32>, vector<8x256xf32> -> vector<32x256xf32>
    %cst_126 = arith.constant dense<0.000000e+00> : vector<4x256xf32>
    %95 = tpu.matmul %85, %94, %cst_126 {dimension_numbers = #tpu.dot_dimension_numbers<[1], [0], [0], [1], [0, 0, 1, 1], [], []>} : vector<4x32xf32>, vector<32x256xf32>, vector<4x256xf32> -> vector<4x256xf32>
    %96 = vector.broadcast %45 : vector<4x1xf32> to vector<4x256xf32>
    %97 = arith.addf %95, %96 : vector<4x256xf32>
    %cst_127 = arith.constant 0.000000e+00 : f32
    %98 = vector.broadcast %cst_127 : f32 to vector<4x256xf32>
    %99 = arith.maximumf %97, %98 : vector<4x256xf32>
    %c0_128 = arith.constant 0 : index
    %c2_129 = arith.constant 2 : index
    %c0_130 = arith.constant 0 : index
    %c0_131 = arith.constant 0 : index
    %100 = vector.load %arg5[%c0_128, %c2_129, %c0_130, %c0_131] : memref<1x4x4x256xf32, #tpu.memory_space<vmem>>, vector<1x1x4x256xf32>
    %101 = vector.shape_cast %100 : vector<1x1x4x256xf32> to vector<4x256xf32>
    %102 = vector.shape_cast %99 : vector<4x256xf32> to vector<1x1x4x256xf32>
    tpu.vector_store %arg5[%c0_128, %c2_129, %c0_130, %c0_131], %102 {strides = array<i32>} : memref<1x4x4x256xf32, #tpu.memory_space<vmem>>, vector<1x1x4x256xf32>,
    %c3 = arith.constant 3 : index
    %c0_132 = arith.constant 0 : index
    %c0_133 = arith.constant 0 : index
    %103 = vector.load %arg3[%c3, %c0_132, %c0_133] : memref<4x4x32xf32, #tpu.memory_space<vmem>>, vector<1x4x32xf32>
    %104 = vector.shape_cast %103 : vector<1x4x32xf32> to vector<4x32xf32>
    %c0_134 = arith.constant 0 : index
    %c1_135 = arith.constant 1 : index
    %c1_136 = arith.constant 1 : index
    %105 = vector.load %arg7[%c0_134, %c1_135, %c1_136] : memref<8x18x18xf32, #tpu.memory_space<vmem>>, vector<8x16x16xf32>
    %106 = vector.shape_cast %105 : vector<8x16x16xf32> to vector<8x256xf32>
    %c0_137 = arith.constant 0 : index
    %c1_138 = arith.constant 1 : index
    %c2_139 = arith.constant 2 : index
    %107 = vector.load %arg7[%c0_137, %c1_138, %c2_139] : memref<8x18x18xf32, #tpu.memory_space<vmem>>, vector<8x16x16xf32>
    %108 = vector.shape_cast %107 : vector<8x16x16xf32> to vector<8x256xf32>
    %c0_140 = arith.constant 0 : index
    %c2_141 = arith.constant 2 : index
    %c1_142 = arith.constant 1 : index
    %109 = vector.load %arg7[%c0_140, %c2_141, %c1_142] : memref<8x18x18xf32, #tpu.memory_space<vmem>>, vector<8x16x16xf32>
    %110 = vector.shape_cast %109 : vector<8x16x16xf32> to vector<8x256xf32>
    %c0_143 = arith.constant 0 : index
    %c2_144 = arith.constant 2 : index
    %c2_145 = arith.constant 2 : index
    %111 = vector.load %arg7[%c0_143, %c2_144, %c2_145] : memref<8x18x18xf32, #tpu.memory_space<vmem>>, vector<8x16x16xf32>
    %112 = vector.shape_cast %111 : vector<8x16x16xf32> to vector<8x256xf32>
    %113 = tpu.concatenate %106, %108, %110, %112 in 0 : vector<8x256xf32>, vector<8x256xf32>, vector<8x256xf32>, vector<8x256xf32> -> vector<32x256xf32>
    %cst_146 = arith.constant dense<0.000000e+00> : vector<4x256xf32>
    %114 = tpu.matmul %104, %113, %cst_146 {dimension_numbers = #tpu.dot_dimension_numbers<[1], [0], [0], [1], [0, 0, 1, 1], [], []>} : vector<4x32xf32>, vector<32x256xf32>, vector<4x256xf32> -> vector<4x256xf32>
    %115 = vector.broadcast %45 : vector<4x1xf32> to vector<4x256xf32>
    %116 = arith.addf %114, %115 : vector<4x256xf32>
    %cst_147 = arith.constant 0.000000e+00 : f32
    %117 = vector.broadcast %cst_147 : f32 to vector<4x256xf32>
    %118 = arith.maximumf %116, %117 : vector<4x256xf32>
    %c0_148 = arith.constant 0 : index
    %c3_149 = arith.constant 3 : index
    %c0_150 = arith.constant 0 : index
    %c0_151 = arith.constant 0 : index
    %119 = vector.load %arg5[%c0_148, %c3_149, %c0_150, %c0_151] : memref<1x4x4x256xf32, #tpu.memory_space<vmem>>, vector<1x1x4x256xf32>
    %120 = vector.shape_cast %119 : vector<1x1x4x256xf32> to vector<4x256xf32>
    %121 = vector.shape_cast %118 : vector<4x256xf32> to vector<1x1x4x256xf32>
    tpu.vector_store %arg5[%c0_148, %c3_149, %c0_150, %c0_151], %121 {strides = array<i32>} : memref<1x4x4x256xf32, #tpu.memory_space<vmem>>, vector<1x1x4x256xf32>,
    return
  }
  func.func @transform_0(%arg0: i32) -> (i32, i32, i32) {
    %c0_i32 = arith.constant 0 : i32
    %c0_i32_0 = arith.constant 0 : i32
    %c0_i32_1 = arith.constant 0 : i32
    return %arg0, %c0_i32, %c0_i32_0 : i32, i32, i32
  }
  func.func @transform_1(%arg0: i32) -> (i32, i32) {
    %c0_i32 = arith.constant 0 : i32
    %c0_i32_0 = arith.constant 0 : i32
    %c0_i32_1 = arith.constant 0 : i32
    return %c0_i32, %c0_i32_0 : i32, i32
  }
  func.func @transform_2(%arg0: i32) -> (i32, i32, i32) {
    %c0_i32 = arith.constant 0 : i32
    %c0_i32_0 = arith.constant 0 : i32
    %c0_i32_1 = arith.constant 0 : i32
    %c0_i32_2 = arith.constant 0 : i32
    return %c0_i32, %c0_i32_0, %c0_i32_1 : i32, i32, i32
  }
  func.func @transform_3(%arg0: i32) -> (i32, i32) {
    %c0_i32 = arith.constant 0 : i32
    %c0_i32_0 = arith.constant 0 : i32
    %c0_i32_1 = arith.constant 0 : i32
    return %c0_i32, %c0_i32_0 : i32, i32
  }
  func.func @transform_4(%arg0: i32) -> (i32, i32, i32, i32) {
    %c0_i32 = arith.constant 0 : i32
    %c0_i32_0 = arith.constant 0 : i32
    %c0_i32_1 = arith.constant 0 : i32
    %c0_i32_2 = arith.constant 0 : i32
    return %arg0, %c0_i32, %c0_i32_0, %c0_i32_1 : i32, i32, i32, i32
  }
}

</mosaic_0001>

<llo_original>
// kernel: tpu_custom_call.1
$region0: #{tpu_custom_call.1}
  #allocation0 [shape = 'u32[]', space=smem, size = 0x4, offset = 0x4, fixed_abs, tag = 'smem constant byte address 0x4 - core index']
  #allocation1 [shape = 'u32[144,128]{1,0:T(1,128)}', space=vmem, size = 0x12000, scoped, tag = 'internal scratch']
  #allocation2 [shape = 'f32[4,18,18]{2,1,0:T(8,128)}', space=vmem, size = 0xc000, scoped, tag = 'scratch operand']
  #allocation3 [shape = 'f32[8,18,18]{2,1,0:T(8,128)}', space=vmem, size = 0x18000, scoped, tag = 'scratch operand']
  %s0 = inlined_call_operand.hbm [shape: f32[2,4,256], index: 0, kind: input, shape index: {}]
  %s1 = inlined_call_operand.hbm [shape: f32[8,36], index: 1, kind: input, shape index: {}]
  %s2 = inlined_call_operand.hbm [shape: f32[4,4,32], index: 2, kind: input, shape index: {}]
  %s3 = inlined_call_operand.vmem [shape: f32[4,1], index: 3, kind: input, shape index: {}]
  %s4 = inlined_call_operand.hbm [shape: f32[2,4,4,256], index: 4, kind: output, shape index: {}]
  %s5 = sld [smem:[#allocation0]]
  $region61: #{tpu_custom_call.1} parent=0
    _
  %s7 = ssub.s32 1, %s5
  %s8 = scalar_select 0, %s7, %s5
  $region1: #{tpu_custom_call.1} parent=0
    #allocation4 [shape = 'u8[8192]{0}', space=vmem, size = 0x2000, scoped, tag = 'input window, operand 0']
    #allocation5 [shape = 's32[2]{0}', space=sflag, size = 0x8, scoped, tag = 'scoped memory for tpu_custom_call.1']
    #allocation6 [shape = 's32[2]{0}', space=sflag, size = 0x8, scoped, tag = 'scoped memory for tpu_custom_call.1']
    #allocation7 [shape = 'u8[4096]{0}', space=vmem, size = 0x1000, scoped, tag = 'input window, operand 1, single buffered']
    #allocation8 [shape = 's32[1]{0}', space=sflag, size = 0x4, scoped, tag = 'scoped memory for tpu_custom_call.1']
    #allocation9 [shape = 'u8[8192]{0}', space=vmem, size = 0x2000, scoped, tag = 'input window, operand 2, single buffered']
    #allocation10 [shape = 'u8[32768]{0}', space=vmem, size = 0x8000, scoped, tag = 'output window, operand 0']
    %9 = vsyncpa [#allocation5], 0
    %s10 = scalar_lea.sflag [#allocation5], 1
    %11 = vsyncpa %s10, 0
    %12 = vsyncpa [#allocation8], 0
    %13 = vsyncpa [#allocation6], 0
    %s14 = scalar_lea.sflag [#allocation6], 1
    %15 = vsyncpa %s14, 0
    loop: start=0, step=1, limit=4
    $region2: #{tpu_custom_call.1} parent=1 // loop_pre_header
      _
    $region3: #{tpu_custom_call.1} parent=1 // loop_header
      %s17 = sphi 0, %s21
      %p18 = scmp.ge.s32.totalorder %s17, 4
      %s27 = sphi 0, %s29
      %s30 = sphi 0, %s27
      %s31 = sphi 0, %s30
      %s47 = sphi 0, %s31
      %s51 = sphi 0, %s51
      %s53 = sphi 0, %s51
      %s54 = sphi 0, %s53
      %s68 = sphi 0, %s54
      %s72 = sphi 0, %s72
      %s74 = sphi 0, %s72
      %s75 = sphi 0, %s74
      %s89 = sphi 0, %s75
      %s93 = sphi 0, %s93
      %s95 = sphi 0, %s93
      %s96 = sphi 0, %s95
      %s110 = sphi 0, %s96
      %s116 = sphi 0, %s118
      %s119 = sphi 0, %s116
      %s120 = sphi 0, %s119
      %s136 = sphi 0, %s120
    $region4: #{tpu_custom_call.1} parent=1 // loop_header_branch
      %20 = sbr.rel (%p18) target = $region8
    $region5: #{tpu_custom_call.1} parent=1 // loop_body
      %s22 = ssub.s32 %s17, 1
      %s23 = ssub.s32 %s17, 2
      %s24 = sadd.s32 %s17, 1
      %s25 = ssub.s32 %s17, %s24
      %p26 = scmp.eq.s32.totalorder %s25, 0
      %s28 = sadd.s32 %s27, 1
      %s29 = scalar_select %p26, %s27, %s28
      %p32 = pneg %p26
      %p33 = scmp.eq.s32.totalorder %s17, 1
      %p34 = por %p32, %p33
      %p35 = scmp.ne.s32.totalorder %s27, %s30
      %p36 = scmp.eq.s32.totalorder %s17, 0
      %p37 = por %p35, %p36
      %p38 = scmp.ne.s32.totalorder %s27, %s30
      %p39 = scmp.eq.s32.totalorder %s22, 1
      %p40 = por %p38, %p39
      %p41 = scmp.ne.s32.totalorder %s30, %s31
      %p42 = scmp.eq.s32.totalorder %s22, 0
      %p43 = por %p41, %p42
      %p44 = scmp.ne.s32.totalorder %s30, %s31
      %p45 = scmp.eq.s32.totalorder %s23, 1
      %p46 = por %p44, %p45
      %p48 = scmp.ne.s32.totalorder %s31, %s47
      %p49 = scmp.eq.s32.totalorder %s23, 0
      %p50 = por %p48, %p49
      %s52 = sadd.s32 %s51, 1
      %p55 = scmp.eq.s32.totalorder %s17, 1
      %p56 = scmp.ne.s32.totalorder %s51, %s53
      %p57 = scmp.eq.s32.totalorder %s17, 0
      %p58 = por %p56, %p57
      %p59 = scmp.ne.s32.totalorder %s51, %s53
      %p60 = scmp.eq.s32.totalorder %s22, 1
      %p61 = por %p59, %p60
      %p62 = scmp.ne.s32.totalorder %s53, %s54
      %p63 = scmp.eq.s32.totalorder %s22, 0
      %p64 = por %p62, %p63
      %p65 = scmp.ne.s32.totalorder %s53, %s54
      %p66 = scmp.eq.s32.totalorder %s23, 1
      %p67 = por %p65, %p66
      %p69 = scmp.ne.s32.totalorder %s54, %s68
      %p70 = scmp.eq.s32.totalorder %s23, 0
      %p71 = por %p69, %p70
      %s73 = sadd.s32 %s72, 1
      %p76 = scmp.eq.s32.totalorder %s17, 1
      %p77 = scmp.ne.s32.totalorder %s72, %s74
      %p78 = scmp.eq.s32.totalorder %s17, 0
      %p79 = por %p77, %p78
      %p80 = scmp.ne.s32.totalorder %s72, %s74
      %p81 = scmp.eq.s32.totalorder %s22, 1
      %p82 = por %p80, %p81
      %p83 = scmp.ne.s32.totalorder %s74, %s75
      %p84 = scmp.eq.s32.totalorder %s22, 0
      %p85 = por %p83, %p84
      %p86 = scmp.ne.s32.totalorder %s74, %s75
      %p87 = scmp.eq.s32.totalorder %s23, 1
      %p88 = por %p86, %p87
      %p90 = scmp.ne.s32.totalorder %s75, %s89
      %p91 = scmp.eq.s32.totalorder %s23, 0
      %p92 = por %p90, %p91
      %s94 = sadd.s32 %s93, 1
      %p97 = scmp.eq.s32.totalorder %s17, 1
      %p98 = scmp.ne.s32.totalorder %s93, %s95
      %p99 = scmp.eq.s32.totalorder %s17, 0
      %p100 = por %p98, %p99
      %p101 = scmp.ne.s32.totalorder %s93, %s95
      %p102 = scmp.eq.s32.totalorder %s22, 1
      %p103 = por %p101, %p102
      %p104 = scmp.ne.s32.totalorder %s95, %s96
      %p105 = scmp.eq.s32.totalorder %s22, 0
      %p106 = por %p104, %p105
      %p107 = scmp.ne.s32.totalorder %s95, %s96
      %p108 = scmp.eq.s32.totalorder %s23, 1
      %p109 = por %p107, %p108
      %p111 = scmp.ne.s32.totalorder %s96, %s110
      %p112 = scmp.eq.s32.totalorder %s23, 0
      %p113 = por %p111, %p112
      %s114 = ssub.s32 %s17, %s24
      %p115 = scmp.eq.s32.totalorder %s114, 0
      %s117 = sadd.s32 %s116, 1
      %s118 = scalar_select %p115, %s116, %s117
      %p121 = pneg %p115
      %p122 = scmp.eq.s32.totalorder %s17, 1
      %p123 = por %p121, %p122
      %p124 = scmp.ne.s32.totalorder %s116, %s119
      %p125 = scmp.eq.s32.totalorder %s17, 0
      %p126 = por %p124, %p125
      %p127 = scmp.ne.s32.totalorder %s116, %s119
      %p128 = scmp.eq.s32.totalorder %s22, 1
      %p129 = por %p127, %p128
      %p130 = scmp.ne.s32.totalorder %s119, %s120
      %p131 = scmp.eq.s32.totalorder %s22, 0
      %p132 = por %p130, %p131
      %p133 = scmp.ne.s32.totalorder %s119, %s120
      %p134 = scmp.eq.s32.totalorder %s23, 1
      %p135 = por %p133, %p134
      %p137 = scmp.ne.s32.totalorder %s120, %s136
      %p138 = scmp.eq.s32.totalorder %s23, 0
      %p139 = por %p137, %p138
      %p140 = scmp.le.s32.totalorder 1, %s17
      %p141 = scmp.lt.s32.totalorder %s17, 3
      %p142 = pnand %p140, %p141
      %p143 = pneg %p142
      // Predicated region
      $region9: #{tpu_custom_call.1} parent=5 // pred_check
        _
      $region10: #{tpu_custom_call.1} parent=5 // pred_check_branch
        %145 = sbr.rel (%p142) target = $region12
      $region11: #{tpu_custom_call.1} parent=5 // pred_region
        %s146 = ssub.s32 %s17, 1
        // Predicated region
        $region13: #{tpu_custom_call.1} parent=11 // pred_check
          %p147 = pneg %p64
        $region14: #{tpu_custom_call.1} parent=11 // pred_check_branch
          %149 = sbr.rel (%p147) target = $region16
        $region15: #{tpu_custom_call.1} parent=11 // pred_region
          %s151 = ssub.s32 128, 128
          %152 = vsyncadd [#allocation8], %s151
          %s154 = sshll.u32 [#allocation7], 4
          %s155 = int_to_ptr.vmem [resolvable:$true] %s154
          %157 = dma.hbm_to_vmem [thread:$0]  %s1, 128, %s155, [#allocation8]
        $region16: #{tpu_custom_call.1} parent=11 // pred_fallthru
          _
        // Predicated region
        $region17: #{tpu_custom_call.1} parent=11 // pred_check
          %p158 = pneg %p85
        $region18: #{tpu_custom_call.1} parent=11 // pred_check_branch
          %160 = sbr.rel (%p158) target = $region20
        $region19: #{tpu_custom_call.1} parent=11 // pred_region
          %s162 = ssub.s32 256, 256
          %163 = vsyncadd [#allocation8], %s162
          %s164 = sshll.u32 [#allocation9], 4
          %s165 = int_to_ptr.vmem [resolvable:$true] %s164
          %170 = dma.hbm_to_vmem [thread:$0]  %s2, 256, %s165, [#allocation8], 64, 64, 4
        $region20: #{tpu_custom_call.1} parent=11 // pred_fallthru
          _
        // Predicated region
        $region21: #{tpu_custom_call.1} parent=11 // pred_check
          %p171 = pneg %p106
        $region22: #{tpu_custom_call.1} parent=11 // pred_check_branch
          %173 = sbr.rel (%p171) target = $region24
        $region23: #{tpu_custom_call.1} parent=11 // pred_region
          _
        $region24: #{tpu_custom_call.1} parent=11 // pred_fallthru
          _
      $region12: #{tpu_custom_call.1} parent=5 // pred_fallthru
        _
      %p174 = scmp.lt.s32.totalorder %s17, 2
      // Predicated region
      $region25: #{tpu_custom_call.1} parent=5 // pred_check
        %p175 = pneg %p174
      $region26: #{tpu_custom_call.1} parent=5 // pred_check_branch
        %177 = sbr.rel (%p175) target = $region28
      $region27: #{tpu_custom_call.1} parent=5 // pred_region
        // Predicated region
        $region29: #{tpu_custom_call.1} parent=27 // pred_check
          %p178 = pneg %p37
        $region30: #{tpu_custom_call.1} parent=27 // pred_check_branch
          %180 = sbr.rel (%p178) target = $region32
        $region31: #{tpu_custom_call.1} parent=27 // pred_region
          %s181 = sand.u32 %s27, 1
          %s182 = scalar_lea.sflag [#allocation5], %s181
          %s183 = sand.u32 %s27, 1
          %s184 = smul.addr %s183, 8
          %s185 = scalar_lea.vmem [#allocation4], %s184
          %s187 = ssub.s32 128, 128
          %188 = vsyncadd %s182, %s187
          %s189 = smul.addr %s17, 2
          %s190 = smul.addr %s189, 64
          %s191 = scalar_lea.hbm %s0, %s190
          %s193 = sshll.u32 %s185, 4
          %s194 = int_to_ptr.vmem [resolvable:$true] %s193
          %196 = dma.hbm_to_vmem [thread:$0]  %s191, 128, %s194, %s182
        $region32: #{tpu_custom_call.1} parent=27 // pred_fallthru
          _
      $region28: #{tpu_custom_call.1} parent=5 // pred_fallthru
        _
      %p197 = scmp.le.s32.totalorder 1, %s17
      %p198 = scmp.lt.s32.totalorder %s17, 3
      %p199 = pnand %p197, %p198
      %p200 = pneg %p199
      // Predicated region
      $region33: #{tpu_custom_call.1} parent=5 // pred_check
        _
      $region34: #{tpu_custom_call.1} parent=5 // pred_check_branch
        %202 = sbr.rel (%p199) target = $region36
      $region35: #{tpu_custom_call.1} parent=5 // pred_region
        %s203 = ssub.s32 %s17, 1
        %s204 = sand.u32 %s30, 1
        %s205 = scalar_lea.sflag [#allocation5], %s204
        %s206 = sand.u32 %s30, 1
        %s207 = smul.addr %s206, 8
        %s208 = scalar_lea.vmem [#allocation4], %s207
        // Predicated region
        $region37: #{tpu_custom_call.1} parent=35 // pred_check
          %p209 = pneg %p43
        $region38: #{tpu_custom_call.1} parent=35 // pred_check_branch
          %211 = sbr.rel (%p209) target = $region40
        $region39: #{tpu_custom_call.1} parent=35 // pred_region
          %212 = dma.done %s205, 128
        $region40: #{tpu_custom_call.1} parent=35 // pred_fallthru
          _
        // Predicated region
        $region41: #{tpu_custom_call.1} parent=35 // pred_check
          %p213 = pneg %p64
        $region42: #{tpu_custom_call.1} parent=35 // pred_check_branch
          %215 = sbr.rel (%p213) target = $region44
        $region43: #{tpu_custom_call.1} parent=35 // pred_region
          %216 = dma.done [#allocation8], 128
        $region44: #{tpu_custom_call.1} parent=35 // pred_fallthru
          _
        // Predicated region
        $region45: #{tpu_custom_call.1} parent=35 // pred_check
          %p217 = pneg %p85
        $region46: #{tpu_custom_call.1} parent=35 // pred_check_branch
          %219 = sbr.rel (%p217) target = $region48
        $region47: #{tpu_custom_call.1} parent=35 // pred_region
          %220 = dma.done [#allocation8], 256
        $region48: #{tpu_custom_call.1} parent=35 // pred_fallthru
          _
        %s221 = sand.u32 %s30, 1
        %s222 = scalar_lea.sflag [#allocation5], %s221
        %s223 = sand.u32 %s30, 1
        %s224 = smul.addr %s223, 8
        %s225 = scalar_lea.vmem [#allocation4], %s224
        %p226 = pneg %p43
        %p227 = pneg %p40
        %p228 = pneg %p64
        %p229 = pneg %p61
        %p230 = pneg %p85
        %p231 = pneg %p82
        %p232 = pneg %p106
        %p233 = pneg %p103
        %p234 = pneg %p132
        %p235 = pneg %p129
        %s236 = sand.u32 %s119, 1
        %s237 = scalar_lea.sflag [#allocation6], %s236
        %s238 = sand.u32 %s119, 1
        %s239 = smul.addr %s238, 32
        %s240 = scalar_lea.vmem [#allocation10], %s239
        %vm241 = vcmask 139264
        %242 = vst.msk [vmem:[#allocation2] sm:$0x1] %vm241, 0.0
        %243 = vst.msk [vmem:[#allocation2 + $0x18] sm:$0x1] %vm241, 0.0
        %244 = vst.msk [vmem:[#allocation2 + $0x30] sm:$0x1] %vm241, 0.0
        %245 = vst.msk [vmem:[#allocation2 + $0x48] sm:$0x1] %vm241, 0.0
        %246 = vst.msk [vmem:[#allocation2 + $0x11] sm:$0x1] %vm241, 0.0
        %247 = vst.msk [vmem:[#allocation2 + $0x29] sm:$0x1] %vm241, 0.0
        %248 = vst.msk [vmem:[#allocation2 + $0x41] sm:$0x1] %vm241, 0.0
        %249 = vst.msk [vmem:[#allocation2 + $0x59] sm:$0x1] %vm241, 0.0
        %vm250 = vcmask 7168
        %251 = vst.msk [vmem:[#allocation2] sm:$0xff] %vm250, 0.0
        %252 = vst.msk [vmem:[#allocation2 + $0x8] sm:$0xff] %vm250, 0.0
        %vm253 = vcmask 1024
        %254 = vst.msk [vmem:[#allocation2 + $0x10] sm:$0x3] %vm253, 0.0
        %255 = vst.msk [vmem:[#allocation2 + $0x18] sm:$0xff] %vm250, 0.0
        %256 = vst.msk [vmem:[#allocation2 + $0x20] sm:$0xff] %vm250, 0.0
        %257 = vst.msk [vmem:[#allocation2 + $0x28] sm:$0x3] %vm253, 0.0
        %258 = vst.msk [vmem:[#allocation2 + $0x30] sm:$0xff] %vm250, 0.0
        %259 = vst.msk [vmem:[#allocation2 + $0x38] sm:$0xff] %vm250, 0.0
        %260 = vst.msk [vmem:[#allocation2 + $0x40] sm:$0x3] %vm253, 0.0
        %261 = vst.msk [vmem:[#allocation2 + $0x48] sm:$0xff] %vm250, 0.0
        %262 = vst.msk [vmem:[#allocation2 + $0x50] sm:$0xff] %vm250, 0.0
        %263 = vst.msk [vmem:[#allocation2 + $0x58] sm:$0x3] %vm253, 0.0
        %vm264 = vcmask 146568
        %265 = vst.msk [vmem:[#allocation2] sm:$0xff] %vm264, 0.0
        %266 = vst.msk [vmem:[#allocation2 + $0x8] sm:$0xff] %vm264, 0.0
        %vm267 = vcmask 140424
        %268 = vst.msk [vmem:[#allocation2 + $0x10] sm:$0x3] %vm267, 0.0
        %269 = vst.msk [vmem:[#allocation2 + $0x18] sm:$0xff] %vm264, 0.0
        %270 = vst.msk [vmem:[#allocation2 + $0x20] sm:$0xff] %vm264, 0.0
        %271 = vst.msk [vmem:[#allocation2 + $0x28] sm:$0x3] %vm267, 0.0
        %272 = vst.msk [vmem:[#allocation2 + $0x30] sm:$0xff] %vm264, 0.0
        %273 = vst.msk [vmem:[#allocation2 + $0x38] sm:$0xff] %vm264, 0.0
        %274 = vst.msk [vmem:[#allocation2 + $0x40] sm:$0x3] %vm267, 0.0
        %275 = vst.msk [vmem:[#allocation2 + $0x48] sm:$0xff] %vm264, 0.0
        %276 = vst.msk [vmem:[#allocation2 + $0x50] sm:$0xff] %vm264, 0.0
        %277 = vst.msk [vmem:[#allocation2 + $0x58] sm:$0x3] %vm267, 0.0
        %278 = vst.msk [vmem:[#allocation3] sm:$0x1] %vm241, 0.0
        %279 = vst.msk [vmem:[#allocation3 + $0x18] sm:$0x1] %vm241, 0.0
        %280 = vst.msk [vmem:[#allocation3 + $0x30] sm:$0x1] %vm241, 0.0
        %281 = vst.msk [vmem:[#allocation3 + $0x48] sm:$0x1] %vm241, 0.0
        %282 = vst.msk [vmem:[#allocation3 + $0x60] sm:$0x1] %vm241, 0.0
        %283 = vst.msk [vmem:[#allocation3 + $0x78] sm:$0x1] %vm241, 0.0
        %284 = vst.msk [vmem:[#allocation3 + $0x90] sm:$0x1] %vm241, 0.0
        %285 = vst.msk [vmem:[#allocation3 + $0xa8] sm:$0x1] %vm241, 0.0
        %286 = vst.msk [vmem:[#allocation3 + $0x11] sm:$0x1] %vm241, 0.0
        %287 = vst.msk [vmem:[#allocation3 + $0x29] sm:$0x1] %vm241, 0.0
        %288 = vst.msk [vmem:[#allocation3 + $0x41] sm:$0x1] %vm241, 0.0
        %289 = vst.msk [vmem:[#allocation3 + $0x59] sm:$0x1] %vm241, 0.0
        %290 = vst.msk [vmem:[#allocation3 + $0x71] sm:$0x1] %vm241, 0.0
        %291 = vst.msk [vmem:[#allocation3 + $0x89] sm:$0x1] %vm241, 0.0
        %292 = vst.msk [vmem:[#allocation3 + $0xa1] sm:$0x1] %vm241, 0.0
        %293 = vst.msk [vmem:[#allocation3 + $0xb9] sm:$0x1] %vm241, 0.0
        %294 = vst.msk [vmem:[#allocation3] sm:$0xff] %vm250, 0.0
        %295 = vst.msk [vmem:[#allocation3 + $0x8] sm:$0xff] %vm250, 0.0
        %296 = vst.msk [vmem:[#allocation3 + $0x10] sm:$0x3] %vm253, 0.0
        %297 = vst.msk [vmem:[#allocation3 + $0x18] sm:$0xff] %vm250, 0.0
        %298 = vst.msk [vmem:[#allocation3 + $0x20] sm:$0xff] %vm250, 0.0
        %299 = vst.msk [vmem:[#allocation3 + $0x28] sm:$0x3] %vm253, 0.0
        %300 = vst.msk [vmem:[#allocation3 + $0x30] sm:$0xff] %vm250, 0.0
        %301 = vst.msk [vmem:[#allocation3 + $0x38] sm:$0xff] %vm250, 0.0
        %302 = vst.msk [vmem:[#allocation3 + $0x40] sm:$0x3] %vm253, 0.0
        %303 = vst.msk [vmem:[#allocation3 + $0x48] sm:$0xff] %vm250, 0.0
        %304 = vst.msk [vmem:[#allocation3 + $0x50] sm:$0xff] %vm250, 0.0
        %305 = vst.msk [vmem:[#allocation3 + $0x58] sm:$0x3] %vm253, 0.0
        %306 = vst.msk [vmem:[#allocation3 + $0x60] sm:$0xff] %vm250, 0.0
        %307 = vst.msk [vmem:[#allocation3 + $0x68] sm:$0xff] %vm250, 0.0
        %308 = vst.msk [vmem:[#allocation3 + $0x70] sm:$0x3] %vm253, 0.0
        %309 = vst.msk [vmem:[#allocation3 + $0x78] sm:$0xff] %vm250, 0.0
        %310 = vst.msk [vmem:[#allocation3 + $0x80] sm:$0xff] %vm250, 0.0
        %311 = vst.msk [vmem:[#allocation3 + $0x88] sm:$0x3] %vm253, 0.0
        %312 = vst.msk [vmem:[#allocation3 + $0x90] sm:$0xff] %vm250, 0.0
        %313 = vst.msk [vmem:[#allocation3 + $0x98] sm:$0xff] %vm250, 0.0
        %314 = vst.msk [vmem:[#allocation3 + $0xa0] sm:$0x3] %vm253, 0.0
        %315 = vst.msk [vmem:[#allocation3 + $0xa8] sm:$0xff] %vm250, 0.0
        %316 = vst.msk [vmem:[#allocation3 + $0xb0] sm:$0xff] %vm250, 0.0
        %317 = vst.msk [vmem:[#allocation3 + $0xb8] sm:$0x3] %vm253, 0.0
        %318 = vst.msk [vmem:[#allocation3] sm:$0xff] %vm264, 0.0
        %319 = vst.msk [vmem:[#allocation3 + $0x8] sm:$0xff] %vm264, 0.0
        %320 = vst.msk [vmem:[#allocation3 + $0x10] sm:$0x3] %vm267, 0.0
        %321 = vst.msk [vmem:[#allocation3 + $0x18] sm:$0xff] %vm264, 0.0
        %322 = vst.msk [vmem:[#allocation3 + $0x20] sm:$0xff] %vm264, 0.0
        %323 = vst.msk [vmem:[#allocation3 + $0x28] sm:$0x3] %vm267, 0.0
        %324 = vst.msk [vmem:[#allocation3 + $0x30] sm:$0xff] %vm264, 0.0
        %325 = vst.msk [vmem:[#allocation3 + $0x38] sm:$0xff] %vm264, 0.0
        %326 = vst.msk [vmem:[#allocation3 + $0x40] sm:$0x3] %vm267, 0.0
        %327 = vst.msk [vmem:[#allocation3 + $0x48] sm:$0xff] %vm264, 0.0
        %328 = vst.msk [vmem:[#allocation3 + $0x50] sm:$0xff] %vm264, 0.0
        %329 = vst.msk [vmem:[#allocation3 + $0x58] sm:$0x3] %vm267, 0.0
        %330 = vst.msk [vmem:[#allocation3 + $0x60] sm:$0xff] %vm264, 0.0
        %331 = vst.msk [vmem:[#allocation3 + $0x68] sm:$0xff] %vm264, 0.0
        %332 = vst.msk [vmem:[#allocation3 + $0x70] sm:$0x3] %vm267, 0.0
        %333 = vst.msk [vmem:[#allocation3 + $0x78] sm:$0xff] %vm264, 0.0
        %334 = vst.msk [vmem:[#allocation3 + $0x80] sm:$0xff] %vm264, 0.0
        %335 = vst.msk [vmem:[#allocation3 + $0x88] sm:$0x3] %vm267, 0.0
        %336 = vst.msk [vmem:[#allocation3 + $0x90] sm:$0xff] %vm264, 0.0
        %337 = vst.msk [vmem:[#allocation3 + $0x98] sm:$0xff] %vm264, 0.0
        %338 = vst.msk [vmem:[#allocation3 + $0xa0] sm:$0x3] %vm267, 0.0
        %339 = vst.msk [vmem:[#allocation3 + $0xa8] sm:$0xff] %vm264, 0.0
        %340 = vst.msk [vmem:[#allocation3 + $0xb0] sm:$0xff] %vm264, 0.0
        %341 = vst.msk [vmem:[#allocation3 + $0xb8] sm:$0x3] %vm267, 0.0
        %v342 = vld [vmem:[%s208] sm:$0xff]
        %v344 = vrot.slane %v342, 4
        %346 = vrot.lane.b32.xlu0 %v342, 112
        %v347 = vpop.permute.xlu0 %346
        %v348 = vrot.slane %v347, 4
        %350 = vrot.lane.b32.xlu0 %v342, 96
        %v351 = vpop.permute.xlu0 %350
        %v352 = vrot.slane %v351, 4
        %354 = vrot.lane.b32.xlu0 %v342, 80
        %v355 = vpop.permute.xlu0 %354
        %v356 = vrot.slane %v355, 4
        %358 = vrot.lane.b32.xlu0 %v342, 64
        %v359 = vpop.permute.xlu0 %358
        %v360 = vrot.slane %v359, 4
        %362 = vrot.lane.b32.xlu0 %v342, 48
        %v363 = vpop.permute.xlu0 %362
        %v364 = vrot.slane %v363, 4
        %366 = vrot.lane.b32.xlu0 %v342, 32
        %v367 = vpop.permute.xlu0 %366
        %v368 = vrot.slane %v367, 4
        %370 = vrot.lane.b32.xlu0 %v342, 16
        %v371 = vpop.permute.xlu0 %370
        %v372 = vrot.slane %v371, 4
        %v381 = vcombine.low %v342, %v351
        %v383 = vunpack.c.l.s4 1983009808
        %v384 = vunpack.c.0.s8 %v383
        %v385 = vlaneseq
        %v386 = vshrl.u32 %v385, 7
        %v387 = vsub.s32 %v384, %v386
        %v388 = vrot.slane %v381, %v387
        %v389 = vcombine.low %v347, %v355
        %v391 = vunpack.c.l.s4 1983009808
        %v392 = vunpack.c.0.s8 %v391
        %v393 = vlaneseq
        %v394 = vshrl.u32 %v393, 7
        %v395 = vsub.s32 %v392, %v394
        %v396 = vrot.slane %v389, %v395
        %v397 = vcombine.low %v388, %v396
        %v398 = vcombine.high %v388, %v396
        %v400 = vunpack.c.l.s4 1934713408
        %v401 = vunpack.c.0.s8 %v400
        %v402 = vlaneseq
        %v403 = vshrl.u32 %v402, 7
        %v404 = vsub.s32 %v401, %v403
        %v405 = vrot.slane %v397, %v404
        %v407 = vunpack.c.l.s4 1934713408
        %v408 = vunpack.c.0.s8 %v407
        %v409 = vlaneseq
        %v410 = vshrl.u32 %v409, 7
        %v411 = vsub.s32 %v408, %v410
        %v412 = vrot.slane %v398, %v411
        %v413 = vcombine.high %v405, 0.0
        %v414 = vcombine.high %v412, 0.0
        %v415 = vcombine.low %v359, %v367
        %v417 = vunpack.c.l.s4 1983009808
        %v418 = vunpack.c.0.s8 %v417
        %v419 = vlaneseq
        %v420 = vshrl.u32 %v419, 7
        %v421 = vsub.s32 %v418, %v420
        %v422 = vrot.slane %v415, %v421
        %v423 = vcombine.low %v363, %v371
        %v425 = vunpack.c.l.s4 1983009808
        %v426 = vunpack.c.0.s8 %v425
        %v427 = vlaneseq
        %v428 = vshrl.u32 %v427, 7
        %v429 = vsub.s32 %v426, %v428
        %v430 = vrot.slane %v423, %v429
        %v431 = vcombine.low %v422, %v430
        %v432 = vcombine.high %v422, %v430
        %v434 = vunpack.c.l.s4 1934713408
        %v435 = vunpack.c.0.s8 %v434
        %v436 = vlaneseq
        %v437 = vshrl.u32 %v436, 7
        %v438 = vsub.s32 %v435, %v437
        %v439 = vrot.slane %v431, %v438
        %v441 = vunpack.c.l.s4 1934713408
        %v442 = vunpack.c.0.s8 %v441
        %v443 = vlaneseq
        %v444 = vshrl.u32 %v443, 7
        %v445 = vsub.s32 %v442, %v444
        %v446 = vrot.slane %v432, %v445
        %v447 = vcombine.high %v439, 0.0
        %v448 = vcombine.high %v446, 0.0
        %v449 = vcombine.low %v344, %v352
        %v451 = vunpack.c.l.s4 1983009808
        %v452 = vunpack.c.0.s8 %v451
        %v453 = vlaneseq
        %v454 = vshrl.u32 %v453, 7
        %v455 = vsub.s32 %v452, %v454
        %v456 = vrot.slane %v449, %v455
        %v457 = vcombine.low %v348, %v356
        %v459 = vunpack.c.l.s4 1983009808
        %v460 = vunpack.c.0.s8 %v459
        %v461 = vlaneseq
        %v462 = vshrl.u32 %v461, 7
        %v463 = vsub.s32 %v460, %v462
        %v464 = vrot.slane %v457, %v463
        %v465 = vcombine.low %v456, %v464
        %v466 = vcombine.high %v456, %v464
        %v468 = vunpack.c.l.s4 1934713408
        %v469 = vunpack.c.0.s8 %v468
        %v470 = vlaneseq
        %v471 = vshrl.u32 %v470, 7
        %v472 = vsub.s32 %v469, %v471
        %v473 = vrot.slane %v465, %v472
        %v475 = vunpack.c.l.s4 1934713408
        %v476 = vunpack.c.0.s8 %v475
        %v477 = vlaneseq
        %v478 = vshrl.u32 %v477, 7
        %v479 = vsub.s32 %v476, %v478
        %v480 = vrot.slane %v466, %v479
        %v481 = vcombine.high %v473, 0.0
        %v482 = vcombine.high %v480, 0.0
        %v483 = vcombine.low %v360, %v368
        %v485 = vunpack.c.l.s4 1983009808
        %v486 = vunpack.c.0.s8 %v485
        %v487 = vlaneseq
        %v488 = vshrl.u32 %v487, 7
        %v489 = vsub.s32 %v486, %v488
        %v490 = vrot.slane %v483, %v489
        %v491 = vcombine.low %v364, %v372
        %v493 = vunpack.c.l.s4 1983009808
        %v494 = vunpack.c.0.s8 %v493
        %v495 = vlaneseq
        %v496 = vshrl.u32 %v495, 7
        %v497 = vsub.s32 %v494, %v496
        %v498 = vrot.slane %v491, %v497
        %v499 = vcombine.low %v490, %v498
        %v500 = vcombine.high %v490, %v498
        %v502 = vunpack.c.l.s4 1934713408
        %v503 = vunpack.c.0.s8 %v502
        %v504 = vlaneseq
        %v505 = vshrl.u32 %v504, 7
        %v506 = vsub.s32 %v503, %v505
        %v507 = vrot.slane %v499, %v506
        %v509 = vunpack.c.l.s4 1934713408
        %v510 = vunpack.c.0.s8 %v509
        %v511 = vlaneseq
        %v512 = vshrl.u32 %v511, 7
        %v513 = vsub.s32 %v510, %v512
        %v514 = vrot.slane %v500, %v513
        %v515 = vcombine.high %v507, 0.0
        %v516 = vcombine.high %v514, 0.0
        %v533 = vcombine.low %v405, %v439
        %v534 = vcombine.low %v473, %v507
        %v535 = vcombine.low %v413, %v447
        %v536 = vcombine.low %v481, %v515
        %v537 = vcombine.low %v412, %v446
        %v538 = vcombine.low %v480, %v514
        %v539 = vcombine.low %v414, %v448
        %v540 = vcombine.low %v482, %v516
        %541 = vrot.lane.b32.xlu0 %v533, 1
        %v542 = vpop.permute.xlu0 %541
        %543 = vrot.lane.b32.xlu0 %v534, 1
        %v544 = vpop.permute.xlu0 %543
        %545 = vrot.lane.b32.xlu0 %v535, 1
        %v546 = vpop.permute.xlu0 %545
        %547 = vrot.lane.b32.xlu0 %v536, 1
        %v548 = vpop.permute.xlu0 %547
        %549 = vrot.lane.b32.xlu0 %v537, 1
        %v550 = vpop.permute.xlu0 %549
        %551 = vrot.lane.b32.xlu0 %v538, 1
        %v552 = vpop.permute.xlu0 %551
        %553 = vrot.lane.b32.xlu0 %v539, 1
        %v554 = vpop.permute.xlu0 %553
        %555 = vrot.lane.b32.xlu0 %v540, 1
        %v556 = vpop.permute.xlu0 %555
        %vm565 = vcmask 138248
        %566 = vst.msk [vmem:[#allocation2 + $0x1] sm:$0xff] %vm565, %v542
        %567 = vst.msk [vmem:[#allocation2 + $0x9] sm:$0xff] %vm565, %v544
        %568 = vst.msk [vmem:[#allocation2 + $0x19] sm:$0xff] %vm565, %v546
        %569 = vst.msk [vmem:[#allocation2 + $0x21] sm:$0xff] %vm565, %v548
        %570 = vst.msk [vmem:[#allocation2 + $0x31] sm:$0xff] %vm565, %v550
        %571 = vst.msk [vmem:[#allocation2 + $0x39] sm:$0xff] %vm565, %v552
        %572 = vst.msk [vmem:[#allocation2 + $0x49] sm:$0xff] %vm565, %v554
        %573 = vst.msk [vmem:[#allocation2 + $0x51] sm:$0xff] %vm565, %v556
        %v574 = vld [vmem:[#allocation2] sm:$0xff]
        %v575 = vld [vmem:[#allocation2 + $0x8] sm:$0xff]
        %v576 = vld [vmem:[#allocation2 + $0x18] sm:$0xff]
        %v577 = vld [vmem:[#allocation2 + $0x20] sm:$0xff]
        %v578 = vld [vmem:[#allocation2 + $0x30] sm:$0xff]
        %v579 = vld [vmem:[#allocation2 + $0x38] sm:$0xff]
        %v580 = vld [vmem:[#allocation2 + $0x48] sm:$0xff]
        %v581 = vld [vmem:[#allocation2 + $0x50] sm:$0xff]
        %v582 = vcombine.low %v574, %v578
        %v583 = vcombine.high %v574, %v578
        %v585 = vunpack.c.l.s4 1983009808
        %v586 = vunpack.c.0.s8 %v585
        %v587 = vlaneseq
        %v588 = vshrl.u32 %v587, 7
        %v589 = vsub.s32 %v586, %v588
        %v590 = vrot.slane %v582, %v589
        %v592 = vunpack.c.l.s4 1983009808
        %v593 = vunpack.c.0.s8 %v592
        %v594 = vlaneseq
        %v595 = vshrl.u32 %v594, 7
        %v596 = vsub.s32 %v593, %v595
        %v597 = vrot.slane %v583, %v596
        %v598 = vcombine.low %v576, %v580
        %v599 = vcombine.high %v576, %v580
        %v601 = vunpack.c.l.s4 1983009808
        %v602 = vunpack.c.0.s8 %v601
        %v603 = vlaneseq
        %v604 = vshrl.u32 %v603, 7
        %v605 = vsub.s32 %v602, %v604
        %v606 = vrot.slane %v598, %v605
        %v608 = vunpack.c.l.s4 1983009808
        %v609 = vunpack.c.0.s8 %v608
        %v610 = vlaneseq
        %v611 = vshrl.u32 %v610, 7
        %v612 = vsub.s32 %v609, %v611
        %v613 = vrot.slane %v599, %v612
        %v614 = vcombine.low %v590, %v606
        %v615 = vcombine.high %v590, %v606
        %v617 = vunpack.c.l.s4 1934713408
        %v618 = vunpack.c.0.s8 %v617
        %v619 = vlaneseq
        %v620 = vshrl.u32 %v619, 7
        %v621 = vsub.s32 %v618, %v620
        %v622 = vrot.slane %v614, %v621
        %v624 = vunpack.c.l.s4 1934713408
        %v625 = vunpack.c.0.s8 %v624
        %v626 = vlaneseq
        %v627 = vshrl.u32 %v626, 7
        %v628 = vsub.s32 %v625, %v627
        %v629 = vrot.slane %v615, %v628
        %v630 = vcombine.low %v597, %v613
        %v631 = vcombine.high %v597, %v613
        %v633 = vunpack.c.l.s4 1934713408
        %v634 = vunpack.c.0.s8 %v633
        %v635 = vlaneseq
        %v636 = vshrl.u32 %v635, 7
        %v637 = vsub.s32 %v634, %v636
        %v638 = vrot.slane %v630, %v637
        %v640 = vunpack.c.l.s4 1934713408
        %v641 = vunpack.c.0.s8 %v640
        %v642 = vlaneseq
        %v643 = vshrl.u32 %v642, 7
        %v644 = vsub.s32 %v641, %v643
        %v645 = vrot.slane %v631, %v644
        %v646 = vcombine.high %v622, 0.0
        %v647 = vcombine.high %v629, 0.0
        %v648 = vcombine.high %v638, 0.0
        %v649 = vcombine.high %v645, 0.0
        %v650 = vcombine.low %v575, %v579
        %v651 = vcombine.high %v575, %v579
        %v653 = vunpack.c.l.s4 1983009808
        %v654 = vunpack.c.0.s8 %v653
        %v655 = vlaneseq
        %v656 = vshrl.u32 %v655, 7
        %v657 = vsub.s32 %v654, %v656
        %v658 = vrot.slane %v650, %v657
        %v660 = vunpack.c.l.s4 1983009808
        %v661 = vunpack.c.0.s8 %v660
        %v662 = vlaneseq
        %v663 = vshrl.u32 %v662, 7
        %v664 = vsub.s32 %v661, %v663
        %v665 = vrot.slane %v651, %v664
        %v666 = vcombine.low %v577, %v581
        %v667 = vcombine.high %v577, %v581
        %v669 = vunpack.c.l.s4 1983009808
        %v670 = vunpack.c.0.s8 %v669
        %v671 = vlaneseq
        %v672 = vshrl.u32 %v671, 7
        %v673 = vsub.s32 %v670, %v672
        %v674 = vrot.slane %v666, %v673
        %v676 = vunpack.c.l.s4 1983009808
        %v677 = vunpack.c.0.s8 %v676
        %v678 = vlaneseq
        %v679 = vshrl.u32 %v678, 7
        %v680 = vsub.s32 %v677, %v679
        %v681 = vrot.slane %v667, %v680
        %v682 = vcombine.low %v658, %v674
        %v683 = vcombine.high %v658, %v674
        %v685 = vunpack.c.l.s4 1934713408
        %v686 = vunpack.c.0.s8 %v685
        %v687 = vlaneseq
        %v688 = vshrl.u32 %v687, 7
        %v689 = vsub.s32 %v686, %v688
        %v690 = vrot.slane %v682, %v689
        %v692 = vunpack.c.l.s4 1934713408
        %v693 = vunpack.c.0.s8 %v692
        %v694 = vlaneseq
        %v695 = vshrl.u32 %v694, 7
        %v696 = vsub.s32 %v693, %v695
        %v697 = vrot.slane %v683, %v696
        %v698 = vcombine.low %v665, %v681
        %v699 = vcombine.high %v665, %v681
        %v701 = vunpack.c.l.s4 1934713408
        %v702 = vunpack.c.0.s8 %v701
        %v703 = vlaneseq
        %v704 = vshrl.u32 %v703, 7
        %v705 = vsub.s32 %v702, %v704
        %v706 = vrot.slane %v698, %v705
        %v708 = vunpack.c.l.s4 1934713408
        %v709 = vunpack.c.0.s8 %v708
        %v710 = vlaneseq
        %v711 = vshrl.u32 %v710, 7
        %v712 = vsub.s32 %v709, %v711
        %v713 = vrot.slane %v699, %v712
        %v714 = vcombine.high %v690, 0.0
        %v715 = vcombine.high %v697, 0.0
        %v716 = vcombine.high %v706, 0.0
        %v717 = vcombine.high %v713, 0.0
        %719 = vrot.lane.b32.xlu0 %v646, 16
        %v720 = vpop.permute.xlu0 %719
        %723 = vrot.lane.b32.xlu0 %v629, 32
        %v724 = vpop.permute.xlu0 %723
        %727 = vrot.lane.b32.xlu0 %v647, 48
        %v728 = vpop.permute.xlu0 %727
        %731 = vrot.lane.b32.xlu0 %v638, 64
        %v732 = vpop.permute.xlu0 %731
        %735 = vrot.lane.b32.xlu0 %v648, 80
        %v736 = vpop.permute.xlu0 %735
        %739 = vrot.lane.b32.xlu0 %v645, 96
        %v740 = vpop.permute.xlu0 %739
        %743 = vrot.lane.b32.xlu0 %v649, 112
        %v744 = vpop.permute.xlu0 %743
        %747 = vrot.lane.b32.xlu0 %v714, 16
        %v748 = vpop.permute.xlu0 %747
        %751 = vrot.lane.b32.xlu0 %v697, 32
        %v752 = vpop.permute.xlu0 %751
        %755 = vrot.lane.b32.xlu0 %v715, 48
        %v756 = vpop.permute.xlu0 %755
        %759 = vrot.lane.b32.xlu0 %v706, 64
        %v760 = vpop.permute.xlu0 %759
        %763 = vrot.lane.b32.xlu0 %v716, 80
        %v764 = vpop.permute.xlu0 %763
        %767 = vrot.lane.b32.xlu0 %v713, 96
        %v768 = vpop.permute.xlu0 %767
        %771 = vrot.lane.b32.xlu0 %v717, 112
        %v772 = vpop.permute.xlu0 %771
        %vm774 = vcmask 130048
        %v775 = vsel %vm774, %v622, %v720
        %vm776 = vcmask 261120
        %v777 = vsel %vm776, %v775, %v724
        %vm778 = vcmask 392192
        %v779 = vsel %vm778, %v777, %v728
        %vm780 = vcmask 523264
        %v781 = vsel %vm780, %v779, %v732
        %vm782 = vcmask 654336
        %v783 = vsel %vm782, %v781, %v736
        %vm784 = vcmask 785408
        %v785 = vsel %vm784, %v783, %v740
        %vm786 = vcmask 916480
        %v787 = vsel %vm786, %v785, %v744
        %v788 = vsel %vm774, %v690, %v748
        %v789 = vsel %vm776, %v788, %v752
        %v790 = vsel %vm778, %v789, %v756
        %v791 = vsel %vm780, %v790, %v760
        %v792 = vsel %vm782, %v791, %v764
        %v793 = vsel %vm784, %v792, %v768
        %v794 = vsel %vm786, %v793, %v772
        %803 = vrot.lane.b32.xlu0 %v574, 127
        %v804 = vpop.permute.xlu0 %803
        %805 = vrot.lane.b32.xlu0 %v575, 127
        %v806 = vpop.permute.xlu0 %805
        %807 = vrot.lane.b32.xlu0 %v576, 127
        %v808 = vpop.permute.xlu0 %807
        %809 = vrot.lane.b32.xlu0 %v577, 127
        %v810 = vpop.permute.xlu0 %809
        %811 = vrot.lane.b32.xlu0 %v578, 127
        %v812 = vpop.permute.xlu0 %811
        %813 = vrot.lane.b32.xlu0 %v579, 127
        %v814 = vpop.permute.xlu0 %813
        %815 = vrot.lane.b32.xlu0 %v580, 127
        %v816 = vpop.permute.xlu0 %815
        %817 = vrot.lane.b32.xlu0 %v581, 127
        %v818 = vpop.permute.xlu0 %817
        %v827 = vcombine.low %v804, %v812
        %v828 = vcombine.high %v804, %v812
        %v830 = vunpack.c.l.s4 1983009808
        %v831 = vunpack.c.0.s8 %v830
        %v832 = vlaneseq
        %v833 = vshrl.u32 %v832, 7
        %v834 = vsub.s32 %v831, %v833
        %v835 = vrot.slane %v827, %v834
        %v837 = vunpack.c.l.s4 1983009808
        %v838 = vunpack.c.0.s8 %v837
        %v839 = vlaneseq
        %v840 = vshrl.u32 %v839, 7
        %v841 = vsub.s32 %v838, %v840
        %v842 = vrot.slane %v828, %v841
        %v843 = vcombine.low %v808, %v816
        %v844 = vcombine.high %v808, %v816
        %v846 = vunpack.c.l.s4 1983009808
        %v847 = vunpack.c.0.s8 %v846
        %v848 = vlaneseq
        %v849 = vshrl.u32 %v848, 7
        %v850 = vsub.s32 %v847, %v849
        %v851 = vrot.slane %v843, %v850
        %v853 = vunpack.c.l.s4 1983009808
        %v854 = vunpack.c.0.s8 %v853
        %v855 = vlaneseq
        %v856 = vshrl.u32 %v855, 7
        %v857 = vsub.s32 %v854, %v856
        %v858 = vrot.slane %v844, %v857
        %v859 = vcombine.low %v835, %v851
        %v860 = vcombine.high %v835, %v851
        %v862 = vunpack.c.l.s4 1934713408
        %v863 = vunpack.c.0.s8 %v862
        %v864 = vlaneseq
        %v865 = vshrl.u32 %v864, 7
        %v866 = vsub.s32 %v863, %v865
        %v867 = vrot.slane %v859, %v866
        %v869 = vunpack.c.l.s4 1934713408
        %v870 = vunpack.c.0.s8 %v869
        %v871 = vlaneseq
        %v872 = vshrl.u32 %v871, 7
        %v873 = vsub.s32 %v870, %v872
        %v874 = vrot.slane %v860, %v873
        %v875 = vcombine.low %v842, %v858
        %v876 = vcombine.high %v842, %v858
        %v878 = vunpack.c.l.s4 1934713408
        %v879 = vunpack.c.0.s8 %v878
        %v880 = vlaneseq
        %v881 = vshrl.u32 %v880, 7
        %v882 = vsub.s32 %v879, %v881
        %v883 = vrot.slane %v875, %v882
        %v885 = vunpack.c.l.s4 1934713408
        %v886 = vunpack.c.0.s8 %v885
        %v887 = vlaneseq
        %v888 = vshrl.u32 %v887, 7
        %v889 = vsub.s32 %v886, %v888
        %v890 = vrot.slane %v876, %v889
        %v891 = vcombine.high %v867, 0.0
        %v892 = vcombine.high %v874, 0.0
        %v893 = vcombine.high %v883, 0.0
        %v894 = vcombine.high %v890, 0.0
        %v895 = vcombine.low %v806, %v814
        %v896 = vcombine.high %v806, %v814
        %v898 = vunpack.c.l.s4 1983009808
        %v899 = vunpack.c.0.s8 %v898
        %v900 = vlaneseq
        %v901 = vshrl.u32 %v900, 7
        %v902 = vsub.s32 %v899, %v901
        %v903 = vrot.slane %v895, %v902
        %v905 = vunpack.c.l.s4 1983009808
        %v906 = vunpack.c.0.s8 %v905
        %v907 = vlaneseq
        %v908 = vshrl.u32 %v907, 7
        %v909 = vsub.s32 %v906, %v908
        %v910 = vrot.slane %v896, %v909
        %v911 = vcombine.low %v810, %v818
        %v912 = vcombine.high %v810, %v818
        %v914 = vunpack.c.l.s4 1983009808
        %v915 = vunpack.c.0.s8 %v914
        %v916 = vlaneseq
        %v917 = vshrl.u32 %v916, 7
        %v918 = vsub.s32 %v915, %v917
        %v919 = vrot.slane %v911, %v918
        %v921 = vunpack.c.l.s4 1983009808
        %v922 = vunpack.c.0.s8 %v921
        %v923 = vlaneseq
        %v924 = vshrl.u32 %v923, 7
        %v925 = vsub.s32 %v922, %v924
        %v926 = vrot.slane %v912, %v925
        %v927 = vcombine.low %v903, %v919
        %v928 = vcombine.high %v903, %v919
        %v930 = vunpack.c.l.s4 1934713408
        %v931 = vunpack.c.0.s8 %v930
        %v932 = vlaneseq
        %v933 = vshrl.u32 %v932, 7
        %v934 = vsub.s32 %v931, %v933
        %v935 = vrot.slane %v927, %v934
        %v937 = vunpack.c.l.s4 1934713408
        %v938 = vunpack.c.0.s8 %v937
        %v939 = vlaneseq
        %v940 = vshrl.u32 %v939, 7
        %v941 = vsub.s32 %v938, %v940
        %v942 = vrot.slane %v928, %v941
        %v943 = vcombine.low %v910, %v926
        %v944 = vcombine.high %v910, %v926
        %v946 = vunpack.c.l.s4 1934713408
        %v947 = vunpack.c.0.s8 %v946
        %v948 = vlaneseq
        %v949 = vshrl.u32 %v948, 7
        %v950 = vsub.s32 %v947, %v949
        %v951 = vrot.slane %v943, %v950
        %v953 = vunpack.c.l.s4 1934713408
        %v954 = vunpack.c.0.s8 %v953
        %v955 = vlaneseq
        %v956 = vshrl.u32 %v955, 7
        %v957 = vsub.s32 %v954, %v956
        %v958 = vrot.slane %v944, %v957
        %v959 = vcombine.high %v935, 0.0
        %v960 = vcombine.high %v942, 0.0
        %v961 = vcombine.high %v951, 0.0
        %v962 = vcombine.high %v958, 0.0
        %964 = vrot.lane.b32.xlu0 %v891, 16
        %v965 = vpop.permute.xlu0 %964
        %968 = vrot.lane.b32.xlu0 %v874, 32
        %v969 = vpop.permute.xlu0 %968
        %972 = vrot.lane.b32.xlu0 %v892, 48
        %v973 = vpop.permute.xlu0 %972
        %976 = vrot.lane.b32.xlu0 %v883, 64
        %v977 = vpop.permute.xlu0 %976
        %980 = vrot.lane.b32.xlu0 %v893, 80
        %v981 = vpop.permute.xlu0 %980
        %984 = vrot.lane.b32.xlu0 %v890, 96
        %v985 = vpop.permute.xlu0 %984
        %988 = vrot.lane.b32.xlu0 %v894, 112
        %v989 = vpop.permute.xlu0 %988
        %992 = vrot.lane.b32.xlu0 %v959, 16
        %v993 = vpop.permute.xlu0 %992
        %996 = vrot.lane.b32.xlu0 %v942, 32
        %v997 = vpop.permute.xlu0 %996
        %1000 = vrot.lane.b32.xlu0 %v960, 48
        %v1001 = vpop.permute.xlu0 %1000
        %1004 = vrot.lane.b32.xlu0 %v951, 64
        %v1005 = vpop.permute.xlu0 %1004
        %1008 = vrot.lane.b32.xlu0 %v961, 80
        %v1009 = vpop.permute.xlu0 %1008
        %1012 = vrot.lane.b32.xlu0 %v958, 96
        %v1013 = vpop.permute.xlu0 %1012
        %1016 = vrot.lane.b32.xlu0 %v962, 112
        %v1017 = vpop.permute.xlu0 %1016
        %v1019 = vsel %vm774, %v867, %v965
        %v1020 = vsel %vm776, %v1019, %v969
        %v1021 = vsel %vm778, %v1020, %v973
        %v1022 = vsel %vm780, %v1021, %v977
        %v1023 = vsel %vm782, %v1022, %v981
        %v1024 = vsel %vm784, %v1023, %v985
        %v1025 = vsel %vm786, %v1024, %v989
        %v1026 = vsel %vm774, %v935, %v993
        %v1027 = vsel %vm776, %v1026, %v997
        %v1028 = vsel %vm778, %v1027, %v1001
        %v1029 = vsel %vm780, %v1028, %v1005
        %v1030 = vsel %vm782, %v1029, %v1009
        %v1031 = vsel %vm784, %v1030, %v1013
        %v1032 = vsel %vm786, %v1031, %v1017
        %1033 = vrot.lane.b32.xlu0 %v574, 126
        %v1034 = vpop.permute.xlu0 %1033
        %1035 = vrot.lane.b32.xlu0 %v575, 126
        %v1036 = vpop.permute.xlu0 %1035
        %1037 = vrot.lane.b32.xlu0 %v576, 126
        %v1038 = vpop.permute.xlu0 %1037
        %1039 = vrot.lane.b32.xlu0 %v577, 126
        %v1040 = vpop.permute.xlu0 %1039
        %1041 = vrot.lane.b32.xlu0 %v578, 126
        %v1042 = vpop.permute.xlu0 %1041
        %1043 = vrot.lane.b32.xlu0 %v579, 126
        %v1044 = vpop.permute.xlu0 %1043
        %1045 = vrot.lane.b32.xlu0 %v580, 126
        %v1046 = vpop.permute.xlu0 %1045
        %1047 = vrot.lane.b32.xlu0 %v581, 126
        %v1048 = vpop.permute.xlu0 %1047
        %v1057 = vcombine.low %v1034, %v1042
        %v1058 = vcombine.high %v1034, %v1042
        %v1060 = vunpack.c.l.s4 1983009808
        %v1061 = vunpack.c.0.s8 %v1060
        %v1062 = vlaneseq
        %v1063 = vshrl.u32 %v1062, 7
        %v1064 = vsub.s32 %v1061, %v1063
        %v1065 = vrot.slane %v1057, %v1064
        %v1067 = vunpack.c.l.s4 1983009808
        %v1068 = vunpack.c.0.s8 %v1067
        %v1069 = vlaneseq
        %v1070 = vshrl.u32 %v1069, 7
        %v1071 = vsub.s32 %v1068, %v1070
        %v1072 = vrot.slane %v1058, %v1071
        %v1073 = vcombine.low %v1038, %v1046
        %v1074 = vcombine.high %v1038, %v1046
        %v1076 = vunpack.c.l.s4 1983009808
        %v1077 = vunpack.c.0.s8 %v1076
        %v1078 = vlaneseq
        %v1079 = vshrl.u32 %v1078, 7
        %v1080 = vsub.s32 %v1077, %v1079
        %v1081 = vrot.slane %v1073, %v1080
        %v1083 = vunpack.c.l.s4 1983009808
        %v1084 = vunpack.c.0.s8 %v1083
        %v1085 = vlaneseq
        %v1086 = vshrl.u32 %v1085, 7
        %v1087 = vsub.s32 %v1084, %v1086
        %v1088 = vrot.slane %v1074, %v1087
        %v1089 = vcombine.low %v1065, %v1081
        %v1090 = vcombine.high %v1065, %v1081
        %v1092 = vunpack.c.l.s4 1934713408
        %v1093 = vunpack.c.0.s8 %v1092
        %v1094 = vlaneseq
        %v1095 = vshrl.u32 %v1094, 7
        %v1096 = vsub.s32 %v1093, %v1095
        %v1097 = vrot.slane %v1089, %v1096
        %v1099 = vunpack.c.l.s4 1934713408
        %v1100 = vunpack.c.0.s8 %v1099
        %v1101 = vlaneseq
        %v1102 = vshrl.u32 %v1101, 7
        %v1103 = vsub.s32 %v1100, %v1102
        %v1104 = vrot.slane %v1090, %v1103
        %v1105 = vcombine.low %v1072, %v1088
        %v1106 = vcombine.high %v1072, %v1088
        %v1108 = vunpack.c.l.s4 1934713408
        %v1109 = vunpack.c.0.s8 %v1108
        %v1110 = vlaneseq
        %v1111 = vshrl.u32 %v1110, 7
        %v1112 = vsub.s32 %v1109, %v1111
        %v1113 = vrot.slane %v1105, %v1112
        %v1115 = vunpack.c.l.s4 1934713408
        %v1116 = vunpack.c.0.s8 %v1115
        %v1117 = vlaneseq
        %v1118 = vshrl.u32 %v1117, 7
        %v1119 = vsub.s32 %v1116, %v1118
        %v1120 = vrot.slane %v1106, %v1119
        %v1121 = vcombine.high %v1097, 0.0
        %v1122 = vcombine.high %v1104, 0.0
        %v1123 = vcombine.high %v1113, 0.0
        %v1124 = vcombine.high %v1120, 0.0
        %v1125 = vcombine.low %v1036, %v1044
        %v1126 = vcombine.high %v1036, %v1044
        %v1128 = vunpack.c.l.s4 1983009808
        %v1129 = vunpack.c.0.s8 %v1128
        %v1130 = vlaneseq
        %v1131 = vshrl.u32 %v1130, 7
        %v1132 = vsub.s32 %v1129, %v1131
        %v1133 = vrot.slane %v1125, %v1132
        %v1135 = vunpack.c.l.s4 1983009808
        %v1136 = vunpack.c.0.s8 %v1135
        %v1137 = vlaneseq
        %v1138 = vshrl.u32 %v1137, 7
        %v1139 = vsub.s32 %v1136, %v1138
        %v1140 = vrot.slane %v1126, %v1139
        %v1141 = vcombine.low %v1040, %v1048
        %v1142 = vcombine.high %v1040, %v1048
        %v1144 = vunpack.c.l.s4 1983009808
        %v1145 = vunpack.c.0.s8 %v1144
        %v1146 = vlaneseq
        %v1147 = vshrl.u32 %v1146, 7
        %v1148 = vsub.s32 %v1145, %v1147
        %v1149 = vrot.slane %v1141, %v1148
        %v1151 = vunpack.c.l.s4 1983009808
        %v1152 = vunpack.c.0.s8 %v1151
        %v1153 = vlaneseq
        %v1154 = vshrl.u32 %v1153, 7
        %v1155 = vsub.s32 %v1152, %v1154
        %v1156 = vrot.slane %v1142, %v1155
        %v1157 = vcombine.low %v1133, %v1149
        %v1158 = vcombine.high %v1133, %v1149
        %v1160 = vunpack.c.l.s4 1934713408
        %v1161 = vunpack.c.0.s8 %v1160
        %v1162 = vlaneseq
        %v1163 = vshrl.u32 %v1162, 7
        %v1164 = vsub.s32 %v1161, %v1163
        %v1165 = vrot.slane %v1157, %v1164
        %v1167 = vunpack.c.l.s4 1934713408
        %v1168 = vunpack.c.0.s8 %v1167
        %v1169 = vlaneseq
        %v1170 = vshrl.u32 %v1169, 7
        %v1171 = vsub.s32 %v1168, %v1170
        %v1172 = vrot.slane %v1158, %v1171
        %v1173 = vcombine.low %v1140, %v1156
        %v1174 = vcombine.high %v1140, %v1156
        %v1176 = vunpack.c.l.s4 1934713408
        %v1177 = vunpack.c.0.s8 %v1176
        %v1178 = vlaneseq
        %v1179 = vshrl.u32 %v1178, 7
        %v1180 = vsub.s32 %v1177, %v1179
        %v1181 = vrot.slane %v1173, %v1180
        %v1183 = vunpack.c.l.s4 1934713408
        %v1184 = vunpack.c.0.s8 %v1183
        %v1185 = vlaneseq
        %v1186 = vshrl.u32 %v1185, 7
        %v1187 = vsub.s32 %v1184, %v1186
        %v1188 = vrot.slane %v1174, %v1187
        %v1189 = vcombine.high %v1165, 0.0
        %v1190 = vcombine.high %v1172, 0.0
        %v1191 = vcombine.high %v1181, 0.0
        %v1192 = vcombine.high %v1188, 0.0
        %1194 = vrot.lane.b32.xlu0 %v1121, 16
        %v1195 = vpop.permute.xlu0 %1194
        %1198 = vrot.lane.b32.xlu0 %v1104, 32
        %v1199 = vpop.permute.xlu0 %1198
        %1202 = vrot.lane.b32.xlu0 %v1122, 48
        %v1203 = vpop.permute.xlu0 %1202
        %1206 = vrot.lane.b32.xlu0 %v1113, 64
        %v1207 = vpop.permute.xlu0 %1206
        %1210 = vrot.lane.b32.xlu0 %v1123, 80
        %v1211 = vpop.permute.xlu0 %1210
        %1214 = vrot.lane.b32.xlu0 %v1120, 96
        %v1215 = vpop.permute.xlu0 %1214
        %1218 = vrot.lane.b32.xlu0 %v1124, 112
        %v1219 = vpop.permute.xlu0 %1218
        %1222 = vrot.lane.b32.xlu0 %v1189, 16
        %v1223 = vpop.permute.xlu0 %1222
        %1226 = vrot.lane.b32.xlu0 %v1172, 32
        %v1227 = vpop.permute.xlu0 %1226
        %1230 = vrot.lane.b32.xlu0 %v1190, 48
        %v1231 = vpop.permute.xlu0 %1230
        %1234 = vrot.lane.b32.xlu0 %v1181, 64
        %v1235 = vpop.permute.xlu0 %1234
        %1238 = vrot.lane.b32.xlu0 %v1191, 80
        %v1239 = vpop.permute.xlu0 %1238
        %1242 = vrot.lane.b32.xlu0 %v1188, 96
        %v1243 = vpop.permute.xlu0 %1242
        %1246 = vrot.lane.b32.xlu0 %v1192, 112
        %v1247 = vpop.permute.xlu0 %1246
        %v1249 = vsel %vm774, %v1097, %v1195
        %v1250 = vsel %vm776, %v1249, %v1199
        %v1251 = vsel %vm778, %v1250, %v1203
        %v1252 = vsel %vm780, %v1251, %v1207
        %v1253 = vsel %vm782, %v1252, %v1211
        %v1254 = vsel %vm784, %v1253, %v1215
        %v1255 = vsel %vm786, %v1254, %v1219
        %v1256 = vsel %vm774, %v1165, %v1223
        %v1257 = vsel %vm776, %v1256, %v1227
        %v1258 = vsel %vm778, %v1257, %v1231
        %v1259 = vsel %vm780, %v1258, %v1235
        %v1260 = vsel %vm782, %v1259, %v1239
        %v1261 = vsel %vm784, %v1260, %v1243
        %v1262 = vsel %vm786, %v1261, %v1247
        %v1263 = vld [vmem:[#allocation2 + $0x1] sm:$0xff]
        %v1264 = vld [vmem:[#allocation2 + $0x9] sm:$0xff]
        %v1265 = vld [vmem:[#allocation2 + $0x19] sm:$0xff]
        %v1266 = vld [vmem:[#allocation2 + $0x21] sm:$0xff]
        %v1267 = vld [vmem:[#allocation2 + $0x31] sm:$0xff]
        %v1268 = vld [vmem:[#allocation2 + $0x39] sm:$0xff]
        %v1269 = vld [vmem:[#allocation2 + $0x49] sm:$0xff]
        %v1270 = vld [vmem:[#allocation2 + $0x51] sm:$0xff]
        %v1271 = vcombine.low %v1263, %v1267
        %v1272 = vcombine.high %v1263, %v1267
        %v1274 = vunpack.c.l.s4 1983009808
        %v1275 = vunpack.c.0.s8 %v1274
        %v1276 = vlaneseq
        %v1277 = vshrl.u32 %v1276, 7
        %v1278 = vsub.s32 %v1275, %v1277
        %v1279 = vrot.slane %v1271, %v1278
        %v1281 = vunpack.c.l.s4 1983009808
        %v1282 = vunpack.c.0.s8 %v1281
        %v1283 = vlaneseq
        %v1284 = vshrl.u32 %v1283, 7
        %v1285 = vsub.s32 %v1282, %v1284
        %v1286 = vrot.slane %v1272, %v1285
        %v1287 = vcombine.low %v1265, %v1269
        %v1288 = vcombine.high %v1265, %v1269
        %v1290 = vunpack.c.l.s4 1983009808
        %v1291 = vunpack.c.0.s8 %v1290
        %v1292 = vlaneseq
        %v1293 = vshrl.u32 %v1292, 7
        %v1294 = vsub.s32 %v1291, %v1293
        %v1295 = vrot.slane %v1287, %v1294
        %v1297 = vunpack.c.l.s4 1983009808
        %v1298 = vunpack.c.0.s8 %v1297
        %v1299 = vlaneseq
        %v1300 = vshrl.u32 %v1299, 7
        %v1301 = vsub.s32 %v1298, %v1300
        %v1302 = vrot.slane %v1288, %v1301
        %v1303 = vcombine.low %v1279, %v1295
        %v1304 = vcombine.high %v1279, %v1295
        %v1306 = vunpack.c.l.s4 1934713408
        %v1307 = vunpack.c.0.s8 %v1306
        %v1308 = vlaneseq
        %v1309 = vshrl.u32 %v1308, 7
        %v1310 = vsub.s32 %v1307, %v1309
        %v1311 = vrot.slane %v1303, %v1310
        %v1313 = vunpack.c.l.s4 1934713408
        %v1314 = vunpack.c.0.s8 %v1313
        %v1315 = vlaneseq
        %v1316 = vshrl.u32 %v1315, 7
        %v1317 = vsub.s32 %v1314, %v1316
        %v1318 = vrot.slane %v1304, %v1317
        %v1319 = vcombine.low %v1286, %v1302
        %v1320 = vcombine.high %v1286, %v1302
        %v1322 = vunpack.c.l.s4 1934713408
        %v1323 = vunpack.c.0.s8 %v1322
        %v1324 = vlaneseq
        %v1325 = vshrl.u32 %v1324, 7
        %v1326 = vsub.s32 %v1323, %v1325
        %v1327 = vrot.slane %v1319, %v1326
        %v1329 = vunpack.c.l.s4 1934713408
        %v1330 = vunpack.c.0.s8 %v1329
        %v1331 = vlaneseq
        %v1332 = vshrl.u32 %v1331, 7
        %v1333 = vsub.s32 %v1330, %v1332
        %v1334 = vrot.slane %v1320, %v1333
        %v1335 = vcombine.high %v1311, 0.0
        %v1336 = vcombine.high %v1318, 0.0
        %v1337 = vcombine.high %v1327, 0.0
        %v1338 = vcombine.high %v1334, 0.0
        %v1339 = vcombine.low %v1264, %v1268
        %v1340 = vcombine.high %v1264, %v1268
        %v1342 = vunpack.c.l.s4 1983009808
        %v1343 = vunpack.c.0.s8 %v1342
        %v1344 = vlaneseq
        %v1345 = vshrl.u32 %v1344, 7
        %v1346 = vsub.s32 %v1343, %v1345
        %v1347 = vrot.slane %v1339, %v1346
        %v1349 = vunpack.c.l.s4 1983009808
        %v1350 = vunpack.c.0.s8 %v1349
        %v1351 = vlaneseq
        %v1352 = vshrl.u32 %v1351, 7
        %v1353 = vsub.s32 %v1350, %v1352
        %v1354 = vrot.slane %v1340, %v1353
        %v1355 = vcombine.low %v1266, %v1270
        %v1356 = vcombine.high %v1266, %v1270
        %v1358 = vunpack.c.l.s4 1983009808
        %v1359 = vunpack.c.0.s8 %v1358
        %v1360 = vlaneseq
        %v1361 = vshrl.u32 %v1360, 7
        %v1362 = vsub.s32 %v1359, %v1361
        %v1363 = vrot.slane %v1355, %v1362
        %v1365 = vunpack.c.l.s4 1983009808
        %v1366 = vunpack.c.0.s8 %v1365
        %v1367 = vlaneseq
        %v1368 = vshrl.u32 %v1367, 7
        %v1369 = vsub.s32 %v1366, %v1368
        %v1370 = vrot.slane %v1356, %v1369
        %v1371 = vcombine.low %v1347, %v1363
        %v1372 = vcombine.high %v1347, %v1363
        %v1374 = vunpack.c.l.s4 1934713408
        %v1375 = vunpack.c.0.s8 %v1374
        %v1376 = vlaneseq
        %v1377 = vshrl.u32 %v1376, 7
        %v1378 = vsub.s32 %v1375, %v1377
        %v1379 = vrot.slane %v1371, %v1378
        %v1381 = vunpack.c.l.s4 1934713408
        %v1382 = vunpack.c.0.s8 %v1381
        %v1383 = vlaneseq
        %v1384 = vshrl.u32 %v1383, 7
        %v1385 = vsub.s32 %v1382, %v1384
        %v1386 = vrot.slane %v1372, %v1385
        %v1387 = vcombine.low %v1354, %v1370
        %v1388 = vcombine.high %v1354, %v1370
        %v1390 = vunpack.c.l.s4 1934713408
        %v1391 = vunpack.c.0.s8 %v1390
        %v1392 = vlaneseq
        %v1393 = vshrl.u32 %v1392, 7
        %v1394 = vsub.s32 %v1391, %v1393
        %v1395 = vrot.slane %v1387, %v1394
        %v1397 = vunpack.c.l.s4 1934713408
        %v1398 = vunpack.c.0.s8 %v1397
        %v1399 = vlaneseq
        %v1400 = vshrl.u32 %v1399, 7
        %v1401 = vsub.s32 %v1398, %v1400
        %v1402 = vrot.slane %v1388, %v1401
        %v1403 = vcombine.high %v1379, 0.0
        %v1404 = vcombine.high %v1386, 0.0
        %v1405 = vcombine.high %v1395, 0.0
        %v1406 = vcombine.high %v1402, 0.0
        %1408 = vrot.lane.b32.xlu0 %v1335, 16
        %v1409 = vpop.permute.xlu0 %1408
        %1412 = vrot.lane.b32.xlu0 %v1318, 32
        %v1413 = vpop.permute.xlu0 %1412
        %1416 = vrot.lane.b32.xlu0 %v1336, 48
        %v1417 = vpop.permute.xlu0 %1416
        %1420 = vrot.lane.b32.xlu0 %v1327, 64
        %v1421 = vpop.permute.xlu0 %1420
        %1424 = vrot.lane.b32.xlu0 %v1337, 80
        %v1425 = vpop.permute.xlu0 %1424
        %1428 = vrot.lane.b32.xlu0 %v1334, 96
        %v1429 = vpop.permute.xlu0 %1428
        %1432 = vrot.lane.b32.xlu0 %v1338, 112
        %v1433 = vpop.permute.xlu0 %1432
        %1436 = vrot.lane.b32.xlu0 %v1403, 16
        %v1437 = vpop.permute.xlu0 %1436
        %1440 = vrot.lane.b32.xlu0 %v1386, 32
        %v1441 = vpop.permute.xlu0 %1440
        %1444 = vrot.lane.b32.xlu0 %v1404, 48
        %v1445 = vpop.permute.xlu0 %1444
        %1448 = vrot.lane.b32.xlu0 %v1395, 64
        %v1449 = vpop.permute.xlu0 %1448
        %1452 = vrot.lane.b32.xlu0 %v1405, 80
        %v1453 = vpop.permute.xlu0 %1452
        %1456 = vrot.lane.b32.xlu0 %v1402, 96
        %v1457 = vpop.permute.xlu0 %1456
        %1460 = vrot.lane.b32.xlu0 %v1406, 112
        %v1461 = vpop.permute.xlu0 %1460
        %v1463 = vsel %vm774, %v1311, %v1409
        %v1464 = vsel %vm776, %v1463, %v1413
        %v1465 = vsel %vm778, %v1464, %v1417
        %v1466 = vsel %vm780, %v1465, %v1421
        %v1467 = vsel %vm782, %v1466, %v1425
        %v1468 = vsel %vm784, %v1467, %v1429
        %v1469 = vsel %vm786, %v1468, %v1433
        %v1470 = vsel %vm774, %v1379, %v1437
        %v1471 = vsel %vm776, %v1470, %v1441
        %v1472 = vsel %vm778, %v1471, %v1445
        %v1473 = vsel %vm780, %v1472, %v1449
        %v1474 = vsel %vm782, %v1473, %v1453
        %v1475 = vsel %vm784, %v1474, %v1457
        %v1476 = vsel %vm786, %v1475, %v1461
        %1485 = vrot.lane.b32.xlu0 %v1263, 127
        %v1486 = vpop.permute.xlu0 %1485
        %1487 = vrot.lane.b32.xlu0 %v1264, 127
        %v1488 = vpop.permute.xlu0 %1487
        %1489 = vrot.lane.b32.xlu0 %v1265, 127
        %v1490 = vpop.permute.xlu0 %1489
        %1491 = vrot.lane.b32.xlu0 %v1266, 127
        %v1492 = vpop.permute.xlu0 %1491
        %1493 = vrot.lane.b32.xlu0 %v1267, 127
        %v1494 = vpop.permute.xlu0 %1493
        %1495 = vrot.lane.b32.xlu0 %v1268, 127
        %v1496 = vpop.permute.xlu0 %1495
        %1497 = vrot.lane.b32.xlu0 %v1269, 127
        %v1498 = vpop.permute.xlu0 %1497
        %1499 = vrot.lane.b32.xlu0 %v1270, 127
        %v1500 = vpop.permute.xlu0 %1499
        %v1509 = vcombine.low %v1486, %v1494
        %v1510 = vcombine.high %v1486, %v1494
        %v1512 = vunpack.c.l.s4 1983009808
        %v1513 = vunpack.c.0.s8 %v1512
        %v1514 = vlaneseq
        %v1515 = vshrl.u32 %v1514, 7
        %v1516 = vsub.s32 %v1513, %v1515
        %v1517 = vrot.slane %v1509, %v1516
        %v1519 = vunpack.c.l.s4 1983009808
        %v1520 = vunpack.c.0.s8 %v1519
        %v1521 = vlaneseq
        %v1522 = vshrl.u32 %v1521, 7
        %v1523 = vsub.s32 %v1520, %v1522
        %v1524 = vrot.slane %v1510, %v1523
        %v1525 = vcombine.low %v1490, %v1498
        %v1526 = vcombine.high %v1490, %v1498
        %v1528 = vunpack.c.l.s4 1983009808
        %v1529 = vunpack.c.0.s8 %v1528
        %v1530 = vlaneseq
        %v1531 = vshrl.u32 %v1530, 7
        %v1532 = vsub.s32 %v1529, %v1531
        %v1533 = vrot.slane %v1525, %v1532
        %v1535 = vunpack.c.l.s4 1983009808
        %v1536 = vunpack.c.0.s8 %v1535
        %v1537 = vlaneseq
        %v1538 = vshrl.u32 %v1537, 7
        %v1539 = vsub.s32 %v1536, %v1538
        %v1540 = vrot.slane %v1526, %v1539
        %v1541 = vcombine.low %v1517, %v1533
        %v1542 = vcombine.high %v1517, %v1533
        %v1544 = vunpack.c.l.s4 1934713408
        %v1545 = vunpack.c.0.s8 %v1544
        %v1546 = vlaneseq
        %v1547 = vshrl.u32 %v1546, 7
        %v1548 = vsub.s32 %v1545, %v1547
        %v1549 = vrot.slane %v1541, %v1548
        %v1551 = vunpack.c.l.s4 1934713408
        %v1552 = vunpack.c.0.s8 %v1551
        %v1553 = vlaneseq
        %v1554 = vshrl.u32 %v1553, 7
        %v1555 = vsub.s32 %v1552, %v1554
        %v1556 = vrot.slane %v1542, %v1555
        %v1557 = vcombine.low %v1524, %v1540
        %v1558 = vcombine.high %v1524, %v1540
        %v1560 = vunpack.c.l.s4 1934713408
        %v1561 = vunpack.c.0.s8 %v1560
        %v1562 = vlaneseq
        %v1563 = vshrl.u32 %v1562, 7
        %v1564 = vsub.s32 %v1561, %v1563
        %v1565 = vrot.slane %v1557, %v1564
        %v1567 = vunpack.c.l.s4 1934713408
        %v1568 = vunpack.c.0.s8 %v1567
        %v1569 = vlaneseq
        %v1570 = vshrl.u32 %v1569, 7
        %v1571 = vsub.s32 %v1568, %v1570
        %v1572 = vrot.slane %v1558, %v1571
        %v1573 = vcombine.high %v1549, 0.0
        %v1574 = vcombine.high %v1556, 0.0
        %v1575 = vcombine.high %v1565, 0.0
        %v1576 = vcombine.high %v1572, 0.0
        %v1577 = vcombine.low %v1488, %v1496
        %v1578 = vcombine.high %v1488, %v1496
        %v1580 = vunpack.c.l.s4 1983009808
        %v1581 = vunpack.c.0.s8 %v1580
        %v1582 = vlaneseq
        %v1583 = vshrl.u32 %v1582, 7
        %v1584 = vsub.s32 %v1581, %v1583
        %v1585 = vrot.slane %v1577, %v1584
        %v1587 = vunpack.c.l.s4 1983009808
        %v1588 = vunpack.c.0.s8 %v1587
        %v1589 = vlaneseq
        %v1590 = vshrl.u32 %v1589, 7
        %v1591 = vsub.s32 %v1588, %v1590
        %v1592 = vrot.slane %v1578, %v1591
        %v1593 = vcombine.low %v1492, %v1500
        %v1594 = vcombine.high %v1492, %v1500
        %v1596 = vunpack.c.l.s4 1983009808
        %v1597 = vunpack.c.0.s8 %v1596
        %v1598 = vlaneseq
        %v1599 = vshrl.u32 %v1598, 7
        %v1600 = vsub.s32 %v1597, %v1599
        %v1601 = vrot.slane %v1593, %v1600
        %v1603 = vunpack.c.l.s4 1983009808
        %v1604 = vunpack.c.0.s8 %v1603
        %v1605 = vlaneseq
        %v1606 = vshrl.u32 %v1605, 7
        %v1607 = vsub.s32 %v1604, %v1606
        %v1608 = vrot.slane %v1594, %v1607
        %v1609 = vcombine.low %v1585, %v1601
        %v1610 = vcombine.high %v1585, %v1601
        %v1612 = vunpack.c.l.s4 1934713408
        %v1613 = vunpack.c.0.s8 %v1612
        %v1614 = vlaneseq
        %v1615 = vshrl.u32 %v1614, 7
        %v1616 = vsub.s32 %v1613, %v1615
        %v1617 = vrot.slane %v1609, %v1616
        %v1619 = vunpack.c.l.s4 1934713408
        %v1620 = vunpack.c.0.s8 %v1619
        %v1621 = vlaneseq
        %v1622 = vshrl.u32 %v1621, 7
        %v1623 = vsub.s32 %v1620, %v1622
        %v1624 = vrot.slane %v1610, %v1623
        %v1625 = vcombine.low %v1592, %v1608
        %v1626 = vcombine.high %v1592, %v1608
        %v1628 = vunpack.c.l.s4 1934713408
        %v1629 = vunpack.c.0.s8 %v1628
        %v1630 = vlaneseq
        %v1631 = vshrl.u32 %v1630, 7
        %v1632 = vsub.s32 %v1629, %v1631
        %v1633 = vrot.slane %v1625, %v1632
        %v1635 = vunpack.c.l.s4 1934713408
        %v1636 = vunpack.c.0.s8 %v1635
        %v1637 = vlaneseq
        %v1638 = vshrl.u32 %v1637, 7
        %v1639 = vsub.s32 %v1636, %v1638
        %v1640 = vrot.slane %v1626, %v1639
        %v1641 = vcombine.high %v1617, 0.0
        %v1642 = vcombine.high %v1624, 0.0
        %v1643 = vcombine.high %v1633, 0.0
        %v1644 = vcombine.high %v1640, 0.0
        %1646 = vrot.lane.b32.xlu0 %v1573, 16
        %v1647 = vpop.permute.xlu0 %1646
        %1650 = vrot.lane.b32.xlu0 %v1556, 32
        %v1651 = vpop.permute.xlu0 %1650
        %1654 = vrot.lane.b32.xlu0 %v1574, 48
        %v1655 = vpop.permute.xlu0 %1654
        %1658 = vrot.lane.b32.xlu0 %v1565, 64
        %v1659 = vpop.permute.xlu0 %1658
        %1662 = vrot.lane.b32.xlu0 %v1575, 80
        %v1663 = vpop.permute.xlu0 %1662
        %1666 = vrot.lane.b32.xlu0 %v1572, 96
        %v1667 = vpop.permute.xlu0 %1666
        %1670 = vrot.lane.b32.xlu0 %v1576, 112
        %v1671 = vpop.permute.xlu0 %1670
        %1674 = vrot.lane.b32.xlu0 %v1641, 16
        %v1675 = vpop.permute.xlu0 %1674
        %1678 = vrot.lane.b32.xlu0 %v1624, 32
        %v1679 = vpop.permute.xlu0 %1678
        %1682 = vrot.lane.b32.xlu0 %v1642, 48
        %v1683 = vpop.permute.xlu0 %1682
        %1686 = vrot.lane.b32.xlu0 %v1633, 64
        %v1687 = vpop.permute.xlu0 %1686
        %1690 = vrot.lane.b32.xlu0 %v1643, 80
        %v1691 = vpop.permute.xlu0 %1690
        %1694 = vrot.lane.b32.xlu0 %v1640, 96
        %v1695 = vpop.permute.xlu0 %1694
        %1698 = vrot.lane.b32.xlu0 %v1644, 112
        %v1699 = vpop.permute.xlu0 %1698
        %v1701 = vsel %vm774, %v1549, %v1647
        %v1702 = vsel %vm776, %v1701, %v1651
        %v1703 = vsel %vm778, %v1702, %v1655
        %v1704 = vsel %vm780, %v1703, %v1659
        %v1705 = vsel %vm782, %v1704, %v1663
        %v1706 = vsel %vm784, %v1705, %v1667
        %v1707 = vsel %vm786, %v1706, %v1671
        %v1708 = vsel %vm774, %v1617, %v1675
        %v1709 = vsel %vm776, %v1708, %v1679
        %v1710 = vsel %vm778, %v1709, %v1683
        %v1711 = vsel %vm780, %v1710, %v1687
        %v1712 = vsel %vm782, %v1711, %v1691
        %v1713 = vsel %vm784, %v1712, %v1695
        %v1714 = vsel %vm786, %v1713, %v1699
        %1715 = vrot.lane.b32.xlu0 %v1263, 126
        %v1716 = vpop.permute.xlu0 %1715
        %1717 = vrot.lane.b32.xlu0 %v1264, 126
        %v1718 = vpop.permute.xlu0 %1717
        %1719 = vrot.lane.b32.xlu0 %v1265, 126
        %v1720 = vpop.permute.xlu0 %1719
        %1721 = vrot.lane.b32.xlu0 %v1266, 126
        %v1722 = vpop.permute.xlu0 %1721
        %1723 = vrot.lane.b32.xlu0 %v1267, 126
        %v1724 = vpop.permute.xlu0 %1723
        %1725 = vrot.lane.b32.xlu0 %v1268, 126
        %v1726 = vpop.permute.xlu0 %1725
        %1727 = vrot.lane.b32.xlu0 %v1269, 126
        %v1728 = vpop.permute.xlu0 %1727
        %1729 = vrot.lane.b32.xlu0 %v1270, 126
        %v1730 = vpop.permute.xlu0 %1729
        %v1739 = vcombine.low %v1716, %v1724
        %v1740 = vcombine.high %v1716, %v1724
        %v1742 = vunpack.c.l.s4 1983009808
        %v1743 = vunpack.c.0.s8 %v1742
        %v1744 = vlaneseq
        %v1745 = vshrl.u32 %v1744, 7
        %v1746 = vsub.s32 %v1743, %v1745
        %v1747 = vrot.slane %v1739, %v1746
        %v1749 = vunpack.c.l.s4 1983009808
        %v1750 = vunpack.c.0.s8 %v1749
        %v1751 = vlaneseq
        %v1752 = vshrl.u32 %v1751, 7
        %v1753 = vsub.s32 %v1750, %v1752
        %v1754 = vrot.slane %v1740, %v1753
        %v1755 = vcombine.low %v1720, %v1728
        %v1756 = vcombine.high %v1720, %v1728
        %v1758 = vunpack.c.l.s4 1983009808
        %v1759 = vunpack.c.0.s8 %v1758
        %v1760 = vlaneseq
        %v1761 = vshrl.u32 %v1760, 7
        %v1762 = vsub.s32 %v1759, %v1761
        %v1763 = vrot.slane %v1755, %v1762
        %v1765 = vunpack.c.l.s4 1983009808
        %v1766 = vunpack.c.0.s8 %v1765
        %v1767 = vlaneseq
        %v1768 = vshrl.u32 %v1767, 7
        %v1769 = vsub.s32 %v1766, %v1768
        %v1770 = vrot.slane %v1756, %v1769
        %v1771 = vcombine.low %v1747, %v1763
        %v1772 = vcombine.high %v1747, %v1763
        %v1774 = vunpack.c.l.s4 1934713408
        %v1775 = vunpack.c.0.s8 %v1774
        %v1776 = vlaneseq
        %v1777 = vshrl.u32 %v1776, 7
        %v1778 = vsub.s32 %v1775, %v1777
        %v1779 = vrot.slane %v1771, %v1778
        %v1781 = vunpack.c.l.s4 1934713408
        %v1782 = vunpack.c.0.s8 %v1781
        %v1783 = vlaneseq
        %v1784 = vshrl.u32 %v1783, 7
        %v1785 = vsub.s32 %v1782, %v1784
        %v1786 = vrot.slane %v1772, %v1785
        %v1787 = vcombine.low %v1754, %v1770
        %v1788 = vcombine.high %v1754, %v1770
        %v1790 = vunpack.c.l.s4 1934713408
        %v1791 = vunpack.c.0.s8 %v1790
        %v1792 = vlaneseq
        %v1793 = vshrl.u32 %v1792, 7
        %v1794 = vsub.s32 %v1791, %v1793
        %v1795 = vrot.slane %v1787, %v1794
        %v1797 = vunpack.c.l.s4 1934713408
        %v1798 = vunpack.c.0.s8 %v1797
        %v1799 = vlaneseq
        %v1800 = vshrl.u32 %v1799, 7
        %v1801 = vsub.s32 %v1798, %v1800
        %v1802 = vrot.slane %v1788, %v1801
        %v1803 = vcombine.high %v1779, 0.0
        %v1804 = vcombine.high %v1786, 0.0
        %v1805 = vcombine.high %v1795, 0.0
        %v1806 = vcombine.high %v1802, 0.0
        %v1807 = vcombine.low %v1718, %v1726
        %v1808 = vcombine.high %v1718, %v1726
        %v1810 = vunpack.c.l.s4 1983009808
        %v1811 = vunpack.c.0.s8 %v1810
        %v1812 = vlaneseq
        %v1813 = vshrl.u32 %v1812, 7
        %v1814 = vsub.s32 %v1811, %v1813
        %v1815 = vrot.slane %v1807, %v1814
        %v1817 = vunpack.c.l.s4 1983009808
        %v1818 = vunpack.c.0.s8 %v1817
        %v1819 = vlaneseq
        %v1820 = vshrl.u32 %v1819, 7
        %v1821 = vsub.s32 %v1818, %v1820
        %v1822 = vrot.slane %v1808, %v1821
        %v1823 = vcombine.low %v1722, %v1730
        %v1824 = vcombine.high %v1722, %v1730
        %v1826 = vunpack.c.l.s4 1983009808
        %v1827 = vunpack.c.0.s8 %v1826
        %v1828 = vlaneseq
        %v1829 = vshrl.u32 %v1828, 7
        %v1830 = vsub.s32 %v1827, %v1829
        %v1831 = vrot.slane %v1823, %v1830
        %v1833 = vunpack.c.l.s4 1983009808
        %v1834 = vunpack.c.0.s8 %v1833
        %v1835 = vlaneseq
        %v1836 = vshrl.u32 %v1835, 7
        %v1837 = vsub.s32 %v1834, %v1836
        %v1838 = vrot.slane %v1824, %v1837
        %v1839 = vcombine.low %v1815, %v1831
        %v1840 = vcombine.high %v1815, %v1831
        %v1842 = vunpack.c.l.s4 1934713408
        %v1843 = vunpack.c.0.s8 %v1842
        %v1844 = vlaneseq
        %v1845 = vshrl.u32 %v1844, 7
        %v1846 = vsub.s32 %v1843, %v1845
        %v1847 = vrot.slane %v1839, %v1846
        %v1849 = vunpack.c.l.s4 1934713408
        %v1850 = vunpack.c.0.s8 %v1849
        %v1851 = vlaneseq
        %v1852 = vshrl.u32 %v1851, 7
        %v1853 = vsub.s32 %v1850, %v1852
        %v1854 = vrot.slane %v1840, %v1853
        %v1855 = vcombine.low %v1822, %v1838
        %v1856 = vcombine.high %v1822, %v1838
        %v1858 = vunpack.c.l.s4 1934713408
        %v1859 = vunpack.c.0.s8 %v1858
        %v1860 = vlaneseq
        %v1861 = vshrl.u32 %v1860, 7
        %v1862 = vsub.s32 %v1859, %v1861
        %v1863 = vrot.slane %v1855, %v1862
        %v1865 = vunpack.c.l.s4 1934713408
        %v1866 = vunpack.c.0.s8 %v1865
        %v1867 = vlaneseq
        %v1868 = vshrl.u32 %v1867, 7
        %v1869 = vsub.s32 %v1866, %v1868
        %v1870 = vrot.slane %v1856, %v1869
        %v1871 = vcombine.high %v1847, 0.0
        %v1872 = vcombine.high %v1854, 0.0
        %v1873 = vcombine.high %v1863, 0.0
        %v1874 = vcombine.high %v1870, 0.0
        %1876 = vrot.lane.b32.xlu0 %v1803, 16
        %v1877 = vpop.permute.xlu0 %1876
        %1880 = vrot.lane.b32.xlu0 %v1786, 32
        %v1881 = vpop.permute.xlu0 %1880
        %1884 = vrot.lane.b32.xlu0 %v1804, 48
        %v1885 = vpop.permute.xlu0 %1884
        %1888 = vrot.lane.b32.xlu0 %v1795, 64
        %v1889 = vpop.permute.xlu0 %1888
        %1892 = vrot.lane.b32.xlu0 %v1805, 80
        %v1893 = vpop.permute.xlu0 %1892
        %1896 = vrot.lane.b32.xlu0 %v1802, 96
        %v1897 = vpop.permute.xlu0 %1896
        %1900 = vrot.lane.b32.xlu0 %v1806, 112
        %v1901 = vpop.permute.xlu0 %1900
        %1904 = vrot.lane.b32.xlu0 %v1871, 16
        %v1905 = vpop.permute.xlu0 %1904
        %1908 = vrot.lane.b32.xlu0 %v1854, 32
        %v1909 = vpop.permute.xlu0 %1908
        %1912 = vrot.lane.b32.xlu0 %v1872, 48
        %v1913 = vpop.permute.xlu0 %1912
        %1916 = vrot.lane.b32.xlu0 %v1863, 64
        %v1917 = vpop.permute.xlu0 %1916
        %1920 = vrot.lane.b32.xlu0 %v1873, 80
        %v1921 = vpop.permute.xlu0 %1920
        %1924 = vrot.lane.b32.xlu0 %v1870, 96
        %v1925 = vpop.permute.xlu0 %1924
        %1928 = vrot.lane.b32.xlu0 %v1874, 112
        %v1929 = vpop.permute.xlu0 %1928
        %v1931 = vsel %vm774, %v1779, %v1877
        %v1932 = vsel %vm776, %v1931, %v1881
        %v1933 = vsel %vm778, %v1932, %v1885
        %v1934 = vsel %vm780, %v1933, %v1889
        %v1935 = vsel %vm782, %v1934, %v1893
        %v1936 = vsel %vm784, %v1935, %v1897
        %v1937 = vsel %vm786, %v1936, %v1901
        %v1938 = vsel %vm774, %v1847, %v1905
        %v1939 = vsel %vm776, %v1938, %v1909
        %v1940 = vsel %vm778, %v1939, %v1913
        %v1941 = vsel %vm780, %v1940, %v1917
        %v1942 = vsel %vm782, %v1941, %v1921
        %v1943 = vsel %vm784, %v1942, %v1925
        %v1944 = vsel %vm786, %v1943, %v1929
        %v1945 = vld [vmem:[#allocation2 + $0x2] sm:$0xff]
        %v1946 = vld [vmem:[#allocation2 + $0xa] sm:$0xff]
        %v1947 = vld [vmem:[#allocation2 + $0x1a] sm:$0xff]
        %v1948 = vld [vmem:[#allocation2 + $0x22] sm:$0xff]
        %v1949 = vld [vmem:[#allocation2 + $0x32] sm:$0xff]
        %v1950 = vld [vmem:[#allocation2 + $0x3a] sm:$0xff]
        %v1951 = vld [vmem:[#allocation2 + $0x4a] sm:$0xff]
        %v1952 = vld [vmem:[#allocation2 + $0x52] sm:$0xff]
        %v1953 = vcombine.low %v1945, %v1949
        %v1954 = vcombine.high %v1945, %v1949
        %v1956 = vunpack.c.l.s4 1983009808
        %v1957 = vunpack.c.0.s8 %v1956
        %v1958 = vlaneseq
        %v1959 = vshrl.u32 %v1958, 7
        %v1960 = vsub.s32 %v1957, %v1959
        %v1961 = vrot.slane %v1953, %v1960
        %v1963 = vunpack.c.l.s4 1983009808
        %v1964 = vunpack.c.0.s8 %v1963
        %v1965 = vlaneseq
        %v1966 = vshrl.u32 %v1965, 7
        %v1967 = vsub.s32 %v1964, %v1966
        %v1968 = vrot.slane %v1954, %v1967
        %v1969 = vcombine.low %v1947, %v1951
        %v1970 = vcombine.high %v1947, %v1951
        %v1972 = vunpack.c.l.s4 1983009808
        %v1973 = vunpack.c.0.s8 %v1972
        %v1974 = vlaneseq
        %v1975 = vshrl.u32 %v1974, 7
        %v1976 = vsub.s32 %v1973, %v1975
        %v1977 = vrot.slane %v1969, %v1976
        %v1979 = vunpack.c.l.s4 1983009808
        %v1980 = vunpack.c.0.s8 %v1979
        %v1981 = vlaneseq
        %v1982 = vshrl.u32 %v1981, 7
        %v1983 = vsub.s32 %v1980, %v1982
        %v1984 = vrot.slane %v1970, %v1983
        %v1985 = vcombine.low %v1961, %v1977
        %v1986 = vcombine.high %v1961, %v1977
        %v1988 = vunpack.c.l.s4 1934713408
        %v1989 = vunpack.c.0.s8 %v1988
        %v1990 = vlaneseq
        %v1991 = vshrl.u32 %v1990, 7
        %v1992 = vsub.s32 %v1989, %v1991
        %v1993 = vrot.slane %v1985, %v1992
        %v1995 = vunpack.c.l.s4 1934713408
        %v1996 = vunpack.c.0.s8 %v1995
        %v1997 = vlaneseq
        %v1998 = vshrl.u32 %v1997, 7
        %v1999 = vsub.s32 %v1996, %v1998
        %v2000 = vrot.slane %v1986, %v1999
        %v2001 = vcombine.low %v1968, %v1984
        %v2002 = vcombine.high %v1968, %v1984
        %v2004 = vunpack.c.l.s4 1934713408
        %v2005 = vunpack.c.0.s8 %v2004
        %v2006 = vlaneseq
        %v2007 = vshrl.u32 %v2006, 7
        %v2008 = vsub.s32 %v2005, %v2007
        %v2009 = vrot.slane %v2001, %v2008
        %v2011 = vunpack.c.l.s4 1934713408
        %v2012 = vunpack.c.0.s8 %v2011
        %v2013 = vlaneseq
        %v2014 = vshrl.u32 %v2013, 7
        %v2015 = vsub.s32 %v2012, %v2014
        %v2016 = vrot.slane %v2002, %v2015
        %v2017 = vcombine.high %v1993, 0.0
        %v2018 = vcombine.high %v2000, 0.0
        %v2019 = vcombine.high %v2009, 0.0
        %v2020 = vcombine.high %v2016, 0.0
        %v2021 = vcombine.low %v1946, %v1950
        %v2022 = vcombine.high %v1946, %v1950
        %v2024 = vunpack.c.l.s4 1983009808
        %v2025 = vunpack.c.0.s8 %v2024
        %v2026 = vlaneseq
        %v2027 = vshrl.u32 %v2026, 7
        %v2028 = vsub.s32 %v2025, %v2027
        %v2029 = vrot.slane %v2021, %v2028
        %v2031 = vunpack.c.l.s4 1983009808
        %v2032 = vunpack.c.0.s8 %v2031
        %v2033 = vlaneseq
        %v2034 = vshrl.u32 %v2033, 7
        %v2035 = vsub.s32 %v2032, %v2034
        %v2036 = vrot.slane %v2022, %v2035
        %v2037 = vcombine.low %v1948, %v1952
        %v2038 = vcombine.high %v1948, %v1952
        %v2040 = vunpack.c.l.s4 1983009808
        %v2041 = vunpack.c.0.s8 %v2040
        %v2042 = vlaneseq
        %v2043 = vshrl.u32 %v2042, 7
        %v2044 = vsub.s32 %v2041, %v2043
        %v2045 = vrot.slane %v2037, %v2044
        %v2047 = vunpack.c.l.s4 1983009808
        %v2048 = vunpack.c.0.s8 %v2047
        %v2049 = vlaneseq
        %v2050 = vshrl.u32 %v2049, 7
        %v2051 = vsub.s32 %v2048, %v2050
        %v2052 = vrot.slane %v2038, %v2051
        %v2053 = vcombine.low %v2029, %v2045
        %v2054 = vcombine.high %v2029, %v2045
        %v2056 = vunpack.c.l.s4 1934713408
        %v2057 = vunpack.c.0.s8 %v2056
        %v2058 = vlaneseq
        %v2059 = vshrl.u32 %v2058, 7
        %v2060 = vsub.s32 %v2057, %v2059
        %v2061 = vrot.slane %v2053, %v2060
        %v2063 = vunpack.c.l.s4 1934713408
        %v2064 = vunpack.c.0.s8 %v2063
        %v2065 = vlaneseq
        %v2066 = vshrl.u32 %v2065, 7
        %v2067 = vsub.s32 %v2064, %v2066
        %v2068 = vrot.slane %v2054, %v2067
        %v2069 = vcombine.low %v2036, %v2052
        %v2070 = vcombine.high %v2036, %v2052
        %v2072 = vunpack.c.l.s4 1934713408
        %v2073 = vunpack.c.0.s8 %v2072
        %v2074 = vlaneseq
        %v2075 = vshrl.u32 %v2074, 7
        %v2076 = vsub.s32 %v2073, %v2075
        %v2077 = vrot.slane %v2069, %v2076
        %v2079 = vunpack.c.l.s4 1934713408
        %v2080 = vunpack.c.0.s8 %v2079
        %v2081 = vlaneseq
        %v2082 = vshrl.u32 %v2081, 7
        %v2083 = vsub.s32 %v2080, %v2082
        %v2084 = vrot.slane %v2070, %v2083
        %v2085 = vcombine.high %v2061, 0.0
        %v2086 = vcombine.high %v2068, 0.0
        %v2087 = vcombine.high %v2077, 0.0
        %v2088 = vcombine.high %v2084, 0.0
        %2090 = vrot.lane.b32.xlu0 %v2017, 16
        %v2091 = vpop.permute.xlu0 %2090
        %2094 = vrot.lane.b32.xlu0 %v2000, 32
        %v2095 = vpop.permute.xlu0 %2094
        %2098 = vrot.lane.b32.xlu0 %v2018, 48
        %v2099 = vpop.permute.xlu0 %2098
        %2102 = vrot.lane.b32.xlu0 %v2009, 64
        %v2103 = vpop.permute.xlu0 %2102
        %2106 = vrot.lane.b32.xlu0 %v2019, 80
        %v2107 = vpop.permute.xlu0 %2106
        %2110 = vrot.lane.b32.xlu0 %v2016, 96
        %v2111 = vpop.permute.xlu0 %2110
        %2114 = vrot.lane.b32.xlu0 %v2020, 112
        %v2115 = vpop.permute.xlu0 %2114
        %2118 = vrot.lane.b32.xlu0 %v2085, 16
        %v2119 = vpop.permute.xlu0 %2118
        %2122 = vrot.lane.b32.xlu0 %v2068, 32
        %v2123 = vpop.permute.xlu0 %2122
        %2126 = vrot.lane.b32.xlu0 %v2086, 48
        %v2127 = vpop.permute.xlu0 %2126
        %2130 = vrot.lane.b32.xlu0 %v2077, 64
        %v2131 = vpop.permute.xlu0 %2130
        %2134 = vrot.lane.b32.xlu0 %v2087, 80
        %v2135 = vpop.permute.xlu0 %2134
        %2138 = vrot.lane.b32.xlu0 %v2084, 96
        %v2139 = vpop.permute.xlu0 %2138
        %2142 = vrot.lane.b32.xlu0 %v2088, 112
        %v2143 = vpop.permute.xlu0 %2142
        %v2145 = vsel %vm774, %v1993, %v2091
        %v2146 = vsel %vm776, %v2145, %v2095
        %v2147 = vsel %vm778, %v2146, %v2099
        %v2148 = vsel %vm780, %v2147, %v2103
        %v2149 = vsel %vm782, %v2148, %v2107
        %v2150 = vsel %vm784, %v2149, %v2111
        %v2151 = vsel %vm786, %v2150, %v2115
        %v2152 = vsel %vm774, %v2061, %v2119
        %v2153 = vsel %vm776, %v2152, %v2123
        %v2154 = vsel %vm778, %v2153, %v2127
        %v2155 = vsel %vm780, %v2154, %v2131
        %v2156 = vsel %vm782, %v2155, %v2135
        %v2157 = vsel %vm784, %v2156, %v2139
        %v2158 = vsel %vm786, %v2157, %v2143
        %2167 = vrot.lane.b32.xlu0 %v1945, 127
        %v2168 = vpop.permute.xlu0 %2167
        %2169 = vrot.lane.b32.xlu0 %v1946, 127
        %v2170 = vpop.permute.xlu0 %2169
        %2171 = vrot.lane.b32.xlu0 %v1947, 127
        %v2172 = vpop.permute.xlu0 %2171
        %2173 = vrot.lane.b32.xlu0 %v1948, 127
        %v2174 = vpop.permute.xlu0 %2173
        %2175 = vrot.lane.b32.xlu0 %v1949, 127
        %v2176 = vpop.permute.xlu0 %2175
        %2177 = vrot.lane.b32.xlu0 %v1950, 127
        %v2178 = vpop.permute.xlu0 %2177
        %2179 = vrot.lane.b32.xlu0 %v1951, 127
        %v2180 = vpop.permute.xlu0 %2179
        %2181 = vrot.lane.b32.xlu0 %v1952, 127
        %v2182 = vpop.permute.xlu0 %2181
        %v2191 = vcombine.low %v2168, %v2176
        %v2192 = vcombine.high %v2168, %v2176
        %v2194 = vunpack.c.l.s4 1983009808
        %v2195 = vunpack.c.0.s8 %v2194
        %v2196 = vlaneseq
        %v2197 = vshrl.u32 %v2196, 7
        %v2198 = vsub.s32 %v2195, %v2197
        %v2199 = vrot.slane %v2191, %v2198
        %v2201 = vunpack.c.l.s4 1983009808
        %v2202 = vunpack.c.0.s8 %v2201
        %v2203 = vlaneseq
        %v2204 = vshrl.u32 %v2203, 7
        %v2205 = vsub.s32 %v2202, %v2204
        %v2206 = vrot.slane %v2192, %v2205
        %v2207 = vcombine.low %v2172, %v2180
        %v2208 = vcombine.high %v2172, %v2180
        %v2210 = vunpack.c.l.s4 1983009808
        %v2211 = vunpack.c.0.s8 %v2210
        %v2212 = vlaneseq
        %v2213 = vshrl.u32 %v2212, 7
        %v2214 = vsub.s32 %v2211, %v2213
        %v2215 = vrot.slane %v2207, %v2214
        %v2217 = vunpack.c.l.s4 1983009808
        %v2218 = vunpack.c.0.s8 %v2217
        %v2219 = vlaneseq
        %v2220 = vshrl.u32 %v2219, 7
        %v2221 = vsub.s32 %v2218, %v2220
        %v2222 = vrot.slane %v2208, %v2221
        %v2223 = vcombine.low %v2199, %v2215
        %v2224 = vcombine.high %v2199, %v2215
        %v2226 = vunpack.c.l.s4 1934713408
        %v2227 = vunpack.c.0.s8 %v2226
        %v2228 = vlaneseq
        %v2229 = vshrl.u32 %v2228, 7
        %v2230 = vsub.s32 %v2227, %v2229
        %v2231 = vrot.slane %v2223, %v2230
        %v2233 = vunpack.c.l.s4 1934713408
        %v2234 = vunpack.c.0.s8 %v2233
        %v2235 = vlaneseq
        %v2236 = vshrl.u32 %v2235, 7
        %v2237 = vsub.s32 %v2234, %v2236
        %v2238 = vrot.slane %v2224, %v2237
        %v2239 = vcombine.low %v2206, %v2222
        %v2240 = vcombine.high %v2206, %v2222
        %v2242 = vunpack.c.l.s4 1934713408
        %v2243 = vunpack.c.0.s8 %v2242
        %v2244 = vlaneseq
        %v2245 = vshrl.u32 %v2244, 7
        %v2246 = vsub.s32 %v2243, %v2245
        %v2247 = vrot.slane %v2239, %v2246
        %v2249 = vunpack.c.l.s4 1934713408
        %v2250 = vunpack.c.0.s8 %v2249
        %v2251 = vlaneseq
        %v2252 = vshrl.u32 %v2251, 7
        %v2253 = vsub.s32 %v2250, %v2252
        %v2254 = vrot.slane %v2240, %v2253
        %v2255 = vcombine.high %v2231, 0.0
        %v2256 = vcombine.high %v2238, 0.0
        %v2257 = vcombine.high %v2247, 0.0
        %v2258 = vcombine.high %v2254, 0.0
        %v2259 = vcombine.low %v2170, %v2178
        %v2260 = vcombine.high %v2170, %v2178
        %v2262 = vunpack.c.l.s4 1983009808
        %v2263 = vunpack.c.0.s8 %v2262
        %v2264 = vlaneseq
        %v2265 = vshrl.u32 %v2264, 7
        %v2266 = vsub.s32 %v2263, %v2265
        %v2267 = vrot.slane %v2259, %v2266
        %v2269 = vunpack.c.l.s4 1983009808
        %v2270 = vunpack.c.0.s8 %v2269
        %v2271 = vlaneseq
        %v2272 = vshrl.u32 %v2271, 7
        %v2273 = vsub.s32 %v2270, %v2272
        %v2274 = vrot.slane %v2260, %v2273
        %v2275 = vcombine.low %v2174, %v2182
        %v2276 = vcombine.high %v2174, %v2182
        %v2278 = vunpack.c.l.s4 1983009808
        %v2279 = vunpack.c.0.s8 %v2278
        %v2280 = vlaneseq
        %v2281 = vshrl.u32 %v2280, 7
        %v2282 = vsub.s32 %v2279, %v2281
        %v2283 = vrot.slane %v2275, %v2282
        %v2285 = vunpack.c.l.s4 1983009808
        %v2286 = vunpack.c.0.s8 %v2285
        %v2287 = vlaneseq
        %v2288 = vshrl.u32 %v2287, 7
        %v2289 = vsub.s32 %v2286, %v2288
        %v2290 = vrot.slane %v2276, %v2289
        %v2291 = vcombine.low %v2267, %v2283
        %v2292 = vcombine.high %v2267, %v2283
        %v2294 = vunpack.c.l.s4 1934713408
        %v2295 = vunpack.c.0.s8 %v2294
        %v2296 = vlaneseq
        %v2297 = vshrl.u32 %v2296, 7
        %v2298 = vsub.s32 %v2295, %v2297
        %v2299 = vrot.slane %v2291, %v2298
        %v2301 = vunpack.c.l.s4 1934713408
        %v2302 = vunpack.c.0.s8 %v2301
        %v2303 = vlaneseq
        %v2304 = vshrl.u32 %v2303, 7
        %v2305 = vsub.s32 %v2302, %v2304
        %v2306 = vrot.slane %v2292, %v2305
        %v2307 = vcombine.low %v2274, %v2290
        %v2308 = vcombine.high %v2274, %v2290
        %v2310 = vunpack.c.l.s4 1934713408
        %v2311 = vunpack.c.0.s8 %v2310
        %v2312 = vlaneseq
        %v2313 = vshrl.u32 %v2312, 7
        %v2314 = vsub.s32 %v2311, %v2313
        %v2315 = vrot.slane %v2307, %v2314
        %v2317 = vunpack.c.l.s4 1934713408
        %v2318 = vunpack.c.0.s8 %v2317
        %v2319 = vlaneseq
        %v2320 = vshrl.u32 %v2319, 7
        %v2321 = vsub.s32 %v2318, %v2320
        %v2322 = vrot.slane %v2308, %v2321
        %v2323 = vcombine.high %v2299, 0.0
        %v2324 = vcombine.high %v2306, 0.0
        %v2325 = vcombine.high %v2315, 0.0
        %v2326 = vcombine.high %v2322, 0.0
        %2328 = vrot.lane.b32.xlu0 %v2255, 16
        %v2329 = vpop.permute.xlu0 %2328
        %2332 = vrot.lane.b32.xlu0 %v2238, 32
        %v2333 = vpop.permute.xlu0 %2332
        %2336 = vrot.lane.b32.xlu0 %v2256, 48
        %v2337 = vpop.permute.xlu0 %2336
        %2340 = vrot.lane.b32.xlu0 %v2247, 64
        %v2341 = vpop.permute.xlu0 %2340
        %2344 = vrot.lane.b32.xlu0 %v2257, 80
        %v2345 = vpop.permute.xlu0 %2344
        %2348 = vrot.lane.b32.xlu0 %v2254, 96
        %v2349 = vpop.permute.xlu0 %2348
        %2352 = vrot.lane.b32.xlu0 %v2258, 112
        %v2353 = vpop.permute.xlu0 %2352
        %2356 = vrot.lane.b32.xlu0 %v2323, 16
        %v2357 = vpop.permute.xlu0 %2356
        %2360 = vrot.lane.b32.xlu0 %v2306, 32
        %v2361 = vpop.permute.xlu0 %2360
        %2364 = vrot.lane.b32.xlu0 %v2324, 48
        %v2365 = vpop.permute.xlu0 %2364
        %2368 = vrot.lane.b32.xlu0 %v2315, 64
        %v2369 = vpop.permute.xlu0 %2368
        %2372 = vrot.lane.b32.xlu0 %v2325, 80
        %v2373 = vpop.permute.xlu0 %2372
        %2376 = vrot.lane.b32.xlu0 %v2322, 96
        %v2377 = vpop.permute.xlu0 %2376
        %2380 = vrot.lane.b32.xlu0 %v2326, 112
        %v2381 = vpop.permute.xlu0 %2380
        %v2383 = vsel %vm774, %v2231, %v2329
        %v2384 = vsel %vm776, %v2383, %v2333
        %v2385 = vsel %vm778, %v2384, %v2337
        %v2386 = vsel %vm780, %v2385, %v2341
        %v2387 = vsel %vm782, %v2386, %v2345
        %v2388 = vsel %vm784, %v2387, %v2349
        %v2389 = vsel %vm786, %v2388, %v2353
        %v2390 = vsel %vm774, %v2299, %v2357
        %v2391 = vsel %vm776, %v2390, %v2361
        %v2392 = vsel %vm778, %v2391, %v2365
        %v2393 = vsel %vm780, %v2392, %v2369
        %v2394 = vsel %vm782, %v2393, %v2373
        %v2395 = vsel %vm784, %v2394, %v2377
        %v2396 = vsel %vm786, %v2395, %v2381
        %2397 = vrot.lane.b32.xlu0 %v1945, 126
        %v2398 = vpop.permute.xlu0 %2397
        %2399 = vrot.lane.b32.xlu0 %v1946, 126
        %v2400 = vpop.permute.xlu0 %2399
        %2401 = vrot.lane.b32.xlu0 %v1947, 126
        %v2402 = vpop.permute.xlu0 %2401
        %2403 = vrot.lane.b32.xlu0 %v1948, 126
        %v2404 = vpop.permute.xlu0 %2403
        %2405 = vrot.lane.b32.xlu0 %v1949, 126
        %v2406 = vpop.permute.xlu0 %2405
        %2407 = vrot.lane.b32.xlu0 %v1950, 126
        %v2408 = vpop.permute.xlu0 %2407
        %2409 = vrot.lane.b32.xlu0 %v1951, 126
        %v2410 = vpop.permute.xlu0 %2409
        %2411 = vrot.lane.b32.xlu0 %v1952, 126
        %v2412 = vpop.permute.xlu0 %2411
        %v2421 = vcombine.low %v2398, %v2406
        %v2422 = vcombine.high %v2398, %v2406
        %v2424 = vunpack.c.l.s4 1983009808
        %v2425 = vunpack.c.0.s8 %v2424
        %v2426 = vlaneseq
        %v2427 = vshrl.u32 %v2426, 7
        %v2428 = vsub.s32 %v2425, %v2427
        %v2429 = vrot.slane %v2421, %v2428
        %v2431 = vunpack.c.l.s4 1983009808
        %v2432 = vunpack.c.0.s8 %v2431
        %v2433 = vlaneseq
        %v2434 = vshrl.u32 %v2433, 7
        %v2435 = vsub.s32 %v2432, %v2434
        %v2436 = vrot.slane %v2422, %v2435
        %v2437 = vcombine.low %v2402, %v2410
        %v2438 = vcombine.high %v2402, %v2410
        %v2440 = vunpack.c.l.s4 1983009808
        %v2441 = vunpack.c.0.s8 %v2440
        %v2442 = vlaneseq
        %v2443 = vshrl.u32 %v2442, 7
        %v2444 = vsub.s32 %v2441, %v2443
        %v2445 = vrot.slane %v2437, %v2444
        %v2447 = vunpack.c.l.s4 1983009808
        %v2448 = vunpack.c.0.s8 %v2447
        %v2449 = vlaneseq
        %v2450 = vshrl.u32 %v2449, 7
        %v2451 = vsub.s32 %v2448, %v2450
        %v2452 = vrot.slane %v2438, %v2451
        %v2453 = vcombine.low %v2429, %v2445
        %v2454 = vcombine.high %v2429, %v2445
        %v2456 = vunpack.c.l.s4 1934713408
        %v2457 = vunpack.c.0.s8 %v2456
        %v2458 = vlaneseq
        %v2459 = vshrl.u32 %v2458, 7
        %v2460 = vsub.s32 %v2457, %v2459
        %v2461 = vrot.slane %v2453, %v2460
        %v2463 = vunpack.c.l.s4 1934713408
        %v2464 = vunpack.c.0.s8 %v2463
        %v2465 = vlaneseq
        %v2466 = vshrl.u32 %v2465, 7
        %v2467 = vsub.s32 %v2464, %v2466
        %v2468 = vrot.slane %v2454, %v2467
        %v2469 = vcombine.low %v2436, %v2452
        %v2470 = vcombine.high %v2436, %v2452
        %v2472 = vunpack.c.l.s4 1934713408
        %v2473 = vunpack.c.0.s8 %v2472
        %v2474 = vlaneseq
        %v2475 = vshrl.u32 %v2474, 7
        %v2476 = vsub.s32 %v2473, %v2475
        %v2477 = vrot.slane %v2469, %v2476
        %v2479 = vunpack.c.l.s4 1934713408
        %v2480 = vunpack.c.0.s8 %v2479
        %v2481 = vlaneseq
        %v2482 = vshrl.u32 %v2481, 7
        %v2483 = vsub.s32 %v2480, %v2482
        %v2484 = vrot.slane %v2470, %v2483
        %v2485 = vcombine.high %v2461, 0.0
        %v2486 = vcombine.high %v2468, 0.0
        %v2487 = vcombine.high %v2477, 0.0
        %v2488 = vcombine.high %v2484, 0.0
        %v2489 = vcombine.low %v2400, %v2408
        %v2490 = vcombine.high %v2400, %v2408
        %v2492 = vunpack.c.l.s4 1983009808
        %v2493 = vunpack.c.0.s8 %v2492
        %v2494 = vlaneseq
        %v2495 = vshrl.u32 %v2494, 7
        %v2496 = vsub.s32 %v2493, %v2495
        %v2497 = vrot.slane %v2489, %v2496
        %v2499 = vunpack.c.l.s4 1983009808
        %v2500 = vunpack.c.0.s8 %v2499
        %v2501 = vlaneseq
        %v2502 = vshrl.u32 %v2501, 7
        %v2503 = vsub.s32 %v2500, %v2502
        %v2504 = vrot.slane %v2490, %v2503
        %v2505 = vcombine.low %v2404, %v2412
        %v2506 = vcombine.high %v2404, %v2412
        %v2508 = vunpack.c.l.s4 1983009808
        %v2509 = vunpack.c.0.s8 %v2508
        %v2510 = vlaneseq
        %v2511 = vshrl.u32 %v2510, 7
        %v2512 = vsub.s32 %v2509, %v2511
        %v2513 = vrot.slane %v2505, %v2512
        %v2515 = vunpack.c.l.s4 1983009808
        %v2516 = vunpack.c.0.s8 %v2515
        %v2517 = vlaneseq
        %v2518 = vshrl.u32 %v2517, 7
        %v2519 = vsub.s32 %v2516, %v2518
        %v2520 = vrot.slane %v2506, %v2519
        %v2521 = vcombine.low %v2497, %v2513
        %v2522 = vcombine.high %v2497, %v2513
        %v2524 = vunpack.c.l.s4 1934713408
        %v2525 = vunpack.c.0.s8 %v2524
        %v2526 = vlaneseq
        %v2527 = vshrl.u32 %v2526, 7
        %v2528 = vsub.s32 %v2525, %v2527
        %v2529 = vrot.slane %v2521, %v2528
        %v2531 = vunpack.c.l.s4 1934713408
        %v2532 = vunpack.c.0.s8 %v2531
        %v2533 = vlaneseq
        %v2534 = vshrl.u32 %v2533, 7
        %v2535 = vsub.s32 %v2532, %v2534
        %v2536 = vrot.slane %v2522, %v2535
        %v2537 = vcombine.low %v2504, %v2520
        %v2538 = vcombine.high %v2504, %v2520
        %v2540 = vunpack.c.l.s4 1934713408
        %v2541 = vunpack.c.0.s8 %v2540
        %v2542 = vlaneseq
        %v2543 = vshrl.u32 %v2542, 7
        %v2544 = vsub.s32 %v2541, %v2543
        %v2545 = vrot.slane %v2537, %v2544
        %v2547 = vunpack.c.l.s4 1934713408
        %v2548 = vunpack.c.0.s8 %v2547
        %v2549 = vlaneseq
        %v2550 = vshrl.u32 %v2549, 7
        %v2551 = vsub.s32 %v2548, %v2550
        %v2552 = vrot.slane %v2538, %v2551
        %v2553 = vcombine.high %v2529, 0.0
        %v2554 = vcombine.high %v2536, 0.0
        %v2555 = vcombine.high %v2545, 0.0
        %v2556 = vcombine.high %v2552, 0.0
        %2558 = vrot.lane.b32.xlu0 %v2485, 16
        %v2559 = vpop.permute.xlu0 %2558
        %2562 = vrot.lane.b32.xlu0 %v2468, 32
        %v2563 = vpop.permute.xlu0 %2562
        %2566 = vrot.lane.b32.xlu0 %v2486, 48
        %v2567 = vpop.permute.xlu0 %2566
        %2570 = vrot.lane.b32.xlu0 %v2477, 64
        %v2571 = vpop.permute.xlu0 %2570
        %2574 = vrot.lane.b32.xlu0 %v2487, 80
        %v2575 = vpop.permute.xlu0 %2574
        %2578 = vrot.lane.b32.xlu0 %v2484, 96
        %v2579 = vpop.permute.xlu0 %2578
        %2582 = vrot.lane.b32.xlu0 %v2488, 112
        %v2583 = vpop.permute.xlu0 %2582
        %2586 = vrot.lane.b32.xlu0 %v2553, 16
        %v2587 = vpop.permute.xlu0 %2586
        %2590 = vrot.lane.b32.xlu0 %v2536, 32
        %v2591 = vpop.permute.xlu0 %2590
        %2594 = vrot.lane.b32.xlu0 %v2554, 48
        %v2595 = vpop.permute.xlu0 %2594
        %2598 = vrot.lane.b32.xlu0 %v2545, 64
        %v2599 = vpop.permute.xlu0 %2598
        %2602 = vrot.lane.b32.xlu0 %v2555, 80
        %v2603 = vpop.permute.xlu0 %2602
        %2606 = vrot.lane.b32.xlu0 %v2552, 96
        %v2607 = vpop.permute.xlu0 %2606
        %2610 = vrot.lane.b32.xlu0 %v2556, 112
        %v2611 = vpop.permute.xlu0 %2610
        %v2613 = vsel %vm774, %v2461, %v2559
        %v2614 = vsel %vm776, %v2613, %v2563
        %v2615 = vsel %vm778, %v2614, %v2567
        %v2616 = vsel %vm780, %v2615, %v2571
        %v2617 = vsel %vm782, %v2616, %v2575
        %v2618 = vsel %vm784, %v2617, %v2579
        %v2619 = vsel %vm786, %v2618, %v2583
        %v2620 = vsel %vm774, %v2529, %v2587
        %v2621 = vsel %vm776, %v2620, %v2591
        %v2622 = vsel %vm778, %v2621, %v2595
        %v2623 = vsel %vm780, %v2622, %v2599
        %v2624 = vsel %vm782, %v2623, %v2603
        %v2625 = vsel %vm784, %v2624, %v2607
        %v2626 = vsel %vm786, %v2625, %v2611
        %v2629 = vrot.slane %v1025, 4
        %v2630 = vrot.slane %v1032, 4
        %v2635 = vrot.slane %v1469, 4
        %v2636 = vrot.slane %v1476, 4
        %v2641 = vrot.slane %v1937, 4
        %v2642 = vrot.slane %v1944, 4
        %v2647 = vrot.slane %v2389, 4
        %v2648 = vrot.slane %v2396, 4
        %vm2651 = vcmask 1043456
        %v2652 = vsel %vm2651, %v787, %v2629
        %v2653 = vsel %vm2651, %v794, %v2630
        %v2654 = vsel %vm2651, %v1255, %v2635
        %v2655 = vsel %vm2651, %v1262, %v2636
        %v2656 = vsel %vm2651, %v1707, %v2641
        %v2657 = vsel %vm2651, %v1714, %v2642
        %v2658 = vsel %vm2651, %v2151, %v2647
        %v2659 = vsel %vm2651, %v2158, %v2648
        %v2660 = vld [vmem:[#allocation7] sm:$0xff]
        %vm2661 = vcmask 293888
        %v2663 = vsel %vm2661, %v2660, 0
        %v2666 = vsel %vm2651, %v2619, 0
        %v2669 = vsel %vm2651, %v2626, 0
        %2671 = vmatprep.subr.mxu0 0.0
        %2672 = vmatpush1.msra.mxu0 0.0
        %2673 = vmatprep.subr.mxu0 0.0
        %2674 = vmatpush1.msra.mxu0 0.0
        %2675 = vmatprep.subr.mxu0 0.0
        %2676 = vmatpush1.msra.mxu0 0.0
        %2677 = vmatprep.subr.mxu0 0.0
        %2678 = vmatpush1.msra.mxu0 0.0
        %2679 = vmatprep.subr.mxu0 0.0
        %2680 = vmatpush1.msra.mxu0 0.0
        %2681 = vmatprep.subr.mxu0 0.0
        %2682 = vmatpush1.msra.mxu0 0.0
        %2683 = vmatprep.subr.mxu0 0.0
        %2684 = vmatpush1.msra.mxu0 0.0
        %2685 = vmatprep.subr.mxu0 0.0
        %2686 = vmatpush1.msra.mxu0 0.0
        %2687 = vmatprep.subr.mxu0 0.0
        %2688 = vmatpush1.msra.mxu0 0.0
        %2689 = vmatprep.subr.mxu0 0.0
        %2690 = vmatpush1.msra.mxu0 0.0
        %2691 = vmatprep.subr.mxu0 0.0
        %2692 = vmatpush1.msra.mxu0 0.0
        %2693 = vmatprep.subr.mxu0 %v2669
        %2694 = vmatpush1.msra.mxu0 %v2666
        %2695 = vmatprep.subr.mxu0 %v2659
        %2696 = vmatpush1.msra.mxu0 %v2658
        %2697 = vmatprep.subr.mxu0 %v2657
        %2698 = vmatpush1.msra.mxu0 %v2656
        %2699 = vmatprep.subr.mxu0 %v2655
        %2700 = vmatpush1.msra.mxu0 %v2654
        %2701 = vmatprep.subr.mxu0 %v2653
        %2702 = vmatpush1.msra.mxu0 %v2652
        %2703 = vmatprep.subr.mxu0 0.0
        %2704 = vmatpush2.msra.mxu0 0.0
        %2705 = vmatprep.subr.mxu0 0.0
        %2706 = vmatpush2.msra.mxu0 0.0
        %2707 = vmatprep.subr.mxu0 0.0
        %2708 = vmatpush2.msra.mxu0 0.0
        %2709 = vmatprep.subr.mxu0 0.0
        %2710 = vmatpush2.msra.mxu0 0.0
        %2711 = vmatprep.subr.mxu0 0.0
        %2712 = vmatpush2.msra.mxu0 0.0
        %2713 = vmatprep.subr.mxu0 0.0
        %2714 = vmatpush2.msra.mxu0 0.0
        %2715 = vmatprep.subr.mxu0 0.0
        %2716 = vmatpush2.msra.mxu0 0.0
        %2717 = vmatprep.subr.mxu0 0.0
        %2718 = vmatpush2.msra.mxu0 0.0
        %2719 = vmatprep.subr.mxu0 0.0
        %2720 = vmatpush2.msra.mxu0 0.0
        %2721 = vmatprep.subr.mxu0 0.0
        %2722 = vmatpush2.msra.mxu0 0.0
        %2723 = vmatprep.subr.mxu0 0.0
        %2724 = vmatpush2.msra.mxu0 0.0
        %2725 = vmatprep.subr.mxu0 0.0
        %2726 = vmatpush2.msra.mxu0 0.0
        %2727 = vmatprep.subr.mxu0 0.0
        %2728 = vmatpush2.msra.mxu0 0.0
        %2729 = vmatprep.subr.mxu0 0.0
        %2730 = vmatpush2.msra.mxu0 0.0
        %2731 = vmatprep.subr.mxu0 0.0
        %2732 = vmatpush2.msra.mxu0 0.0
        %2733 = vmatprep.subr.mxu0 0.0
        %2734 = vmatpush2.msra.mxu0 0.0
        %2735 = vmatprep.mubr.f32.mxu0 0.0
        %2736 = vmatmul.mubr.f32.gmra.mxu0 %v2663
        %v2737 = vpop.f32.mrf.mxu0
        %v2738 = vadd.f32 0.0, %v2737
        %v2739 = vpop.f32.mrf.mxu0
        %v2740 = vadd.f32 0.0, %v2739
        %2741 = vdwg.mxu0
        %v2742 = vmax.f32 %v2738, 0.0
        %v2743 = vmax.f32 %v2740, 0.0
        %2745 = vrot.lane.b32.xlu0 %v2742, 112
        %v2746 = vpop.permute.xlu0 %2745
        %2748 = vrot.lane.b32.xlu0 %v2742, 96
        %v2749 = vpop.permute.xlu0 %2748
        %2751 = vrot.lane.b32.xlu0 %v2742, 80
        %v2752 = vpop.permute.xlu0 %2751
        %2754 = vrot.lane.b32.xlu0 %v2742, 64
        %v2755 = vpop.permute.xlu0 %2754
        %2757 = vrot.lane.b32.xlu0 %v2742, 48
        %v2758 = vpop.permute.xlu0 %2757
        %2760 = vrot.lane.b32.xlu0 %v2742, 32
        %v2761 = vpop.permute.xlu0 %2760
        %2763 = vrot.lane.b32.xlu0 %v2742, 16
        %v2764 = vpop.permute.xlu0 %2763
        %2767 = vrot.lane.b32.xlu0 %v2743, 112
        %v2768 = vpop.permute.xlu0 %2767
        %2770 = vrot.lane.b32.xlu0 %v2743, 96
        %v2771 = vpop.permute.xlu0 %2770
        %2773 = vrot.lane.b32.xlu0 %v2743, 80
        %v2774 = vpop.permute.xlu0 %2773
        %2776 = vrot.lane.b32.xlu0 %v2743, 64
        %v2777 = vpop.permute.xlu0 %2776
        %2779 = vrot.lane.b32.xlu0 %v2743, 48
        %v2780 = vpop.permute.xlu0 %2779
        %2782 = vrot.lane.b32.xlu0 %v2743, 32
        %v2783 = vpop.permute.xlu0 %2782
        %2785 = vrot.lane.b32.xlu0 %v2743, 16
        %v2786 = vpop.permute.xlu0 %2785
        %v2788 = vcombine.low %v2742, %v2749
        %v2789 = vcombine.high %v2742, %v2749
        %v2791 = vunpack.c.l.s4 1983009808
        %v2792 = vunpack.c.0.s8 %v2791
        %v2793 = vlaneseq
        %v2794 = vshrl.u32 %v2793, 7
        %v2795 = vsub.s32 %v2792, %v2794
        %v2796 = vrot.slane %v2788, %v2795
        %v2798 = vunpack.c.l.s4 1983009808
        %v2799 = vunpack.c.0.s8 %v2798
        %v2800 = vlaneseq
        %v2801 = vshrl.u32 %v2800, 7
        %v2802 = vsub.s32 %v2799, %v2801
        %v2803 = vrot.slane %v2789, %v2802
        %v2804 = vcombine.low %v2746, %v2752
        %v2805 = vcombine.high %v2746, %v2752
        %v2807 = vunpack.c.l.s4 1983009808
        %v2808 = vunpack.c.0.s8 %v2807
        %v2809 = vlaneseq
        %v2810 = vshrl.u32 %v2809, 7
        %v2811 = vsub.s32 %v2808, %v2810
        %v2812 = vrot.slane %v2804, %v2811
        %v2814 = vunpack.c.l.s4 1983009808
        %v2815 = vunpack.c.0.s8 %v2814
        %v2816 = vlaneseq
        %v2817 = vshrl.u32 %v2816, 7
        %v2818 = vsub.s32 %v2815, %v2817
        %v2819 = vrot.slane %v2805, %v2818
        %v2820 = vcombine.low %v2755, %v2761
        %v2821 = vcombine.high %v2755, %v2761
        %v2823 = vunpack.c.l.s4 1983009808
        %v2824 = vunpack.c.0.s8 %v2823
        %v2825 = vlaneseq
        %v2826 = vshrl.u32 %v2825, 7
        %v2827 = vsub.s32 %v2824, %v2826
        %v2828 = vrot.slane %v2820, %v2827
        %v2830 = vunpack.c.l.s4 1983009808
        %v2831 = vunpack.c.0.s8 %v2830
        %v2832 = vlaneseq
        %v2833 = vshrl.u32 %v2832, 7
        %v2834 = vsub.s32 %v2831, %v2833
        %v2835 = vrot.slane %v2821, %v2834
        %v2836 = vcombine.low %v2758, %v2764
        %v2837 = vcombine.high %v2758, %v2764
        %v2839 = vunpack.c.l.s4 1983009808
        %v2840 = vunpack.c.0.s8 %v2839
        %v2841 = vlaneseq
        %v2842 = vshrl.u32 %v2841, 7
        %v2843 = vsub.s32 %v2840, %v2842
        %v2844 = vrot.slane %v2836, %v2843
        %v2846 = vunpack.c.l.s4 1983009808
        %v2847 = vunpack.c.0.s8 %v2846
        %v2848 = vlaneseq
        %v2849 = vshrl.u32 %v2848, 7
        %v2850 = vsub.s32 %v2847, %v2849
        %v2851 = vrot.slane %v2837, %v2850
        %v2852 = vcombine.low %v2796, %v2812
        %v2853 = vcombine.high %v2796, %v2812
        %v2855 = vunpack.c.l.s4 1934713408
        %v2856 = vunpack.c.0.s8 %v2855
        %v2857 = vlaneseq
        %v2858 = vshrl.u32 %v2857, 7
        %v2859 = vsub.s32 %v2856, %v2858
        %v2860 = vrot.slane %v2852, %v2859
        %v2862 = vunpack.c.l.s4 1934713408
        %v2863 = vunpack.c.0.s8 %v2862
        %v2864 = vlaneseq
        %v2865 = vshrl.u32 %v2864, 7
        %v2866 = vsub.s32 %v2863, %v2865
        %v2867 = vrot.slane %v2853, %v2866
        %v2868 = vcombine.low %v2803, %v2819
        %v2869 = vcombine.high %v2803, %v2819
        %v2871 = vunpack.c.l.s4 1934713408
        %v2872 = vunpack.c.0.s8 %v2871
        %v2873 = vlaneseq
        %v2874 = vshrl.u32 %v2873, 7
        %v2875 = vsub.s32 %v2872, %v2874
        %v2876 = vrot.slane %v2868, %v2875
        %v2878 = vunpack.c.l.s4 1934713408
        %v2879 = vunpack.c.0.s8 %v2878
        %v2880 = vlaneseq
        %v2881 = vshrl.u32 %v2880, 7
        %v2882 = vsub.s32 %v2879, %v2881
        %v2883 = vrot.slane %v2869, %v2882
        %v2884 = vcombine.low %v2828, %v2844
        %v2885 = vcombine.high %v2828, %v2844
        %v2887 = vunpack.c.l.s4 1934713408
        %v2888 = vunpack.c.0.s8 %v2887
        %v2889 = vlaneseq
        %v2890 = vshrl.u32 %v2889, 7
        %v2891 = vsub.s32 %v2888, %v2890
        %v2892 = vrot.slane %v2884, %v2891
        %v2894 = vunpack.c.l.s4 1934713408
        %v2895 = vunpack.c.0.s8 %v2894
        %v2896 = vlaneseq
        %v2897 = vshrl.u32 %v2896, 7
        %v2898 = vsub.s32 %v2895, %v2897
        %v2899 = vrot.slane %v2885, %v2898
        %v2900 = vcombine.low %v2835, %v2851
        %v2901 = vcombine.high %v2835, %v2851
        %v2903 = vunpack.c.l.s4 1934713408
        %v2904 = vunpack.c.0.s8 %v2903
        %v2905 = vlaneseq
        %v2906 = vshrl.u32 %v2905, 7
        %v2907 = vsub.s32 %v2904, %v2906
        %v2908 = vrot.slane %v2900, %v2907
        %v2910 = vunpack.c.l.s4 1934713408
        %v2911 = vunpack.c.0.s8 %v2910
        %v2912 = vlaneseq
        %v2913 = vshrl.u32 %v2912, 7
        %v2914 = vsub.s32 %v2911, %v2913
        %v2915 = vrot.slane %v2901, %v2914
        %v2916 = vcombine.low %v2860, %v2892
        %v2917 = vcombine.high %v2860, %v2892
        %v2918 = vcombine.low %v2867, %v2899
        %v2919 = vcombine.high %v2867, %v2899
        %v2920 = vcombine.low %v2876, %v2908
        %v2921 = vcombine.high %v2876, %v2908
        %v2922 = vcombine.low %v2883, %v2915
        %v2923 = vcombine.high %v2883, %v2915
        %v2924 = vcombine.low %v2743, %v2771
        %v2925 = vcombine.high %v2743, %v2771
        %v2927 = vunpack.c.l.s4 1983009808
        %v2928 = vunpack.c.0.s8 %v2927
        %v2929 = vlaneseq
        %v2930 = vshrl.u32 %v2929, 7
        %v2931 = vsub.s32 %v2928, %v2930
        %v2932 = vrot.slane %v2924, %v2931
        %v2934 = vunpack.c.l.s4 1983009808
        %v2935 = vunpack.c.0.s8 %v2934
        %v2936 = vlaneseq
        %v2937 = vshrl.u32 %v2936, 7
        %v2938 = vsub.s32 %v2935, %v2937
        %v2939 = vrot.slane %v2925, %v2938
        %v2940 = vcombine.low %v2768, %v2774
        %v2941 = vcombine.high %v2768, %v2774
        %v2943 = vunpack.c.l.s4 1983009808
        %v2944 = vunpack.c.0.s8 %v2943
        %v2945 = vlaneseq
        %v2946 = vshrl.u32 %v2945, 7
        %v2947 = vsub.s32 %v2944, %v2946
        %v2948 = vrot.slane %v2940, %v2947
        %v2950 = vunpack.c.l.s4 1983009808
        %v2951 = vunpack.c.0.s8 %v2950
        %v2952 = vlaneseq
        %v2953 = vshrl.u32 %v2952, 7
        %v2954 = vsub.s32 %v2951, %v2953
        %v2955 = vrot.slane %v2941, %v2954
        %v2956 = vcombine.low %v2777, %v2783
        %v2957 = vcombine.high %v2777, %v2783
        %v2959 = vunpack.c.l.s4 1983009808
        %v2960 = vunpack.c.0.s8 %v2959
        %v2961 = vlaneseq
        %v2962 = vshrl.u32 %v2961, 7
        %v2963 = vsub.s32 %v2960, %v2962
        %v2964 = vrot.slane %v2956, %v2963
        %v2966 = vunpack.c.l.s4 1983009808
        %v2967 = vunpack.c.0.s8 %v2966
        %v2968 = vlaneseq
        %v2969 = vshrl.u32 %v2968, 7
        %v2970 = vsub.s32 %v2967, %v2969
        %v2971 = vrot.slane %v2957, %v2970
        %v2972 = vcombine.low %v2780, %v2786
        %v2973 = vcombine.high %v2780, %v2786
        %v2975 = vunpack.c.l.s4 1983009808
        %v2976 = vunpack.c.0.s8 %v2975
        %v2977 = vlaneseq
        %v2978 = vshrl.u32 %v2977, 7
        %v2979 = vsub.s32 %v2976, %v2978
        %v2980 = vrot.slane %v2972, %v2979
        %v2982 = vunpack.c.l.s4 1983009808
        %v2983 = vunpack.c.0.s8 %v2982
        %v2984 = vlaneseq
        %v2985 = vshrl.u32 %v2984, 7
        %v2986 = vsub.s32 %v2983, %v2985
        %v2987 = vrot.slane %v2973, %v2986
        %v2988 = vcombine.low %v2932, %v2948
        %v2989 = vcombine.high %v2932, %v2948
        %v2991 = vunpack.c.l.s4 1934713408
        %v2992 = vunpack.c.0.s8 %v2991
        %v2993 = vlaneseq
        %v2994 = vshrl.u32 %v2993, 7
        %v2995 = vsub.s32 %v2992, %v2994
        %v2996 = vrot.slane %v2988, %v2995
        %v2998 = vunpack.c.l.s4 1934713408
        %v2999 = vunpack.c.0.s8 %v2998
        %v3000 = vlaneseq
        %v3001 = vshrl.u32 %v3000, 7
        %v3002 = vsub.s32 %v2999, %v3001
        %v3003 = vrot.slane %v2989, %v3002
        %v3004 = vcombine.low %v2939, %v2955
        %v3005 = vcombine.high %v2939, %v2955
        %v3007 = vunpack.c.l.s4 1934713408
        %v3008 = vunpack.c.0.s8 %v3007
        %v3009 = vlaneseq
        %v3010 = vshrl.u32 %v3009, 7
        %v3011 = vsub.s32 %v3008, %v3010
        %v3012 = vrot.slane %v3004, %v3011
        %v3014 = vunpack.c.l.s4 1934713408
        %v3015 = vunpack.c.0.s8 %v3014
        %v3016 = vlaneseq
        %v3017 = vshrl.u32 %v3016, 7
        %v3018 = vsub.s32 %v3015, %v3017
        %v3019 = vrot.slane %v3005, %v3018
        %v3020 = vcombine.low %v2964, %v2980
        %v3021 = vcombine.high %v2964, %v2980
        %v3023 = vunpack.c.l.s4 1934713408
        %v3024 = vunpack.c.0.s8 %v3023
        %v3025 = vlaneseq
        %v3026 = vshrl.u32 %v3025, 7
        %v3027 = vsub.s32 %v3024, %v3026
        %v3028 = vrot.slane %v3020, %v3027
        %v3030 = vunpack.c.l.s4 1934713408
        %v3031 = vunpack.c.0.s8 %v3030
        %v3032 = vlaneseq
        %v3033 = vshrl.u32 %v3032, 7
        %v3034 = vsub.s32 %v3031, %v3033
        %v3035 = vrot.slane %v3021, %v3034
        %v3036 = vcombine.low %v2971, %v2987
        %v3037 = vcombine.high %v2971, %v2987
        %v3039 = vunpack.c.l.s4 1934713408
        %v3040 = vunpack.c.0.s8 %v3039
        %v3041 = vlaneseq
        %v3042 = vshrl.u32 %v3041, 7
        %v3043 = vsub.s32 %v3040, %v3042
        %v3044 = vrot.slane %v3036, %v3043
        %v3046 = vunpack.c.l.s4 1934713408
        %v3047 = vunpack.c.0.s8 %v3046
        %v3048 = vlaneseq
        %v3049 = vshrl.u32 %v3048, 7
        %v3050 = vsub.s32 %v3047, %v3049
        %v3051 = vrot.slane %v3037, %v3050
        %v3052 = vcombine.low %v2996, %v3028
        %v3053 = vcombine.high %v2996, %v3028
        %v3054 = vcombine.low %v3003, %v3035
        %v3055 = vcombine.high %v3003, %v3035
        %v3056 = vcombine.low %v3012, %v3044
        %v3057 = vcombine.high %v3012, %v3044
        %v3058 = vcombine.low %v3019, %v3051
        %v3059 = vcombine.high %v3019, %v3051
        %3076 = vrot.lane.b32.xlu0 %v2916, 1
        %v3077 = vpop.permute.xlu0 %3076
        %3078 = vrot.lane.b32.xlu0 %v3052, 1
        %v3079 = vpop.permute.xlu0 %3078
        %3080 = vrot.lane.b32.xlu0 %v2917, 1
        %v3081 = vpop.permute.xlu0 %3080
        %3082 = vrot.lane.b32.xlu0 %v3053, 1
        %v3083 = vpop.permute.xlu0 %3082
        %3084 = vrot.lane.b32.xlu0 %v2918, 1
        %v3085 = vpop.permute.xlu0 %3084
        %3086 = vrot.lane.b32.xlu0 %v3054, 1
        %v3087 = vpop.permute.xlu0 %3086
        %3088 = vrot.lane.b32.xlu0 %v2919, 1
        %v3089 = vpop.permute.xlu0 %3088
        %3090 = vrot.lane.b32.xlu0 %v3055, 1
        %v3091 = vpop.permute.xlu0 %3090
        %3092 = vrot.lane.b32.xlu0 %v2920, 1
        %v3093 = vpop.permute.xlu0 %3092
        %3094 = vrot.lane.b32.xlu0 %v3056, 1
        %v3095 = vpop.permute.xlu0 %3094
        %3096 = vrot.lane.b32.xlu0 %v2921, 1
        %v3097 = vpop.permute.xlu0 %3096
        %3098 = vrot.lane.b32.xlu0 %v3057, 1
        %v3099 = vpop.permute.xlu0 %3098
        %3100 = vrot.lane.b32.xlu0 %v2922, 1
        %v3101 = vpop.permute.xlu0 %3100
        %3102 = vrot.lane.b32.xlu0 %v3058, 1
        %v3103 = vpop.permute.xlu0 %3102
        %3104 = vrot.lane.b32.xlu0 %v2923, 1
        %v3105 = vpop.permute.xlu0 %3104
        %3106 = vrot.lane.b32.xlu0 %v3059, 1
        %v3107 = vpop.permute.xlu0 %3106
        %3124 = vst.msk [vmem:[#allocation3 + $0x1] sm:$0xff] %vm565, %v3077
        %3125 = vst.msk [vmem:[#allocation3 + $0x9] sm:$0xff] %vm565, %v3079
        %3126 = vst.msk [vmem:[#allocation3 + $0x19] sm:$0xff] %vm565, %v3081
        %3127 = vst.msk [vmem:[#allocation3 + $0x21] sm:$0xff] %vm565, %v3083
        %3128 = vst.msk [vmem:[#allocation3 + $0x31] sm:$0xff] %vm565, %v3085
        %3129 = vst.msk [vmem:[#allocation3 + $0x39] sm:$0xff] %vm565, %v3087
        %3130 = vst.msk [vmem:[#allocation3 + $0x49] sm:$0xff] %vm565, %v3089
        %3131 = vst.msk [vmem:[#allocation3 + $0x51] sm:$0xff] %vm565, %v3091
        %3132 = vst.msk [vmem:[#allocation3 + $0x61] sm:$0xff] %vm565, %v3093
        %3133 = vst.msk [vmem:[#allocation3 + $0x69] sm:$0xff] %vm565, %v3095
        %3134 = vst.msk [vmem:[#allocation3 + $0x79] sm:$0xff] %vm565, %v3097
        %3135 = vst.msk [vmem:[#allocation3 + $0x81] sm:$0xff] %vm565, %v3099
        %3136 = vst.msk [vmem:[#allocation3 + $0x91] sm:$0xff] %vm565, %v3101
        %3137 = vst.msk [vmem:[#allocation3 + $0x99] sm:$0xff] %vm565, %v3103
        %3138 = vst.msk [vmem:[#allocation3 + $0xa9] sm:$0xff] %vm565, %v3105
        %3139 = vst.msk [vmem:[#allocation3 + $0xb1] sm:$0xff] %vm565, %v3107
        %v3140 = vld [vmem:[%s3] sm:$0xf]
        %v3141 = vld [vmem:[#allocation9] sm:$0xf]
        %v3142 = vld [vmem:[#allocation3] sm:$0xff]
        %v3143 = vld [vmem:[#allocation3 + $0x8] sm:$0xff]
        %v3144 = vld [vmem:[#allocation3 + $0x18] sm:$0xff]
        %v3145 = vld [vmem:[#allocation3 + $0x20] sm:$0xff]
        %v3146 = vld [vmem:[#allocation3 + $0x30] sm:$0xff]
        %v3147 = vld [vmem:[#allocation3 + $0x38] sm:$0xff]
        %v3148 = vld [vmem:[#allocation3 + $0x48] sm:$0xff]
        %v3149 = vld [vmem:[#allocation3 + $0x50] sm:$0xff]
        %v3150 = vld [vmem:[#allocation3 + $0x60] sm:$0xff]
        %v3151 = vld [vmem:[#allocation3 + $0x68] sm:$0xff]
        %v3152 = vld [vmem:[#allocation3 + $0x78] sm:$0xff]
        %v3153 = vld [vmem:[#allocation3 + $0x80] sm:$0xff]
        %v3154 = vld [vmem:[#allocation3 + $0x90] sm:$0xff]
        %v3155 = vld [vmem:[#allocation3 + $0x98] sm:$0xff]
        %v3156 = vld [vmem:[#allocation3 + $0xa8] sm:$0xff]
        %v3157 = vld [vmem:[#allocation3 + $0xb0] sm:$0xff]
        %v3158 = vcombine.low %v3142, %v3146
        %v3159 = vcombine.high %v3142, %v3146
        %v3161 = vunpack.c.l.s4 1983009808
        %v3162 = vunpack.c.0.s8 %v3161
        %v3163 = vlaneseq
        %v3164 = vshrl.u32 %v3163, 7
        %v3165 = vsub.s32 %v3162, %v3164
        %v3166 = vrot.slane %v3158, %v3165
        %v3168 = vunpack.c.l.s4 1983009808
        %v3169 = vunpack.c.0.s8 %v3168
        %v3170 = vlaneseq
        %v3171 = vshrl.u32 %v3170, 7
        %v3172 = vsub.s32 %v3169, %v3171
        %v3173 = vrot.slane %v3159, %v3172
        %v3174 = vcombine.low %v3144, %v3148
        %v3175 = vcombine.high %v3144, %v3148
        %v3177 = vunpack.c.l.s4 1983009808
        %v3178 = vunpack.c.0.s8 %v3177
        %v3179 = vlaneseq
        %v3180 = vshrl.u32 %v3179, 7
        %v3181 = vsub.s32 %v3178, %v3180
        %v3182 = vrot.slane %v3174, %v3181
        %v3184 = vunpack.c.l.s4 1983009808
        %v3185 = vunpack.c.0.s8 %v3184
        %v3186 = vlaneseq
        %v3187 = vshrl.u32 %v3186, 7
        %v3188 = vsub.s32 %v3185, %v3187
        %v3189 = vrot.slane %v3175, %v3188
        %v3190 = vcombine.low %v3150, %v3154
        %v3191 = vcombine.high %v3150, %v3154
        %v3193 = vunpack.c.l.s4 1983009808
        %v3194 = vunpack.c.0.s8 %v3193
        %v3195 = vlaneseq
        %v3196 = vshrl.u32 %v3195, 7
        %v3197 = vsub.s32 %v3194, %v3196
        %v3198 = vrot.slane %v3190, %v3197
        %v3200 = vunpack.c.l.s4 1983009808
        %v3201 = vunpack.c.0.s8 %v3200
        %v3202 = vlaneseq
        %v3203 = vshrl.u32 %v3202, 7
        %v3204 = vsub.s32 %v3201, %v3203
        %v3205 = vrot.slane %v3191, %v3204
        %v3206 = vcombine.low %v3152, %v3156
        %v3207 = vcombine.high %v3152, %v3156
        %v3209 = vunpack.c.l.s4 1983009808
        %v3210 = vunpack.c.0.s8 %v3209
        %v3211 = vlaneseq
        %v3212 = vshrl.u32 %v3211, 7
        %v3213 = vsub.s32 %v3210, %v3212
        %v3214 = vrot.slane %v3206, %v3213
        %v3216 = vunpack.c.l.s4 1983009808
        %v3217 = vunpack.c.0.s8 %v3216
        %v3218 = vlaneseq
        %v3219 = vshrl.u32 %v3218, 7
        %v3220 = vsub.s32 %v3217, %v3219
        %v3221 = vrot.slane %v3207, %v3220
        %v3222 = vcombine.low %v3166, %v3182
        %v3223 = vcombine.high %v3166, %v3182
        %v3225 = vunpack.c.l.s4 1934713408
        %v3226 = vunpack.c.0.s8 %v3225
        %v3227 = vlaneseq
        %v3228 = vshrl.u32 %v3227, 7
        %v3229 = vsub.s32 %v3226, %v3228
        %v3230 = vrot.slane %v3222, %v3229
        %v3232 = vunpack.c.l.s4 1934713408
        %v3233 = vunpack.c.0.s8 %v3232
        %v3234 = vlaneseq
        %v3235 = vshrl.u32 %v3234, 7
        %v3236 = vsub.s32 %v3233, %v3235
        %v3237 = vrot.slane %v3223, %v3236
        %v3238 = vcombine.low %v3173, %v3189
        %v3239 = vcombine.high %v3173, %v3189
        %v3241 = vunpack.c.l.s4 1934713408
        %v3242 = vunpack.c.0.s8 %v3241
        %v3243 = vlaneseq
        %v3244 = vshrl.u32 %v3243, 7
        %v3245 = vsub.s32 %v3242, %v3244
        %v3246 = vrot.slane %v3238, %v3245
        %v3248 = vunpack.c.l.s4 1934713408
        %v3249 = vunpack.c.0.s8 %v3248
        %v3250 = vlaneseq
        %v3251 = vshrl.u32 %v3250, 7
        %v3252 = vsub.s32 %v3249, %v3251
        %v3253 = vrot.slane %v3239, %v3252
        %v3254 = vcombine.low %v3198, %v3214
        %v3255 = vcombine.high %v3198, %v3214
        %v3257 = vunpack.c.l.s4 1934713408
        %v3258 = vunpack.c.0.s8 %v3257
        %v3259 = vlaneseq
        %v3260 = vshrl.u32 %v3259, 7
        %v3261 = vsub.s32 %v3258, %v3260
        %v3262 = vrot.slane %v3254, %v3261
        %v3264 = vunpack.c.l.s4 1934713408
        %v3265 = vunpack.c.0.s8 %v3264
        %v3266 = vlaneseq
        %v3267 = vshrl.u32 %v3266, 7
        %v3268 = vsub.s32 %v3265, %v3267
        %v3269 = vrot.slane %v3255, %v3268
        %v3270 = vcombine.low %v3205, %v3221
        %v3271 = vcombine.high %v3205, %v3221
        %v3273 = vunpack.c.l.s4 1934713408
        %v3274 = vunpack.c.0.s8 %v3273
        %v3275 = vlaneseq
        %v3276 = vshrl.u32 %v3275, 7
        %v3277 = vsub.s32 %v3274, %v3276
        %v3278 = vrot.slane %v3270, %v3277
        %v3280 = vunpack.c.l.s4 1934713408
        %v3281 = vunpack.c.0.s8 %v3280
        %v3282 = vlaneseq
        %v3283 = vshrl.u32 %v3282, 7
        %v3284 = vsub.s32 %v3281, %v3283
        %v3285 = vrot.slane %v3271, %v3284
        %v3286 = vcombine.low %v3230, %v3262
        %v3287 = vcombine.high %v3230, %v3262
        %v3288 = vcombine.low %v3237, %v3269
        %v3289 = vcombine.high %v3237, %v3269
        %v3290 = vcombine.low %v3246, %v3278
        %v3291 = vcombine.high %v3246, %v3278
        %v3292 = vcombine.low %v3253, %v3285
        %v3293 = vcombine.high %v3253, %v3285
        %v3294 = vcombine.low %v3143, %v3147
        %v3295 = vcombine.high %v3143, %v3147
        %v3297 = vunpack.c.l.s4 1983009808
        %v3298 = vunpack.c.0.s8 %v3297
        %v3299 = vlaneseq
        %v3300 = vshrl.u32 %v3299, 7
        %v3301 = vsub.s32 %v3298, %v3300
        %v3302 = vrot.slane %v3294, %v3301
        %v3304 = vunpack.c.l.s4 1983009808
        %v3305 = vunpack.c.0.s8 %v3304
        %v3306 = vlaneseq
        %v3307 = vshrl.u32 %v3306, 7
        %v3308 = vsub.s32 %v3305, %v3307
        %v3309 = vrot.slane %v3295, %v3308
        %v3310 = vcombine.low %v3145, %v3149
        %v3311 = vcombine.high %v3145, %v3149
        %v3313 = vunpack.c.l.s4 1983009808
        %v3314 = vunpack.c.0.s8 %v3313
        %v3315 = vlaneseq
        %v3316 = vshrl.u32 %v3315, 7
        %v3317 = vsub.s32 %v3314, %v3316
        %v3318 = vrot.slane %v3310, %v3317
        %v3320 = vunpack.c.l.s4 1983009808
        %v3321 = vunpack.c.0.s8 %v3320
        %v3322 = vlaneseq
        %v3323 = vshrl.u32 %v3322, 7
        %v3324 = vsub.s32 %v3321, %v3323
        %v3325 = vrot.slane %v3311, %v3324
        %v3326 = vcombine.low %v3151, %v3155
        %v3327 = vcombine.high %v3151, %v3155
        %v3329 = vunpack.c.l.s4 1983009808
        %v3330 = vunpack.c.0.s8 %v3329
        %v3331 = vlaneseq
        %v3332 = vshrl.u32 %v3331, 7
        %v3333 = vsub.s32 %v3330, %v3332
        %v3334 = vrot.slane %v3326, %v3333
        %v3336 = vunpack.c.l.s4 1983009808
        %v3337 = vunpack.c.0.s8 %v3336
        %v3338 = vlaneseq
        %v3339 = vshrl.u32 %v3338, 7
        %v3340 = vsub.s32 %v3337, %v3339
        %v3341 = vrot.slane %v3327, %v3340
        %v3342 = vcombine.low %v3153, %v3157
        %v3343 = vcombine.high %v3153, %v3157
        %v3345 = vunpack.c.l.s4 1983009808
        %v3346 = vunpack.c.0.s8 %v3345
        %v3347 = vlaneseq
        %v3348 = vshrl.u32 %v3347, 7
        %v3349 = vsub.s32 %v3346, %v3348
        %v3350 = vrot.slane %v3342, %v3349
        %v3352 = vunpack.c.l.s4 1983009808
        %v3353 = vunpack.c.0.s8 %v3352
        %v3354 = vlaneseq
        %v3355 = vshrl.u32 %v3354, 7
        %v3356 = vsub.s32 %v3353, %v3355
        %v3357 = vrot.slane %v3343, %v3356
        %v3358 = vcombine.low %v3302, %v3318
        %v3359 = vcombine.high %v3302, %v3318
        %v3361 = vunpack.c.l.s4 1934713408
        %v3362 = vunpack.c.0.s8 %v3361
        %v3363 = vlaneseq
        %v3364 = vshrl.u32 %v3363, 7
        %v3365 = vsub.s32 %v3362, %v3364
        %v3366 = vrot.slane %v3358, %v3365
        %v3368 = vunpack.c.l.s4 1934713408
        %v3369 = vunpack.c.0.s8 %v3368
        %v3370 = vlaneseq
        %v3371 = vshrl.u32 %v3370, 7
        %v3372 = vsub.s32 %v3369, %v3371
        %v3373 = vrot.slane %v3359, %v3372
        %v3374 = vcombine.low %v3309, %v3325
        %v3375 = vcombine.high %v3309, %v3325
        %v3377 = vunpack.c.l.s4 1934713408
        %v3378 = vunpack.c.0.s8 %v3377
        %v3379 = vlaneseq
        %v3380 = vshrl.u32 %v3379, 7
        %v3381 = vsub.s32 %v3378, %v3380
        %v3382 = vrot.slane %v3374, %v3381
        %v3384 = vunpack.c.l.s4 1934713408
        %v3385 = vunpack.c.0.s8 %v3384
        %v3386 = vlaneseq
        %v3387 = vshrl.u32 %v3386, 7
        %v3388 = vsub.s32 %v3385, %v3387
        %v3389 = vrot.slane %v3375, %v3388
        %v3390 = vcombine.low %v3334, %v3350
        %v3391 = vcombine.high %v3334, %v3350
        %v3393 = vunpack.c.l.s4 1934713408
        %v3394 = vunpack.c.0.s8 %v3393
        %v3395 = vlaneseq
        %v3396 = vshrl.u32 %v3395, 7
        %v3397 = vsub.s32 %v3394, %v3396
        %v3398 = vrot.slane %v3390, %v3397
        %v3400 = vunpack.c.l.s4 1934713408
        %v3401 = vunpack.c.0.s8 %v3400
        %v3402 = vlaneseq
        %v3403 = vshrl.u32 %v3402, 7
        %v3404 = vsub.s32 %v3401, %v3403
        %v3405 = vrot.slane %v3391, %v3404
        %v3406 = vcombine.low %v3341, %v3357
        %v3407 = vcombine.high %v3341, %v3357
        %v3409 = vunpack.c.l.s4 1934713408
        %v3410 = vunpack.c.0.s8 %v3409
        %v3411 = vlaneseq
        %v3412 = vshrl.u32 %v3411, 7
        %v3413 = vsub.s32 %v3410, %v3412
        %v3414 = vrot.slane %v3406, %v3413
        %v3416 = vunpack.c.l.s4 1934713408
        %v3417 = vunpack.c.0.s8 %v3416
        %v3418 = vlaneseq
        %v3419 = vshrl.u32 %v3418, 7
        %v3420 = vsub.s32 %v3417, %v3419
        %v3421 = vrot.slane %v3407, %v3420
        %v3422 = vcombine.low %v3366, %v3398
        %v3423 = vcombine.high %v3366, %v3398
        %v3424 = vcombine.low %v3373, %v3405
        %v3425 = vcombine.high %v3373, %v3405
        %v3426 = vcombine.low %v3382, %v3414
        %v3427 = vcombine.high %v3382, %v3414
        %v3428 = vcombine.low %v3389, %v3421
        %v3429 = vcombine.high %v3389, %v3421
        %3431 = vrot.lane.b32.xlu0 %v3287, 16
        %v3432 = vpop.permute.xlu0 %3431
        %3435 = vrot.lane.b32.xlu0 %v3288, 32
        %v3436 = vpop.permute.xlu0 %3435
        %3439 = vrot.lane.b32.xlu0 %v3289, 48
        %v3440 = vpop.permute.xlu0 %3439
        %3443 = vrot.lane.b32.xlu0 %v3290, 64
        %v3444 = vpop.permute.xlu0 %3443
        %3447 = vrot.lane.b32.xlu0 %v3291, 80
        %v3448 = vpop.permute.xlu0 %3447
        %3451 = vrot.lane.b32.xlu0 %v3292, 96
        %v3452 = vpop.permute.xlu0 %3451
        %3455 = vrot.lane.b32.xlu0 %v3293, 112
        %v3456 = vpop.permute.xlu0 %3455
        %3459 = vrot.lane.b32.xlu0 %v3423, 16
        %v3460 = vpop.permute.xlu0 %3459
        %3463 = vrot.lane.b32.xlu0 %v3424, 32
        %v3464 = vpop.permute.xlu0 %3463
        %3467 = vrot.lane.b32.xlu0 %v3425, 48
        %v3468 = vpop.permute.xlu0 %3467
        %3471 = vrot.lane.b32.xlu0 %v3426, 64
        %v3472 = vpop.permute.xlu0 %3471
        %3475 = vrot.lane.b32.xlu0 %v3427, 80
        %v3476 = vpop.permute.xlu0 %3475
        %3479 = vrot.lane.b32.xlu0 %v3428, 96
        %v3480 = vpop.permute.xlu0 %3479
        %3483 = vrot.lane.b32.xlu0 %v3429, 112
        %v3484 = vpop.permute.xlu0 %3483
        %v3486 = vsel %vm774, %v3286, %v3432
        %v3487 = vsel %vm776, %v3486, %v3436
        %v3488 = vsel %vm778, %v3487, %v3440
        %v3489 = vsel %vm780, %v3488, %v3444
        %v3490 = vsel %vm782, %v3489, %v3448
        %v3491 = vsel %vm784, %v3490, %v3452
        %v3492 = vsel %vm786, %v3491, %v3456
        %v3493 = vsel %vm774, %v3422, %v3460
        %v3494 = vsel %vm776, %v3493, %v3464
        %v3495 = vsel %vm778, %v3494, %v3468
        %v3496 = vsel %vm780, %v3495, %v3472
        %v3497 = vsel %vm782, %v3496, %v3476
        %v3498 = vsel %vm784, %v3497, %v3480
        %v3499 = vsel %vm786, %v3498, %v3484
        %3516 = vrot.lane.b32.xlu0 %v3142, 127
        %v3517 = vpop.permute.xlu0 %3516
        %3518 = vrot.lane.b32.xlu0 %v3143, 127
        %v3519 = vpop.permute.xlu0 %3518
        %3520 = vrot.lane.b32.xlu0 %v3144, 127
        %v3521 = vpop.permute.xlu0 %3520
        %3522 = vrot.lane.b32.xlu0 %v3145, 127
        %v3523 = vpop.permute.xlu0 %3522
        %3524 = vrot.lane.b32.xlu0 %v3146, 127
        %v3525 = vpop.permute.xlu0 %3524
        %3526 = vrot.lane.b32.xlu0 %v3147, 127
        %v3527 = vpop.permute.xlu0 %3526
        %3528 = vrot.lane.b32.xlu0 %v3148, 127
        %v3529 = vpop.permute.xlu0 %3528
        %3530 = vrot.lane.b32.xlu0 %v3149, 127
        %v3531 = vpop.permute.xlu0 %3530
        %3532 = vrot.lane.b32.xlu0 %v3150, 127
        %v3533 = vpop.permute.xlu0 %3532
        %3534 = vrot.lane.b32.xlu0 %v3151, 127
        %v3535 = vpop.permute.xlu0 %3534
        %3536 = vrot.lane.b32.xlu0 %v3152, 127
        %v3537 = vpop.permute.xlu0 %3536
        %3538 = vrot.lane.b32.xlu0 %v3153, 127
        %v3539 = vpop.permute.xlu0 %3538
        %3540 = vrot.lane.b32.xlu0 %v3154, 127
        %v3541 = vpop.permute.xlu0 %3540
        %3542 = vrot.lane.b32.xlu0 %v3155, 127
        %v3543 = vpop.permute.xlu0 %3542
        %3544 = vrot.lane.b32.xlu0 %v3156, 127
        %v3545 = vpop.permute.xlu0 %3544
        %3546 = vrot.lane.b32.xlu0 %v3157, 127
        %v3547 = vpop.permute.xlu0 %3546
        %v3564 = vcombine.low %v3517, %v3525
        %v3565 = vcombine.high %v3517, %v3525
        %v3567 = vunpack.c.l.s4 1983009808
        %v3568 = vunpack.c.0.s8 %v3567
        %v3569 = vlaneseq
        %v3570 = vshrl.u32 %v3569, 7
        %v3571 = vsub.s32 %v3568, %v3570
        %v3572 = vrot.slane %v3564, %v3571
        %v3574 = vunpack.c.l.s4 1983009808
        %v3575 = vunpack.c.0.s8 %v3574
        %v3576 = vlaneseq
        %v3577 = vshrl.u32 %v3576, 7
        %v3578 = vsub.s32 %v3575, %v3577
        %v3579 = vrot.slane %v3565, %v3578
        %v3580 = vcombine.low %v3521, %v3529
        %v3581 = vcombine.high %v3521, %v3529
        %v3583 = vunpack.c.l.s4 1983009808
        %v3584 = vunpack.c.0.s8 %v3583
        %v3585 = vlaneseq
        %v3586 = vshrl.u32 %v3585, 7
        %v3587 = vsub.s32 %v3584, %v3586
        %v3588 = vrot.slane %v3580, %v3587
        %v3590 = vunpack.c.l.s4 1983009808
        %v3591 = vunpack.c.0.s8 %v3590
        %v3592 = vlaneseq
        %v3593 = vshrl.u32 %v3592, 7
        %v3594 = vsub.s32 %v3591, %v3593
        %v3595 = vrot.slane %v3581, %v3594
        %v3596 = vcombine.low %v3533, %v3541
        %v3597 = vcombine.high %v3533, %v3541
        %v3599 = vunpack.c.l.s4 1983009808
        %v3600 = vunpack.c.0.s8 %v3599
        %v3601 = vlaneseq
        %v3602 = vshrl.u32 %v3601, 7
        %v3603 = vsub.s32 %v3600, %v3602
        %v3604 = vrot.slane %v3596, %v3603
        %v3606 = vunpack.c.l.s4 1983009808
        %v3607 = vunpack.c.0.s8 %v3606
        %v3608 = vlaneseq
        %v3609 = vshrl.u32 %v3608, 7
        %v3610 = vsub.s32 %v3607, %v3609
        %v3611 = vrot.slane %v3597, %v3610
        %v3612 = vcombine.low %v3537, %v3545
        %v3613 = vcombine.high %v3537, %v3545
        %v3615 = vunpack.c.l.s4 1983009808
        %v3616 = vunpack.c.0.s8 %v3615
        %v3617 = vlaneseq
        %v3618 = vshrl.u32 %v3617, 7
        %v3619 = vsub.s32 %v3616, %v3618
        %v3620 = vrot.slane %v3612, %v3619
        %v3622 = vunpack.c.l.s4 1983009808
        %v3623 = vunpack.c.0.s8 %v3622
        %v3624 = vlaneseq
        %v3625 = vshrl.u32 %v3624, 7
        %v3626 = vsub.s32 %v3623, %v3625
        %v3627 = vrot.slane %v3613, %v3626
        %v3628 = vcombine.low %v3572, %v3588
        %v3629 = vcombine.high %v3572, %v3588
        %v3631 = vunpack.c.l.s4 1934713408
        %v3632 = vunpack.c.0.s8 %v3631
        %v3633 = vlaneseq
        %v3634 = vshrl.u32 %v3633, 7
        %v3635 = vsub.s32 %v3632, %v3634
        %v3636 = vrot.slane %v3628, %v3635
        %v3638 = vunpack.c.l.s4 1934713408
        %v3639 = vunpack.c.0.s8 %v3638
        %v3640 = vlaneseq
        %v3641 = vshrl.u32 %v3640, 7
        %v3642 = vsub.s32 %v3639, %v3641
        %v3643 = vrot.slane %v3629, %v3642
        %v3644 = vcombine.low %v3579, %v3595
        %v3645 = vcombine.high %v3579, %v3595
        %v3647 = vunpack.c.l.s4 1934713408
        %v3648 = vunpack.c.0.s8 %v3647
        %v3649 = vlaneseq
        %v3650 = vshrl.u32 %v3649, 7
        %v3651 = vsub.s32 %v3648, %v3650
        %v3652 = vrot.slane %v3644, %v3651
        %v3654 = vunpack.c.l.s4 1934713408
        %v3655 = vunpack.c.0.s8 %v3654
        %v3656 = vlaneseq
        %v3657 = vshrl.u32 %v3656, 7
        %v3658 = vsub.s32 %v3655, %v3657
        %v3659 = vrot.slane %v3645, %v3658
        %v3660 = vcombine.low %v3604, %v3620
        %v3661 = vcombine.high %v3604, %v3620
        %v3663 = vunpack.c.l.s4 1934713408
        %v3664 = vunpack.c.0.s8 %v3663
        %v3665 = vlaneseq
        %v3666 = vshrl.u32 %v3665, 7
        %v3667 = vsub.s32 %v3664, %v3666
        %v3668 = vrot.slane %v3660, %v3667
        %v3670 = vunpack.c.l.s4 1934713408
        %v3671 = vunpack.c.0.s8 %v3670
        %v3672 = vlaneseq
        %v3673 = vshrl.u32 %v3672, 7
        %v3674 = vsub.s32 %v3671, %v3673
        %v3675 = vrot.slane %v3661, %v3674
        %v3676 = vcombine.low %v3611, %v3627
        %v3677 = vcombine.high %v3611, %v3627
        %v3679 = vunpack.c.l.s4 1934713408
        %v3680 = vunpack.c.0.s8 %v3679
        %v3681 = vlaneseq
        %v3682 = vshrl.u32 %v3681, 7
        %v3683 = vsub.s32 %v3680, %v3682
        %v3684 = vrot.slane %v3676, %v3683
        %v3686 = vunpack.c.l.s4 1934713408
        %v3687 = vunpack.c.0.s8 %v3686
        %v3688 = vlaneseq
        %v3689 = vshrl.u32 %v3688, 7
        %v3690 = vsub.s32 %v3687, %v3689
        %v3691 = vrot.slane %v3677, %v3690
        %v3692 = vcombine.low %v3636, %v3668
        %v3693 = vcombine.high %v3636, %v3668
        %v3694 = vcombine.low %v3643, %v3675
        %v3695 = vcombine.high %v3643, %v3675
        %v3696 = vcombine.low %v3652, %v3684
        %v3697 = vcombine.high %v3652, %v3684
        %v3698 = vcombine.low %v3659, %v3691
        %v3699 = vcombine.high %v3659, %v3691
        %v3700 = vcombine.low %v3519, %v3527
        %v3701 = vcombine.high %v3519, %v3527
        %v3703 = vunpack.c.l.s4 1983009808
        %v3704 = vunpack.c.0.s8 %v3703
        %v3705 = vlaneseq
        %v3706 = vshrl.u32 %v3705, 7
        %v3707 = vsub.s32 %v3704, %v3706
        %v3708 = vrot.slane %v3700, %v3707
        %v3710 = vunpack.c.l.s4 1983009808
        %v3711 = vunpack.c.0.s8 %v3710
        %v3712 = vlaneseq
        %v3713 = vshrl.u32 %v3712, 7
        %v3714 = vsub.s32 %v3711, %v3713
        %v3715 = vrot.slane %v3701, %v3714
        %v3716 = vcombine.low %v3523, %v3531
        %v3717 = vcombine.high %v3523, %v3531
        %v3719 = vunpack.c.l.s4 1983009808
        %v3720 = vunpack.c.0.s8 %v3719
        %v3721 = vlaneseq
        %v3722 = vshrl.u32 %v3721, 7
        %v3723 = vsub.s32 %v3720, %v3722
        %v3724 = vrot.slane %v3716, %v3723
        %v3726 = vunpack.c.l.s4 1983009808
        %v3727 = vunpack.c.0.s8 %v3726
        %v3728 = vlaneseq
        %v3729 = vshrl.u32 %v3728, 7
        %v3730 = vsub.s32 %v3727, %v3729
        %v3731 = vrot.slane %v3717, %v3730
        %v3732 = vcombine.low %v3535, %v3543
        %v3733 = vcombine.high %v3535, %v3543
        %v3735 = vunpack.c.l.s4 1983009808
        %v3736 = vunpack.c.0.s8 %v3735
        %v3737 = vlaneseq
        %v3738 = vshrl.u32 %v3737, 7
        %v3739 = vsub.s32 %v3736, %v3738
        %v3740 = vrot.slane %v3732, %v3739
        %v3742 = vunpack.c.l.s4 1983009808
        %v3743 = vunpack.c.0.s8 %v3742
        %v3744 = vlaneseq
        %v3745 = vshrl.u32 %v3744, 7
        %v3746 = vsub.s32 %v3743, %v3745
        %v3747 = vrot.slane %v3733, %v3746
        %v3748 = vcombine.low %v3539, %v3547
        %v3749 = vcombine.high %v3539, %v3547
        %v3751 = vunpack.c.l.s4 1983009808
        %v3752 = vunpack.c.0.s8 %v3751
        %v3753 = vlaneseq
        %v3754 = vshrl.u32 %v3753, 7
        %v3755 = vsub.s32 %v3752, %v3754
        %v3756 = vrot.slane %v3748, %v3755
        %v3758 = vunpack.c.l.s4 1983009808
        %v3759 = vunpack.c.0.s8 %v3758
        %v3760 = vlaneseq
        %v3761 = vshrl.u32 %v3760, 7
        %v3762 = vsub.s32 %v3759, %v3761
        %v3763 = vrot.slane %v3749, %v3762
        %v3764 = vcombine.low %v3708, %v3724
        %v3765 = vcombine.high %v3708, %v3724
        %v3767 = vunpack.c.l.s4 1934713408
        %v3768 = vunpack.c.0.s8 %v3767
        %v3769 = vlaneseq
        %v3770 = vshrl.u32 %v3769, 7
        %v3771 = vsub.s32 %v3768, %v3770
        %v3772 = vrot.slane %v3764, %v3771
        %v3774 = vunpack.c.l.s4 1934713408
        %v3775 = vunpack.c.0.s8 %v3774
        %v3776 = vlaneseq
        %v3777 = vshrl.u32 %v3776, 7
        %v3778 = vsub.s32 %v3775, %v3777
        %v3779 = vrot.slane %v3765, %v3778
        %v3780 = vcombine.low %v3715, %v3731
        %v3781 = vcombine.high %v3715, %v3731
        %v3783 = vunpack.c.l.s4 1934713408
        %v3784 = vunpack.c.0.s8 %v3783
        %v3785 = vlaneseq
        %v3786 = vshrl.u32 %v3785, 7
        %v3787 = vsub.s32 %v3784, %v3786
        %v3788 = vrot.slane %v3780, %v3787
        %v3790 = vunpack.c.l.s4 1934713408
        %v3791 = vunpack.c.0.s8 %v3790
        %v3792 = vlaneseq
        %v3793 = vshrl.u32 %v3792, 7
        %v3794 = vsub.s32 %v3791, %v3793
        %v3795 = vrot.slane %v3781, %v3794
        %v3796 = vcombine.low %v3740, %v3756
        %v3797 = vcombine.high %v3740, %v3756
        %v3799 = vunpack.c.l.s4 1934713408
        %v3800 = vunpack.c.0.s8 %v3799
        %v3801 = vlaneseq
        %v3802 = vshrl.u32 %v3801, 7
        %v3803 = vsub.s32 %v3800, %v3802
        %v3804 = vrot.slane %v3796, %v3803
        %v3806 = vunpack.c.l.s4 1934713408
        %v3807 = vunpack.c.0.s8 %v3806
        %v3808 = vlaneseq
        %v3809 = vshrl.u32 %v3808, 7
        %v3810 = vsub.s32 %v3807, %v3809
        %v3811 = vrot.slane %v3797, %v3810
        %v3812 = vcombine.low %v3747, %v3763
        %v3813 = vcombine.high %v3747, %v3763
        %v3815 = vunpack.c.l.s4 1934713408
        %v3816 = vunpack.c.0.s8 %v3815
        %v3817 = vlaneseq
        %v3818 = vshrl.u32 %v3817, 7
        %v3819 = vsub.s32 %v3816, %v3818
        %v3820 = vrot.slane %v3812, %v3819
        %v3822 = vunpack.c.l.s4 1934713408
        %v3823 = vunpack.c.0.s8 %v3822
        %v3824 = vlaneseq
        %v3825 = vshrl.u32 %v3824, 7
        %v3826 = vsub.s32 %v3823, %v3825
        %v3827 = vrot.slane %v3813, %v3826
        %v3828 = vcombine.low %v3772, %v3804
        %v3829 = vcombine.high %v3772, %v3804
        %v3830 = vcombine.low %v3779, %v3811
        %v3831 = vcombine.high %v3779, %v3811
        %v3832 = vcombine.low %v3788, %v3820
        %v3833 = vcombine.high %v3788, %v3820
        %v3834 = vcombine.low %v3795, %v3827
        %v3835 = vcombine.high %v3795, %v3827
        %3837 = vrot.lane.b32.xlu0 %v3693, 16
        %v3838 = vpop.permute.xlu0 %3837
        %3841 = vrot.lane.b32.xlu0 %v3694, 32
        %v3842 = vpop.permute.xlu0 %3841
        %3845 = vrot.lane.b32.xlu0 %v3695, 48
        %v3846 = vpop.permute.xlu0 %3845
        %3849 = vrot.lane.b32.xlu0 %v3696, 64
        %v3850 = vpop.permute.xlu0 %3849
        %3853 = vrot.lane.b32.xlu0 %v3697, 80
        %v3854 = vpop.permute.xlu0 %3853
        %3857 = vrot.lane.b32.xlu0 %v3698, 96
        %v3858 = vpop.permute.xlu0 %3857
        %3861 = vrot.lane.b32.xlu0 %v3699, 112
        %v3862 = vpop.permute.xlu0 %3861
        %3865 = vrot.lane.b32.xlu0 %v3829, 16
        %v3866 = vpop.permute.xlu0 %3865
        %3869 = vrot.lane.b32.xlu0 %v3830, 32
        %v3870 = vpop.permute.xlu0 %3869
        %3873 = vrot.lane.b32.xlu0 %v3831, 48
        %v3874 = vpop.permute.xlu0 %3873
        %3877 = vrot.lane.b32.xlu0 %v3832, 64
        %v3878 = vpop.permute.xlu0 %3877
        %3881 = vrot.lane.b32.xlu0 %v3833, 80
        %v3882 = vpop.permute.xlu0 %3881
        %3885 = vrot.lane.b32.xlu0 %v3834, 96
        %v3886 = vpop.permute.xlu0 %3885
        %3889 = vrot.lane.b32.xlu0 %v3835, 112
        %v3890 = vpop.permute.xlu0 %3889
        %v3892 = vsel %vm774, %v3692, %v3838
        %v3893 = vsel %vm776, %v3892, %v3842
        %v3894 = vsel %vm778, %v3893, %v3846
        %v3895 = vsel %vm780, %v3894, %v3850
        %v3896 = vsel %vm782, %v3895, %v3854
        %v3897 = vsel %vm784, %v3896, %v3858
        %v3898 = vsel %vm786, %v3897, %v3862
        %v3899 = vsel %vm774, %v3828, %v3866
        %v3900 = vsel %vm776, %v3899, %v3870
        %v3901 = vsel %vm778, %v3900, %v3874
        %v3902 = vsel %vm780, %v3901, %v3878
        %v3903 = vsel %vm782, %v3902, %v3882
        %v3904 = vsel %vm784, %v3903, %v3886
        %v3905 = vsel %vm786, %v3904, %v3890
        %v3906 = vld [vmem:[#allocation3 + $0x1] sm:$0xff]
        %v3907 = vld [vmem:[#allocation3 + $0x9] sm:$0xff]
        %v3908 = vld [vmem:[#allocation3 + $0x19] sm:$0xff]
        %v3909 = vld [vmem:[#allocation3 + $0x21] sm:$0xff]
        %v3910 = vld [vmem:[#allocation3 + $0x31] sm:$0xff]
        %v3911 = vld [vmem:[#allocation3 + $0x39] sm:$0xff]
        %v3912 = vld [vmem:[#allocation3 + $0x49] sm:$0xff]
        %v3913 = vld [vmem:[#allocation3 + $0x51] sm:$0xff]
        %v3914 = vld [vmem:[#allocation3 + $0x61] sm:$0xff]
        %v3915 = vld [vmem:[#allocation3 + $0x69] sm:$0xff]
        %v3916 = vld [vmem:[#allocation3 + $0x79] sm:$0xff]
        %v3917 = vld [vmem:[#allocation3 + $0x81] sm:$0xff]
        %v3918 = vld [vmem:[#allocation3 + $0x91] sm:$0xff]
        %v3919 = vld [vmem:[#allocation3 + $0x99] sm:$0xff]
        %v3920 = vld [vmem:[#allocation3 + $0xa9] sm:$0xff]
        %v3921 = vld [vmem:[#allocation3 + $0xb1] sm:$0xff]
        %v3922 = vcombine.low %v3906, %v3910
        %v3923 = vcombine.high %v3906, %v3910
        %v3925 = vunpack.c.l.s4 1983009808
        %v3926 = vunpack.c.0.s8 %v3925
        %v3927 = vlaneseq
        %v3928 = vshrl.u32 %v3927, 7
        %v3929 = vsub.s32 %v3926, %v3928
        %v3930 = vrot.slane %v3922, %v3929
        %v3932 = vunpack.c.l.s4 1983009808
        %v3933 = vunpack.c.0.s8 %v3932
        %v3934 = vlaneseq
        %v3935 = vshrl.u32 %v3934, 7
        %v3936 = vsub.s32 %v3933, %v3935
        %v3937 = vrot.slane %v3923, %v3936
        %v3938 = vcombine.low %v3908, %v3912
        %v3939 = vcombine.high %v3908, %v3912
        %v3941 = vunpack.c.l.s4 1983009808
        %v3942 = vunpack.c.0.s8 %v3941
        %v3943 = vlaneseq
        %v3944 = vshrl.u32 %v3943, 7
        %v3945 = vsub.s32 %v3942, %v3944
        %v3946 = vrot.slane %v3938, %v3945
        %v3948 = vunpack.c.l.s4 1983009808
        %v3949 = vunpack.c.0.s8 %v3948
        %v3950 = vlaneseq
        %v3951 = vshrl.u32 %v3950, 7
        %v3952 = vsub.s32 %v3949, %v3951
        %v3953 = vrot.slane %v3939, %v3952
        %v3954 = vcombine.low %v3914, %v3918
        %v3955 = vcombine.high %v3914, %v3918
        %v3957 = vunpack.c.l.s4 1983009808
        %v3958 = vunpack.c.0.s8 %v3957
        %v3959 = vlaneseq
        %v3960 = vshrl.u32 %v3959, 7
        %v3961 = vsub.s32 %v3958, %v3960
        %v3962 = vrot.slane %v3954, %v3961
        %v3964 = vunpack.c.l.s4 1983009808
        %v3965 = vunpack.c.0.s8 %v3964
        %v3966 = vlaneseq
        %v3967 = vshrl.u32 %v3966, 7
        %v3968 = vsub.s32 %v3965, %v3967
        %v3969 = vrot.slane %v3955, %v3968
        %v3970 = vcombine.low %v3916, %v3920
        %v3971 = vcombine.high %v3916, %v3920
        %v3973 = vunpack.c.l.s4 1983009808
        %v3974 = vunpack.c.0.s8 %v3973
        %v3975 = vlaneseq
        %v3976 = vshrl.u32 %v3975, 7
        %v3977 = vsub.s32 %v3974, %v3976
        %v3978 = vrot.slane %v3970, %v3977
        %v3980 = vunpack.c.l.s4 1983009808
        %v3981 = vunpack.c.0.s8 %v3980
        %v3982 = vlaneseq
        %v3983 = vshrl.u32 %v3982, 7
        %v3984 = vsub.s32 %v3981, %v3983
        %v3985 = vrot.slane %v3971, %v3984
        %v3986 = vcombine.low %v3930, %v3946
        %v3987 = vcombine.high %v3930, %v3946
        %v3989 = vunpack.c.l.s4 1934713408
        %v3990 = vunpack.c.0.s8 %v3989
        %v3991 = vlaneseq
        %v3992 = vshrl.u32 %v3991, 7
        %v3993 = vsub.s32 %v3990, %v3992
        %v3994 = vrot.slane %v3986, %v3993
        %v3996 = vunpack.c.l.s4 1934713408
        %v3997 = vunpack.c.0.s8 %v3996
        %v3998 = vlaneseq
        %v3999 = vshrl.u32 %v3998, 7
        %v4000 = vsub.s32 %v3997, %v3999
        %v4001 = vrot.slane %v3987, %v4000
        %v4002 = vcombine.low %v3937, %v3953
        %v4003 = vcombine.high %v3937, %v3953
        %v4005 = vunpack.c.l.s4 1934713408
        %v4006 = vunpack.c.0.s8 %v4005
        %v4007 = vlaneseq
        %v4008 = vshrl.u32 %v4007, 7
        %v4009 = vsub.s32 %v4006, %v4008
        %v4010 = vrot.slane %v4002, %v4009
        %v4012 = vunpack.c.l.s4 1934713408
        %v4013 = vunpack.c.0.s8 %v4012
        %v4014 = vlaneseq
        %v4015 = vshrl.u32 %v4014, 7
        %v4016 = vsub.s32 %v4013, %v4015
        %v4017 = vrot.slane %v4003, %v4016
        %v4018 = vcombine.low %v3962, %v3978
        %v4019 = vcombine.high %v3962, %v3978
        %v4021 = vunpack.c.l.s4 1934713408
        %v4022 = vunpack.c.0.s8 %v4021
        %v4023 = vlaneseq
        %v4024 = vshrl.u32 %v4023, 7
        %v4025 = vsub.s32 %v4022, %v4024
        %v4026 = vrot.slane %v4018, %v4025
        %v4028 = vunpack.c.l.s4 1934713408
        %v4029 = vunpack.c.0.s8 %v4028
        %v4030 = vlaneseq
        %v4031 = vshrl.u32 %v4030, 7
        %v4032 = vsub.s32 %v4029, %v4031
        %v4033 = vrot.slane %v4019, %v4032
        %v4034 = vcombine.low %v3969, %v3985
        %v4035 = vcombine.high %v3969, %v3985
        %v4037 = vunpack.c.l.s4 1934713408
        %v4038 = vunpack.c.0.s8 %v4037
        %v4039 = vlaneseq
        %v4040 = vshrl.u32 %v4039, 7
        %v4041 = vsub.s32 %v4038, %v4040
        %v4042 = vrot.slane %v4034, %v4041
        %v4044 = vunpack.c.l.s4 1934713408
        %v4045 = vunpack.c.0.s8 %v4044
        %v4046 = vlaneseq
        %v4047 = vshrl.u32 %v4046, 7
        %v4048 = vsub.s32 %v4045, %v4047
        %v4049 = vrot.slane %v4035, %v4048
        %v4050 = vcombine.low %v3994, %v4026
        %v4051 = vcombine.high %v3994, %v4026
        %v4052 = vcombine.low %v4001, %v4033
        %v4053 = vcombine.high %v4001, %v4033
        %v4054 = vcombine.low %v4010, %v4042
        %v4055 = vcombine.high %v4010, %v4042
        %v4056 = vcombine.low %v4017, %v4049
        %v4057 = vcombine.high %v4017, %v4049
        %v4058 = vcombine.low %v3907, %v3911
        %v4059 = vcombine.high %v3907, %v3911
        %v4061 = vunpack.c.l.s4 1983009808
        %v4062 = vunpack.c.0.s8 %v4061
        %v4063 = vlaneseq
        %v4064 = vshrl.u32 %v4063, 7
        %v4065 = vsub.s32 %v4062, %v4064
        %v4066 = vrot.slane %v4058, %v4065
        %v4068 = vunpack.c.l.s4 1983009808
        %v4069 = vunpack.c.0.s8 %v4068
        %v4070 = vlaneseq
        %v4071 = vshrl.u32 %v4070, 7
        %v4072 = vsub.s32 %v4069, %v4071
        %v4073 = vrot.slane %v4059, %v4072
        %v4074 = vcombine.low %v3909, %v3913
        %v4075 = vcombine.high %v3909, %v3913
        %v4077 = vunpack.c.l.s4 1983009808
        %v4078 = vunpack.c.0.s8 %v4077
        %v4079 = vlaneseq
        %v4080 = vshrl.u32 %v4079, 7
        %v4081 = vsub.s32 %v4078, %v4080
        %v4082 = vrot.slane %v4074, %v4081
        %v4084 = vunpack.c.l.s4 1983009808
        %v4085 = vunpack.c.0.s8 %v4084
        %v4086 = vlaneseq
        %v4087 = vshrl.u32 %v4086, 7
        %v4088 = vsub.s32 %v4085, %v4087
        %v4089 = vrot.slane %v4075, %v4088
        %v4090 = vcombine.low %v3915, %v3919
        %v4091 = vcombine.high %v3915, %v3919
        %v4093 = vunpack.c.l.s4 1983009808
        %v4094 = vunpack.c.0.s8 %v4093
        %v4095 = vlaneseq
        %v4096 = vshrl.u32 %v4095, 7
        %v4097 = vsub.s32 %v4094, %v4096
        %v4098 = vrot.slane %v4090, %v4097
        %v4100 = vunpack.c.l.s4 1983009808
        %v4101 = vunpack.c.0.s8 %v4100
        %v4102 = vlaneseq
        %v4103 = vshrl.u32 %v4102, 7
        %v4104 = vsub.s32 %v4101, %v4103
        %v4105 = vrot.slane %v4091, %v4104
        %v4106 = vcombine.low %v3917, %v3921
        %v4107 = vcombine.high %v3917, %v3921
        %v4109 = vunpack.c.l.s4 1983009808
        %v4110 = vunpack.c.0.s8 %v4109
        %v4111 = vlaneseq
        %v4112 = vshrl.u32 %v4111, 7
        %v4113 = vsub.s32 %v4110, %v4112
        %v4114 = vrot.slane %v4106, %v4113
        %v4116 = vunpack.c.l.s4 1983009808
        %v4117 = vunpack.c.0.s8 %v4116
        %v4118 = vlaneseq
        %v4119 = vshrl.u32 %v4118, 7
        %v4120 = vsub.s32 %v4117, %v4119
        %v4121 = vrot.slane %v4107, %v4120
        %v4122 = vcombine.low %v4066, %v4082
        %v4123 = vcombine.high %v4066, %v4082
        %v4125 = vunpack.c.l.s4 1934713408
        %v4126 = vunpack.c.0.s8 %v4125
        %v4127 = vlaneseq
        %v4128 = vshrl.u32 %v4127, 7
        %v4129 = vsub.s32 %v4126, %v4128
        %v4130 = vrot.slane %v4122, %v4129
        %v4132 = vunpack.c.l.s4 1934713408
        %v4133 = vunpack.c.0.s8 %v4132
        %v4134 = vlaneseq
        %v4135 = vshrl.u32 %v4134, 7
        %v4136 = vsub.s32 %v4133, %v4135
        %v4137 = vrot.slane %v4123, %v4136
        %v4138 = vcombine.low %v4073, %v4089
        %v4139 = vcombine.high %v4073, %v4089
        %v4141 = vunpack.c.l.s4 1934713408
        %v4142 = vunpack.c.0.s8 %v4141
        %v4143 = vlaneseq
        %v4144 = vshrl.u32 %v4143, 7
        %v4145 = vsub.s32 %v4142, %v4144
        %v4146 = vrot.slane %v4138, %v4145
        %v4148 = vunpack.c.l.s4 1934713408
        %v4149 = vunpack.c.0.s8 %v4148
        %v4150 = vlaneseq
        %v4151 = vshrl.u32 %v4150, 7
        %v4152 = vsub.s32 %v4149, %v4151
        %v4153 = vrot.slane %v4139, %v4152
        %v4154 = vcombine.low %v4098, %v4114
        %v4155 = vcombine.high %v4098, %v4114
        %v4157 = vunpack.c.l.s4 1934713408
        %v4158 = vunpack.c.0.s8 %v4157
        %v4159 = vlaneseq
        %v4160 = vshrl.u32 %v4159, 7
        %v4161 = vsub.s32 %v4158, %v4160
        %v4162 = vrot.slane %v4154, %v4161
        %v4164 = vunpack.c.l.s4 1934713408
        %v4165 = vunpack.c.0.s8 %v4164
        %v4166 = vlaneseq
        %v4167 = vshrl.u32 %v4166, 7
        %v4168 = vsub.s32 %v4165, %v4167
        %v4169 = vrot.slane %v4155, %v4168
        %v4170 = vcombine.low %v4105, %v4121
        %v4171 = vcombine.high %v4105, %v4121
        %v4173 = vunpack.c.l.s4 1934713408
        %v4174 = vunpack.c.0.s8 %v4173
        %v4175 = vlaneseq
        %v4176 = vshrl.u32 %v4175, 7
        %v4177 = vsub.s32 %v4174, %v4176
        %v4178 = vrot.slane %v4170, %v4177
        %v4180 = vunpack.c.l.s4 1934713408
        %v4181 = vunpack.c.0.s8 %v4180
        %v4182 = vlaneseq
        %v4183 = vshrl.u32 %v4182, 7
        %v4184 = vsub.s32 %v4181, %v4183
        %v4185 = vrot.slane %v4171, %v4184
        %v4186 = vcombine.low %v4130, %v4162
        %v4187 = vcombine.high %v4130, %v4162
        %v4188 = vcombine.low %v4137, %v4169
        %v4189 = vcombine.high %v4137, %v4169
        %v4190 = vcombine.low %v4146, %v4178
        %v4191 = vcombine.high %v4146, %v4178
        %v4192 = vcombine.low %v4153, %v4185
        %v4193 = vcombine.high %v4153, %v4185
        %4195 = vrot.lane.b32.xlu0 %v4051, 16
        %v4196 = vpop.permute.xlu0 %4195
        %4199 = vrot.lane.b32.xlu0 %v4052, 32
        %v4200 = vpop.permute.xlu0 %4199
        %4203 = vrot.lane.b32.xlu0 %v4053, 48
        %v4204 = vpop.permute.xlu0 %4203
        %4207 = vrot.lane.b32.xlu0 %v4054, 64
        %v4208 = vpop.permute.xlu0 %4207
        %4211 = vrot.lane.b32.xlu0 %v4055, 80
        %v4212 = vpop.permute.xlu0 %4211
        %4215 = vrot.lane.b32.xlu0 %v4056, 96
        %v4216 = vpop.permute.xlu0 %4215
        %4219 = vrot.lane.b32.xlu0 %v4057, 112
        %v4220 = vpop.permute.xlu0 %4219
        %4223 = vrot.lane.b32.xlu0 %v4187, 16
        %v4224 = vpop.permute.xlu0 %4223
        %4227 = vrot.lane.b32.xlu0 %v4188, 32
        %v4228 = vpop.permute.xlu0 %4227
        %4231 = vrot.lane.b32.xlu0 %v4189, 48
        %v4232 = vpop.permute.xlu0 %4231
        %4235 = vrot.lane.b32.xlu0 %v4190, 64
        %v4236 = vpop.permute.xlu0 %4235
        %4239 = vrot.lane.b32.xlu0 %v4191, 80
        %v4240 = vpop.permute.xlu0 %4239
        %4243 = vrot.lane.b32.xlu0 %v4192, 96
        %v4244 = vpop.permute.xlu0 %4243
        %4247 = vrot.lane.b32.xlu0 %v4193, 112
        %v4248 = vpop.permute.xlu0 %4247
        %v4250 = vsel %vm774, %v4050, %v4196
        %v4251 = vsel %vm776, %v4250, %v4200
        %v4252 = vsel %vm778, %v4251, %v4204
        %v4253 = vsel %vm780, %v4252, %v4208
        %v4254 = vsel %vm782, %v4253, %v4212
        %v4255 = vsel %vm784, %v4254, %v4216
        %v4256 = vsel %vm786, %v4255, %v4220
        %v4257 = vsel %vm774, %v4186, %v4224
        %v4258 = vsel %vm776, %v4257, %v4228
        %v4259 = vsel %vm778, %v4258, %v4232
        %v4260 = vsel %vm780, %v4259, %v4236
        %v4261 = vsel %vm782, %v4260, %v4240
        %v4262 = vsel %vm784, %v4261, %v4244
        %v4263 = vsel %vm786, %v4262, %v4248
        %4280 = vrot.lane.b32.xlu0 %v3906, 127
        %v4281 = vpop.permute.xlu0 %4280
        %4282 = vrot.lane.b32.xlu0 %v3907, 127
        %v4283 = vpop.permute.xlu0 %4282
        %4284 = vrot.lane.b32.xlu0 %v3908, 127
        %v4285 = vpop.permute.xlu0 %4284
        %4286 = vrot.lane.b32.xlu0 %v3909, 127
        %v4287 = vpop.permute.xlu0 %4286
        %4288 = vrot.lane.b32.xlu0 %v3910, 127
        %v4289 = vpop.permute.xlu0 %4288
        %4290 = vrot.lane.b32.xlu0 %v3911, 127
        %v4291 = vpop.permute.xlu0 %4290
        %4292 = vrot.lane.b32.xlu0 %v3912, 127
        %v4293 = vpop.permute.xlu0 %4292
        %4294 = vrot.lane.b32.xlu0 %v3913, 127
        %v4295 = vpop.permute.xlu0 %4294
        %4296 = vrot.lane.b32.xlu0 %v3914, 127
        %v4297 = vpop.permute.xlu0 %4296
        %4298 = vrot.lane.b32.xlu0 %v3915, 127
        %v4299 = vpop.permute.xlu0 %4298
        %4300 = vrot.lane.b32.xlu0 %v3916, 127
        %v4301 = vpop.permute.xlu0 %4300
        %4302 = vrot.lane.b32.xlu0 %v3917, 127
        %v4303 = vpop.permute.xlu0 %4302
        %4304 = vrot.lane.b32.xlu0 %v3918, 127
        %v4305 = vpop.permute.xlu0 %4304
        %4306 = vrot.lane.b32.xlu0 %v3919, 127
        %v4307 = vpop.permute.xlu0 %4306
        %4308 = vrot.lane.b32.xlu0 %v3920, 127
        %v4309 = vpop.permute.xlu0 %4308
        %4310 = vrot.lane.b32.xlu0 %v3921, 127
        %v4311 = vpop.permute.xlu0 %4310
        %v4328 = vcombine.low %v4281, %v4289
        %v4329 = vcombine.high %v4281, %v4289
        %v4331 = vunpack.c.l.s4 1983009808
        %v4332 = vunpack.c.0.s8 %v4331
        %v4333 = vlaneseq
        %v4334 = vshrl.u32 %v4333, 7
        %v4335 = vsub.s32 %v4332, %v4334
        %v4336 = vrot.slane %v4328, %v4335
        %v4338 = vunpack.c.l.s4 1983009808
        %v4339 = vunpack.c.0.s8 %v4338
        %v4340 = vlaneseq
        %v4341 = vshrl.u32 %v4340, 7
        %v4342 = vsub.s32 %v4339, %v4341
        %v4343 = vrot.slane %v4329, %v4342
        %v4344 = vcombine.low %v4285, %v4293
        %v4345 = vcombine.high %v4285, %v4293
        %v4347 = vunpack.c.l.s4 1983009808
        %v4348 = vunpack.c.0.s8 %v4347
        %v4349 = vlaneseq
        %v4350 = vshrl.u32 %v4349, 7
        %v4351 = vsub.s32 %v4348, %v4350
        %v4352 = vrot.slane %v4344, %v4351
        %v4354 = vunpack.c.l.s4 1983009808
        %v4355 = vunpack.c.0.s8 %v4354
        %v4356 = vlaneseq
        %v4357 = vshrl.u32 %v4356, 7
        %v4358 = vsub.s32 %v4355, %v4357
        %v4359 = vrot.slane %v4345, %v4358
        %v4360 = vcombine.low %v4297, %v4305
        %v4361 = vcombine.high %v4297, %v4305
        %v4363 = vunpack.c.l.s4 1983009808
        %v4364 = vunpack.c.0.s8 %v4363
        %v4365 = vlaneseq
        %v4366 = vshrl.u32 %v4365, 7
        %v4367 = vsub.s32 %v4364, %v4366
        %v4368 = vrot.slane %v4360, %v4367
        %v4370 = vunpack.c.l.s4 1983009808
        %v4371 = vunpack.c.0.s8 %v4370
        %v4372 = vlaneseq
        %v4373 = vshrl.u32 %v4372, 7
        %v4374 = vsub.s32 %v4371, %v4373
        %v4375 = vrot.slane %v4361, %v4374
        %v4376 = vcombine.low %v4301, %v4309
        %v4377 = vcombine.high %v4301, %v4309
        %v4379 = vunpack.c.l.s4 1983009808
        %v4380 = vunpack.c.0.s8 %v4379
        %v4381 = vlaneseq
        %v4382 = vshrl.u32 %v4381, 7
        %v4383 = vsub.s32 %v4380, %v4382
        %v4384 = vrot.slane %v4376, %v4383
        %v4386 = vunpack.c.l.s4 1983009808
        %v4387 = vunpack.c.0.s8 %v4386
        %v4388 = vlaneseq
        %v4389 = vshrl.u32 %v4388, 7
        %v4390 = vsub.s32 %v4387, %v4389
        %v4391 = vrot.slane %v4377, %v4390
        %v4392 = vcombine.low %v4336, %v4352
        %v4393 = vcombine.high %v4336, %v4352
        %v4395 = vunpack.c.l.s4 1934713408
        %v4396 = vunpack.c.0.s8 %v4395
        %v4397 = vlaneseq
        %v4398 = vshrl.u32 %v4397, 7
        %v4399 = vsub.s32 %v4396, %v4398
        %v4400 = vrot.slane %v4392, %v4399
        %v4402 = vunpack.c.l.s4 1934713408
        %v4403 = vunpack.c.0.s8 %v4402
        %v4404 = vlaneseq
        %v4405 = vshrl.u32 %v4404, 7
        %v4406 = vsub.s32 %v4403, %v4405
        %v4407 = vrot.slane %v4393, %v4406
        %v4408 = vcombine.low %v4343, %v4359
        %v4409 = vcombine.high %v4343, %v4359
        %v4411 = vunpack.c.l.s4 1934713408
        %v4412 = vunpack.c.0.s8 %v4411
        %v4413 = vlaneseq
        %v4414 = vshrl.u32 %v4413, 7
        %v4415 = vsub.s32 %v4412, %v4414
        %v4416 = vrot.slane %v4408, %v4415
        %v4418 = vunpack.c.l.s4 1934713408
        %v4419 = vunpack.c.0.s8 %v4418
        %v4420 = vlaneseq
        %v4421 = vshrl.u32 %v4420, 7
        %v4422 = vsub.s32 %v4419, %v4421
        %v4423 = vrot.slane %v4409, %v4422
        %v4424 = vcombine.low %v4368, %v4384
        %v4425 = vcombine.high %v4368, %v4384
        %v4427 = vunpack.c.l.s4 1934713408
        %v4428 = vunpack.c.0.s8 %v4427
        %v4429 = vlaneseq
        %v4430 = vshrl.u32 %v4429, 7
        %v4431 = vsub.s32 %v4428, %v4430
        %v4432 = vrot.slane %v4424, %v4431
        %v4434 = vunpack.c.l.s4 1934713408
        %v4435 = vunpack.c.0.s8 %v4434
        %v4436 = vlaneseq
        %v4437 = vshrl.u32 %v4436, 7
        %v4438 = vsub.s32 %v4435, %v4437
        %v4439 = vrot.slane %v4425, %v4438
        %v4440 = vcombine.low %v4375, %v4391
        %v4441 = vcombine.high %v4375, %v4391
        %v4443 = vunpack.c.l.s4 1934713408
        %v4444 = vunpack.c.0.s8 %v4443
        %v4445 = vlaneseq
        %v4446 = vshrl.u32 %v4445, 7
        %v4447 = vsub.s32 %v4444, %v4446
        %v4448 = vrot.slane %v4440, %v4447
        %v4450 = vunpack.c.l.s4 1934713408
        %v4451 = vunpack.c.0.s8 %v4450
        %v4452 = vlaneseq
        %v4453 = vshrl.u32 %v4452, 7
        %v4454 = vsub.s32 %v4451, %v4453
        %v4455 = vrot.slane %v4441, %v4454
        %v4456 = vcombine.low %v4400, %v4432
        %v4457 = vcombine.high %v4400, %v4432
        %v4458 = vcombine.low %v4407, %v4439
        %v4459 = vcombine.high %v4407, %v4439
        %v4460 = vcombine.low %v4416, %v4448
        %v4461 = vcombine.high %v4416, %v4448
        %v4462 = vcombine.low %v4423, %v4455
        %v4463 = vcombine.high %v4423, %v4455
        %v4464 = vcombine.low %v4283, %v4291
        %v4465 = vcombine.high %v4283, %v4291
        %v4467 = vunpack.c.l.s4 1983009808
        %v4468 = vunpack.c.0.s8 %v4467
        %v4469 = vlaneseq
        %v4470 = vshrl.u32 %v4469, 7
        %v4471 = vsub.s32 %v4468, %v4470
        %v4472 = vrot.slane %v4464, %v4471
        %v4474 = vunpack.c.l.s4 1983009808
        %v4475 = vunpack.c.0.s8 %v4474
        %v4476 = vlaneseq
        %v4477 = vshrl.u32 %v4476, 7
        %v4478 = vsub.s32 %v4475, %v4477
        %v4479 = vrot.slane %v4465, %v4478
        %v4480 = vcombine.low %v4287, %v4295
        %v4481 = vcombine.high %v4287, %v4295
        %v4483 = vunpack.c.l.s4 1983009808
        %v4484 = vunpack.c.0.s8 %v4483
        %v4485 = vlaneseq
        %v4486 = vshrl.u32 %v4485, 7
        %v4487 = vsub.s32 %v4484, %v4486
        %v4488 = vrot.slane %v4480, %v4487
        %v4490 = vunpack.c.l.s4 1983009808
        %v4491 = vunpack.c.0.s8 %v4490
        %v4492 = vlaneseq
        %v4493 = vshrl.u32 %v4492, 7
        %v4494 = vsub.s32 %v4491, %v4493
        %v4495 = vrot.slane %v4481, %v4494
        %v4496 = vcombine.low %v4299, %v4307
        %v4497 = vcombine.high %v4299, %v4307
        %v4499 = vunpack.c.l.s4 1983009808
        %v4500 = vunpack.c.0.s8 %v4499
        %v4501 = vlaneseq
        %v4502 = vshrl.u32 %v4501, 7
        %v4503 = vsub.s32 %v4500, %v4502
        %v4504 = vrot.slane %v4496, %v4503
        %v4506 = vunpack.c.l.s4 1983009808
        %v4507 = vunpack.c.0.s8 %v4506
        %v4508 = vlaneseq
        %v4509 = vshrl.u32 %v4508, 7
        %v4510 = vsub.s32 %v4507, %v4509
        %v4511 = vrot.slane %v4497, %v4510
        %v4512 = vcombine.low %v4303, %v4311
        %v4513 = vcombine.high %v4303, %v4311
        %v4515 = vunpack.c.l.s4 1983009808
        %v4516 = vunpack.c.0.s8 %v4515
        %v4517 = vlaneseq
        %v4518 = vshrl.u32 %v4517, 7
        %v4519 = vsub.s32 %v4516, %v4518
        %v4520 = vrot.slane %v4512, %v4519
        %v4522 = vunpack.c.l.s4 1983009808
        %v4523 = vunpack.c.0.s8 %v4522
        %v4524 = vlaneseq
        %v4525 = vshrl.u32 %v4524, 7
        %v4526 = vsub.s32 %v4523, %v4525
        %v4527 = vrot.slane %v4513, %v4526
        %v4528 = vcombine.low %v4472, %v4488
        %v4529 = vcombine.high %v4472, %v4488
        %v4531 = vunpack.c.l.s4 1934713408
        %v4532 = vunpack.c.0.s8 %v4531
        %v4533 = vlaneseq
        %v4534 = vshrl.u32 %v4533, 7
        %v4535 = vsub.s32 %v4532, %v4534
        %v4536 = vrot.slane %v4528, %v4535
        %v4538 = vunpack.c.l.s4 1934713408
        %v4539 = vunpack.c.0.s8 %v4538
        %v4540 = vlaneseq
        %v4541 = vshrl.u32 %v4540, 7
        %v4542 = vsub.s32 %v4539, %v4541
        %v4543 = vrot.slane %v4529, %v4542
        %v4544 = vcombine.low %v4479, %v4495
        %v4545 = vcombine.high %v4479, %v4495
        %v4547 = vunpack.c.l.s4 1934713408
        %v4548 = vunpack.c.0.s8 %v4547
        %v4549 = vlaneseq
        %v4550 = vshrl.u32 %v4549, 7
        %v4551 = vsub.s32 %v4548, %v4550
        %v4552 = vrot.slane %v4544, %v4551
        %v4554 = vunpack.c.l.s4 1934713408
        %v4555 = vunpack.c.0.s8 %v4554
        %v4556 = vlaneseq
        %v4557 = vshrl.u32 %v4556, 7
        %v4558 = vsub.s32 %v4555, %v4557
        %v4559 = vrot.slane %v4545, %v4558
        %v4560 = vcombine.low %v4504, %v4520
        %v4561 = vcombine.high %v4504, %v4520
        %v4563 = vunpack.c.l.s4 1934713408
        %v4564 = vunpack.c.0.s8 %v4563
        %v4565 = vlaneseq
        %v4566 = vshrl.u32 %v4565, 7
        %v4567 = vsub.s32 %v4564, %v4566
        %v4568 = vrot.slane %v4560, %v4567
        %v4570 = vunpack.c.l.s4 1934713408
        %v4571 = vunpack.c.0.s8 %v4570
        %v4572 = vlaneseq
        %v4573 = vshrl.u32 %v4572, 7
        %v4574 = vsub.s32 %v4571, %v4573
        %v4575 = vrot.slane %v4561, %v4574
        %v4576 = vcombine.low %v4511, %v4527
        %v4577 = vcombine.high %v4511, %v4527
        %v4579 = vunpack.c.l.s4 1934713408
        %v4580 = vunpack.c.0.s8 %v4579
        %v4581 = vlaneseq
        %v4582 = vshrl.u32 %v4581, 7
        %v4583 = vsub.s32 %v4580, %v4582
        %v4584 = vrot.slane %v4576, %v4583
        %v4586 = vunpack.c.l.s4 1934713408
        %v4587 = vunpack.c.0.s8 %v4586
        %v4588 = vlaneseq
        %v4589 = vshrl.u32 %v4588, 7
        %v4590 = vsub.s32 %v4587, %v4589
        %v4591 = vrot.slane %v4577, %v4590
        %v4592 = vcombine.low %v4536, %v4568
        %v4593 = vcombine.high %v4536, %v4568
        %v4594 = vcombine.low %v4543, %v4575
        %v4595 = vcombine.high %v4543, %v4575
        %v4596 = vcombine.low %v4552, %v4584
        %v4597 = vcombine.high %v4552, %v4584
        %v4598 = vcombine.low %v4559, %v4591
        %v4599 = vcombine.high %v4559, %v4591
        %4601 = vrot.lane.b32.xlu0 %v4457, 16
        %v4602 = vpop.permute.xlu0 %4601
        %4605 = vrot.lane.b32.xlu0 %v4458, 32
        %v4606 = vpop.permute.xlu0 %4605
        %4609 = vrot.lane.b32.xlu0 %v4459, 48
        %v4610 = vpop.permute.xlu0 %4609
        %4613 = vrot.lane.b32.xlu0 %v4460, 64
        %v4614 = vpop.permute.xlu0 %4613
        %4617 = vrot.lane.b32.xlu0 %v4461, 80
        %v4618 = vpop.permute.xlu0 %4617
        %4621 = vrot.lane.b32.xlu0 %v4462, 96
        %v4622 = vpop.permute.xlu0 %4621
        %4625 = vrot.lane.b32.xlu0 %v4463, 112
        %v4626 = vpop.permute.xlu0 %4625
        %4629 = vrot.lane.b32.xlu0 %v4593, 16
        %v4630 = vpop.permute.xlu0 %4629
        %4633 = vrot.lane.b32.xlu0 %v4594, 32
        %v4634 = vpop.permute.xlu0 %4633
        %4637 = vrot.lane.b32.xlu0 %v4595, 48
        %v4638 = vpop.permute.xlu0 %4637
        %4641 = vrot.lane.b32.xlu0 %v4596, 64
        %v4642 = vpop.permute.xlu0 %4641
        %4645 = vrot.lane.b32.xlu0 %v4597, 80
        %v4646 = vpop.permute.xlu0 %4645
        %4649 = vrot.lane.b32.xlu0 %v4598, 96
        %v4650 = vpop.permute.xlu0 %4649
        %4653 = vrot.lane.b32.xlu0 %v4599, 112
        %v4654 = vpop.permute.xlu0 %4653
        %v4656 = vsel %vm774, %v4456, %v4602
        %v4657 = vsel %vm776, %v4656, %v4606
        %v4658 = vsel %vm778, %v4657, %v4610
        %v4659 = vsel %vm780, %v4658, %v4614
        %v4660 = vsel %vm782, %v4659, %v4618
        %v4661 = vsel %vm784, %v4660, %v4622
        %v4662 = vsel %vm786, %v4661, %v4626
        %v4663 = vsel %vm774, %v4592, %v4630
        %v4664 = vsel %vm776, %v4663, %v4634
        %v4665 = vsel %vm778, %v4664, %v4638
        %v4666 = vsel %vm780, %v4665, %v4642
        %v4667 = vsel %vm782, %v4666, %v4646
        %v4668 = vsel %vm784, %v4667, %v4650
        %v4669 = vsel %vm786, %v4668, %v4654
        %4671 = vset.pattern.permute.xlu0 0
        %4672 = vperm.xlu0 %4671, %v3140
        %v4673 = vpop.permute.xlu0 %4672
        %v4676 = vsel %vm776, %v3141, 0
        %4678 = vmatprep.subr.mxu0 0.0
        %4679 = vmatpush1.msra.mxu0 0.0
        %4680 = vmatprep.subr.mxu0 0.0
        %4681 = vmatpush1.msra.mxu0 0.0
        %4682 = vmatprep.subr.mxu0 0.0
        %4683 = vmatpush1.msra.mxu0 0.0
        %4684 = vmatprep.subr.mxu0 0.0
        %4685 = vmatpush1.msra.mxu0 0.0
        %4686 = vmatprep.subr.mxu0 0.0
        %4687 = vmatpush1.msra.mxu0 0.0
        %4688 = vmatprep.subr.mxu0 0.0
        %4689 = vmatpush1.msra.mxu0 0.0
        %4690 = vmatprep.subr.mxu0 0.0
        %4691 = vmatpush1.msra.mxu0 0.0
        %4692 = vmatprep.subr.mxu0 0.0
        %4693 = vmatpush1.msra.mxu0 0.0
        %4694 = vmatprep.subr.mxu0 0.0
        %4695 = vmatpush1.msra.mxu0 0.0
        %4696 = vmatprep.subr.mxu0 0.0
        %4697 = vmatpush1.msra.mxu0 0.0
        %4698 = vmatprep.subr.mxu0 0.0
        %4699 = vmatpush1.msra.mxu0 0.0
        %4700 = vmatprep.subr.mxu0 0.0
        %4701 = vmatpush1.msra.mxu0 0.0
        %4702 = vmatprep.subr.mxu0 %v4669
        %4703 = vmatpush1.msra.mxu0 %v4662
        %4704 = vmatprep.subr.mxu0 %v4263
        %4705 = vmatpush1.msra.mxu0 %v4256
        %4706 = vmatprep.subr.mxu0 %v3905
        %4707 = vmatpush1.msra.mxu0 %v3898
        %4708 = vmatprep.subr.mxu0 %v3499
        %4709 = vmatpush1.msra.mxu0 %v3492
        %4710 = vmatprep.subr.mxu0 0.0
        %4711 = vmatpush2.msra.mxu0 0.0
        %4712 = vmatprep.subr.mxu0 0.0
        %4713 = vmatpush2.msra.mxu0 0.0
        %4714 = vmatprep.subr.mxu0 0.0
        %4715 = vmatpush2.msra.mxu0 0.0
        %4716 = vmatprep.subr.mxu0 0.0
        %4717 = vmatpush2.msra.mxu0 0.0
        %4718 = vmatprep.subr.mxu0 0.0
        %4719 = vmatpush2.msra.mxu0 0.0
        %4720 = vmatprep.subr.mxu0 0.0
        %4721 = vmatpush2.msra.mxu0 0.0
        %4722 = vmatprep.subr.mxu0 0.0
        %4723 = vmatpush2.msra.mxu0 0.0
        %4724 = vmatprep.subr.mxu0 0.0
        %4725 = vmatpush2.msra.mxu0 0.0
        %4726 = vmatprep.subr.mxu0 0.0
        %4727 = vmatpush2.msra.mxu0 0.0
        %4728 = vmatprep.subr.mxu0 0.0
        %4729 = vmatpush2.msra.mxu0 0.0
        %4730 = vmatprep.subr.mxu0 0.0
        %4731 = vmatpush2.msra.mxu0 0.0
        %4732 = vmatprep.subr.mxu0 0.0
        %4733 = vmatpush2.msra.mxu0 0.0
        %4734 = vmatprep.subr.mxu0 0.0
        %4735 = vmatpush2.msra.mxu0 0.0
        %4736 = vmatprep.subr.mxu0 0.0
        %4737 = vmatpush2.msra.mxu0 0.0
        %4738 = vmatprep.subr.mxu0 0.0
        %4739 = vmatpush2.msra.mxu0 0.0
        %4740 = vmatprep.subr.mxu0 0.0
        %4741 = vmatpush2.msra.mxu0 0.0
        %4742 = vmatprep.mubr.f32.mxu0 0.0
        %4743 = vmatmul.mubr.f32.gmra.mxu0 %v4676
        %v4744 = vpop.f32.mrf.mxu0
        %v4745 = vadd.f32 %v4673, %v4744
        %v4746 = vpop.f32.mrf.mxu0
        %v4747 = vadd.f32 %v4673, %v4746
        %4748 = vdwg.mxu0
        %v4749 = vmax.f32 %v4745, 0.0
        %v4750 = vmax.f32 %v4747, 0.0
        %v4753 = vcombine.low %v4749, %v4750
        %4755 = vst [vmem:[%s240] sm:$0xff] %v4753
        %s4756 = scalar_lea.vmem [#allocation9], 4
        %v4757 = vld [vmem:[%s4756] sm:$0xf]
        %v4758 = vld [vmem:[#allocation3] sm:$0xff]
        %v4759 = vld [vmem:[#allocation3 + $0x8] sm:$0xff]
        %v4760 = vld [vmem:[#allocation3 + $0x18] sm:$0xff]
        %v4761 = vld [vmem:[#allocation3 + $0x20] sm:$0xff]
        %v4762 = vld [vmem:[#allocation3 + $0x30] sm:$0xff]
        %v4763 = vld [vmem:[#allocation3 + $0x38] sm:$0xff]
        %v4764 = vld [vmem:[#allocation3 + $0x48] sm:$0xff]
        %v4765 = vld [vmem:[#allocation3 + $0x50] sm:$0xff]
        %v4766 = vld [vmem:[#allocation3 + $0x60] sm:$0xff]
        %v4767 = vld [vmem:[#allocation3 + $0x68] sm:$0xff]
        %v4768 = vld [vmem:[#allocation3 + $0x78] sm:$0xff]
        %v4769 = vld [vmem:[#allocation3 + $0x80] sm:$0xff]
        %v4770 = vld [vmem:[#allocation3 + $0x90] sm:$0xff]
        %v4771 = vld [vmem:[#allocation3 + $0x98] sm:$0xff]
        %v4772 = vld [vmem:[#allocation3 + $0xa8] sm:$0xff]
        %v4773 = vld [vmem:[#allocation3 + $0xb0] sm:$0xff]
        %4790 = vrot.lane.b32.xlu0 %v4758, 127
        %v4791 = vpop.permute.xlu0 %4790
        %4792 = vrot.lane.b32.xlu0 %v4759, 127
        %v4793 = vpop.permute.xlu0 %4792
        %4794 = vrot.lane.b32.xlu0 %v4760, 127
        %v4795 = vpop.permute.xlu0 %4794
        %4796 = vrot.lane.b32.xlu0 %v4761, 127
        %v4797 = vpop.permute.xlu0 %4796
        %4798 = vrot.lane.b32.xlu0 %v4762, 127
        %v4799 = vpop.permute.xlu0 %4798
        %4800 = vrot.lane.b32.xlu0 %v4763, 127
        %v4801 = vpop.permute.xlu0 %4800
        %4802 = vrot.lane.b32.xlu0 %v4764, 127
        %v4803 = vpop.permute.xlu0 %4802
        %4804 = vrot.lane.b32.xlu0 %v4765, 127
        %v4805 = vpop.permute.xlu0 %4804
        %4806 = vrot.lane.b32.xlu0 %v4766, 127
        %v4807 = vpop.permute.xlu0 %4806
        %4808 = vrot.lane.b32.xlu0 %v4767, 127
        %v4809 = vpop.permute.xlu0 %4808
        %4810 = vrot.lane.b32.xlu0 %v4768, 127
        %v4811 = vpop.permute.xlu0 %4810
        %4812 = vrot.lane.b32.xlu0 %v4769, 127
        %v4813 = vpop.permute.xlu0 %4812
        %4814 = vrot.lane.b32.xlu0 %v4770, 127
        %v4815 = vpop.permute.xlu0 %4814
        %4816 = vrot.lane.b32.xlu0 %v4771, 127
        %v4817 = vpop.permute.xlu0 %4816
        %4818 = vrot.lane.b32.xlu0 %v4772, 127
        %v4819 = vpop.permute.xlu0 %4818
        %4820 = vrot.lane.b32.xlu0 %v4773, 127
        %v4821 = vpop.permute.xlu0 %4820
        %v4838 = vcombine.low %v4791, %v4799
        %v4839 = vcombine.high %v4791, %v4799
        %v4841 = vunpack.c.l.s4 1983009808
        %v4842 = vunpack.c.0.s8 %v4841
        %v4843 = vlaneseq
        %v4844 = vshrl.u32 %v4843, 7
        %v4845 = vsub.s32 %v4842, %v4844
        %v4846 = vrot.slane %v4838, %v4845
        %v4848 = vunpack.c.l.s4 1983009808
        %v4849 = vunpack.c.0.s8 %v4848
        %v4850 = vlaneseq
        %v4851 = vshrl.u32 %v4850, 7
        %v4852 = vsub.s32 %v4849, %v4851
        %v4853 = vrot.slane %v4839, %v4852
        %v4854 = vcombine.low %v4795, %v4803
        %v4855 = vcombine.high %v4795, %v4803
        %v4857 = vunpack.c.l.s4 1983009808
        %v4858 = vunpack.c.0.s8 %v4857
        %v4859 = vlaneseq
        %v4860 = vshrl.u32 %v4859, 7
        %v4861 = vsub.s32 %v4858, %v4860
        %v4862 = vrot.slane %v4854, %v4861
        %v4864 = vunpack.c.l.s4 1983009808
        %v4865 = vunpack.c.0.s8 %v4864
        %v4866 = vlaneseq
        %v4867 = vshrl.u32 %v4866, 7
        %v4868 = vsub.s32 %v4865, %v4867
        %v4869 = vrot.slane %v4855, %v4868
        %v4870 = vcombine.low %v4807, %v4815
        %v4871 = vcombine.high %v4807, %v4815
        %v4873 = vunpack.c.l.s4 1983009808
        %v4874 = vunpack.c.0.s8 %v4873
        %v4875 = vlaneseq
        %v4876 = vshrl.u32 %v4875, 7
        %v4877 = vsub.s32 %v4874, %v4876
        %v4878 = vrot.slane %v4870, %v4877
        %v4880 = vunpack.c.l.s4 1983009808
        %v4881 = vunpack.c.0.s8 %v4880
        %v4882 = vlaneseq
        %v4883 = vshrl.u32 %v4882, 7
        %v4884 = vsub.s32 %v4881, %v4883
        %v4885 = vrot.slane %v4871, %v4884
        %v4886 = vcombine.low %v4811, %v4819
        %v4887 = vcombine.high %v4811, %v4819
        %v4889 = vunpack.c.l.s4 1983009808
        %v4890 = vunpack.c.0.s8 %v4889
        %v4891 = vlaneseq
        %v4892 = vshrl.u32 %v4891, 7
        %v4893 = vsub.s32 %v4890, %v4892
        %v4894 = vrot.slane %v4886, %v4893
        %v4896 = vunpack.c.l.s4 1983009808
        %v4897 = vunpack.c.0.s8 %v4896
        %v4898 = vlaneseq
        %v4899 = vshrl.u32 %v4898, 7
        %v4900 = vsub.s32 %v4897, %v4899
        %v4901 = vrot.slane %v4887, %v4900
        %v4902 = vcombine.low %v4846, %v4862
        %v4903 = vcombine.high %v4846, %v4862
        %v4905 = vunpack.c.l.s4 1934713408
        %v4906 = vunpack.c.0.s8 %v4905
        %v4907 = vlaneseq
        %v4908 = vshrl.u32 %v4907, 7
        %v4909 = vsub.s32 %v4906, %v4908
        %v4910 = vrot.slane %v4902, %v4909
        %v4912 = vunpack.c.l.s4 1934713408
        %v4913 = vunpack.c.0.s8 %v4912
        %v4914 = vlaneseq
        %v4915 = vshrl.u32 %v4914, 7
        %v4916 = vsub.s32 %v4913, %v4915
        %v4917 = vrot.slane %v4903, %v4916
        %v4918 = vcombine.low %v4853, %v4869
        %v4919 = vcombine.high %v4853, %v4869
        %v4921 = vunpack.c.l.s4 1934713408
        %v4922 = vunpack.c.0.s8 %v4921
        %v4923 = vlaneseq
        %v4924 = vshrl.u32 %v4923, 7
        %v4925 = vsub.s32 %v4922, %v4924
        %v4926 = vrot.slane %v4918, %v4925
        %v4928 = vunpack.c.l.s4 1934713408
        %v4929 = vunpack.c.0.s8 %v4928
        %v4930 = vlaneseq
        %v4931 = vshrl.u32 %v4930, 7
        %v4932 = vsub.s32 %v4929, %v4931
        %v4933 = vrot.slane %v4919, %v4932
        %v4934 = vcombine.low %v4878, %v4894
        %v4935 = vcombine.high %v4878, %v4894
        %v4937 = vunpack.c.l.s4 1934713408
        %v4938 = vunpack.c.0.s8 %v4937
        %v4939 = vlaneseq
        %v4940 = vshrl.u32 %v4939, 7
        %v4941 = vsub.s32 %v4938, %v4940
        %v4942 = vrot.slane %v4934, %v4941
        %v4944 = vunpack.c.l.s4 1934713408
        %v4945 = vunpack.c.0.s8 %v4944
        %v4946 = vlaneseq
        %v4947 = vshrl.u32 %v4946, 7
        %v4948 = vsub.s32 %v4945, %v4947
        %v4949 = vrot.slane %v4935, %v4948
        %v4950 = vcombine.low %v4885, %v4901
        %v4951 = vcombine.high %v4885, %v4901
        %v4953 = vunpack.c.l.s4 1934713408
        %v4954 = vunpack.c.0.s8 %v4953
        %v4955 = vlaneseq
        %v4956 = vshrl.u32 %v4955, 7
        %v4957 = vsub.s32 %v4954, %v4956
        %v4958 = vrot.slane %v4950, %v4957
        %v4960 = vunpack.c.l.s4 1934713408
        %v4961 = vunpack.c.0.s8 %v4960
        %v4962 = vlaneseq
        %v4963 = vshrl.u32 %v4962, 7
        %v4964 = vsub.s32 %v4961, %v4963
        %v4965 = vrot.slane %v4951, %v4964
        %v4966 = vcombine.low %v4910, %v4942
        %v4967 = vcombine.high %v4910, %v4942
        %v4968 = vcombine.low %v4917, %v4949
        %v4969 = vcombine.high %v4917, %v4949
        %v4970 = vcombine.low %v4926, %v4958
        %v4971 = vcombine.high %v4926, %v4958
        %v4972 = vcombine.low %v4933, %v4965
        %v4973 = vcombine.high %v4933, %v4965
        %v4974 = vcombine.low %v4793, %v4801
        %v4975 = vcombine.high %v4793, %v4801
        %v4977 = vunpack.c.l.s4 1983009808
        %v4978 = vunpack.c.0.s8 %v4977
        %v4979 = vlaneseq
        %v4980 = vshrl.u32 %v4979, 7
        %v4981 = vsub.s32 %v4978, %v4980
        %v4982 = vrot.slane %v4974, %v4981
        %v4984 = vunpack.c.l.s4 1983009808
        %v4985 = vunpack.c.0.s8 %v4984
        %v4986 = vlaneseq
        %v4987 = vshrl.u32 %v4986, 7
        %v4988 = vsub.s32 %v4985, %v4987
        %v4989 = vrot.slane %v4975, %v4988
        %v4990 = vcombine.low %v4797, %v4805
        %v4991 = vcombine.high %v4797, %v4805
        %v4993 = vunpack.c.l.s4 1983009808
        %v4994 = vunpack.c.0.s8 %v4993
        %v4995 = vlaneseq
        %v4996 = vshrl.u32 %v4995, 7
        %v4997 = vsub.s32 %v4994, %v4996
        %v4998 = vrot.slane %v4990, %v4997
        %v5000 = vunpack.c.l.s4 1983009808
        %v5001 = vunpack.c.0.s8 %v5000
        %v5002 = vlaneseq
        %v5003 = vshrl.u32 %v5002, 7
        %v5004 = vsub.s32 %v5001, %v5003
        %v5005 = vrot.slane %v4991, %v5004
        %v5006 = vcombine.low %v4809, %v4817
        %v5007 = vcombine.high %v4809, %v4817
        %v5009 = vunpack.c.l.s4 1983009808
        %v5010 = vunpack.c.0.s8 %v5009
        %v5011 = vlaneseq
        %v5012 = vshrl.u32 %v5011, 7
        %v5013 = vsub.s32 %v5010, %v5012
        %v5014 = vrot.slane %v5006, %v5013
        %v5016 = vunpack.c.l.s4 1983009808
        %v5017 = vunpack.c.0.s8 %v5016
        %v5018 = vlaneseq
        %v5019 = vshrl.u32 %v5018, 7
        %v5020 = vsub.s32 %v5017, %v5019
        %v5021 = vrot.slane %v5007, %v5020
        %v5022 = vcombine.low %v4813, %v4821
        %v5023 = vcombine.high %v4813, %v4821
        %v5025 = vunpack.c.l.s4 1983009808
        %v5026 = vunpack.c.0.s8 %v5025
        %v5027 = vlaneseq
        %v5028 = vshrl.u32 %v5027, 7
        %v5029 = vsub.s32 %v5026, %v5028
        %v5030 = vrot.slane %v5022, %v5029
        %v5032 = vunpack.c.l.s4 1983009808
        %v5033 = vunpack.c.0.s8 %v5032
        %v5034 = vlaneseq
        %v5035 = vshrl.u32 %v5034, 7
        %v5036 = vsub.s32 %v5033, %v5035
        %v5037 = vrot.slane %v5023, %v5036
        %v5038 = vcombine.low %v4982, %v4998
        %v5039 = vcombine.high %v4982, %v4998
        %v5041 = vunpack.c.l.s4 1934713408
        %v5042 = vunpack.c.0.s8 %v5041
        %v5043 = vlaneseq
        %v5044 = vshrl.u32 %v5043, 7
        %v5045 = vsub.s32 %v5042, %v5044
        %v5046 = vrot.slane %v5038, %v5045
        %v5048 = vunpack.c.l.s4 1934713408
        %v5049 = vunpack.c.0.s8 %v5048
        %v5050 = vlaneseq
        %v5051 = vshrl.u32 %v5050, 7
        %v5052 = vsub.s32 %v5049, %v5051
        %v5053 = vrot.slane %v5039, %v5052
        %v5054 = vcombine.low %v4989, %v5005
        %v5055 = vcombine.high %v4989, %v5005
        %v5057 = vunpack.c.l.s4 1934713408
        %v5058 = vunpack.c.0.s8 %v5057
        %v5059 = vlaneseq
        %v5060 = vshrl.u32 %v5059, 7
        %v5061 = vsub.s32 %v5058, %v5060
        %v5062 = vrot.slane %v5054, %v5061
        %v5064 = vunpack.c.l.s4 1934713408
        %v5065 = vunpack.c.0.s8 %v5064
        %v5066 = vlaneseq
        %v5067 = vshrl.u32 %v5066, 7
        %v5068 = vsub.s32 %v5065, %v5067
        %v5069 = vrot.slane %v5055, %v5068
        %v5070 = vcombine.low %v5014, %v5030
        %v5071 = vcombine.high %v5014, %v5030
        %v5073 = vunpack.c.l.s4 1934713408
        %v5074 = vunpack.c.0.s8 %v5073
        %v5075 = vlaneseq
        %v5076 = vshrl.u32 %v5075, 7
        %v5077 = vsub.s32 %v5074, %v5076
        %v5078 = vrot.slane %v5070, %v5077
        %v5080 = vunpack.c.l.s4 1934713408
        %v5081 = vunpack.c.0.s8 %v5080
        %v5082 = vlaneseq
        %v5083 = vshrl.u32 %v5082, 7
        %v5084 = vsub.s32 %v5081, %v5083
        %v5085 = vrot.slane %v5071, %v5084
        %v5086 = vcombine.low %v5021, %v5037
        %v5087 = vcombine.high %v5021, %v5037
        %v5089 = vunpack.c.l.s4 1934713408
        %v5090 = vunpack.c.0.s8 %v5089
        %v5091 = vlaneseq
        %v5092 = vshrl.u32 %v5091, 7
        %v5093 = vsub.s32 %v5090, %v5092
        %v5094 = vrot.slane %v5086, %v5093
        %v5096 = vunpack.c.l.s4 1934713408
        %v5097 = vunpack.c.0.s8 %v5096
        %v5098 = vlaneseq
        %v5099 = vshrl.u32 %v5098, 7
        %v5100 = vsub.s32 %v5097, %v5099
        %v5101 = vrot.slane %v5087, %v5100
        %v5102 = vcombine.low %v5046, %v5078
        %v5103 = vcombine.high %v5046, %v5078
        %v5104 = vcombine.low %v5053, %v5085
        %v5105 = vcombine.high %v5053, %v5085
        %v5106 = vcombine.low %v5062, %v5094
        %v5107 = vcombine.high %v5062, %v5094
        %v5108 = vcombine.low %v5069, %v5101
        %v5109 = vcombine.high %v5069, %v5101
        %5111 = vrot.lane.b32.xlu0 %v4967, 16
        %v5112 = vpop.permute.xlu0 %5111
        %5115 = vrot.lane.b32.xlu0 %v4968, 32
        %v5116 = vpop.permute.xlu0 %5115
        %5119 = vrot.lane.b32.xlu0 %v4969, 48
        %v5120 = vpop.permute.xlu0 %5119
        %5123 = vrot.lane.b32.xlu0 %v4970, 64
        %v5124 = vpop.permute.xlu0 %5123
        %5127 = vrot.lane.b32.xlu0 %v4971, 80
        %v5128 = vpop.permute.xlu0 %5127
        %5131 = vrot.lane.b32.xlu0 %v4972, 96
        %v5132 = vpop.permute.xlu0 %5131
        %5135 = vrot.lane.b32.xlu0 %v4973, 112
        %v5136 = vpop.permute.xlu0 %5135
        %5139 = vrot.lane.b32.xlu0 %v5103, 16
        %v5140 = vpop.permute.xlu0 %5139
        %5143 = vrot.lane.b32.xlu0 %v5104, 32
        %v5144 = vpop.permute.xlu0 %5143
        %5147 = vrot.lane.b32.xlu0 %v5105, 48
        %v5148 = vpop.permute.xlu0 %5147
        %5151 = vrot.lane.b32.xlu0 %v5106, 64
        %v5152 = vpop.permute.xlu0 %5151
        %5155 = vrot.lane.b32.xlu0 %v5107, 80
        %v5156 = vpop.permute.xlu0 %5155
        %5159 = vrot.lane.b32.xlu0 %v5108, 96
        %v5160 = vpop.permute.xlu0 %5159
        %5163 = vrot.lane.b32.xlu0 %v5109, 112
        %v5164 = vpop.permute.xlu0 %5163
        %v5166 = vsel %vm774, %v4966, %v5112
        %v5167 = vsel %vm776, %v5166, %v5116
        %v5168 = vsel %vm778, %v5167, %v5120
        %v5169 = vsel %vm780, %v5168, %v5124
        %v5170 = vsel %vm782, %v5169, %v5128
        %v5171 = vsel %vm784, %v5170, %v5132
        %v5172 = vsel %vm786, %v5171, %v5136
        %v5173 = vsel %vm774, %v5102, %v5140
        %v5174 = vsel %vm776, %v5173, %v5144
        %v5175 = vsel %vm778, %v5174, %v5148
        %v5176 = vsel %vm780, %v5175, %v5152
        %v5177 = vsel %vm782, %v5176, %v5156
        %v5178 = vsel %vm784, %v5177, %v5160
        %v5179 = vsel %vm786, %v5178, %v5164
        %5180 = vrot.lane.b32.xlu0 %v4758, 126
        %v5181 = vpop.permute.xlu0 %5180
        %5182 = vrot.lane.b32.xlu0 %v4759, 126
        %v5183 = vpop.permute.xlu0 %5182
        %5184 = vrot.lane.b32.xlu0 %v4760, 126
        %v5185 = vpop.permute.xlu0 %5184
        %5186 = vrot.lane.b32.xlu0 %v4761, 126
        %v5187 = vpop.permute.xlu0 %5186
        %5188 = vrot.lane.b32.xlu0 %v4762, 126
        %v5189 = vpop.permute.xlu0 %5188
        %5190 = vrot.lane.b32.xlu0 %v4763, 126
        %v5191 = vpop.permute.xlu0 %5190
        %5192 = vrot.lane.b32.xlu0 %v4764, 126
        %v5193 = vpop.permute.xlu0 %5192
        %5194 = vrot.lane.b32.xlu0 %v4765, 126
        %v5195 = vpop.permute.xlu0 %5194
        %5196 = vrot.lane.b32.xlu0 %v4766, 126
        %v5197 = vpop.permute.xlu0 %5196
        %5198 = vrot.lane.b32.xlu0 %v4767, 126
        %v5199 = vpop.permute.xlu0 %5198
        %5200 = vrot.lane.b32.xlu0 %v4768, 126
        %v5201 = vpop.permute.xlu0 %5200
        %5202 = vrot.lane.b32.xlu0 %v4769, 126
        %v5203 = vpop.permute.xlu0 %5202
        %5204 = vrot.lane.b32.xlu0 %v4770, 126
        %v5205 = vpop.permute.xlu0 %5204
        %5206 = vrot.lane.b32.xlu0 %v4771, 126
        %v5207 = vpop.permute.xlu0 %5206
        %5208 = vrot.lane.b32.xlu0 %v4772, 126
        %v5209 = vpop.permute.xlu0 %5208
        %5210 = vrot.lane.b32.xlu0 %v4773, 126
        %v5211 = vpop.permute.xlu0 %5210
        %v5228 = vcombine.low %v5181, %v5189
        %v5229 = vcombine.high %v5181, %v5189
        %v5231 = vunpack.c.l.s4 1983009808
        %v5232 = vunpack.c.0.s8 %v5231
        %v5233 = vlaneseq
        %v5234 = vshrl.u32 %v5233, 7
        %v5235 = vsub.s32 %v5232, %v5234
        %v5236 = vrot.slane %v5228, %v5235
        %v5238 = vunpack.c.l.s4 1983009808
        %v5239 = vunpack.c.0.s8 %v5238
        %v5240 = vlaneseq
        %v5241 = vshrl.u32 %v5240, 7
        %v5242 = vsub.s32 %v5239, %v5241
        %v5243 = vrot.slane %v5229, %v5242
        %v5244 = vcombine.low %v5185, %v5193
        %v5245 = vcombine.high %v5185, %v5193
        %v5247 = vunpack.c.l.s4 1983009808
        %v5248 = vunpack.c.0.s8 %v5247
        %v5249 = vlaneseq
        %v5250 = vshrl.u32 %v5249, 7
        %v5251 = vsub.s32 %v5248, %v5250
        %v5252 = vrot.slane %v5244, %v5251
        %v5254 = vunpack.c.l.s4 1983009808
        %v5255 = vunpack.c.0.s8 %v5254
        %v5256 = vlaneseq
        %v5257 = vshrl.u32 %v5256, 7
        %v5258 = vsub.s32 %v5255, %v5257
        %v5259 = vrot.slane %v5245, %v5258
        %v5260 = vcombine.low %v5197, %v5205
        %v5261 = vcombine.high %v5197, %v5205
        %v5263 = vunpack.c.l.s4 1983009808
        %v5264 = vunpack.c.0.s8 %v5263
        %v5265 = vlaneseq
        %v5266 = vshrl.u32 %v5265, 7
        %v5267 = vsub.s32 %v5264, %v5266
        %v5268 = vrot.slane %v5260, %v5267
        %v5270 = vunpack.c.l.s4 1983009808
        %v5271 = vunpack.c.0.s8 %v5270
        %v5272 = vlaneseq
        %v5273 = vshrl.u32 %v5272, 7
        %v5274 = vsub.s32 %v5271, %v5273
        %v5275 = vrot.slane %v5261, %v5274
        %v5276 = vcombine.low %v5201, %v5209
        %v5277 = vcombine.high %v5201, %v5209
        %v5279 = vunpack.c.l.s4 1983009808
        %v5280 = vunpack.c.0.s8 %v5279
        %v5281 = vlaneseq
        %v5282 = vshrl.u32 %v5281, 7
        %v5283 = vsub.s32 %v5280, %v5282
        %v5284 = vrot.slane %v5276, %v5283
        %v5286 = vunpack.c.l.s4 1983009808
        %v5287 = vunpack.c.0.s8 %v5286
        %v5288 = vlaneseq
        %v5289 = vshrl.u32 %v5288, 7
        %v5290 = vsub.s32 %v5287, %v5289
        %v5291 = vrot.slane %v5277, %v5290
        %v5292 = vcombine.low %v5236, %v5252
        %v5293 = vcombine.high %v5236, %v5252
        %v5295 = vunpack.c.l.s4 1934713408
        %v5296 = vunpack.c.0.s8 %v5295
        %v5297 = vlaneseq
        %v5298 = vshrl.u32 %v5297, 7
        %v5299 = vsub.s32 %v5296, %v5298
        %v5300 = vrot.slane %v5292, %v5299
        %v5302 = vunpack.c.l.s4 1934713408
        %v5303 = vunpack.c.0.s8 %v5302
        %v5304 = vlaneseq
        %v5305 = vshrl.u32 %v5304, 7
        %v5306 = vsub.s32 %v5303, %v5305
        %v5307 = vrot.slane %v5293, %v5306
        %v5308 = vcombine.low %v5243, %v5259
        %v5309 = vcombine.high %v5243, %v5259
        %v5311 = vunpack.c.l.s4 1934713408
        %v5312 = vunpack.c.0.s8 %v5311
        %v5313 = vlaneseq
        %v5314 = vshrl.u32 %v5313, 7
        %v5315 = vsub.s32 %v5312, %v5314
        %v5316 = vrot.slane %v5308, %v5315
        %v5318 = vunpack.c.l.s4 1934713408
        %v5319 = vunpack.c.0.s8 %v5318
        %v5320 = vlaneseq
        %v5321 = vshrl.u32 %v5320, 7
        %v5322 = vsub.s32 %v5319, %v5321
        %v5323 = vrot.slane %v5309, %v5322
        %v5324 = vcombine.low %v5268, %v5284
        %v5325 = vcombine.high %v5268, %v5284
        %v5327 = vunpack.c.l.s4 1934713408
        %v5328 = vunpack.c.0.s8 %v5327
        %v5329 = vlaneseq
        %v5330 = vshrl.u32 %v5329, 7
        %v5331 = vsub.s32 %v5328, %v5330
        %v5332 = vrot.slane %v5324, %v5331
        %v5334 = vunpack.c.l.s4 1934713408
        %v5335 = vunpack.c.0.s8 %v5334
        %v5336 = vlaneseq
        %v5337 = vshrl.u32 %v5336, 7
        %v5338 = vsub.s32 %v5335, %v5337
        %v5339 = vrot.slane %v5325, %v5338
        %v5340 = vcombine.low %v5275, %v5291
        %v5341 = vcombine.high %v5275, %v5291
        %v5343 = vunpack.c.l.s4 1934713408
        %v5344 = vunpack.c.0.s8 %v5343
        %v5345 = vlaneseq
        %v5346 = vshrl.u32 %v5345, 7
        %v5347 = vsub.s32 %v5344, %v5346
        %v5348 = vrot.slane %v5340, %v5347
        %v5350 = vunpack.c.l.s4 1934713408
        %v5351 = vunpack.c.0.s8 %v5350
        %v5352 = vlaneseq
        %v5353 = vshrl.u32 %v5352, 7
        %v5354 = vsub.s32 %v5351, %v5353
        %v5355 = vrot.slane %v5341, %v5354
        %v5356 = vcombine.low %v5300, %v5332
        %v5357 = vcombine.high %v5300, %v5332
        %v5358 = vcombine.low %v5307, %v5339
        %v5359 = vcombine.high %v5307, %v5339
        %v5360 = vcombine.low %v5316, %v5348
        %v5361 = vcombine.high %v5316, %v5348
        %v5362 = vcombine.low %v5323, %v5355
        %v5363 = vcombine.high %v5323, %v5355
        %v5364 = vcombine.low %v5183, %v5191
        %v5365 = vcombine.high %v5183, %v5191
        %v5367 = vunpack.c.l.s4 1983009808
        %v5368 = vunpack.c.0.s8 %v5367
        %v5369 = vlaneseq
        %v5370 = vshrl.u32 %v5369, 7
        %v5371 = vsub.s32 %v5368, %v5370
        %v5372 = vrot.slane %v5364, %v5371
        %v5374 = vunpack.c.l.s4 1983009808
        %v5375 = vunpack.c.0.s8 %v5374
        %v5376 = vlaneseq
        %v5377 = vshrl.u32 %v5376, 7
        %v5378 = vsub.s32 %v5375, %v5377
        %v5379 = vrot.slane %v5365, %v5378
        %v5380 = vcombine.low %v5187, %v5195
        %v5381 = vcombine.high %v5187, %v5195
        %v5383 = vunpack.c.l.s4 1983009808
        %v5384 = vunpack.c.0.s8 %v5383
        %v5385 = vlaneseq
        %v5386 = vshrl.u32 %v5385, 7
        %v5387 = vsub.s32 %v5384, %v5386
        %v5388 = vrot.slane %v5380, %v5387
        %v5390 = vunpack.c.l.s4 1983009808
        %v5391 = vunpack.c.0.s8 %v5390
        %v5392 = vlaneseq
        %v5393 = vshrl.u32 %v5392, 7
        %v5394 = vsub.s32 %v5391, %v5393
        %v5395 = vrot.slane %v5381, %v5394
        %v5396 = vcombine.low %v5199, %v5207
        %v5397 = vcombine.high %v5199, %v5207
        %v5399 = vunpack.c.l.s4 1983009808
        %v5400 = vunpack.c.0.s8 %v5399
        %v5401 = vlaneseq
        %v5402 = vshrl.u32 %v5401, 7
        %v5403 = vsub.s32 %v5400, %v5402
        %v5404 = vrot.slane %v5396, %v5403
        %v5406 = vunpack.c.l.s4 1983009808
        %v5407 = vunpack.c.0.s8 %v5406
        %v5408 = vlaneseq
        %v5409 = vshrl.u32 %v5408, 7
        %v5410 = vsub.s32 %v5407, %v5409
        %v5411 = vrot.slane %v5397, %v5410
        %v5412 = vcombine.low %v5203, %v5211
        %v5413 = vcombine.high %v5203, %v5211
        %v5415 = vunpack.c.l.s4 1983009808
        %v5416 = vunpack.c.0.s8 %v5415
        %v5417 = vlaneseq
        %v5418 = vshrl.u32 %v5417, 7
        %v5419 = vsub.s32 %v5416, %v5418
        %v5420 = vrot.slane %v5412, %v5419
        %v5422 = vunpack.c.l.s4 1983009808
        %v5423 = vunpack.c.0.s8 %v5422
        %v5424 = vlaneseq
        %v5425 = vshrl.u32 %v5424, 7
        %v5426 = vsub.s32 %v5423, %v5425
        %v5427 = vrot.slane %v5413, %v5426
        %v5428 = vcombine.low %v5372, %v5388
        %v5429 = vcombine.high %v5372, %v5388
        %v5431 = vunpack.c.l.s4 1934713408
        %v5432 = vunpack.c.0.s8 %v5431
        %v5433 = vlaneseq
        %v5434 = vshrl.u32 %v5433, 7
        %v5435 = vsub.s32 %v5432, %v5434
        %v5436 = vrot.slane %v5428, %v5435
        %v5438 = vunpack.c.l.s4 1934713408
        %v5439 = vunpack.c.0.s8 %v5438
        %v5440 = vlaneseq
        %v5441 = vshrl.u32 %v5440, 7
        %v5442 = vsub.s32 %v5439, %v5441
        %v5443 = vrot.slane %v5429, %v5442
        %v5444 = vcombine.low %v5379, %v5395
        %v5445 = vcombine.high %v5379, %v5395
        %v5447 = vunpack.c.l.s4 1934713408
        %v5448 = vunpack.c.0.s8 %v5447
        %v5449 = vlaneseq
        %v5450 = vshrl.u32 %v5449, 7
        %v5451 = vsub.s32 %v5448, %v5450
        %v5452 = vrot.slane %v5444, %v5451
        %v5454 = vunpack.c.l.s4 1934713408
        %v5455 = vunpack.c.0.s8 %v5454
        %v5456 = vlaneseq
        %v5457 = vshrl.u32 %v5456, 7
        %v5458 = vsub.s32 %v5455, %v5457
        %v5459 = vrot.slane %v5445, %v5458
        %v5460 = vcombine.low %v5404, %v5420
        %v5461 = vcombine.high %v5404, %v5420
        %v5463 = vunpack.c.l.s4 1934713408
        %v5464 = vunpack.c.0.s8 %v5463
        %v5465 = vlaneseq
        %v5466 = vshrl.u32 %v5465, 7
        %v5467 = vsub.s32 %v5464, %v5466
        %v5468 = vrot.slane %v5460, %v5467
        %v5470 = vunpack.c.l.s4 1934713408
        %v5471 = vunpack.c.0.s8 %v5470
        %v5472 = vlaneseq
        %v5473 = vshrl.u32 %v5472, 7
        %v5474 = vsub.s32 %v5471, %v5473
        %v5475 = vrot.slane %v5461, %v5474
        %v5476 = vcombine.low %v5411, %v5427
        %v5477 = vcombine.high %v5411, %v5427
        %v5479 = vunpack.c.l.s4 1934713408
        %v5480 = vunpack.c.0.s8 %v5479
        %v5481 = vlaneseq
        %v5482 = vshrl.u32 %v5481, 7
        %v5483 = vsub.s32 %v5480, %v5482
        %v5484 = vrot.slane %v5476, %v5483
        %v5486 = vunpack.c.l.s4 1934713408
        %v5487 = vunpack.c.0.s8 %v5486
        %v5488 = vlaneseq
        %v5489 = vshrl.u32 %v5488, 7
        %v5490 = vsub.s32 %v5487, %v5489
        %v5491 = vrot.slane %v5477, %v5490
        %v5492 = vcombine.low %v5436, %v5468
        %v5493 = vcombine.high %v5436, %v5468
        %v5494 = vcombine.low %v5443, %v5475
        %v5495 = vcombine.high %v5443, %v5475
        %v5496 = vcombine.low %v5452, %v5484
        %v5497 = vcombine.high %v5452, %v5484
        %v5498 = vcombine.low %v5459, %v5491
        %v5499 = vcombine.high %v5459, %v5491
        %5501 = vrot.lane.b32.xlu0 %v5357, 16
        %v5502 = vpop.permute.xlu0 %5501
        %5505 = vrot.lane.b32.xlu0 %v5358, 32
        %v5506 = vpop.permute.xlu0 %5505
        %5509 = vrot.lane.b32.xlu0 %v5359, 48
        %v5510 = vpop.permute.xlu0 %5509
        %5513 = vrot.lane.b32.xlu0 %v5360, 64
        %v5514 = vpop.permute.xlu0 %5513
        %5517 = vrot.lane.b32.xlu0 %v5361, 80
        %v5518 = vpop.permute.xlu0 %5517
        %5521 = vrot.lane.b32.xlu0 %v5362, 96
        %v5522 = vpop.permute.xlu0 %5521
        %5525 = vrot.lane.b32.xlu0 %v5363, 112
        %v5526 = vpop.permute.xlu0 %5525
        %5529 = vrot.lane.b32.xlu0 %v5493, 16
        %v5530 = vpop.permute.xlu0 %5529
        %5533 = vrot.lane.b32.xlu0 %v5494, 32
        %v5534 = vpop.permute.xlu0 %5533
        %5537 = vrot.lane.b32.xlu0 %v5495, 48
        %v5538 = vpop.permute.xlu0 %5537
        %5541 = vrot.lane.b32.xlu0 %v5496, 64
        %v5542 = vpop.permute.xlu0 %5541
        %5545 = vrot.lane.b32.xlu0 %v5497, 80
        %v5546 = vpop.permute.xlu0 %5545
        %5549 = vrot.lane.b32.xlu0 %v5498, 96
        %v5550 = vpop.permute.xlu0 %5549
        %5553 = vrot.lane.b32.xlu0 %v5499, 112
        %v5554 = vpop.permute.xlu0 %5553
        %v5556 = vsel %vm774, %v5356, %v5502
        %v5557 = vsel %vm776, %v5556, %v5506
        %v5558 = vsel %vm778, %v5557, %v5510
        %v5559 = vsel %vm780, %v5558, %v5514
        %v5560 = vsel %vm782, %v5559, %v5518
        %v5561 = vsel %vm784, %v5560, %v5522
        %v5562 = vsel %vm786, %v5561, %v5526
        %v5563 = vsel %vm774, %v5492, %v5530
        %v5564 = vsel %vm776, %v5563, %v5534
        %v5565 = vsel %vm778, %v5564, %v5538
        %v5566 = vsel %vm780, %v5565, %v5542
        %v5567 = vsel %vm782, %v5566, %v5546
        %v5568 = vsel %vm784, %v5567, %v5550
        %v5569 = vsel %vm786, %v5568, %v5554
        %v5570 = vld [vmem:[#allocation3 + $0x1] sm:$0xff]
        %v5571 = vld [vmem:[#allocation3 + $0x9] sm:$0xff]
        %v5572 = vld [vmem:[#allocation3 + $0x19] sm:$0xff]
        %v5573 = vld [vmem:[#allocation3 + $0x21] sm:$0xff]
        %v5574 = vld [vmem:[#allocation3 + $0x31] sm:$0xff]
        %v5575 = vld [vmem:[#allocation3 + $0x39] sm:$0xff]
        %v5576 = vld [vmem:[#allocation3 + $0x49] sm:$0xff]
        %v5577 = vld [vmem:[#allocation3 + $0x51] sm:$0xff]
        %v5578 = vld [vmem:[#allocation3 + $0x61] sm:$0xff]
        %v5579 = vld [vmem:[#allocation3 + $0x69] sm:$0xff]
        %v5580 = vld [vmem:[#allocation3 + $0x79] sm:$0xff]
        %v5581 = vld [vmem:[#allocation3 + $0x81] sm:$0xff]
        %v5582 = vld [vmem:[#allocation3 + $0x91] sm:$0xff]
        %v5583 = vld [vmem:[#allocation3 + $0x99] sm:$0xff]
        %v5584 = vld [vmem:[#allocation3 + $0xa9] sm:$0xff]
        %v5585 = vld [vmem:[#allocation3 + $0xb1] sm:$0xff]
        %5602 = vrot.lane.b32.xlu0 %v5570, 127
        %v5603 = vpop.permute.xlu0 %5602
        %5604 = vrot.lane.b32.xlu0 %v5571, 127
        %v5605 = vpop.permute.xlu0 %5604
        %5606 = vrot.lane.b32.xlu0 %v5572, 127
        %v5607 = vpop.permute.xlu0 %5606
        %5608 = vrot.lane.b32.xlu0 %v5573, 127
        %v5609 = vpop.permute.xlu0 %5608
        %5610 = vrot.lane.b32.xlu0 %v5574, 127
        %v5611 = vpop.permute.xlu0 %5610
        %5612 = vrot.lane.b32.xlu0 %v5575, 127
        %v5613 = vpop.permute.xlu0 %5612
        %5614 = vrot.lane.b32.xlu0 %v5576, 127
        %v5615 = vpop.permute.xlu0 %5614
        %5616 = vrot.lane.b32.xlu0 %v5577, 127
        %v5617 = vpop.permute.xlu0 %5616
        %5618 = vrot.lane.b32.xlu0 %v5578, 127
        %v5619 = vpop.permute.xlu0 %5618
        %5620 = vrot.lane.b32.xlu0 %v5579, 127
        %v5621 = vpop.permute.xlu0 %5620
        %5622 = vrot.lane.b32.xlu0 %v5580, 127
        %v5623 = vpop.permute.xlu0 %5622
        %5624 = vrot.lane.b32.xlu0 %v5581, 127
        %v5625 = vpop.permute.xlu0 %5624
        %5626 = vrot.lane.b32.xlu0 %v5582, 127
        %v5627 = vpop.permute.xlu0 %5626
        %5628 = vrot.lane.b32.xlu0 %v5583, 127
        %v5629 = vpop.permute.xlu0 %5628
        %5630 = vrot.lane.b32.xlu0 %v5584, 127
        %v5631 = vpop.permute.xlu0 %5630
        %5632 = vrot.lane.b32.xlu0 %v5585, 127
        %v5633 = vpop.permute.xlu0 %5632
        %v5650 = vcombine.low %v5603, %v5611
        %v5651 = vcombine.high %v5603, %v5611
        %v5653 = vunpack.c.l.s4 1983009808
        %v5654 = vunpack.c.0.s8 %v5653
        %v5655 = vlaneseq
        %v5656 = vshrl.u32 %v5655, 7
        %v5657 = vsub.s32 %v5654, %v5656
        %v5658 = vrot.slane %v5650, %v5657
        %v5660 = vunpack.c.l.s4 1983009808
        %v5661 = vunpack.c.0.s8 %v5660
        %v5662 = vlaneseq
        %v5663 = vshrl.u32 %v5662, 7
        %v5664 = vsub.s32 %v5661, %v5663
        %v5665 = vrot.slane %v5651, %v5664
        %v5666 = vcombine.low %v5607, %v5615
        %v5667 = vcombine.high %v5607, %v5615
        %v5669 = vunpack.c.l.s4 1983009808
        %v5670 = vunpack.c.0.s8 %v5669
        %v5671 = vlaneseq
        %v5672 = vshrl.u32 %v5671, 7
        %v5673 = vsub.s32 %v5670, %v5672
        %v5674 = vrot.slane %v5666, %v5673
        %v5676 = vunpack.c.l.s4 1983009808
        %v5677 = vunpack.c.0.s8 %v5676
        %v5678 = vlaneseq
        %v5679 = vshrl.u32 %v5678, 7
        %v5680 = vsub.s32 %v5677, %v5679
        %v5681 = vrot.slane %v5667, %v5680
        %v5682 = vcombine.low %v5619, %v5627
        %v5683 = vcombine.high %v5619, %v5627
        %v5685 = vunpack.c.l.s4 1983009808
        %v5686 = vunpack.c.0.s8 %v5685
        %v5687 = vlaneseq
        %v5688 = vshrl.u32 %v5687, 7
        %v5689 = vsub.s32 %v5686, %v5688
        %v5690 = vrot.slane %v5682, %v5689
        %v5692 = vunpack.c.l.s4 1983009808
        %v5693 = vunpack.c.0.s8 %v5692
        %v5694 = vlaneseq
        %v5695 = vshrl.u32 %v5694, 7
        %v5696 = vsub.s32 %v5693, %v5695
        %v5697 = vrot.slane %v5683, %v5696
        %v5698 = vcombine.low %v5623, %v5631
        %v5699 = vcombine.high %v5623, %v5631
        %v5701 = vunpack.c.l.s4 1983009808
        %v5702 = vunpack.c.0.s8 %v5701
        %v5703 = vlaneseq
        %v5704 = vshrl.u32 %v5703, 7
        %v5705 = vsub.s32 %v5702, %v5704
        %v5706 = vrot.slane %v5698, %v5705
        %v5708 = vunpack.c.l.s4 1983009808
        %v5709 = vunpack.c.0.s8 %v5708
        %v5710 = vlaneseq
        %v5711 = vshrl.u32 %v5710, 7
        %v5712 = vsub.s32 %v5709, %v5711
        %v5713 = vrot.slane %v5699, %v5712
        %v5714 = vcombine.low %v5658, %v5674
        %v5715 = vcombine.high %v5658, %v5674
        %v5717 = vunpack.c.l.s4 1934713408
        %v5718 = vunpack.c.0.s8 %v5717
        %v5719 = vlaneseq
        %v5720 = vshrl.u32 %v5719, 7
        %v5721 = vsub.s32 %v5718, %v5720
        %v5722 = vrot.slane %v5714, %v5721
        %v5724 = vunpack.c.l.s4 1934713408
        %v5725 = vunpack.c.0.s8 %v5724
        %v5726 = vlaneseq
        %v5727 = vshrl.u32 %v5726, 7
        %v5728 = vsub.s32 %v5725, %v5727
        %v5729 = vrot.slane %v5715, %v5728
        %v5730 = vcombine.low %v5665, %v5681
        %v5731 = vcombine.high %v5665, %v5681
        %v5733 = vunpack.c.l.s4 1934713408
        %v5734 = vunpack.c.0.s8 %v5733
        %v5735 = vlaneseq
        %v5736 = vshrl.u32 %v5735, 7
        %v5737 = vsub.s32 %v5734, %v5736
        %v5738 = vrot.slane %v5730, %v5737
        %v5740 = vunpack.c.l.s4 1934713408
        %v5741 = vunpack.c.0.s8 %v5740
        %v5742 = vlaneseq
        %v5743 = vshrl.u32 %v5742, 7
        %v5744 = vsub.s32 %v5741, %v5743
        %v5745 = vrot.slane %v5731, %v5744
        %v5746 = vcombine.low %v5690, %v5706
        %v5747 = vcombine.high %v5690, %v5706
        %v5749 = vunpack.c.l.s4 1934713408
        %v5750 = vunpack.c.0.s8 %v5749
        %v5751 = vlaneseq
        %v5752 = vshrl.u32 %v5751, 7
        %v5753 = vsub.s32 %v5750, %v5752
        %v5754 = vrot.slane %v5746, %v5753
        %v5756 = vunpack.c.l.s4 1934713408
        %v5757 = vunpack.c.0.s8 %v5756
        %v5758 = vlaneseq
        %v5759 = vshrl.u32 %v5758, 7
        %v5760 = vsub.s32 %v5757, %v5759
        %v5761 = vrot.slane %v5747, %v5760
        %v5762 = vcombine.low %v5697, %v5713
        %v5763 = vcombine.high %v5697, %v5713
        %v5765 = vunpack.c.l.s4 1934713408
        %v5766 = vunpack.c.0.s8 %v5765
        %v5767 = vlaneseq
        %v5768 = vshrl.u32 %v5767, 7
        %v5769 = vsub.s32 %v5766, %v5768
        %v5770 = vrot.slane %v5762, %v5769
        %v5772 = vunpack.c.l.s4 1934713408
        %v5773 = vunpack.c.0.s8 %v5772
        %v5774 = vlaneseq
        %v5775 = vshrl.u32 %v5774, 7
        %v5776 = vsub.s32 %v5773, %v5775
        %v5777 = vrot.slane %v5763, %v5776
        %v5778 = vcombine.low %v5722, %v5754
        %v5779 = vcombine.high %v5722, %v5754
        %v5780 = vcombine.low %v5729, %v5761
        %v5781 = vcombine.high %v5729, %v5761
        %v5782 = vcombine.low %v5738, %v5770
        %v5783 = vcombine.high %v5738, %v5770
        %v5784 = vcombine.low %v5745, %v5777
        %v5785 = vcombine.high %v5745, %v5777
        %v5786 = vcombine.low %v5605, %v5613
        %v5787 = vcombine.high %v5605, %v5613
        %v5789 = vunpack.c.l.s4 1983009808
        %v5790 = vunpack.c.0.s8 %v5789
        %v5791 = vlaneseq
        %v5792 = vshrl.u32 %v5791, 7
        %v5793 = vsub.s32 %v5790, %v5792
        %v5794 = vrot.slane %v5786, %v5793
        %v5796 = vunpack.c.l.s4 1983009808
        %v5797 = vunpack.c.0.s8 %v5796
        %v5798 = vlaneseq
        %v5799 = vshrl.u32 %v5798, 7
        %v5800 = vsub.s32 %v5797, %v5799
        %v5801 = vrot.slane %v5787, %v5800
        %v5802 = vcombine.low %v5609, %v5617
        %v5803 = vcombine.high %v5609, %v5617
        %v5805 = vunpack.c.l.s4 1983009808
        %v5806 = vunpack.c.0.s8 %v5805
        %v5807 = vlaneseq
        %v5808 = vshrl.u32 %v5807, 7
        %v5809 = vsub.s32 %v5806, %v5808
        %v5810 = vrot.slane %v5802, %v5809
        %v5812 = vunpack.c.l.s4 1983009808
        %v5813 = vunpack.c.0.s8 %v5812
        %v5814 = vlaneseq
        %v5815 = vshrl.u32 %v5814, 7
        %v5816 = vsub.s32 %v5813, %v5815
        %v5817 = vrot.slane %v5803, %v5816
        %v5818 = vcombine.low %v5621, %v5629
        %v5819 = vcombine.high %v5621, %v5629
        %v5821 = vunpack.c.l.s4 1983009808
        %v5822 = vunpack.c.0.s8 %v5821
        %v5823 = vlaneseq
        %v5824 = vshrl.u32 %v5823, 7
        %v5825 = vsub.s32 %v5822, %v5824
        %v5826 = vrot.slane %v5818, %v5825
        %v5828 = vunpack.c.l.s4 1983009808
        %v5829 = vunpack.c.0.s8 %v5828
        %v5830 = vlaneseq
        %v5831 = vshrl.u32 %v5830, 7
        %v5832 = vsub.s32 %v5829, %v5831
        %v5833 = vrot.slane %v5819, %v5832
        %v5834 = vcombine.low %v5625, %v5633
        %v5835 = vcombine.high %v5625, %v5633
        %v5837 = vunpack.c.l.s4 1983009808
        %v5838 = vunpack.c.0.s8 %v5837
        %v5839 = vlaneseq
        %v5840 = vshrl.u32 %v5839, 7
        %v5841 = vsub.s32 %v5838, %v5840
        %v5842 = vrot.slane %v5834, %v5841
        %v5844 = vunpack.c.l.s4 1983009808
        %v5845 = vunpack.c.0.s8 %v5844
        %v5846 = vlaneseq
        %v5847 = vshrl.u32 %v5846, 7
        %v5848 = vsub.s32 %v5845, %v5847
        %v5849 = vrot.slane %v5835, %v5848
        %v5850 = vcombine.low %v5794, %v5810
        %v5851 = vcombine.high %v5794, %v5810
        %v5853 = vunpack.c.l.s4 1934713408
        %v5854 = vunpack.c.0.s8 %v5853
        %v5855 = vlaneseq
        %v5856 = vshrl.u32 %v5855, 7
        %v5857 = vsub.s32 %v5854, %v5856
        %v5858 = vrot.slane %v5850, %v5857
        %v5860 = vunpack.c.l.s4 1934713408
        %v5861 = vunpack.c.0.s8 %v5860
        %v5862 = vlaneseq
        %v5863 = vshrl.u32 %v5862, 7
        %v5864 = vsub.s32 %v5861, %v5863
        %v5865 = vrot.slane %v5851, %v5864
        %v5866 = vcombine.low %v5801, %v5817
        %v5867 = vcombine.high %v5801, %v5817
        %v5869 = vunpack.c.l.s4 1934713408
        %v5870 = vunpack.c.0.s8 %v5869
        %v5871 = vlaneseq
        %v5872 = vshrl.u32 %v5871, 7
        %v5873 = vsub.s32 %v5870, %v5872
        %v5874 = vrot.slane %v5866, %v5873
        %v5876 = vunpack.c.l.s4 1934713408
        %v5877 = vunpack.c.0.s8 %v5876
        %v5878 = vlaneseq
        %v5879 = vshrl.u32 %v5878, 7
        %v5880 = vsub.s32 %v5877, %v5879
        %v5881 = vrot.slane %v5867, %v5880
        %v5882 = vcombine.low %v5826, %v5842
        %v5883 = vcombine.high %v5826, %v5842
        %v5885 = vunpack.c.l.s4 1934713408
        %v5886 = vunpack.c.0.s8 %v5885
        %v5887 = vlaneseq
        %v5888 = vshrl.u32 %v5887, 7
        %v5889 = vsub.s32 %v5886, %v5888
        %v5890 = vrot.slane %v5882, %v5889
        %v5892 = vunpack.c.l.s4 1934713408
        %v5893 = vunpack.c.0.s8 %v5892
        %v5894 = vlaneseq
        %v5895 = vshrl.u32 %v5894, 7
        %v5896 = vsub.s32 %v5893, %v5895
        %v5897 = vrot.slane %v5883, %v5896
        %v5898 = vcombine.low %v5833, %v5849
        %v5899 = vcombine.high %v5833, %v5849
        %v5901 = vunpack.c.l.s4 1934713408
        %v5902 = vunpack.c.0.s8 %v5901
        %v5903 = vlaneseq
        %v5904 = vshrl.u32 %v5903, 7
        %v5905 = vsub.s32 %v5902, %v5904
        %v5906 = vrot.slane %v5898, %v5905
        %v5908 = vunpack.c.l.s4 1934713408
        %v5909 = vunpack.c.0.s8 %v5908
        %v5910 = vlaneseq
        %v5911 = vshrl.u32 %v5910, 7
        %v5912 = vsub.s32 %v5909, %v5911
        %v5913 = vrot.slane %v5899, %v5912
        %v5914 = vcombine.low %v5858, %v5890
        %v5915 = vcombine.high %v5858, %v5890
        %v5916 = vcombine.low %v5865, %v5897
        %v5917 = vcombine.high %v5865, %v5897
        %v5918 = vcombine.low %v5874, %v5906
        %v5919 = vcombine.high %v5874, %v5906
        %v5920 = vcombine.low %v5881, %v5913
        %v5921 = vcombine.high %v5881, %v5913
        %5923 = vrot.lane.b32.xlu0 %v5779, 16
        %v5924 = vpop.permute.xlu0 %5923
        %5927 = vrot.lane.b32.xlu0 %v5780, 32
        %v5928 = vpop.permute.xlu0 %5927
        %5931 = vrot.lane.b32.xlu0 %v5781, 48
        %v5932 = vpop.permute.xlu0 %5931
        %5935 = vrot.lane.b32.xlu0 %v5782, 64
        %v5936 = vpop.permute.xlu0 %5935
        %5939 = vrot.lane.b32.xlu0 %v5783, 80
        %v5940 = vpop.permute.xlu0 %5939
        %5943 = vrot.lane.b32.xlu0 %v5784, 96
        %v5944 = vpop.permute.xlu0 %5943
        %5947 = vrot.lane.b32.xlu0 %v5785, 112
        %v5948 = vpop.permute.xlu0 %5947
        %5951 = vrot.lane.b32.xlu0 %v5915, 16
        %v5952 = vpop.permute.xlu0 %5951
        %5955 = vrot.lane.b32.xlu0 %v5916, 32
        %v5956 = vpop.permute.xlu0 %5955
        %5959 = vrot.lane.b32.xlu0 %v5917, 48
        %v5960 = vpop.permute.xlu0 %5959
        %5963 = vrot.lane.b32.xlu0 %v5918, 64
        %v5964 = vpop.permute.xlu0 %5963
        %5967 = vrot.lane.b32.xlu0 %v5919, 80
        %v5968 = vpop.permute.xlu0 %5967
        %5971 = vrot.lane.b32.xlu0 %v5920, 96
        %v5972 = vpop.permute.xlu0 %5971
        %5975 = vrot.lane.b32.xlu0 %v5921, 112
        %v5976 = vpop.permute.xlu0 %5975
        %v5978 = vsel %vm774, %v5778, %v5924
        %v5979 = vsel %vm776, %v5978, %v5928
        %v5980 = vsel %vm778, %v5979, %v5932
        %v5981 = vsel %vm780, %v5980, %v5936
        %v5982 = vsel %vm782, %v5981, %v5940
        %v5983 = vsel %vm784, %v5982, %v5944
        %v5984 = vsel %vm786, %v5983, %v5948
        %v5985 = vsel %vm774, %v5914, %v5952
        %v5986 = vsel %vm776, %v5985, %v5956
        %v5987 = vsel %vm778, %v5986, %v5960
        %v5988 = vsel %vm780, %v5987, %v5964
        %v5989 = vsel %vm782, %v5988, %v5968
        %v5990 = vsel %vm784, %v5989, %v5972
        %v5991 = vsel %vm786, %v5990, %v5976
        %5992 = vrot.lane.b32.xlu0 %v5570, 126
        %v5993 = vpop.permute.xlu0 %5992
        %5994 = vrot.lane.b32.xlu0 %v5571, 126
        %v5995 = vpop.permute.xlu0 %5994
        %5996 = vrot.lane.b32.xlu0 %v5572, 126
        %v5997 = vpop.permute.xlu0 %5996
        %5998 = vrot.lane.b32.xlu0 %v5573, 126
        %v5999 = vpop.permute.xlu0 %5998
        %6000 = vrot.lane.b32.xlu0 %v5574, 126
        %v6001 = vpop.permute.xlu0 %6000
        %6002 = vrot.lane.b32.xlu0 %v5575, 126
        %v6003 = vpop.permute.xlu0 %6002
        %6004 = vrot.lane.b32.xlu0 %v5576, 126
        %v6005 = vpop.permute.xlu0 %6004
        %6006 = vrot.lane.b32.xlu0 %v5577, 126
        %v6007 = vpop.permute.xlu0 %6006
        %6008 = vrot.lane.b32.xlu0 %v5578, 126
        %v6009 = vpop.permute.xlu0 %6008
        %6010 = vrot.lane.b32.xlu0 %v5579, 126
        %v6011 = vpop.permute.xlu0 %6010
        %6012 = vrot.lane.b32.xlu0 %v5580, 126
        %v6013 = vpop.permute.xlu0 %6012
        %6014 = vrot.lane.b32.xlu0 %v5581, 126
        %v6015 = vpop.permute.xlu0 %6014
        %6016 = vrot.lane.b32.xlu0 %v5582, 126
        %v6017 = vpop.permute.xlu0 %6016
        %6018 = vrot.lane.b32.xlu0 %v5583, 126
        %v6019 = vpop.permute.xlu0 %6018
        %6020 = vrot.lane.b32.xlu0 %v5584, 126
        %v6021 = vpop.permute.xlu0 %6020
        %6022 = vrot.lane.b32.xlu0 %v5585, 126
        %v6023 = vpop.permute.xlu0 %6022
        %v6040 = vcombine.low %v5993, %v6001
        %v6041 = vcombine.high %v5993, %v6001
        %v6043 = vunpack.c.l.s4 1983009808
        %v6044 = vunpack.c.0.s8 %v6043
        %v6045 = vlaneseq
        %v6046 = vshrl.u32 %v6045, 7
        %v6047 = vsub.s32 %v6044, %v6046
        %v6048 = vrot.slane %v6040, %v6047
        %v6050 = vunpack.c.l.s4 1983009808
        %v6051 = vunpack.c.0.s8 %v6050
        %v6052 = vlaneseq
        %v6053 = vshrl.u32 %v6052, 7
        %v6054 = vsub.s32 %v6051, %v6053
        %v6055 = vrot.slane %v6041, %v6054
        %v6056 = vcombine.low %v5997, %v6005
        %v6057 = vcombine.high %v5997, %v6005
        %v6059 = vunpack.c.l.s4 1983009808
        %v6060 = vunpack.c.0.s8 %v6059
        %v6061 = vlaneseq
        %v6062 = vshrl.u32 %v6061, 7
        %v6063 = vsub.s32 %v6060, %v6062
        %v6064 = vrot.slane %v6056, %v6063
        %v6066 = vunpack.c.l.s4 1983009808
        %v6067 = vunpack.c.0.s8 %v6066
        %v6068 = vlaneseq
        %v6069 = vshrl.u32 %v6068, 7
        %v6070 = vsub.s32 %v6067, %v6069
        %v6071 = vrot.slane %v6057, %v6070
        %v6072 = vcombine.low %v6009, %v6017
        %v6073 = vcombine.high %v6009, %v6017
        %v6075 = vunpack.c.l.s4 1983009808
        %v6076 = vunpack.c.0.s8 %v6075
        %v6077 = vlaneseq
        %v6078 = vshrl.u32 %v6077, 7
        %v6079 = vsub.s32 %v6076, %v6078
        %v6080 = vrot.slane %v6072, %v6079
        %v6082 = vunpack.c.l.s4 1983009808
        %v6083 = vunpack.c.0.s8 %v6082
        %v6084 = vlaneseq
        %v6085 = vshrl.u32 %v6084, 7
        %v6086 = vsub.s32 %v6083, %v6085
        %v6087 = vrot.slane %v6073, %v6086
        %v6088 = vcombine.low %v6013, %v6021
        %v6089 = vcombine.high %v6013, %v6021
        %v6091 = vunpack.c.l.s4 1983009808
        %v6092 = vunpack.c.0.s8 %v6091
        %v6093 = vlaneseq
        %v6094 = vshrl.u32 %v6093, 7
        %v6095 = vsub.s32 %v6092, %v6094
        %v6096 = vrot.slane %v6088, %v6095
        %v6098 = vunpack.c.l.s4 1983009808
        %v6099 = vunpack.c.0.s8 %v6098
        %v6100 = vlaneseq
        %v6101 = vshrl.u32 %v6100, 7
        %v6102 = vsub.s32 %v6099, %v6101
        %v6103 = vrot.slane %v6089, %v6102
        %v6104 = vcombine.low %v6048, %v6064
        %v6105 = vcombine.high %v6048, %v6064
        %v6107 = vunpack.c.l.s4 1934713408
        %v6108 = vunpack.c.0.s8 %v6107
        %v6109 = vlaneseq
        %v6110 = vshrl.u32 %v6109, 7
        %v6111 = vsub.s32 %v6108, %v6110
        %v6112 = vrot.slane %v6104, %v6111
        %v6114 = vunpack.c.l.s4 1934713408
        %v6115 = vunpack.c.0.s8 %v6114
        %v6116 = vlaneseq
        %v6117 = vshrl.u32 %v6116, 7
        %v6118 = vsub.s32 %v6115, %v6117
        %v6119 = vrot.slane %v6105, %v6118
        %v6120 = vcombine.low %v6055, %v6071
        %v6121 = vcombine.high %v6055, %v6071
        %v6123 = vunpack.c.l.s4 1934713408
        %v6124 = vunpack.c.0.s8 %v6123
        %v6125 = vlaneseq
        %v6126 = vshrl.u32 %v6125, 7
        %v6127 = vsub.s32 %v6124, %v6126
        %v6128 = vrot.slane %v6120, %v6127
        %v6130 = vunpack.c.l.s4 1934713408
        %v6131 = vunpack.c.0.s8 %v6130
        %v6132 = vlaneseq
        %v6133 = vshrl.u32 %v6132, 7
        %v6134 = vsub.s32 %v6131, %v6133
        %v6135 = vrot.slane %v6121, %v6134
        %v6136 = vcombine.low %v6080, %v6096
        %v6137 = vcombine.high %v6080, %v6096
        %v6139 = vunpack.c.l.s4 1934713408
        %v6140 = vunpack.c.0.s8 %v6139
        %v6141 = vlaneseq
        %v6142 = vshrl.u32 %v6141, 7
        %v6143 = vsub.s32 %v6140, %v6142
        %v6144 = vrot.slane %v6136, %v6143
        %v6146 = vunpack.c.l.s4 1934713408
        %v6147 = vunpack.c.0.s8 %v6146
        %v6148 = vlaneseq
        %v6149 = vshrl.u32 %v6148, 7
        %v6150 = vsub.s32 %v6147, %v6149
        %v6151 = vrot.slane %v6137, %v6150
        %v6152 = vcombine.low %v6087, %v6103
        %v6153 = vcombine.high %v6087, %v6103
        %v6155 = vunpack.c.l.s4 1934713408
        %v6156 = vunpack.c.0.s8 %v6155
        %v6157 = vlaneseq
        %v6158 = vshrl.u32 %v6157, 7
        %v6159 = vsub.s32 %v6156, %v6158
        %v6160 = vrot.slane %v6152, %v6159
        %v6162 = vunpack.c.l.s4 1934713408
        %v6163 = vunpack.c.0.s8 %v6162
        %v6164 = vlaneseq
        %v6165 = vshrl.u32 %v6164, 7
        %v6166 = vsub.s32 %v6163, %v6165
        %v6167 = vrot.slane %v6153, %v6166
        %v6168 = vcombine.low %v6112, %v6144
        %v6169 = vcombine.high %v6112, %v6144
        %v6170 = vcombine.low %v6119, %v6151
        %v6171 = vcombine.high %v6119, %v6151
        %v6172 = vcombine.low %v6128, %v6160
        %v6173 = vcombine.high %v6128, %v6160
        %v6174 = vcombine.low %v6135, %v6167
        %v6175 = vcombine.high %v6135, %v6167
        %v6176 = vcombine.low %v5995, %v6003
        %v6177 = vcombine.high %v5995, %v6003
        %v6179 = vunpack.c.l.s4 1983009808
        %v6180 = vunpack.c.0.s8 %v6179
        %v6181 = vlaneseq
        %v6182 = vshrl.u32 %v6181, 7
        %v6183 = vsub.s32 %v6180, %v6182
        %v6184 = vrot.slane %v6176, %v6183
        %v6186 = vunpack.c.l.s4 1983009808
        %v6187 = vunpack.c.0.s8 %v6186
        %v6188 = vlaneseq
        %v6189 = vshrl.u32 %v6188, 7
        %v6190 = vsub.s32 %v6187, %v6189
        %v6191 = vrot.slane %v6177, %v6190
        %v6192 = vcombine.low %v5999, %v6007
        %v6193 = vcombine.high %v5999, %v6007
        %v6195 = vunpack.c.l.s4 1983009808
        %v6196 = vunpack.c.0.s8 %v6195
        %v6197 = vlaneseq
        %v6198 = vshrl.u32 %v6197, 7
        %v6199 = vsub.s32 %v6196, %v6198
        %v6200 = vrot.slane %v6192, %v6199
        %v6202 = vunpack.c.l.s4 1983009808
        %v6203 = vunpack.c.0.s8 %v6202
        %v6204 = vlaneseq
        %v6205 = vshrl.u32 %v6204, 7
        %v6206 = vsub.s32 %v6203, %v6205
        %v6207 = vrot.slane %v6193, %v6206
        %v6208 = vcombine.low %v6011, %v6019
        %v6209 = vcombine.high %v6011, %v6019
        %v6211 = vunpack.c.l.s4 1983009808
        %v6212 = vunpack.c.0.s8 %v6211
        %v6213 = vlaneseq
        %v6214 = vshrl.u32 %v6213, 7
        %v6215 = vsub.s32 %v6212, %v6214
        %v6216 = vrot.slane %v6208, %v6215
        %v6218 = vunpack.c.l.s4 1983009808
        %v6219 = vunpack.c.0.s8 %v6218
        %v6220 = vlaneseq
        %v6221 = vshrl.u32 %v6220, 7
        %v6222 = vsub.s32 %v6219, %v6221
        %v6223 = vrot.slane %v6209, %v6222
        %v6224 = vcombine.low %v6015, %v6023
        %v6225 = vcombine.high %v6015, %v6023
        %v6227 = vunpack.c.l.s4 1983009808
        %v6228 = vunpack.c.0.s8 %v6227
        %v6229 = vlaneseq
        %v6230 = vshrl.u32 %v6229, 7
        %v6231 = vsub.s32 %v6228, %v6230
        %v6232 = vrot.slane %v6224, %v6231
        %v6234 = vunpack.c.l.s4 1983009808
        %v6235 = vunpack.c.0.s8 %v6234
        %v6236 = vlaneseq
        %v6237 = vshrl.u32 %v6236, 7
        %v6238 = vsub.s32 %v6235, %v6237
        %v6239 = vrot.slane %v6225, %v6238
        %v6240 = vcombine.low %v6184, %v6200
        %v6241 = vcombine.high %v6184, %v6200
        %v6243 = vunpack.c.l.s4 1934713408
        %v6244 = vunpack.c.0.s8 %v6243
        %v6245 = vlaneseq
        %v6246 = vshrl.u32 %v6245, 7
        %v6247 = vsub.s32 %v6244, %v6246
        %v6248 = vrot.slane %v6240, %v6247
        %v6250 = vunpack.c.l.s4 1934713408
        %v6251 = vunpack.c.0.s8 %v6250
        %v6252 = vlaneseq
        %v6253 = vshrl.u32 %v6252, 7
        %v6254 = vsub.s32 %v6251, %v6253
        %v6255 = vrot.slane %v6241, %v6254
        %v6256 = vcombine.low %v6191, %v6207
        %v6257 = vcombine.high %v6191, %v6207
        %v6259 = vunpack.c.l.s4 1934713408
        %v6260 = vunpack.c.0.s8 %v6259
        %v6261 = vlaneseq
        %v6262 = vshrl.u32 %v6261, 7
        %v6263 = vsub.s32 %v6260, %v6262
        %v6264 = vrot.slane %v6256, %v6263
        %v6266 = vunpack.c.l.s4 1934713408
        %v6267 = vunpack.c.0.s8 %v6266
        %v6268 = vlaneseq
        %v6269 = vshrl.u32 %v6268, 7
        %v6270 = vsub.s32 %v6267, %v6269
        %v6271 = vrot.slane %v6257, %v6270
        %v6272 = vcombine.low %v6216, %v6232
        %v6273 = vcombine.high %v6216, %v6232
        %v6275 = vunpack.c.l.s4 1934713408
        %v6276 = vunpack.c.0.s8 %v6275
        %v6277 = vlaneseq
        %v6278 = vshrl.u32 %v6277, 7
        %v6279 = vsub.s32 %v6276, %v6278
        %v6280 = vrot.slane %v6272, %v6279
        %v6282 = vunpack.c.l.s4 1934713408
        %v6283 = vunpack.c.0.s8 %v6282
        %v6284 = vlaneseq
        %v6285 = vshrl.u32 %v6284, 7
        %v6286 = vsub.s32 %v6283, %v6285
        %v6287 = vrot.slane %v6273, %v6286
        %v6288 = vcombine.low %v6223, %v6239
        %v6289 = vcombine.high %v6223, %v6239
        %v6291 = vunpack.c.l.s4 1934713408
        %v6292 = vunpack.c.0.s8 %v6291
        %v6293 = vlaneseq
        %v6294 = vshrl.u32 %v6293, 7
        %v6295 = vsub.s32 %v6292, %v6294
        %v6296 = vrot.slane %v6288, %v6295
        %v6298 = vunpack.c.l.s4 1934713408
        %v6299 = vunpack.c.0.s8 %v6298
        %v6300 = vlaneseq
        %v6301 = vshrl.u32 %v6300, 7
        %v6302 = vsub.s32 %v6299, %v6301
        %v6303 = vrot.slane %v6289, %v6302
        %v6304 = vcombine.low %v6248, %v6280
        %v6305 = vcombine.high %v6248, %v6280
        %v6306 = vcombine.low %v6255, %v6287
        %v6307 = vcombine.high %v6255, %v6287
        %v6308 = vcombine.low %v6264, %v6296
        %v6309 = vcombine.high %v6264, %v6296
        %v6310 = vcombine.low %v6271, %v6303
        %v6311 = vcombine.high %v6271, %v6303
        %6313 = vrot.lane.b32.xlu0 %v6169, 16
        %v6314 = vpop.permute.xlu0 %6313
        %6317 = vrot.lane.b32.xlu0 %v6170, 32
        %v6318 = vpop.permute.xlu0 %6317
        %6321 = vrot.lane.b32.xlu0 %v6171, 48
        %v6322 = vpop.permute.xlu0 %6321
        %6325 = vrot.lane.b32.xlu0 %v6172, 64
        %v6326 = vpop.permute.xlu0 %6325
        %6329 = vrot.lane.b32.xlu0 %v6173, 80
        %v6330 = vpop.permute.xlu0 %6329
        %6333 = vrot.lane.b32.xlu0 %v6174, 96
        %v6334 = vpop.permute.xlu0 %6333
        %6337 = vrot.lane.b32.xlu0 %v6175, 112
        %v6338 = vpop.permute.xlu0 %6337
        %6341 = vrot.lane.b32.xlu0 %v6305, 16
        %v6342 = vpop.permute.xlu0 %6341
        %6345 = vrot.lane.b32.xlu0 %v6306, 32
        %v6346 = vpop.permute.xlu0 %6345
        %6349 = vrot.lane.b32.xlu0 %v6307, 48
        %v6350 = vpop.permute.xlu0 %6349
        %6353 = vrot.lane.b32.xlu0 %v6308, 64
        %v6354 = vpop.permute.xlu0 %6353
        %6357 = vrot.lane.b32.xlu0 %v6309, 80
        %v6358 = vpop.permute.xlu0 %6357
        %6361 = vrot.lane.b32.xlu0 %v6310, 96
        %v6362 = vpop.permute.xlu0 %6361
        %6365 = vrot.lane.b32.xlu0 %v6311, 112
        %v6366 = vpop.permute.xlu0 %6365
        %v6368 = vsel %vm774, %v6168, %v6314
        %v6369 = vsel %vm776, %v6368, %v6318
        %v6370 = vsel %vm778, %v6369, %v6322
        %v6371 = vsel %vm780, %v6370, %v6326
        %v6372 = vsel %vm782, %v6371, %v6330
        %v6373 = vsel %vm784, %v6372, %v6334
        %v6374 = vsel %vm786, %v6373, %v6338
        %v6375 = vsel %vm774, %v6304, %v6342
        %v6376 = vsel %vm776, %v6375, %v6346
        %v6377 = vsel %vm778, %v6376, %v6350
        %v6378 = vsel %vm780, %v6377, %v6354
        %v6379 = vsel %vm782, %v6378, %v6358
        %v6380 = vsel %vm784, %v6379, %v6362
        %v6381 = vsel %vm786, %v6380, %v6366
        %v6383 = vsel %vm776, %v4757, 0
        %6385 = vmatprep.subr.mxu0 0.0
        %6386 = vmatpush1.msra.mxu0 0.0
        %6387 = vmatprep.subr.mxu0 0.0
        %6388 = vmatpush1.msra.mxu0 0.0
        %6389 = vmatprep.subr.mxu0 0.0
        %6390 = vmatpush1.msra.mxu0 0.0
        %6391 = vmatprep.subr.mxu0 0.0
        %6392 = vmatpush1.msra.mxu0 0.0
        %6393 = vmatprep.subr.mxu0 0.0
        %6394 = vmatpush1.msra.mxu0 0.0
        %6395 = vmatprep.subr.mxu0 0.0
        %6396 = vmatpush1.msra.mxu0 0.0
        %6397 = vmatprep.subr.mxu0 0.0
        %6398 = vmatpush1.msra.mxu0 0.0
        %6399 = vmatprep.subr.mxu0 0.0
        %6400 = vmatpush1.msra.mxu0 0.0
        %6401 = vmatprep.subr.mxu0 0.0
        %6402 = vmatpush1.msra.mxu0 0.0
        %6403 = vmatprep.subr.mxu0 0.0
        %6404 = vmatpush1.msra.mxu0 0.0
        %6405 = vmatprep.subr.mxu0 0.0
        %6406 = vmatpush1.msra.mxu0 0.0
        %6407 = vmatprep.subr.mxu0 0.0
        %6408 = vmatpush1.msra.mxu0 0.0
        %6409 = vmatprep.subr.mxu0 %v6381
        %6410 = vmatpush1.msra.mxu0 %v6374
        %6411 = vmatprep.subr.mxu0 %v5991
        %6412 = vmatpush1.msra.mxu0 %v5984
        %6413 = vmatprep.subr.mxu0 %v5569
        %6414 = vmatpush1.msra.mxu0 %v5562
        %6415 = vmatprep.subr.mxu0 %v5179
        %6416 = vmatpush1.msra.mxu0 %v5172
        %6417 = vmatprep.subr.mxu0 0.0
        %6418 = vmatpush2.msra.mxu0 0.0
        %6419 = vmatprep.subr.mxu0 0.0
        %6420 = vmatpush2.msra.mxu0 0.0
        %6421 = vmatprep.subr.mxu0 0.0
        %6422 = vmatpush2.msra.mxu0 0.0
        %6423 = vmatprep.subr.mxu0 0.0
        %6424 = vmatpush2.msra.mxu0 0.0
        %6425 = vmatprep.subr.mxu0 0.0
        %6426 = vmatpush2.msra.mxu0 0.0
        %6427 = vmatprep.subr.mxu0 0.0
        %6428 = vmatpush2.msra.mxu0 0.0
        %6429 = vmatprep.subr.mxu0 0.0
        %6430 = vmatpush2.msra.mxu0 0.0
        %6431 = vmatprep.subr.mxu0 0.0
        %6432 = vmatpush2.msra.mxu0 0.0
        %6433 = vmatprep.subr.mxu0 0.0
        %6434 = vmatpush2.msra.mxu0 0.0
        %6435 = vmatprep.subr.mxu0 0.0
        %6436 = vmatpush2.msra.mxu0 0.0
        %6437 = vmatprep.subr.mxu0 0.0
        %6438 = vmatpush2.msra.mxu0 0.0
        %6439 = vmatprep.subr.mxu0 0.0
        %6440 = vmatpush2.msra.mxu0 0.0
        %6441 = vmatprep.subr.mxu0 0.0
        %6442 = vmatpush2.msra.mxu0 0.0
        %6443 = vmatprep.subr.mxu0 0.0
        %6444 = vmatpush2.msra.mxu0 0.0
        %6445 = vmatprep.subr.mxu0 0.0
        %6446 = vmatpush2.msra.mxu0 0.0
        %6447 = vmatprep.subr.mxu0 0.0
        %6448 = vmatpush2.msra.mxu0 0.0
        %6449 = vmatprep.mubr.f32.mxu0 0.0
        %6450 = vmatmul.mubr.f32.gmra.mxu0 %v6383
        %v6451 = vpop.f32.mrf.mxu0
        %v6452 = vadd.f32 %v4673, %v6451
        %v6453 = vpop.f32.mrf.mxu0
        %v6454 = vadd.f32 %v4673, %v6453
        %6455 = vdwg.mxu0
        %v6456 = vmax.f32 %v6452, 0.0
        %v6457 = vmax.f32 %v6454, 0.0
        %v6460 = vcombine.low %v6456, %v6457
        %s6462 = scalar_lea.vmem %s240, 8 [#allocation10]
        %6463 = vst [vmem:[%s6462] sm:$0xff] %v6460
        %s6464 = scalar_lea.vmem [#allocation9], 8
        %v6465 = vld [vmem:[%s6464] sm:$0xf]
        %v6466 = vld [vmem:[#allocation3 + $0x1] sm:$0xff]
        %v6467 = vld [vmem:[#allocation3 + $0x9] sm:$0xff]
        %v6468 = vld [vmem:[#allocation3 + $0x19] sm:$0xff]
        %v6469 = vld [vmem:[#allocation3 + $0x21] sm:$0xff]
        %v6470 = vld [vmem:[#allocation3 + $0x31] sm:$0xff]
        %v6471 = vld [vmem:[#allocation3 + $0x39] sm:$0xff]
        %v6472 = vld [vmem:[#allocation3 + $0x49] sm:$0xff]
        %v6473 = vld [vmem:[#allocation3 + $0x51] sm:$0xff]
        %v6474 = vld [vmem:[#allocation3 + $0x61] sm:$0xff]
        %v6475 = vld [vmem:[#allocation3 + $0x69] sm:$0xff]
        %v6476 = vld [vmem:[#allocation3 + $0x79] sm:$0xff]
        %v6477 = vld [vmem:[#allocation3 + $0x81] sm:$0xff]
        %v6478 = vld [vmem:[#allocation3 + $0x91] sm:$0xff]
        %v6479 = vld [vmem:[#allocation3 + $0x99] sm:$0xff]
        %v6480 = vld [vmem:[#allocation3 + $0xa9] sm:$0xff]
        %v6481 = vld [vmem:[#allocation3 + $0xb1] sm:$0xff]
        %v6482 = vcombine.low %v6466, %v6470
        %v6483 = vcombine.high %v6466, %v6470
        %v6485 = vunpack.c.l.s4 1983009808
        %v6486 = vunpack.c.0.s8 %v6485
        %v6487 = vlaneseq
        %v6488 = vshrl.u32 %v6487, 7
        %v6489 = vsub.s32 %v6486, %v6488
        %v6490 = vrot.slane %v6482, %v6489
        %v6492 = vunpack.c.l.s4 1983009808
        %v6493 = vunpack.c.0.s8 %v6492
        %v6494 = vlaneseq
        %v6495 = vshrl.u32 %v6494, 7
        %v6496 = vsub.s32 %v6493, %v6495
        %v6497 = vrot.slane %v6483, %v6496
        %v6498 = vcombine.low %v6468, %v6472
        %v6499 = vcombine.high %v6468, %v6472
        %v6501 = vunpack.c.l.s4 1983009808
        %v6502 = vunpack.c.0.s8 %v6501
        %v6503 = vlaneseq
        %v6504 = vshrl.u32 %v6503, 7
        %v6505 = vsub.s32 %v6502, %v6504
        %v6506 = vrot.slane %v6498, %v6505
        %v6508 = vunpack.c.l.s4 1983009808
        %v6509 = vunpack.c.0.s8 %v6508
        %v6510 = vlaneseq
        %v6511 = vshrl.u32 %v6510, 7
        %v6512 = vsub.s32 %v6509, %v6511
        %v6513 = vrot.slane %v6499, %v6512
        %v6514 = vcombine.low %v6474, %v6478
        %v6515 = vcombine.high %v6474, %v6478
        %v6517 = vunpack.c.l.s4 1983009808
        %v6518 = vunpack.c.0.s8 %v6517
        %v6519 = vlaneseq
        %v6520 = vshrl.u32 %v6519, 7
        %v6521 = vsub.s32 %v6518, %v6520
        %v6522 = vrot.slane %v6514, %v6521
        %v6524 = vunpack.c.l.s4 1983009808
        %v6525 = vunpack.c.0.s8 %v6524
        %v6526 = vlaneseq
        %v6527 = vshrl.u32 %v6526, 7
        %v6528 = vsub.s32 %v6525, %v6527
        %v6529 = vrot.slane %v6515, %v6528
        %v6530 = vcombine.low %v6476, %v6480
        %v6531 = vcombine.high %v6476, %v6480
        %v6533 = vunpack.c.l.s4 1983009808
        %v6534 = vunpack.c.0.s8 %v6533
        %v6535 = vlaneseq
        %v6536 = vshrl.u32 %v6535, 7
        %v6537 = vsub.s32 %v6534, %v6536
        %v6538 = vrot.slane %v6530, %v6537
        %v6540 = vunpack.c.l.s4 1983009808
        %v6541 = vunpack.c.0.s8 %v6540
        %v6542 = vlaneseq
        %v6543 = vshrl.u32 %v6542, 7
        %v6544 = vsub.s32 %v6541, %v6543
        %v6545 = vrot.slane %v6531, %v6544
        %v6546 = vcombine.low %v6490, %v6506
        %v6547 = vcombine.high %v6490, %v6506
        %v6549 = vunpack.c.l.s4 1934713408
        %v6550 = vunpack.c.0.s8 %v6549
        %v6551 = vlaneseq
        %v6552 = vshrl.u32 %v6551, 7
        %v6553 = vsub.s32 %v6550, %v6552
        %v6554 = vrot.slane %v6546, %v6553
        %v6556 = vunpack.c.l.s4 1934713408
        %v6557 = vunpack.c.0.s8 %v6556
        %v6558 = vlaneseq
        %v6559 = vshrl.u32 %v6558, 7
        %v6560 = vsub.s32 %v6557, %v6559
        %v6561 = vrot.slane %v6547, %v6560
        %v6562 = vcombine.low %v6497, %v6513
        %v6563 = vcombine.high %v6497, %v6513
        %v6565 = vunpack.c.l.s4 1934713408
        %v6566 = vunpack.c.0.s8 %v6565
        %v6567 = vlaneseq
        %v6568 = vshrl.u32 %v6567, 7
        %v6569 = vsub.s32 %v6566, %v6568
        %v6570 = vrot.slane %v6562, %v6569
        %v6572 = vunpack.c.l.s4 1934713408
        %v6573 = vunpack.c.0.s8 %v6572
        %v6574 = vlaneseq
        %v6575 = vshrl.u32 %v6574, 7
        %v6576 = vsub.s32 %v6573, %v6575
        %v6577 = vrot.slane %v6563, %v6576
        %v6578 = vcombine.low %v6522, %v6538
        %v6579 = vcombine.high %v6522, %v6538
        %v6581 = vunpack.c.l.s4 1934713408
        %v6582 = vunpack.c.0.s8 %v6581
        %v6583 = vlaneseq
        %v6584 = vshrl.u32 %v6583, 7
        %v6585 = vsub.s32 %v6582, %v6584
        %v6586 = vrot.slane %v6578, %v6585
        %v6588 = vunpack.c.l.s4 1934713408
        %v6589 = vunpack.c.0.s8 %v6588
        %v6590 = vlaneseq
        %v6591 = vshrl.u32 %v6590, 7
        %v6592 = vsub.s32 %v6589, %v6591
        %v6593 = vrot.slane %v6579, %v6592
        %v6594 = vcombine.low %v6529, %v6545
        %v6595 = vcombine.high %v6529, %v6545
        %v6597 = vunpack.c.l.s4 1934713408
        %v6598 = vunpack.c.0.s8 %v6597
        %v6599 = vlaneseq
        %v6600 = vshrl.u32 %v6599, 7
        %v6601 = vsub.s32 %v6598, %v6600
        %v6602 = vrot.slane %v6594, %v6601
        %v6604 = vunpack.c.l.s4 1934713408
        %v6605 = vunpack.c.0.s8 %v6604
        %v6606 = vlaneseq
        %v6607 = vshrl.u32 %v6606, 7
        %v6608 = vsub.s32 %v6605, %v6607
        %v6609 = vrot.slane %v6595, %v6608
        %v6610 = vcombine.low %v6554, %v6586
        %v6611 = vcombine.high %v6554, %v6586
        %v6612 = vcombine.low %v6561, %v6593
        %v6613 = vcombine.high %v6561, %v6593
        %v6614 = vcombine.low %v6570, %v6602
        %v6615 = vcombine.high %v6570, %v6602
        %v6616 = vcombine.low %v6577, %v6609
        %v6617 = vcombine.high %v6577, %v6609
        %v6618 = vcombine.low %v6467, %v6471
        %v6619 = vcombine.high %v6467, %v6471
        %v6621 = vunpack.c.l.s4 1983009808
        %v6622 = vunpack.c.0.s8 %v6621
        %v6623 = vlaneseq
        %v6624 = vshrl.u32 %v6623, 7
        %v6625 = vsub.s32 %v6622, %v6624
        %v6626 = vrot.slane %v6618, %v6625
        %v6628 = vunpack.c.l.s4 1983009808
        %v6629 = vunpack.c.0.s8 %v6628
        %v6630 = vlaneseq
        %v6631 = vshrl.u32 %v6630, 7
        %v6632 = vsub.s32 %v6629, %v6631
        %v6633 = vrot.slane %v6619, %v6632
        %v6634 = vcombine.low %v6469, %v6473
        %v6635 = vcombine.high %v6469, %v6473
        %v6637 = vunpack.c.l.s4 1983009808
        %v6638 = vunpack.c.0.s8 %v6637
        %v6639 = vlaneseq
        %v6640 = vshrl.u32 %v6639, 7
        %v6641 = vsub.s32 %v6638, %v6640
        %v6642 = vrot.slane %v6634, %v6641
        %v6644 = vunpack.c.l.s4 1983009808
        %v6645 = vunpack.c.0.s8 %v6644
        %v6646 = vlaneseq
        %v6647 = vshrl.u32 %v6646, 7
        %v6648 = vsub.s32 %v6645, %v6647
        %v6649 = vrot.slane %v6635, %v6648
        %v6650 = vcombine.low %v6475, %v6479
        %v6651 = vcombine.high %v6475, %v6479
        %v6653 = vunpack.c.l.s4 1983009808
        %v6654 = vunpack.c.0.s8 %v6653
        %v6655 = vlaneseq
        %v6656 = vshrl.u32 %v6655, 7
        %v6657 = vsub.s32 %v6654, %v6656
        %v6658 = vrot.slane %v6650, %v6657
        %v6660 = vunpack.c.l.s4 1983009808
        %v6661 = vunpack.c.0.s8 %v6660
        %v6662 = vlaneseq
        %v6663 = vshrl.u32 %v6662, 7
        %v6664 = vsub.s32 %v6661, %v6663
        %v6665 = vrot.slane %v6651, %v6664
        %v6666 = vcombine.low %v6477, %v6481
        %v6667 = vcombine.high %v6477, %v6481
        %v6669 = vunpack.c.l.s4 1983009808
        %v6670 = vunpack.c.0.s8 %v6669
        %v6671 = vlaneseq
        %v6672 = vshrl.u32 %v6671, 7
        %v6673 = vsub.s32 %v6670, %v6672
        %v6674 = vrot.slane %v6666, %v6673
        %v6676 = vunpack.c.l.s4 1983009808
        %v6677 = vunpack.c.0.s8 %v6676
        %v6678 = vlaneseq
        %v6679 = vshrl.u32 %v6678, 7
        %v6680 = vsub.s32 %v6677, %v6679
        %v6681 = vrot.slane %v6667, %v6680
        %v6682 = vcombine.low %v6626, %v6642
        %v6683 = vcombine.high %v6626, %v6642
        %v6685 = vunpack.c.l.s4 1934713408
        %v6686 = vunpack.c.0.s8 %v6685
        %v6687 = vlaneseq
        %v6688 = vshrl.u32 %v6687, 7
        %v6689 = vsub.s32 %v6686, %v6688
        %v6690 = vrot.slane %v6682, %v6689
        %v6692 = vunpack.c.l.s4 1934713408
        %v6693 = vunpack.c.0.s8 %v6692
        %v6694 = vlaneseq
        %v6695 = vshrl.u32 %v6694, 7
        %v6696 = vsub.s32 %v6693, %v6695
        %v6697 = vrot.slane %v6683, %v6696
        %v6698 = vcombine.low %v6633, %v6649
        %v6699 = vcombine.high %v6633, %v6649
        %v6701 = vunpack.c.l.s4 1934713408
        %v6702 = vunpack.c.0.s8 %v6701
        %v6703 = vlaneseq
        %v6704 = vshrl.u32 %v6703, 7
        %v6705 = vsub.s32 %v6702, %v6704
        %v6706 = vrot.slane %v6698, %v6705
        %v6708 = vunpack.c.l.s4 1934713408
        %v6709 = vunpack.c.0.s8 %v6708
        %v6710 = vlaneseq
        %v6711 = vshrl.u32 %v6710, 7
        %v6712 = vsub.s32 %v6709, %v6711
        %v6713 = vrot.slane %v6699, %v6712
        %v6714 = vcombine.low %v6658, %v6674
        %v6715 = vcombine.high %v6658, %v6674
        %v6717 = vunpack.c.l.s4 1934713408
        %v6718 = vunpack.c.0.s8 %v6717
        %v6719 = vlaneseq
        %v6720 = vshrl.u32 %v6719, 7
        %v6721 = vsub.s32 %v6718, %v6720
        %v6722 = vrot.slane %v6714, %v6721
        %v6724 = vunpack.c.l.s4 1934713408
        %v6725 = vunpack.c.0.s8 %v6724
        %v6726 = vlaneseq
        %v6727 = vshrl.u32 %v6726, 7
        %v6728 = vsub.s32 %v6725, %v6727
        %v6729 = vrot.slane %v6715, %v6728
        %v6730 = vcombine.low %v6665, %v6681
        %v6731 = vcombine.high %v6665, %v6681
        %v6733 = vunpack.c.l.s4 1934713408
        %v6734 = vunpack.c.0.s8 %v6733
        %v6735 = vlaneseq
        %v6736 = vshrl.u32 %v6735, 7
        %v6737 = vsub.s32 %v6734, %v6736
        %v6738 = vrot.slane %v6730, %v6737
        %v6740 = vunpack.c.l.s4 1934713408
        %v6741 = vunpack.c.0.s8 %v6740
        %v6742 = vlaneseq
        %v6743 = vshrl.u32 %v6742, 7
        %v6744 = vsub.s32 %v6741, %v6743
        %v6745 = vrot.slane %v6731, %v6744
        %v6746 = vcombine.low %v6690, %v6722
        %v6747 = vcombine.high %v6690, %v6722
        %v6748 = vcombine.low %v6697, %v6729
        %v6749 = vcombine.high %v6697, %v6729
        %v6750 = vcombine.low %v6706, %v6738
        %v6751 = vcombine.high %v6706, %v6738
        %v6752 = vcombine.low %v6713, %v6745
        %v6753 = vcombine.high %v6713, %v6745
        %6755 = vrot.lane.b32.xlu0 %v6611, 16
        %v6756 = vpop.permute.xlu0 %6755
        %6759 = vrot.lane.b32.xlu0 %v6612, 32
        %v6760 = vpop.permute.xlu0 %6759
        %6763 = vrot.lane.b32.xlu0 %v6613, 48
        %v6764 = vpop.permute.xlu0 %6763
        %6767 = vrot.lane.b32.xlu0 %v6614, 64
        %v6768 = vpop.permute.xlu0 %6767
        %6771 = vrot.lane.b32.xlu0 %v6615, 80
        %v6772 = vpop.permute.xlu0 %6771
        %6775 = vrot.lane.b32.xlu0 %v6616, 96
        %v6776 = vpop.permute.xlu0 %6775
        %6779 = vrot.lane.b32.xlu0 %v6617, 112
        %v6780 = vpop.permute.xlu0 %6779
        %6783 = vrot.lane.b32.xlu0 %v6747, 16
        %v6784 = vpop.permute.xlu0 %6783
        %6787 = vrot.lane.b32.xlu0 %v6748, 32
        %v6788 = vpop.permute.xlu0 %6787
        %6791 = vrot.lane.b32.xlu0 %v6749, 48
        %v6792 = vpop.permute.xlu0 %6791
        %6795 = vrot.lane.b32.xlu0 %v6750, 64
        %v6796 = vpop.permute.xlu0 %6795
        %6799 = vrot.lane.b32.xlu0 %v6751, 80
        %v6800 = vpop.permute.xlu0 %6799
        %6803 = vrot.lane.b32.xlu0 %v6752, 96
        %v6804 = vpop.permute.xlu0 %6803
        %6807 = vrot.lane.b32.xlu0 %v6753, 112
        %v6808 = vpop.permute.xlu0 %6807
        %v6810 = vsel %vm774, %v6610, %v6756
        %v6811 = vsel %vm776, %v6810, %v6760
        %v6812 = vsel %vm778, %v6811, %v6764
        %v6813 = vsel %vm780, %v6812, %v6768
        %v6814 = vsel %vm782, %v6813, %v6772
        %v6815 = vsel %vm784, %v6814, %v6776
        %v6816 = vsel %vm786, %v6815, %v6780
        %v6817 = vsel %vm774, %v6746, %v6784
        %v6818 = vsel %vm776, %v6817, %v6788
        %v6819 = vsel %vm778, %v6818, %v6792
        %v6820 = vsel %vm780, %v6819, %v6796
        %v6821 = vsel %vm782, %v6820, %v6800
        %v6822 = vsel %vm784, %v6821, %v6804
        %v6823 = vsel %vm786, %v6822, %v6808
        %6840 = vrot.lane.b32.xlu0 %v6466, 127
        %v6841 = vpop.permute.xlu0 %6840
        %6842 = vrot.lane.b32.xlu0 %v6467, 127
        %v6843 = vpop.permute.xlu0 %6842
        %6844 = vrot.lane.b32.xlu0 %v6468, 127
        %v6845 = vpop.permute.xlu0 %6844
        %6846 = vrot.lane.b32.xlu0 %v6469, 127
        %v6847 = vpop.permute.xlu0 %6846
        %6848 = vrot.lane.b32.xlu0 %v6470, 127
        %v6849 = vpop.permute.xlu0 %6848
        %6850 = vrot.lane.b32.xlu0 %v6471, 127
        %v6851 = vpop.permute.xlu0 %6850
        %6852 = vrot.lane.b32.xlu0 %v6472, 127
        %v6853 = vpop.permute.xlu0 %6852
        %6854 = vrot.lane.b32.xlu0 %v6473, 127
        %v6855 = vpop.permute.xlu0 %6854
        %6856 = vrot.lane.b32.xlu0 %v6474, 127
        %v6857 = vpop.permute.xlu0 %6856
        %6858 = vrot.lane.b32.xlu0 %v6475, 127
        %v6859 = vpop.permute.xlu0 %6858
        %6860 = vrot.lane.b32.xlu0 %v6476, 127
        %v6861 = vpop.permute.xlu0 %6860
        %6862 = vrot.lane.b32.xlu0 %v6477, 127
        %v6863 = vpop.permute.xlu0 %6862
        %6864 = vrot.lane.b32.xlu0 %v6478, 127
        %v6865 = vpop.permute.xlu0 %6864
        %6866 = vrot.lane.b32.xlu0 %v6479, 127
        %v6867 = vpop.permute.xlu0 %6866
        %6868 = vrot.lane.b32.xlu0 %v6480, 127
        %v6869 = vpop.permute.xlu0 %6868
        %6870 = vrot.lane.b32.xlu0 %v6481, 127
        %v6871 = vpop.permute.xlu0 %6870
        %v6888 = vcombine.low %v6841, %v6849
        %v6889 = vcombine.high %v6841, %v6849
        %v6891 = vunpack.c.l.s4 1983009808
        %v6892 = vunpack.c.0.s8 %v6891
        %v6893 = vlaneseq
        %v6894 = vshrl.u32 %v6893, 7
        %v6895 = vsub.s32 %v6892, %v6894
        %v6896 = vrot.slane %v6888, %v6895
        %v6898 = vunpack.c.l.s4 1983009808
        %v6899 = vunpack.c.0.s8 %v6898
        %v6900 = vlaneseq
        %v6901 = vshrl.u32 %v6900, 7
        %v6902 = vsub.s32 %v6899, %v6901
        %v6903 = vrot.slane %v6889, %v6902
        %v6904 = vcombine.low %v6845, %v6853
        %v6905 = vcombine.high %v6845, %v6853
        %v6907 = vunpack.c.l.s4 1983009808
        %v6908 = vunpack.c.0.s8 %v6907
        %v6909 = vlaneseq
        %v6910 = vshrl.u32 %v6909, 7
        %v6911 = vsub.s32 %v6908, %v6910
        %v6912 = vrot.slane %v6904, %v6911
        %v6914 = vunpack.c.l.s4 1983009808
        %v6915 = vunpack.c.0.s8 %v6914
        %v6916 = vlaneseq
        %v6917 = vshrl.u32 %v6916, 7
        %v6918 = vsub.s32 %v6915, %v6917
        %v6919 = vrot.slane %v6905, %v6918
        %v6920 = vcombine.low %v6857, %v6865
        %v6921 = vcombine.high %v6857, %v6865
        %v6923 = vunpack.c.l.s4 1983009808
        %v6924 = vunpack.c.0.s8 %v6923
        %v6925 = vlaneseq
        %v6926 = vshrl.u32 %v6925, 7
        %v6927 = vsub.s32 %v6924, %v6926
        %v6928 = vrot.slane %v6920, %v6927
        %v6930 = vunpack.c.l.s4 1983009808
        %v6931 = vunpack.c.0.s8 %v6930
        %v6932 = vlaneseq
        %v6933 = vshrl.u32 %v6932, 7
        %v6934 = vsub.s32 %v6931, %v6933
        %v6935 = vrot.slane %v6921, %v6934
        %v6936 = vcombine.low %v6861, %v6869
        %v6937 = vcombine.high %v6861, %v6869
        %v6939 = vunpack.c.l.s4 1983009808
        %v6940 = vunpack.c.0.s8 %v6939
        %v6941 = vlaneseq
        %v6942 = vshrl.u32 %v6941, 7
        %v6943 = vsub.s32 %v6940, %v6942
        %v6944 = vrot.slane %v6936, %v6943
        %v6946 = vunpack.c.l.s4 1983009808
        %v6947 = vunpack.c.0.s8 %v6946
        %v6948 = vlaneseq
        %v6949 = vshrl.u32 %v6948, 7
        %v6950 = vsub.s32 %v6947, %v6949
        %v6951 = vrot.slane %v6937, %v6950
        %v6952 = vcombine.low %v6896, %v6912
        %v6953 = vcombine.high %v6896, %v6912
        %v6955 = vunpack.c.l.s4 1934713408
        %v6956 = vunpack.c.0.s8 %v6955
        %v6957 = vlaneseq
        %v6958 = vshrl.u32 %v6957, 7
        %v6959 = vsub.s32 %v6956, %v6958
        %v6960 = vrot.slane %v6952, %v6959
        %v6962 = vunpack.c.l.s4 1934713408
        %v6963 = vunpack.c.0.s8 %v6962
        %v6964 = vlaneseq
        %v6965 = vshrl.u32 %v6964, 7
        %v6966 = vsub.s32 %v6963, %v6965
        %v6967 = vrot.slane %v6953, %v6966
        %v6968 = vcombine.low %v6903, %v6919
        %v6969 = vcombine.high %v6903, %v6919
        %v6971 = vunpack.c.l.s4 1934713408
        %v6972 = vunpack.c.0.s8 %v6971
        %v6973 = vlaneseq
        %v6974 = vshrl.u32 %v6973, 7
        %v6975 = vsub.s32 %v6972, %v6974
        %v6976 = vrot.slane %v6968, %v6975
        %v6978 = vunpack.c.l.s4 1934713408
        %v6979 = vunpack.c.0.s8 %v6978
        %v6980 = vlaneseq
        %v6981 = vshrl.u32 %v6980, 7
        %v6982 = vsub.s32 %v6979, %v6981
        %v6983 = vrot.slane %v6969, %v6982
        %v6984 = vcombine.low %v6928, %v6944
        %v6985 = vcombine.high %v6928, %v6944
        %v6987 = vunpack.c.l.s4 1934713408
        %v6988 = vunpack.c.0.s8 %v6987
        %v6989 = vlaneseq
        %v6990 = vshrl.u32 %v6989, 7
        %v6991 = vsub.s32 %v6988, %v6990
        %v6992 = vrot.slane %v6984, %v6991
        %v6994 = vunpack.c.l.s4 1934713408
        %v6995 = vunpack.c.0.s8 %v6994
        %v6996 = vlaneseq
        %v6997 = vshrl.u32 %v6996, 7
        %v6998 = vsub.s32 %v6995, %v6997
        %v6999 = vrot.slane %v6985, %v6998
        %v7000 = vcombine.low %v6935, %v6951
        %v7001 = vcombine.high %v6935, %v6951
        %v7003 = vunpack.c.l.s4 1934713408
        %v7004 = vunpack.c.0.s8 %v7003
        %v7005 = vlaneseq
        %v7006 = vshrl.u32 %v7005, 7
        %v7007 = vsub.s32 %v7004, %v7006
        %v7008 = vrot.slane %v7000, %v7007
        %v7010 = vunpack.c.l.s4 1934713408
        %v7011 = vunpack.c.0.s8 %v7010
        %v7012 = vlaneseq
        %v7013 = vshrl.u32 %v7012, 7
        %v7014 = vsub.s32 %v7011, %v7013
        %v7015 = vrot.slane %v7001, %v7014
        %v7016 = vcombine.low %v6960, %v6992
        %v7017 = vcombine.high %v6960, %v6992
        %v7018 = vcombine.low %v6967, %v6999
        %v7019 = vcombine.high %v6967, %v6999
        %v7020 = vcombine.low %v6976, %v7008
        %v7021 = vcombine.high %v6976, %v7008
        %v7022 = vcombine.low %v6983, %v7015
        %v7023 = vcombine.high %v6983, %v7015
        %v7024 = vcombine.low %v6843, %v6851
        %v7025 = vcombine.high %v6843, %v6851
        %v7027 = vunpack.c.l.s4 1983009808
        %v7028 = vunpack.c.0.s8 %v7027
        %v7029 = vlaneseq
        %v7030 = vshrl.u32 %v7029, 7
        %v7031 = vsub.s32 %v7028, %v7030
        %v7032 = vrot.slane %v7024, %v7031
        %v7034 = vunpack.c.l.s4 1983009808
        %v7035 = vunpack.c.0.s8 %v7034
        %v7036 = vlaneseq
        %v7037 = vshrl.u32 %v7036, 7
        %v7038 = vsub.s32 %v7035, %v7037
        %v7039 = vrot.slane %v7025, %v7038
        %v7040 = vcombine.low %v6847, %v6855
        %v7041 = vcombine.high %v6847, %v6855
        %v7043 = vunpack.c.l.s4 1983009808
        %v7044 = vunpack.c.0.s8 %v7043
        %v7045 = vlaneseq
        %v7046 = vshrl.u32 %v7045, 7
        %v7047 = vsub.s32 %v7044, %v7046
        %v7048 = vrot.slane %v7040, %v7047
        %v7050 = vunpack.c.l.s4 1983009808
        %v7051 = vunpack.c.0.s8 %v7050
        %v7052 = vlaneseq
        %v7053 = vshrl.u32 %v7052, 7
        %v7054 = vsub.s32 %v7051, %v7053
        %v7055 = vrot.slane %v7041, %v7054
        %v7056 = vcombine.low %v6859, %v6867
        %v7057 = vcombine.high %v6859, %v6867
        %v7059 = vunpack.c.l.s4 1983009808
        %v7060 = vunpack.c.0.s8 %v7059
        %v7061 = vlaneseq
        %v7062 = vshrl.u32 %v7061, 7
        %v7063 = vsub.s32 %v7060, %v7062
        %v7064 = vrot.slane %v7056, %v7063
        %v7066 = vunpack.c.l.s4 1983009808
        %v7067 = vunpack.c.0.s8 %v7066
        %v7068 = vlaneseq
        %v7069 = vshrl.u32 %v7068, 7
        %v7070 = vsub.s32 %v7067, %v7069
        %v7071 = vrot.slane %v7057, %v7070
        %v7072 = vcombine.low %v6863, %v6871
        %v7073 = vcombine.high %v6863, %v6871
        %v7075 = vunpack.c.l.s4 1983009808
        %v7076 = vunpack.c.0.s8 %v7075
        %v7077 = vlaneseq
        %v7078 = vshrl.u32 %v7077, 7
        %v7079 = vsub.s32 %v7076, %v7078
        %v7080 = vrot.slane %v7072, %v7079
        %v7082 = vunpack.c.l.s4 1983009808
        %v7083 = vunpack.c.0.s8 %v7082
        %v7084 = vlaneseq
        %v7085 = vshrl.u32 %v7084, 7
        %v7086 = vsub.s32 %v7083, %v7085
        %v7087 = vrot.slane %v7073, %v7086
        %v7088 = vcombine.low %v7032, %v7048
        %v7089 = vcombine.high %v7032, %v7048
        %v7091 = vunpack.c.l.s4 1934713408
        %v7092 = vunpack.c.0.s8 %v7091
        %v7093 = vlaneseq
        %v7094 = vshrl.u32 %v7093, 7
        %v7095 = vsub.s32 %v7092, %v7094
        %v7096 = vrot.slane %v7088, %v7095
        %v7098 = vunpack.c.l.s4 1934713408
        %v7099 = vunpack.c.0.s8 %v7098
        %v7100 = vlaneseq
        %v7101 = vshrl.u32 %v7100, 7
        %v7102 = vsub.s32 %v7099, %v7101
        %v7103 = vrot.slane %v7089, %v7102
        %v7104 = vcombine.low %v7039, %v7055
        %v7105 = vcombine.high %v7039, %v7055
        %v7107 = vunpack.c.l.s4 1934713408
        %v7108 = vunpack.c.0.s8 %v7107
        %v7109 = vlaneseq
        %v7110 = vshrl.u32 %v7109, 7
        %v7111 = vsub.s32 %v7108, %v7110
        %v7112 = vrot.slane %v7104, %v7111
        %v7114 = vunpack.c.l.s4 1934713408
        %v7115 = vunpack.c.0.s8 %v7114
        %v7116 = vlaneseq
        %v7117 = vshrl.u32 %v7116, 7
        %v7118 = vsub.s32 %v7115, %v7117
        %v7119 = vrot.slane %v7105, %v7118
        %v7120 = vcombine.low %v7064, %v7080
        %v7121 = vcombine.high %v7064, %v7080
        %v7123 = vunpack.c.l.s4 1934713408
        %v7124 = vunpack.c.0.s8 %v7123
        %v7125 = vlaneseq
        %v7126 = vshrl.u32 %v7125, 7
        %v7127 = vsub.s32 %v7124, %v7126
        %v7128 = vrot.slane %v7120, %v7127
        %v7130 = vunpack.c.l.s4 1934713408
        %v7131 = vunpack.c.0.s8 %v7130
        %v7132 = vlaneseq
        %v7133 = vshrl.u32 %v7132, 7
        %v7134 = vsub.s32 %v7131, %v7133
        %v7135 = vrot.slane %v7121, %v7134
        %v7136 = vcombine.low %v7071, %v7087
        %v7137 = vcombine.high %v7071, %v7087
        %v7139 = vunpack.c.l.s4 1934713408
        %v7140 = vunpack.c.0.s8 %v7139
        %v7141 = vlaneseq
        %v7142 = vshrl.u32 %v7141, 7
        %v7143 = vsub.s32 %v7140, %v7142
        %v7144 = vrot.slane %v7136, %v7143
        %v7146 = vunpack.c.l.s4 1934713408
        %v7147 = vunpack.c.0.s8 %v7146
        %v7148 = vlaneseq
        %v7149 = vshrl.u32 %v7148, 7
        %v7150 = vsub.s32 %v7147, %v7149
        %v7151 = vrot.slane %v7137, %v7150
        %v7152 = vcombine.low %v7096, %v7128
        %v7153 = vcombine.high %v7096, %v7128
        %v7154 = vcombine.low %v7103, %v7135
        %v7155 = vcombine.high %v7103, %v7135
        %v7156 = vcombine.low %v7112, %v7144
        %v7157 = vcombine.high %v7112, %v7144
        %v7158 = vcombine.low %v7119, %v7151
        %v7159 = vcombine.high %v7119, %v7151
        %7161 = vrot.lane.b32.xlu0 %v7017, 16
        %v7162 = vpop.permute.xlu0 %7161
        %7165 = vrot.lane.b32.xlu0 %v7018, 32
        %v7166 = vpop.permute.xlu0 %7165
        %7169 = vrot.lane.b32.xlu0 %v7019, 48
        %v7170 = vpop.permute.xlu0 %7169
        %7173 = vrot.lane.b32.xlu0 %v7020, 64
        %v7174 = vpop.permute.xlu0 %7173
        %7177 = vrot.lane.b32.xlu0 %v7021, 80
        %v7178 = vpop.permute.xlu0 %7177
        %7181 = vrot.lane.b32.xlu0 %v7022, 96
        %v7182 = vpop.permute.xlu0 %7181
        %7185 = vrot.lane.b32.xlu0 %v7023, 112
        %v7186 = vpop.permute.xlu0 %7185
        %7189 = vrot.lane.b32.xlu0 %v7153, 16
        %v7190 = vpop.permute.xlu0 %7189
        %7193 = vrot.lane.b32.xlu0 %v7154, 32
        %v7194 = vpop.permute.xlu0 %7193
        %7197 = vrot.lane.b32.xlu0 %v7155, 48
        %v7198 = vpop.permute.xlu0 %7197
        %7201 = vrot.lane.b32.xlu0 %v7156, 64
        %v7202 = vpop.permute.xlu0 %7201
        %7205 = vrot.lane.b32.xlu0 %v7157, 80
        %v7206 = vpop.permute.xlu0 %7205
        %7209 = vrot.lane.b32.xlu0 %v7158, 96
        %v7210 = vpop.permute.xlu0 %7209
        %7213 = vrot.lane.b32.xlu0 %v7159, 112
        %v7214 = vpop.permute.xlu0 %7213
        %v7216 = vsel %vm774, %v7016, %v7162
        %v7217 = vsel %vm776, %v7216, %v7166
        %v7218 = vsel %vm778, %v7217, %v7170
        %v7219 = vsel %vm780, %v7218, %v7174
        %v7220 = vsel %vm782, %v7219, %v7178
        %v7221 = vsel %vm784, %v7220, %v7182
        %v7222 = vsel %vm786, %v7221, %v7186
        %v7223 = vsel %vm774, %v7152, %v7190
        %v7224 = vsel %vm776, %v7223, %v7194
        %v7225 = vsel %vm778, %v7224, %v7198
        %v7226 = vsel %vm780, %v7225, %v7202
        %v7227 = vsel %vm782, %v7226, %v7206
        %v7228 = vsel %vm784, %v7227, %v7210
        %v7229 = vsel %vm786, %v7228, %v7214
        %v7230 = vld [vmem:[#allocation3 + $0x2] sm:$0xff]
        %v7231 = vld [vmem:[#allocation3 + $0xa] sm:$0xff]
        %v7232 = vld [vmem:[#allocation3 + $0x1a] sm:$0xff]
        %v7233 = vld [vmem:[#allocation3 + $0x22] sm:$0xff]
        %v7234 = vld [vmem:[#allocation3 + $0x32] sm:$0xff]
        %v7235 = vld [vmem:[#allocation3 + $0x3a] sm:$0xff]
        %v7236 = vld [vmem:[#allocation3 + $0x4a] sm:$0xff]
        %v7237 = vld [vmem:[#allocation3 + $0x52] sm:$0xff]
        %v7238 = vld [vmem:[#allocation3 + $0x62] sm:$0xff]
        %v7239 = vld [vmem:[#allocation3 + $0x6a] sm:$0xff]
        %v7240 = vld [vmem:[#allocation3 + $0x7a] sm:$0xff]
        %v7241 = vld [vmem:[#allocation3 + $0x82] sm:$0xff]
        %v7242 = vld [vmem:[#allocation3 + $0x92] sm:$0xff]
        %v7243 = vld [vmem:[#allocation3 + $0x9a] sm:$0xff]
        %v7244 = vld [vmem:[#allocation3 + $0xaa] sm:$0xff]
        %v7245 = vld [vmem:[#allocation3 + $0xb2] sm:$0xff]
        %v7246 = vcombine.low %v7230, %v7234
        %v7247 = vcombine.high %v7230, %v7234
        %v7249 = vunpack.c.l.s4 1983009808
        %v7250 = vunpack.c.0.s8 %v7249
        %v7251 = vlaneseq
        %v7252 = vshrl.u32 %v7251, 7
        %v7253 = vsub.s32 %v7250, %v7252
        %v7254 = vrot.slane %v7246, %v7253
        %v7256 = vunpack.c.l.s4 1983009808
        %v7257 = vunpack.c.0.s8 %v7256
        %v7258 = vlaneseq
        %v7259 = vshrl.u32 %v7258, 7
        %v7260 = vsub.s32 %v7257, %v7259
        %v7261 = vrot.slane %v7247, %v7260
        %v7262 = vcombine.low %v7232, %v7236
        %v7263 = vcombine.high %v7232, %v7236
        %v7265 = vunpack.c.l.s4 1983009808
        %v7266 = vunpack.c.0.s8 %v7265
        %v7267 = vlaneseq
        %v7268 = vshrl.u32 %v7267, 7
        %v7269 = vsub.s32 %v7266, %v7268
        %v7270 = vrot.slane %v7262, %v7269
        %v7272 = vunpack.c.l.s4 1983009808
        %v7273 = vunpack.c.0.s8 %v7272
        %v7274 = vlaneseq
        %v7275 = vshrl.u32 %v7274, 7
        %v7276 = vsub.s32 %v7273, %v7275
        %v7277 = vrot.slane %v7263, %v7276
        %v7278 = vcombine.low %v7238, %v7242
        %v7279 = vcombine.high %v7238, %v7242
        %v7281 = vunpack.c.l.s4 1983009808
        %v7282 = vunpack.c.0.s8 %v7281
        %v7283 = vlaneseq
        %v7284 = vshrl.u32 %v7283, 7
        %v7285 = vsub.s32 %v7282, %v7284
        %v7286 = vrot.slane %v7278, %v7285
        %v7288 = vunpack.c.l.s4 1983009808
        %v7289 = vunpack.c.0.s8 %v7288
        %v7290 = vlaneseq
        %v7291 = vshrl.u32 %v7290, 7
        %v7292 = vsub.s32 %v7289, %v7291
        %v7293 = vrot.slane %v7279, %v7292
        %v7294 = vcombine.low %v7240, %v7244
        %v7295 = vcombine.high %v7240, %v7244
        %v7297 = vunpack.c.l.s4 1983009808
        %v7298 = vunpack.c.0.s8 %v7297
        %v7299 = vlaneseq
        %v7300 = vshrl.u32 %v7299, 7
        %v7301 = vsub.s32 %v7298, %v7300
        %v7302 = vrot.slane %v7294, %v7301
        %v7304 = vunpack.c.l.s4 1983009808
        %v7305 = vunpack.c.0.s8 %v7304
        %v7306 = vlaneseq
        %v7307 = vshrl.u32 %v7306, 7
        %v7308 = vsub.s32 %v7305, %v7307
        %v7309 = vrot.slane %v7295, %v7308
        %v7310 = vcombine.low %v7254, %v7270
        %v7311 = vcombine.high %v7254, %v7270
        %v7313 = vunpack.c.l.s4 1934713408
        %v7314 = vunpack.c.0.s8 %v7313
        %v7315 = vlaneseq
        %v7316 = vshrl.u32 %v7315, 7
        %v7317 = vsub.s32 %v7314, %v7316
        %v7318 = vrot.slane %v7310, %v7317
        %v7320 = vunpack.c.l.s4 1934713408
        %v7321 = vunpack.c.0.s8 %v7320
        %v7322 = vlaneseq
        %v7323 = vshrl.u32 %v7322, 7
        %v7324 = vsub.s32 %v7321, %v7323
        %v7325 = vrot.slane %v7311, %v7324
        %v7326 = vcombine.low %v7261, %v7277
        %v7327 = vcombine.high %v7261, %v7277
        %v7329 = vunpack.c.l.s4 1934713408
        %v7330 = vunpack.c.0.s8 %v7329
        %v7331 = vlaneseq
        %v7332 = vshrl.u32 %v7331, 7
        %v7333 = vsub.s32 %v7330, %v7332
        %v7334 = vrot.slane %v7326, %v7333
        %v7336 = vunpack.c.l.s4 1934713408
        %v7337 = vunpack.c.0.s8 %v7336
        %v7338 = vlaneseq
        %v7339 = vshrl.u32 %v7338, 7
        %v7340 = vsub.s32 %v7337, %v7339
        %v7341 = vrot.slane %v7327, %v7340
        %v7342 = vcombine.low %v7286, %v7302
        %v7343 = vcombine.high %v7286, %v7302
        %v7345 = vunpack.c.l.s4 1934713408
        %v7346 = vunpack.c.0.s8 %v7345
        %v7347 = vlaneseq
        %v7348 = vshrl.u32 %v7347, 7
        %v7349 = vsub.s32 %v7346, %v7348
        %v7350 = vrot.slane %v7342, %v7349
        %v7352 = vunpack.c.l.s4 1934713408
        %v7353 = vunpack.c.0.s8 %v7352
        %v7354 = vlaneseq
        %v7355 = vshrl.u32 %v7354, 7
        %v7356 = vsub.s32 %v7353, %v7355
        %v7357 = vrot.slane %v7343, %v7356
        %v7358 = vcombine.low %v7293, %v7309
        %v7359 = vcombine.high %v7293, %v7309
        %v7361 = vunpack.c.l.s4 1934713408
        %v7362 = vunpack.c.0.s8 %v7361
        %v7363 = vlaneseq
        %v7364 = vshrl.u32 %v7363, 7
        %v7365 = vsub.s32 %v7362, %v7364
        %v7366 = vrot.slane %v7358, %v7365
        %v7368 = vunpack.c.l.s4 1934713408
        %v7369 = vunpack.c.0.s8 %v7368
        %v7370 = vlaneseq
        %v7371 = vshrl.u32 %v7370, 7
        %v7372 = vsub.s32 %v7369, %v7371
        %v7373 = vrot.slane %v7359, %v7372
        %v7374 = vcombine.low %v7318, %v7350
        %v7375 = vcombine.high %v7318, %v7350
        %v7376 = vcombine.low %v7325, %v7357
        %v7377 = vcombine.high %v7325, %v7357
        %v7378 = vcombine.low %v7334, %v7366
        %v7379 = vcombine.high %v7334, %v7366
        %v7380 = vcombine.low %v7341, %v7373
        %v7381 = vcombine.high %v7341, %v7373
        %v7382 = vcombine.low %v7231, %v7235
        %v7383 = vcombine.high %v7231, %v7235
        %v7385 = vunpack.c.l.s4 1983009808
        %v7386 = vunpack.c.0.s8 %v7385
        %v7387 = vlaneseq
        %v7388 = vshrl.u32 %v7387, 7
        %v7389 = vsub.s32 %v7386, %v7388
        %v7390 = vrot.slane %v7382, %v7389
        %v7392 = vunpack.c.l.s4 1983009808
        %v7393 = vunpack.c.0.s8 %v7392
        %v7394 = vlaneseq
        %v7395 = vshrl.u32 %v7394, 7
        %v7396 = vsub.s32 %v7393, %v7395
        %v7397 = vrot.slane %v7383, %v7396
        %v7398 = vcombine.low %v7233, %v7237
        %v7399 = vcombine.high %v7233, %v7237
        %v7401 = vunpack.c.l.s4 1983009808
        %v7402 = vunpack.c.0.s8 %v7401
        %v7403 = vlaneseq
        %v7404 = vshrl.u32 %v7403, 7
        %v7405 = vsub.s32 %v7402, %v7404
        %v7406 = vrot.slane %v7398, %v7405
        %v7408 = vunpack.c.l.s4 1983009808
        %v7409 = vunpack.c.0.s8 %v7408
        %v7410 = vlaneseq
        %v7411 = vshrl.u32 %v7410, 7
        %v7412 = vsub.s32 %v7409, %v7411
        %v7413 = vrot.slane %v7399, %v7412
        %v7414 = vcombine.low %v7239, %v7243
        %v7415 = vcombine.high %v7239, %v7243
        %v7417 = vunpack.c.l.s4 1983009808
        %v7418 = vunpack.c.0.s8 %v7417
        %v7419 = vlaneseq
        %v7420 = vshrl.u32 %v7419, 7
        %v7421 = vsub.s32 %v7418, %v7420
        %v7422 = vrot.slane %v7414, %v7421
        %v7424 = vunpack.c.l.s4 1983009808
        %v7425 = vunpack.c.0.s8 %v7424
        %v7426 = vlaneseq
        %v7427 = vshrl.u32 %v7426, 7
        %v7428 = vsub.s32 %v7425, %v7427
        %v7429 = vrot.slane %v7415, %v7428
        %v7430 = vcombine.low %v7241, %v7245
        %v7431 = vcombine.high %v7241, %v7245
        %v7433 = vunpack.c.l.s4 1983009808
        %v7434 = vunpack.c.0.s8 %v7433
        %v7435 = vlaneseq
        %v7436 = vshrl.u32 %v7435, 7
        %v7437 = vsub.s32 %v7434, %v7436
        %v7438 = vrot.slane %v7430, %v7437
        %v7440 = vunpack.c.l.s4 1983009808
        %v7441 = vunpack.c.0.s8 %v7440
        %v7442 = vlaneseq
        %v7443 = vshrl.u32 %v7442, 7
        %v7444 = vsub.s32 %v7441, %v7443
        %v7445 = vrot.slane %v7431, %v7444
        %v7446 = vcombine.low %v7390, %v7406
        %v7447 = vcombine.high %v7390, %v7406
        %v7449 = vunpack.c.l.s4 1934713408
        %v7450 = vunpack.c.0.s8 %v7449
        %v7451 = vlaneseq
        %v7452 = vshrl.u32 %v7451, 7
        %v7453 = vsub.s32 %v7450, %v7452
        %v7454 = vrot.slane %v7446, %v7453
        %v7456 = vunpack.c.l.s4 1934713408
        %v7457 = vunpack.c.0.s8 %v7456
        %v7458 = vlaneseq
        %v7459 = vshrl.u32 %v7458, 7
        %v7460 = vsub.s32 %v7457, %v7459
        %v7461 = vrot.slane %v7447, %v7460
        %v7462 = vcombine.low %v7397, %v7413
        %v7463 = vcombine.high %v7397, %v7413
        %v7465 = vunpack.c.l.s4 1934713408
        %v7466 = vunpack.c.0.s8 %v7465
        %v7467 = vlaneseq
        %v7468 = vshrl.u32 %v7467, 7
        %v7469 = vsub.s32 %v7466, %v7468
        %v7470 = vrot.slane %v7462, %v7469
        %v7472 = vunpack.c.l.s4 1934713408
        %v7473 = vunpack.c.0.s8 %v7472
        %v7474 = vlaneseq
        %v7475 = vshrl.u32 %v7474, 7
        %v7476 = vsub.s32 %v7473, %v7475
        %v7477 = vrot.slane %v7463, %v7476
        %v7478 = vcombine.low %v7422, %v7438
        %v7479 = vcombine.high %v7422, %v7438
        %v7481 = vunpack.c.l.s4 1934713408
        %v7482 = vunpack.c.0.s8 %v7481
        %v7483 = vlaneseq
        %v7484 = vshrl.u32 %v7483, 7
        %v7485 = vsub.s32 %v7482, %v7484
        %v7486 = vrot.slane %v7478, %v7485
        %v7488 = vunpack.c.l.s4 1934713408
        %v7489 = vunpack.c.0.s8 %v7488
        %v7490 = vlaneseq
        %v7491 = vshrl.u32 %v7490, 7
        %v7492 = vsub.s32 %v7489, %v7491
        %v7493 = vrot.slane %v7479, %v7492
        %v7494 = vcombine.low %v7429, %v7445
        %v7495 = vcombine.high %v7429, %v7445
        %v7497 = vunpack.c.l.s4 1934713408
        %v7498 = vunpack.c.0.s8 %v7497
        %v7499 = vlaneseq
        %v7500 = vshrl.u32 %v7499, 7
        %v7501 = vsub.s32 %v7498, %v7500
        %v7502 = vrot.slane %v7494, %v7501
        %v7504 = vunpack.c.l.s4 1934713408
        %v7505 = vunpack.c.0.s8 %v7504
        %v7506 = vlaneseq
        %v7507 = vshrl.u32 %v7506, 7
        %v7508 = vsub.s32 %v7505, %v7507
        %v7509 = vrot.slane %v7495, %v7508
        %v7510 = vcombine.low %v7454, %v7486
        %v7511 = vcombine.high %v7454, %v7486
        %v7512 = vcombine.low %v7461, %v7493
        %v7513 = vcombine.high %v7461, %v7493
        %v7514 = vcombine.low %v7470, %v7502
        %v7515 = vcombine.high %v7470, %v7502
        %v7516 = vcombine.low %v7477, %v7509
        %v7517 = vcombine.high %v7477, %v7509
        %7519 = vrot.lane.b32.xlu0 %v7375, 16
        %v7520 = vpop.permute.xlu0 %7519
        %7523 = vrot.lane.b32.xlu0 %v7376, 32
        %v7524 = vpop.permute.xlu0 %7523
        %7527 = vrot.lane.b32.xlu0 %v7377, 48
        %v7528 = vpop.permute.xlu0 %7527
        %7531 = vrot.lane.b32.xlu0 %v7378, 64
        %v7532 = vpop.permute.xlu0 %7531
        %7535 = vrot.lane.b32.xlu0 %v7379, 80
        %v7536 = vpop.permute.xlu0 %7535
        %7539 = vrot.lane.b32.xlu0 %v7380, 96
        %v7540 = vpop.permute.xlu0 %7539
        %7543 = vrot.lane.b32.xlu0 %v7381, 112
        %v7544 = vpop.permute.xlu0 %7543
        %7547 = vrot.lane.b32.xlu0 %v7511, 16
        %v7548 = vpop.permute.xlu0 %7547
        %7551 = vrot.lane.b32.xlu0 %v7512, 32
        %v7552 = vpop.permute.xlu0 %7551
        %7555 = vrot.lane.b32.xlu0 %v7513, 48
        %v7556 = vpop.permute.xlu0 %7555
        %7559 = vrot.lane.b32.xlu0 %v7514, 64
        %v7560 = vpop.permute.xlu0 %7559
        %7563 = vrot.lane.b32.xlu0 %v7515, 80
        %v7564 = vpop.permute.xlu0 %7563
        %7567 = vrot.lane.b32.xlu0 %v7516, 96
        %v7568 = vpop.permute.xlu0 %7567
        %7571 = vrot.lane.b32.xlu0 %v7517, 112
        %v7572 = vpop.permute.xlu0 %7571
        %v7574 = vsel %vm774, %v7374, %v7520
        %v7575 = vsel %vm776, %v7574, %v7524
        %v7576 = vsel %vm778, %v7575, %v7528
        %v7577 = vsel %vm780, %v7576, %v7532
        %v7578 = vsel %vm782, %v7577, %v7536
        %v7579 = vsel %vm784, %v7578, %v7540
        %v7580 = vsel %vm786, %v7579, %v7544
        %v7581 = vsel %vm774, %v7510, %v7548
        %v7582 = vsel %vm776, %v7581, %v7552
        %v7583 = vsel %vm778, %v7582, %v7556
        %v7584 = vsel %vm780, %v7583, %v7560
        %v7585 = vsel %vm782, %v7584, %v7564
        %v7586 = vsel %vm784, %v7585, %v7568
        %v7587 = vsel %vm786, %v7586, %v7572
        %7604 = vrot.lane.b32.xlu0 %v7230, 127
        %v7605 = vpop.permute.xlu0 %7604
        %7606 = vrot.lane.b32.xlu0 %v7231, 127
        %v7607 = vpop.permute.xlu0 %7606
        %7608 = vrot.lane.b32.xlu0 %v7232, 127
        %v7609 = vpop.permute.xlu0 %7608
        %7610 = vrot.lane.b32.xlu0 %v7233, 127
        %v7611 = vpop.permute.xlu0 %7610
        %7612 = vrot.lane.b32.xlu0 %v7234, 127
        %v7613 = vpop.permute.xlu0 %7612
        %7614 = vrot.lane.b32.xlu0 %v7235, 127
        %v7615 = vpop.permute.xlu0 %7614
        %7616 = vrot.lane.b32.xlu0 %v7236, 127
        %v7617 = vpop.permute.xlu0 %7616
        %7618 = vrot.lane.b32.xlu0 %v7237, 127
        %v7619 = vpop.permute.xlu0 %7618
        %7620 = vrot.lane.b32.xlu0 %v7238, 127
        %v7621 = vpop.permute.xlu0 %7620
        %7622 = vrot.lane.b32.xlu0 %v7239, 127
        %v7623 = vpop.permute.xlu0 %7622
        %7624 = vrot.lane.b32.xlu0 %v7240, 127
        %v7625 = vpop.permute.xlu0 %7624
        %7626 = vrot.lane.b32.xlu0 %v7241, 127
        %v7627 = vpop.permute.xlu0 %7626
        %7628 = vrot.lane.b32.xlu0 %v7242, 127
        %v7629 = vpop.permute.xlu0 %7628
        %7630 = vrot.lane.b32.xlu0 %v7243, 127
        %v7631 = vpop.permute.xlu0 %7630
        %7632 = vrot.lane.b32.xlu0 %v7244, 127
        %v7633 = vpop.permute.xlu0 %7632
        %7634 = vrot.lane.b32.xlu0 %v7245, 127
        %v7635 = vpop.permute.xlu0 %7634
        %v7652 = vcombine.low %v7605, %v7613
        %v7653 = vcombine.high %v7605, %v7613
        %v7655 = vunpack.c.l.s4 1983009808
        %v7656 = vunpack.c.0.s8 %v7655
        %v7657 = vlaneseq
        %v7658 = vshrl.u32 %v7657, 7
        %v7659 = vsub.s32 %v7656, %v7658
        %v7660 = vrot.slane %v7652, %v7659
        %v7662 = vunpack.c.l.s4 1983009808
        %v7663 = vunpack.c.0.s8 %v7662
        %v7664 = vlaneseq
        %v7665 = vshrl.u32 %v7664, 7
        %v7666 = vsub.s32 %v7663, %v7665
        %v7667 = vrot.slane %v7653, %v7666
        %v7668 = vcombine.low %v7609, %v7617
        %v7669 = vcombine.high %v7609, %v7617
        %v7671 = vunpack.c.l.s4 1983009808
        %v7672 = vunpack.c.0.s8 %v7671
        %v7673 = vlaneseq
        %v7674 = vshrl.u32 %v7673, 7
        %v7675 = vsub.s32 %v7672, %v7674
        %v7676 = vrot.slane %v7668, %v7675
        %v7678 = vunpack.c.l.s4 1983009808
        %v7679 = vunpack.c.0.s8 %v7678
        %v7680 = vlaneseq
        %v7681 = vshrl.u32 %v7680, 7
        %v7682 = vsub.s32 %v7679, %v7681
        %v7683 = vrot.slane %v7669, %v7682
        %v7684 = vcombine.low %v7621, %v7629
        %v7685 = vcombine.high %v7621, %v7629
        %v7687 = vunpack.c.l.s4 1983009808
        %v7688 = vunpack.c.0.s8 %v7687
        %v7689 = vlaneseq
        %v7690 = vshrl.u32 %v7689, 7
        %v7691 = vsub.s32 %v7688, %v7690
        %v7692 = vrot.slane %v7684, %v7691
        %v7694 = vunpack.c.l.s4 1983009808
        %v7695 = vunpack.c.0.s8 %v7694
        %v7696 = vlaneseq
        %v7697 = vshrl.u32 %v7696, 7
        %v7698 = vsub.s32 %v7695, %v7697
        %v7699 = vrot.slane %v7685, %v7698
        %v7700 = vcombine.low %v7625, %v7633
        %v7701 = vcombine.high %v7625, %v7633
        %v7703 = vunpack.c.l.s4 1983009808
        %v7704 = vunpack.c.0.s8 %v7703
        %v7705 = vlaneseq
        %v7706 = vshrl.u32 %v7705, 7
        %v7707 = vsub.s32 %v7704, %v7706
        %v7708 = vrot.slane %v7700, %v7707
        %v7710 = vunpack.c.l.s4 1983009808
        %v7711 = vunpack.c.0.s8 %v7710
        %v7712 = vlaneseq
        %v7713 = vshrl.u32 %v7712, 7
        %v7714 = vsub.s32 %v7711, %v7713
        %v7715 = vrot.slane %v7701, %v7714
        %v7716 = vcombine.low %v7660, %v7676
        %v7717 = vcombine.high %v7660, %v7676
        %v7719 = vunpack.c.l.s4 1934713408
        %v7720 = vunpack.c.0.s8 %v7719
        %v7721 = vlaneseq
        %v7722 = vshrl.u32 %v7721, 7
        %v7723 = vsub.s32 %v7720, %v7722
        %v7724 = vrot.slane %v7716, %v7723
        %v7726 = vunpack.c.l.s4 1934713408
        %v7727 = vunpack.c.0.s8 %v7726
        %v7728 = vlaneseq
        %v7729 = vshrl.u32 %v7728, 7
        %v7730 = vsub.s32 %v7727, %v7729
        %v7731 = vrot.slane %v7717, %v7730
        %v7732 = vcombine.low %v7667, %v7683
        %v7733 = vcombine.high %v7667, %v7683
        %v7735 = vunpack.c.l.s4 1934713408
        %v7736 = vunpack.c.0.s8 %v7735
        %v7737 = vlaneseq
        %v7738 = vshrl.u32 %v7737, 7
        %v7739 = vsub.s32 %v7736, %v7738
        %v7740 = vrot.slane %v7732, %v7739
        %v7742 = vunpack.c.l.s4 1934713408
        %v7743 = vunpack.c.0.s8 %v7742
        %v7744 = vlaneseq
        %v7745 = vshrl.u32 %v7744, 7
        %v7746 = vsub.s32 %v7743, %v7745
        %v7747 = vrot.slane %v7733, %v7746
        %v7748 = vcombine.low %v7692, %v7708
        %v7749 = vcombine.high %v7692, %v7708
        %v7751 = vunpack.c.l.s4 1934713408
        %v7752 = vunpack.c.0.s8 %v7751
        %v7753 = vlaneseq
        %v7754 = vshrl.u32 %v7753, 7
        %v7755 = vsub.s32 %v7752, %v7754
        %v7756 = vrot.slane %v7748, %v7755
        %v7758 = vunpack.c.l.s4 1934713408
        %v7759 = vunpack.c.0.s8 %v7758
        %v7760 = vlaneseq
        %v7761 = vshrl.u32 %v7760, 7
        %v7762 = vsub.s32 %v7759, %v7761
        %v7763 = vrot.slane %v7749, %v7762
        %v7764 = vcombine.low %v7699, %v7715
        %v7765 = vcombine.high %v7699, %v7715
        %v7767 = vunpack.c.l.s4 1934713408
        %v7768 = vunpack.c.0.s8 %v7767
        %v7769 = vlaneseq
        %v7770 = vshrl.u32 %v7769, 7
        %v7771 = vsub.s32 %v7768, %v7770
        %v7772 = vrot.slane %v7764, %v7771
        %v7774 = vunpack.c.l.s4 1934713408
        %v7775 = vunpack.c.0.s8 %v7774
        %v7776 = vlaneseq
        %v7777 = vshrl.u32 %v7776, 7
        %v7778 = vsub.s32 %v7775, %v7777
        %v7779 = vrot.slane %v7765, %v7778
        %v7780 = vcombine.low %v7724, %v7756
        %v7781 = vcombine.high %v7724, %v7756
        %v7782 = vcombine.low %v7731, %v7763
        %v7783 = vcombine.high %v7731, %v7763
        %v7784 = vcombine.low %v7740, %v7772
        %v7785 = vcombine.high %v7740, %v7772
        %v7786 = vcombine.low %v7747, %v7779
        %v7787 = vcombine.high %v7747, %v7779
        %v7788 = vcombine.low %v7607, %v7615
        %v7789 = vcombine.high %v7607, %v7615
        %v7791 = vunpack.c.l.s4 1983009808
        %v7792 = vunpack.c.0.s8 %v7791
        %v7793 = vlaneseq
        %v7794 = vshrl.u32 %v7793, 7
        %v7795 = vsub.s32 %v7792, %v7794
        %v7796 = vrot.slane %v7788, %v7795
        %v7798 = vunpack.c.l.s4 1983009808
        %v7799 = vunpack.c.0.s8 %v7798
        %v7800 = vlaneseq
        %v7801 = vshrl.u32 %v7800, 7
        %v7802 = vsub.s32 %v7799, %v7801
        %v7803 = vrot.slane %v7789, %v7802
        %v7804 = vcombine.low %v7611, %v7619
        %v7805 = vcombine.high %v7611, %v7619
        %v7807 = vunpack.c.l.s4 1983009808
        %v7808 = vunpack.c.0.s8 %v7807
        %v7809 = vlaneseq
        %v7810 = vshrl.u32 %v7809, 7
        %v7811 = vsub.s32 %v7808, %v7810
        %v7812 = vrot.slane %v7804, %v7811
        %v7814 = vunpack.c.l.s4 1983009808
        %v7815 = vunpack.c.0.s8 %v7814
        %v7816 = vlaneseq
        %v7817 = vshrl.u32 %v7816, 7
        %v7818 = vsub.s32 %v7815, %v7817
        %v7819 = vrot.slane %v7805, %v7818
        %v7820 = vcombine.low %v7623, %v7631
        %v7821 = vcombine.high %v7623, %v7631
        %v7823 = vunpack.c.l.s4 1983009808
        %v7824 = vunpack.c.0.s8 %v7823
        %v7825 = vlaneseq
        %v7826 = vshrl.u32 %v7825, 7
        %v7827 = vsub.s32 %v7824, %v7826
        %v7828 = vrot.slane %v7820, %v7827
        %v7830 = vunpack.c.l.s4 1983009808
        %v7831 = vunpack.c.0.s8 %v7830
        %v7832 = vlaneseq
        %v7833 = vshrl.u32 %v7832, 7
        %v7834 = vsub.s32 %v7831, %v7833
        %v7835 = vrot.slane %v7821, %v7834
        %v7836 = vcombine.low %v7627, %v7635
        %v7837 = vcombine.high %v7627, %v7635
        %v7839 = vunpack.c.l.s4 1983009808
        %v7840 = vunpack.c.0.s8 %v7839
        %v7841 = vlaneseq
        %v7842 = vshrl.u32 %v7841, 7
        %v7843 = vsub.s32 %v7840, %v7842
        %v7844 = vrot.slane %v7836, %v7843
        %v7846 = vunpack.c.l.s4 1983009808
        %v7847 = vunpack.c.0.s8 %v7846
        %v7848 = vlaneseq
        %v7849 = vshrl.u32 %v7848, 7
        %v7850 = vsub.s32 %v7847, %v7849
        %v7851 = vrot.slane %v7837, %v7850
        %v7852 = vcombine.low %v7796, %v7812
        %v7853 = vcombine.high %v7796, %v7812
        %v7855 = vunpack.c.l.s4 1934713408
        %v7856 = vunpack.c.0.s8 %v7855
        %v7857 = vlaneseq
        %v7858 = vshrl.u32 %v7857, 7
        %v7859 = vsub.s32 %v7856, %v7858
        %v7860 = vrot.slane %v7852, %v7859
        %v7862 = vunpack.c.l.s4 1934713408
        %v7863 = vunpack.c.0.s8 %v7862
        %v7864 = vlaneseq
        %v7865 = vshrl.u32 %v7864, 7
        %v7866 = vsub.s32 %v7863, %v7865
        %v7867 = vrot.slane %v7853, %v7866
        %v7868 = vcombine.low %v7803, %v7819
        %v7869 = vcombine.high %v7803, %v7819
        %v7871 = vunpack.c.l.s4 1934713408
        %v7872 = vunpack.c.0.s8 %v7871
        %v7873 = vlaneseq
        %v7874 = vshrl.u32 %v7873, 7
        %v7875 = vsub.s32 %v7872, %v7874
        %v7876 = vrot.slane %v7868, %v7875
        %v7878 = vunpack.c.l.s4 1934713408
        %v7879 = vunpack.c.0.s8 %v7878
        %v7880 = vlaneseq
        %v7881 = vshrl.u32 %v7880, 7
        %v7882 = vsub.s32 %v7879, %v7881
        %v7883 = vrot.slane %v7869, %v7882
        %v7884 = vcombine.low %v7828, %v7844
        %v7885 = vcombine.high %v7828, %v7844
        %v7887 = vunpack.c.l.s4 1934713408
        %v7888 = vunpack.c.0.s8 %v7887
        %v7889 = vlaneseq
        %v7890 = vshrl.u32 %v7889, 7
        %v7891 = vsub.s32 %v7888, %v7890
        %v7892 = vrot.slane %v7884, %v7891
        %v7894 = vunpack.c.l.s4 1934713408
        %v7895 = vunpack.c.0.s8 %v7894
        %v7896 = vlaneseq
        %v7897 = vshrl.u32 %v7896, 7
        %v7898 = vsub.s32 %v7895, %v7897
        %v7899 = vrot.slane %v7885, %v7898
        %v7900 = vcombine.low %v7835, %v7851
        %v7901 = vcombine.high %v7835, %v7851
        %v7903 = vunpack.c.l.s4 1934713408
        %v7904 = vunpack.c.0.s8 %v7903
        %v7905 = vlaneseq
        %v7906 = vshrl.u32 %v7905, 7
        %v7907 = vsub.s32 %v7904, %v7906
        %v7908 = vrot.slane %v7900, %v7907
        %v7910 = vunpack.c.l.s4 1934713408
        %v7911 = vunpack.c.0.s8 %v7910
        %v7912 = vlaneseq
        %v7913 = vshrl.u32 %v7912, 7
        %v7914 = vsub.s32 %v7911, %v7913
        %v7915 = vrot.slane %v7901, %v7914
        %v7916 = vcombine.low %v7860, %v7892
        %v7917 = vcombine.high %v7860, %v7892
        %v7918 = vcombine.low %v7867, %v7899
        %v7919 = vcombine.high %v7867, %v7899
        %v7920 = vcombine.low %v7876, %v7908
        %v7921 = vcombine.high %v7876, %v7908
        %v7922 = vcombine.low %v7883, %v7915
        %v7923 = vcombine.high %v7883, %v7915
        %7925 = vrot.lane.b32.xlu0 %v7781, 16
        %v7926 = vpop.permute.xlu0 %7925
        %7929 = vrot.lane.b32.xlu0 %v7782, 32
        %v7930 = vpop.permute.xlu0 %7929
        %7933 = vrot.lane.b32.xlu0 %v7783, 48
        %v7934 = vpop.permute.xlu0 %7933
        %7937 = vrot.lane.b32.xlu0 %v7784, 64
        %v7938 = vpop.permute.xlu0 %7937
        %7941 = vrot.lane.b32.xlu0 %v7785, 80
        %v7942 = vpop.permute.xlu0 %7941
        %7945 = vrot.lane.b32.xlu0 %v7786, 96
        %v7946 = vpop.permute.xlu0 %7945
        %7949 = vrot.lane.b32.xlu0 %v7787, 112
        %v7950 = vpop.permute.xlu0 %7949
        %7953 = vrot.lane.b32.xlu0 %v7917, 16
        %v7954 = vpop.permute.xlu0 %7953
        %7957 = vrot.lane.b32.xlu0 %v7918, 32
        %v7958 = vpop.permute.xlu0 %7957
        %7961 = vrot.lane.b32.xlu0 %v7919, 48
        %v7962 = vpop.permute.xlu0 %7961
        %7965 = vrot.lane.b32.xlu0 %v7920, 64
        %v7966 = vpop.permute.xlu0 %7965
        %7969 = vrot.lane.b32.xlu0 %v7921, 80
        %v7970 = vpop.permute.xlu0 %7969
        %7973 = vrot.lane.b32.xlu0 %v7922, 96
        %v7974 = vpop.permute.xlu0 %7973
        %7977 = vrot.lane.b32.xlu0 %v7923, 112
        %v7978 = vpop.permute.xlu0 %7977
        %v7980 = vsel %vm774, %v7780, %v7926
        %v7981 = vsel %vm776, %v7980, %v7930
        %v7982 = vsel %vm778, %v7981, %v7934
        %v7983 = vsel %vm780, %v7982, %v7938
        %v7984 = vsel %vm782, %v7983, %v7942
        %v7985 = vsel %vm784, %v7984, %v7946
        %v7986 = vsel %vm786, %v7985, %v7950
        %v7987 = vsel %vm774, %v7916, %v7954
        %v7988 = vsel %vm776, %v7987, %v7958
        %v7989 = vsel %vm778, %v7988, %v7962
        %v7990 = vsel %vm780, %v7989, %v7966
        %v7991 = vsel %vm782, %v7990, %v7970
        %v7992 = vsel %vm784, %v7991, %v7974
        %v7993 = vsel %vm786, %v7992, %v7978
        %v7995 = vsel %vm776, %v6465, 0
        %7997 = vmatprep.subr.mxu0 0.0
        %7998 = vmatpush1.msra.mxu0 0.0
        %7999 = vmatprep.subr.mxu0 0.0
        %8000 = vmatpush1.msra.mxu0 0.0
        %8001 = vmatprep.subr.mxu0 0.0
        %8002 = vmatpush1.msra.mxu0 0.0
        %8003 = vmatprep.subr.mxu0 0.0
        %8004 = vmatpush1.msra.mxu0 0.0
        %8005 = vmatprep.subr.mxu0 0.0
        %8006 = vmatpush1.msra.mxu0 0.0
        %8007 = vmatprep.subr.mxu0 0.0
        %8008 = vmatpush1.msra.mxu0 0.0
        %8009 = vmatprep.subr.mxu0 0.0
        %8010 = vmatpush1.msra.mxu0 0.0
        %8011 = vmatprep.subr.mxu0 0.0
        %8012 = vmatpush1.msra.mxu0 0.0
        %8013 = vmatprep.subr.mxu0 0.0
        %8014 = vmatpush1.msra.mxu0 0.0
        %8015 = vmatprep.subr.mxu0 0.0
        %8016 = vmatpush1.msra.mxu0 0.0
        %8017 = vmatprep.subr.mxu0 0.0
        %8018 = vmatpush1.msra.mxu0 0.0
        %8019 = vmatprep.subr.mxu0 0.0
        %8020 = vmatpush1.msra.mxu0 0.0
        %8021 = vmatprep.subr.mxu0 %v7993
        %8022 = vmatpush1.msra.mxu0 %v7986
        %8023 = vmatprep.subr.mxu0 %v7587
        %8024 = vmatpush1.msra.mxu0 %v7580
        %8025 = vmatprep.subr.mxu0 %v7229
        %8026 = vmatpush1.msra.mxu0 %v7222
        %8027 = vmatprep.subr.mxu0 %v6823
        %8028 = vmatpush1.msra.mxu0 %v6816
        %8029 = vmatprep.subr.mxu0 0.0
        %8030 = vmatpush2.msra.mxu0 0.0
        %8031 = vmatprep.subr.mxu0 0.0
        %8032 = vmatpush2.msra.mxu0 0.0
        %8033 = vmatprep.subr.mxu0 0.0
        %8034 = vmatpush2.msra.mxu0 0.0
        %8035 = vmatprep.subr.mxu0 0.0
        %8036 = vmatpush2.msra.mxu0 0.0
        %8037 = vmatprep.subr.mxu0 0.0
        %8038 = vmatpush2.msra.mxu0 0.0
        %8039 = vmatprep.subr.mxu0 0.0
        %8040 = vmatpush2.msra.mxu0 0.0
        %8041 = vmatprep.subr.mxu0 0.0
        %8042 = vmatpush2.msra.mxu0 0.0
        %8043 = vmatprep.subr.mxu0 0.0
        %8044 = vmatpush2.msra.mxu0 0.0
        %8045 = vmatprep.subr.mxu0 0.0
        %8046 = vmatpush2.msra.mxu0 0.0
        %8047 = vmatprep.subr.mxu0 0.0
        %8048 = vmatpush2.msra.mxu0 0.0
        %8049 = vmatprep.subr.mxu0 0.0
        %8050 = vmatpush2.msra.mxu0 0.0
        %8051 = vmatprep.subr.mxu0 0.0
        %8052 = vmatpush2.msra.mxu0 0.0
        %8053 = vmatprep.subr.mxu0 0.0
        %8054 = vmatpush2.msra.mxu0 0.0
        %8055 = vmatprep.subr.mxu0 0.0
        %8056 = vmatpush2.msra.mxu0 0.0
        %8057 = vmatprep.subr.mxu0 0.0
        %8058 = vmatpush2.msra.mxu0 0.0
        %8059 = vmatprep.subr.mxu0 0.0
        %8060 = vmatpush2.msra.mxu0 0.0
        %8061 = vmatprep.mubr.f32.mxu0 0.0
        %8062 = vmatmul.mubr.f32.gmra.mxu0 %v7995
        %v8063 = vpop.f32.mrf.mxu0
        %v8064 = vadd.f32 %v4673, %v8063
        %v8065 = vpop.f32.mrf.mxu0
        %v8066 = vadd.f32 %v4673, %v8065
        %8067 = vdwg.mxu0
        %v8068 = vmax.f32 %v8064, 0.0
        %v8069 = vmax.f32 %v8066, 0.0
        %v8072 = vcombine.low %v8068, %v8069
        %s8074 = scalar_lea.vmem %s240, 16 [#allocation10]
        %8075 = vst [vmem:[%s8074] sm:$0xff] %v8072
        %s8076 = scalar_lea.vmem [#allocation9], 12
        %v8077 = vld [vmem:[%s8076] sm:$0xf]
        %v8078 = vld [vmem:[#allocation3 + $0x1] sm:$0xff]
        %v8079 = vld [vmem:[#allocation3 + $0x9] sm:$0xff]
        %v8080 = vld [vmem:[#allocation3 + $0x19] sm:$0xff]
        %v8081 = vld [vmem:[#allocation3 + $0x21] sm:$0xff]
        %v8082 = vld [vmem:[#allocation3 + $0x31] sm:$0xff]
        %v8083 = vld [vmem:[#allocation3 + $0x39] sm:$0xff]
        %v8084 = vld [vmem:[#allocation3 + $0x49] sm:$0xff]
        %v8085 = vld [vmem:[#allocation3 + $0x51] sm:$0xff]
        %v8086 = vld [vmem:[#allocation3 + $0x61] sm:$0xff]
        %v8087 = vld [vmem:[#allocation3 + $0x69] sm:$0xff]
        %v8088 = vld [vmem:[#allocation3 + $0x79] sm:$0xff]
        %v8089 = vld [vmem:[#allocation3 + $0x81] sm:$0xff]
        %v8090 = vld [vmem:[#allocation3 + $0x91] sm:$0xff]
        %v8091 = vld [vmem:[#allocation3 + $0x99] sm:$0xff]
        %v8092 = vld [vmem:[#allocation3 + $0xa9] sm:$0xff]
        %v8093 = vld [vmem:[#allocation3 + $0xb1] sm:$0xff]
        %8110 = vrot.lane.b32.xlu0 %v8078, 127
        %v8111 = vpop.permute.xlu0 %8110
        %8112 = vrot.lane.b32.xlu0 %v8079, 127
        %v8113 = vpop.permute.xlu0 %8112
        %8114 = vrot.lane.b32.xlu0 %v8080, 127
        %v8115 = vpop.permute.xlu0 %8114
        %8116 = vrot.lane.b32.xlu0 %v8081, 127
        %v8117 = vpop.permute.xlu0 %8116
        %8118 = vrot.lane.b32.xlu0 %v8082, 127
        %v8119 = vpop.permute.xlu0 %8118
        %8120 = vrot.lane.b32.xlu0 %v8083, 127
        %v8121 = vpop.permute.xlu0 %8120
        %8122 = vrot.lane.b32.xlu0 %v8084, 127
        %v8123 = vpop.permute.xlu0 %8122
        %8124 = vrot.lane.b32.xlu0 %v8085, 127
        %v8125 = vpop.permute.xlu0 %8124
        %8126 = vrot.lane.b32.xlu0 %v8086, 127
        %v8127 = vpop.permute.xlu0 %8126
        %8128 = vrot.lane.b32.xlu0 %v8087, 127
        %v8129 = vpop.permute.xlu0 %8128
        %8130 = vrot.lane.b32.xlu0 %v8088, 127
        %v8131 = vpop.permute.xlu0 %8130
        %8132 = vrot.lane.b32.xlu0 %v8089, 127
        %v8133 = vpop.permute.xlu0 %8132
        %8134 = vrot.lane.b32.xlu0 %v8090, 127
        %v8135 = vpop.permute.xlu0 %8134
        %8136 = vrot.lane.b32.xlu0 %v8091, 127
        %v8137 = vpop.permute.xlu0 %8136
        %8138 = vrot.lane.b32.xlu0 %v8092, 127
        %v8139 = vpop.permute.xlu0 %8138
        %8140 = vrot.lane.b32.xlu0 %v8093, 127
        %v8141 = vpop.permute.xlu0 %8140
        %v8158 = vcombine.low %v8111, %v8119
        %v8159 = vcombine.high %v8111, %v8119
        %v8161 = vunpack.c.l.s4 1983009808
        %v8162 = vunpack.c.0.s8 %v8161
        %v8163 = vlaneseq
        %v8164 = vshrl.u32 %v8163, 7
        %v8165 = vsub.s32 %v8162, %v8164
        %v8166 = vrot.slane %v8158, %v8165
        %v8168 = vunpack.c.l.s4 1983009808
        %v8169 = vunpack.c.0.s8 %v8168
        %v8170 = vlaneseq
        %v8171 = vshrl.u32 %v8170, 7
        %v8172 = vsub.s32 %v8169, %v8171
        %v8173 = vrot.slane %v8159, %v8172
        %v8174 = vcombine.low %v8115, %v8123
        %v8175 = vcombine.high %v8115, %v8123
        %v8177 = vunpack.c.l.s4 1983009808
        %v8178 = vunpack.c.0.s8 %v8177
        %v8179 = vlaneseq
        %v8180 = vshrl.u32 %v8179, 7
        %v8181 = vsub.s32 %v8178, %v8180
        %v8182 = vrot.slane %v8174, %v8181
        %v8184 = vunpack.c.l.s4 1983009808
        %v8185 = vunpack.c.0.s8 %v8184
        %v8186 = vlaneseq
        %v8187 = vshrl.u32 %v8186, 7
        %v8188 = vsub.s32 %v8185, %v8187
        %v8189 = vrot.slane %v8175, %v8188
        %v8190 = vcombine.low %v8127, %v8135
        %v8191 = vcombine.high %v8127, %v8135
        %v8193 = vunpack.c.l.s4 1983009808
        %v8194 = vunpack.c.0.s8 %v8193
        %v8195 = vlaneseq
        %v8196 = vshrl.u32 %v8195, 7
        %v8197 = vsub.s32 %v8194, %v8196
        %v8198 = vrot.slane %v8190, %v8197
        %v8200 = vunpack.c.l.s4 1983009808
        %v8201 = vunpack.c.0.s8 %v8200
        %v8202 = vlaneseq
        %v8203 = vshrl.u32 %v8202, 7
        %v8204 = vsub.s32 %v8201, %v8203
        %v8205 = vrot.slane %v8191, %v8204
        %v8206 = vcombine.low %v8131, %v8139
        %v8207 = vcombine.high %v8131, %v8139
        %v8209 = vunpack.c.l.s4 1983009808
        %v8210 = vunpack.c.0.s8 %v8209
        %v8211 = vlaneseq
        %v8212 = vshrl.u32 %v8211, 7
        %v8213 = vsub.s32 %v8210, %v8212
        %v8214 = vrot.slane %v8206, %v8213
        %v8216 = vunpack.c.l.s4 1983009808
        %v8217 = vunpack.c.0.s8 %v8216
        %v8218 = vlaneseq
        %v8219 = vshrl.u32 %v8218, 7
        %v8220 = vsub.s32 %v8217, %v8219
        %v8221 = vrot.slane %v8207, %v8220
        %v8222 = vcombine.low %v8166, %v8182
        %v8223 = vcombine.high %v8166, %v8182
        %v8225 = vunpack.c.l.s4 1934713408
        %v8226 = vunpack.c.0.s8 %v8225
        %v8227 = vlaneseq
        %v8228 = vshrl.u32 %v8227, 7
        %v8229 = vsub.s32 %v8226, %v8228
        %v8230 = vrot.slane %v8222, %v8229
        %v8232 = vunpack.c.l.s4 1934713408
        %v8233 = vunpack.c.0.s8 %v8232
        %v8234 = vlaneseq
        %v8235 = vshrl.u32 %v8234, 7
        %v8236 = vsub.s32 %v8233, %v8235
        %v8237 = vrot.slane %v8223, %v8236
        %v8238 = vcombine.low %v8173, %v8189
        %v8239 = vcombine.high %v8173, %v8189
        %v8241 = vunpack.c.l.s4 1934713408
        %v8242 = vunpack.c.0.s8 %v8241
        %v8243 = vlaneseq
        %v8244 = vshrl.u32 %v8243, 7
        %v8245 = vsub.s32 %v8242, %v8244
        %v8246 = vrot.slane %v8238, %v8245
        %v8248 = vunpack.c.l.s4 1934713408
        %v8249 = vunpack.c.0.s8 %v8248
        %v8250 = vlaneseq
        %v8251 = vshrl.u32 %v8250, 7
        %v8252 = vsub.s32 %v8249, %v8251
        %v8253 = vrot.slane %v8239, %v8252
        %v8254 = vcombine.low %v8198, %v8214
        %v8255 = vcombine.high %v8198, %v8214
        %v8257 = vunpack.c.l.s4 1934713408
        %v8258 = vunpack.c.0.s8 %v8257
        %v8259 = vlaneseq
        %v8260 = vshrl.u32 %v8259, 7
        %v8261 = vsub.s32 %v8258, %v8260
        %v8262 = vrot.slane %v8254, %v8261
        %v8264 = vunpack.c.l.s4 1934713408
        %v8265 = vunpack.c.0.s8 %v8264
        %v8266 = vlaneseq
        %v8267 = vshrl.u32 %v8266, 7
        %v8268 = vsub.s32 %v8265, %v8267
        %v8269 = vrot.slane %v8255, %v8268
        %v8270 = vcombine.low %v8205, %v8221
        %v8271 = vcombine.high %v8205, %v8221
        %v8273 = vunpack.c.l.s4 1934713408
        %v8274 = vunpack.c.0.s8 %v8273
        %v8275 = vlaneseq
        %v8276 = vshrl.u32 %v8275, 7
        %v8277 = vsub.s32 %v8274, %v8276
        %v8278 = vrot.slane %v8270, %v8277
        %v8280 = vunpack.c.l.s4 1934713408
        %v8281 = vunpack.c.0.s8 %v8280
        %v8282 = vlaneseq
        %v8283 = vshrl.u32 %v8282, 7
        %v8284 = vsub.s32 %v8281, %v8283
        %v8285 = vrot.slane %v8271, %v8284
        %v8286 = vcombine.low %v8230, %v8262
        %v8287 = vcombine.high %v8230, %v8262
        %v8288 = vcombine.low %v8237, %v8269
        %v8289 = vcombine.high %v8237, %v8269
        %v8290 = vcombine.low %v8246, %v8278
        %v8291 = vcombine.high %v8246, %v8278
        %v8292 = vcombine.low %v8253, %v8285
        %v8293 = vcombine.high %v8253, %v8285
        %v8294 = vcombine.low %v8113, %v8121
        %v8295 = vcombine.high %v8113, %v8121
        %v8297 = vunpack.c.l.s4 1983009808
        %v8298 = vunpack.c.0.s8 %v8297
        %v8299 = vlaneseq
        %v8300 = vshrl.u32 %v8299, 7
        %v8301 = vsub.s32 %v8298, %v8300
        %v8302 = vrot.slane %v8294, %v8301
        %v8304 = vunpack.c.l.s4 1983009808
        %v8305 = vunpack.c.0.s8 %v8304
        %v8306 = vlaneseq
        %v8307 = vshrl.u32 %v8306, 7
        %v8308 = vsub.s32 %v8305, %v8307
        %v8309 = vrot.slane %v8295, %v8308
        %v8310 = vcombine.low %v8117, %v8125
        %v8311 = vcombine.high %v8117, %v8125
        %v8313 = vunpack.c.l.s4 1983009808
        %v8314 = vunpack.c.0.s8 %v8313
        %v8315 = vlaneseq
        %v8316 = vshrl.u32 %v8315, 7
        %v8317 = vsub.s32 %v8314, %v8316
        %v8318 = vrot.slane %v8310, %v8317
        %v8320 = vunpack.c.l.s4 1983009808
        %v8321 = vunpack.c.0.s8 %v8320
        %v8322 = vlaneseq
        %v8323 = vshrl.u32 %v8322, 7
        %v8324 = vsub.s32 %v8321, %v8323
        %v8325 = vrot.slane %v8311, %v8324
        %v8326 = vcombine.low %v8129, %v8137
        %v8327 = vcombine.high %v8129, %v8137
        %v8329 = vunpack.c.l.s4 1983009808
        %v8330 = vunpack.c.0.s8 %v8329
        %v8331 = vlaneseq
        %v8332 = vshrl.u32 %v8331, 7
        %v8333 = vsub.s32 %v8330, %v8332
        %v8334 = vrot.slane %v8326, %v8333
        %v8336 = vunpack.c.l.s4 1983009808
        %v8337 = vunpack.c.0.s8 %v8336
        %v8338 = vlaneseq
        %v8339 = vshrl.u32 %v8338, 7
        %v8340 = vsub.s32 %v8337, %v8339
        %v8341 = vrot.slane %v8327, %v8340
        %v8342 = vcombine.low %v8133, %v8141
        %v8343 = vcombine.high %v8133, %v8141
        %v8345 = vunpack.c.l.s4 1983009808
        %v8346 = vunpack.c.0.s8 %v8345
        %v8347 = vlaneseq
        %v8348 = vshrl.u32 %v8347, 7
        %v8349 = vsub.s32 %v8346, %v8348
        %v8350 = vrot.slane %v8342, %v8349
        %v8352 = vunpack.c.l.s4 1983009808
        %v8353 = vunpack.c.0.s8 %v8352
        %v8354 = vlaneseq
        %v8355 = vshrl.u32 %v8354, 7
        %v8356 = vsub.s32 %v8353, %v8355
        %v8357 = vrot.slane %v8343, %v8356
        %v8358 = vcombine.low %v8302, %v8318
        %v8359 = vcombine.high %v8302, %v8318
        %v8361 = vunpack.c.l.s4 1934713408
        %v8362 = vunpack.c.0.s8 %v8361
        %v8363 = vlaneseq
        %v8364 = vshrl.u32 %v8363, 7
        %v8365 = vsub.s32 %v8362, %v8364
        %v8366 = vrot.slane %v8358, %v8365
        %v8368 = vunpack.c.l.s4 1934713408
        %v8369 = vunpack.c.0.s8 %v8368
        %v8370 = vlaneseq
        %v8371 = vshrl.u32 %v8370, 7
        %v8372 = vsub.s32 %v8369, %v8371
        %v8373 = vrot.slane %v8359, %v8372
        %v8374 = vcombine.low %v8309, %v8325
        %v8375 = vcombine.high %v8309, %v8325
        %v8377 = vunpack.c.l.s4 1934713408
        %v8378 = vunpack.c.0.s8 %v8377
        %v8379 = vlaneseq
        %v8380 = vshrl.u32 %v8379, 7
        %v8381 = vsub.s32 %v8378, %v8380
        %v8382 = vrot.slane %v8374, %v8381
        %v8384 = vunpack.c.l.s4 1934713408
        %v8385 = vunpack.c.0.s8 %v8384
        %v8386 = vlaneseq
        %v8387 = vshrl.u32 %v8386, 7
        %v8388 = vsub.s32 %v8385, %v8387
        %v8389 = vrot.slane %v8375, %v8388
        %v8390 = vcombine.low %v8334, %v8350
        %v8391 = vcombine.high %v8334, %v8350
        %v8393 = vunpack.c.l.s4 1934713408
        %v8394 = vunpack.c.0.s8 %v8393
        %v8395 = vlaneseq
        %v8396 = vshrl.u32 %v8395, 7
        %v8397 = vsub.s32 %v8394, %v8396
        %v8398 = vrot.slane %v8390, %v8397
        %v8400 = vunpack.c.l.s4 1934713408
        %v8401 = vunpack.c.0.s8 %v8400
        %v8402 = vlaneseq
        %v8403 = vshrl.u32 %v8402, 7
        %v8404 = vsub.s32 %v8401, %v8403
        %v8405 = vrot.slane %v8391, %v8404
        %v8406 = vcombine.low %v8341, %v8357
        %v8407 = vcombine.high %v8341, %v8357
        %v8409 = vunpack.c.l.s4 1934713408
        %v8410 = vunpack.c.0.s8 %v8409
        %v8411 = vlaneseq
        %v8412 = vshrl.u32 %v8411, 7
        %v8413 = vsub.s32 %v8410, %v8412
        %v8414 = vrot.slane %v8406, %v8413
        %v8416 = vunpack.c.l.s4 1934713408
        %v8417 = vunpack.c.0.s8 %v8416
        %v8418 = vlaneseq
        %v8419 = vshrl.u32 %v8418, 7
        %v8420 = vsub.s32 %v8417, %v8419
        %v8421 = vrot.slane %v8407, %v8420
        %v8422 = vcombine.low %v8366, %v8398
        %v8423 = vcombine.high %v8366, %v8398
        %v8424 = vcombine.low %v8373, %v8405
        %v8425 = vcombine.high %v8373, %v8405
        %v8426 = vcombine.low %v8382, %v8414
        %v8427 = vcombine.high %v8382, %v8414
        %v8428 = vcombine.low %v8389, %v8421
        %v8429 = vcombine.high %v8389, %v8421
        %8431 = vrot.lane.b32.xlu0 %v8287, 16
        %v8432 = vpop.permute.xlu0 %8431
        %8435 = vrot.lane.b32.xlu0 %v8288, 32
        %v8436 = vpop.permute.xlu0 %8435
        %8439 = vrot.lane.b32.xlu0 %v8289, 48
        %v8440 = vpop.permute.xlu0 %8439
        %8443 = vrot.lane.b32.xlu0 %v8290, 64
        %v8444 = vpop.permute.xlu0 %8443
        %8447 = vrot.lane.b32.xlu0 %v8291, 80
        %v8448 = vpop.permute.xlu0 %8447
        %8451 = vrot.lane.b32.xlu0 %v8292, 96
        %v8452 = vpop.permute.xlu0 %8451
        %8455 = vrot.lane.b32.xlu0 %v8293, 112
        %v8456 = vpop.permute.xlu0 %8455
        %8459 = vrot.lane.b32.xlu0 %v8423, 16
        %v8460 = vpop.permute.xlu0 %8459
        %8463 = vrot.lane.b32.xlu0 %v8424, 32
        %v8464 = vpop.permute.xlu0 %8463
        %8467 = vrot.lane.b32.xlu0 %v8425, 48
        %v8468 = vpop.permute.xlu0 %8467
        %8471 = vrot.lane.b32.xlu0 %v8426, 64
        %v8472 = vpop.permute.xlu0 %8471
        %8475 = vrot.lane.b32.xlu0 %v8427, 80
        %v8476 = vpop.permute.xlu0 %8475
        %8479 = vrot.lane.b32.xlu0 %v8428, 96
        %v8480 = vpop.permute.xlu0 %8479
        %8483 = vrot.lane.b32.xlu0 %v8429, 112
        %v8484 = vpop.permute.xlu0 %8483
        %v8486 = vsel %vm774, %v8286, %v8432
        %v8487 = vsel %vm776, %v8486, %v8436
        %v8488 = vsel %vm778, %v8487, %v8440
        %v8489 = vsel %vm780, %v8488, %v8444
        %v8490 = vsel %vm782, %v8489, %v8448
        %v8491 = vsel %vm784, %v8490, %v8452
        %v8492 = vsel %vm786, %v8491, %v8456
        %v8493 = vsel %vm774, %v8422, %v8460
        %v8494 = vsel %vm776, %v8493, %v8464
        %v8495 = vsel %vm778, %v8494, %v8468
        %v8496 = vsel %vm780, %v8495, %v8472
        %v8497 = vsel %vm782, %v8496, %v8476
        %v8498 = vsel %vm784, %v8497, %v8480
        %v8499 = vsel %vm786, %v8498, %v8484
        %8500 = vrot.lane.b32.xlu0 %v8078, 126
        %v8501 = vpop.permute.xlu0 %8500
        %8502 = vrot.lane.b32.xlu0 %v8079, 126
        %v8503 = vpop.permute.xlu0 %8502
        %8504 = vrot.lane.b32.xlu0 %v8080, 126
        %v8505 = vpop.permute.xlu0 %8504
        %8506 = vrot.lane.b32.xlu0 %v8081, 126
        %v8507 = vpop.permute.xlu0 %8506
        %8508 = vrot.lane.b32.xlu0 %v8082, 126
        %v8509 = vpop.permute.xlu0 %8508
        %8510 = vrot.lane.b32.xlu0 %v8083, 126
        %v8511 = vpop.permute.xlu0 %8510
        %8512 = vrot.lane.b32.xlu0 %v8084, 126
        %v8513 = vpop.permute.xlu0 %8512
        %8514 = vrot.lane.b32.xlu0 %v8085, 126
        %v8515 = vpop.permute.xlu0 %8514
        %8516 = vrot.lane.b32.xlu0 %v8086, 126
        %v8517 = vpop.permute.xlu0 %8516
        %8518 = vrot.lane.b32.xlu0 %v8087, 126
        %v8519 = vpop.permute.xlu0 %8518
        %8520 = vrot.lane.b32.xlu0 %v8088, 126
        %v8521 = vpop.permute.xlu0 %8520
        %8522 = vrot.lane.b32.xlu0 %v8089, 126
        %v8523 = vpop.permute.xlu0 %8522
        %8524 = vrot.lane.b32.xlu0 %v8090, 126
        %v8525 = vpop.permute.xlu0 %8524
        %8526 = vrot.lane.b32.xlu0 %v8091, 126
        %v8527 = vpop.permute.xlu0 %8526
        %8528 = vrot.lane.b32.xlu0 %v8092, 126
        %v8529 = vpop.permute.xlu0 %8528
        %8530 = vrot.lane.b32.xlu0 %v8093, 126
        %v8531 = vpop.permute.xlu0 %8530
        %v8548 = vcombine.low %v8501, %v8509
        %v8549 = vcombine.high %v8501, %v8509
        %v8551 = vunpack.c.l.s4 1983009808
        %v8552 = vunpack.c.0.s8 %v8551
        %v8553 = vlaneseq
        %v8554 = vshrl.u32 %v8553, 7
        %v8555 = vsub.s32 %v8552, %v8554
        %v8556 = vrot.slane %v8548, %v8555
        %v8558 = vunpack.c.l.s4 1983009808
        %v8559 = vunpack.c.0.s8 %v8558
        %v8560 = vlaneseq
        %v8561 = vshrl.u32 %v8560, 7
        %v8562 = vsub.s32 %v8559, %v8561
        %v8563 = vrot.slane %v8549, %v8562
        %v8564 = vcombine.low %v8505, %v8513
        %v8565 = vcombine.high %v8505, %v8513
        %v8567 = vunpack.c.l.s4 1983009808
        %v8568 = vunpack.c.0.s8 %v8567
        %v8569 = vlaneseq
        %v8570 = vshrl.u32 %v8569, 7
        %v8571 = vsub.s32 %v8568, %v8570
        %v8572 = vrot.slane %v8564, %v8571
        %v8574 = vunpack.c.l.s4 1983009808
        %v8575 = vunpack.c.0.s8 %v8574
        %v8576 = vlaneseq
        %v8577 = vshrl.u32 %v8576, 7
        %v8578 = vsub.s32 %v8575, %v8577
        %v8579 = vrot.slane %v8565, %v8578
        %v8580 = vcombine.low %v8517, %v8525
        %v8581 = vcombine.high %v8517, %v8525
        %v8583 = vunpack.c.l.s4 1983009808
        %v8584 = vunpack.c.0.s8 %v8583
        %v8585 = vlaneseq
        %v8586 = vshrl.u32 %v8585, 7
        %v8587 = vsub.s32 %v8584, %v8586
        %v8588 = vrot.slane %v8580, %v8587
        %v8590 = vunpack.c.l.s4 1983009808
        %v8591 = vunpack.c.0.s8 %v8590
        %v8592 = vlaneseq
        %v8593 = vshrl.u32 %v8592, 7
        %v8594 = vsub.s32 %v8591, %v8593
        %v8595 = vrot.slane %v8581, %v8594
        %v8596 = vcombine.low %v8521, %v8529
        %v8597 = vcombine.high %v8521, %v8529
        %v8599 = vunpack.c.l.s4 1983009808
        %v8600 = vunpack.c.0.s8 %v8599
        %v8601 = vlaneseq
        %v8602 = vshrl.u32 %v8601, 7
        %v8603 = vsub.s32 %v8600, %v8602
        %v8604 = vrot.slane %v8596, %v8603
        %v8606 = vunpack.c.l.s4 1983009808
        %v8607 = vunpack.c.0.s8 %v8606
        %v8608 = vlaneseq
        %v8609 = vshrl.u32 %v8608, 7
        %v8610 = vsub.s32 %v8607, %v8609
        %v8611 = vrot.slane %v8597, %v8610
        %v8612 = vcombine.low %v8556, %v8572
        %v8613 = vcombine.high %v8556, %v8572
        %v8615 = vunpack.c.l.s4 1934713408
        %v8616 = vunpack.c.0.s8 %v8615
        %v8617 = vlaneseq
        %v8618 = vshrl.u32 %v8617, 7
        %v8619 = vsub.s32 %v8616, %v8618
        %v8620 = vrot.slane %v8612, %v8619
        %v8622 = vunpack.c.l.s4 1934713408
        %v8623 = vunpack.c.0.s8 %v8622
        %v8624 = vlaneseq
        %v8625 = vshrl.u32 %v8624, 7
        %v8626 = vsub.s32 %v8623, %v8625
        %v8627 = vrot.slane %v8613, %v8626
        %v8628 = vcombine.low %v8563, %v8579
        %v8629 = vcombine.high %v8563, %v8579
        %v8631 = vunpack.c.l.s4 1934713408
        %v8632 = vunpack.c.0.s8 %v8631
        %v8633 = vlaneseq
        %v8634 = vshrl.u32 %v8633, 7
        %v8635 = vsub.s32 %v8632, %v8634
        %v8636 = vrot.slane %v8628, %v8635
        %v8638 = vunpack.c.l.s4 1934713408
        %v8639 = vunpack.c.0.s8 %v8638
        %v8640 = vlaneseq
        %v8641 = vshrl.u32 %v8640, 7
        %v8642 = vsub.s32 %v8639, %v8641
        %v8643 = vrot.slane %v8629, %v8642
        %v8644 = vcombine.low %v8588, %v8604
        %v8645 = vcombine.high %v8588, %v8604
        %v8647 = vunpack.c.l.s4 1934713408
        %v8648 = vunpack.c.0.s8 %v8647
        %v8649 = vlaneseq
        %v8650 = vshrl.u32 %v8649, 7
        %v8651 = vsub.s32 %v8648, %v8650
        %v8652 = vrot.slane %v8644, %v8651
        %v8654 = vunpack.c.l.s4 1934713408
        %v8655 = vunpack.c.0.s8 %v8654
        %v8656 = vlaneseq
        %v8657 = vshrl.u32 %v8656, 7
        %v8658 = vsub.s32 %v8655, %v8657
        %v8659 = vrot.slane %v8645, %v8658
        %v8660 = vcombine.low %v8595, %v8611
        %v8661 = vcombine.high %v8595, %v8611
        %v8663 = vunpack.c.l.s4 1934713408
        %v8664 = vunpack.c.0.s8 %v8663
        %v8665 = vlaneseq
        %v8666 = vshrl.u32 %v8665, 7
        %v8667 = vsub.s32 %v8664, %v8666
        %v8668 = vrot.slane %v8660, %v8667
        %v8670 = vunpack.c.l.s4 1934713408
        %v8671 = vunpack.c.0.s8 %v8670
        %v8672 = vlaneseq
        %v8673 = vshrl.u32 %v8672, 7
        %v8674 = vsub.s32 %v8671, %v8673
        %v8675 = vrot.slane %v8661, %v8674
        %v8676 = vcombine.low %v8620, %v8652
        %v8677 = vcombine.high %v8620, %v8652
        %v8678 = vcombine.low %v8627, %v8659
        %v8679 = vcombine.high %v8627, %v8659
        %v8680 = vcombine.low %v8636, %v8668
        %v8681 = vcombine.high %v8636, %v8668
        %v8682 = vcombine.low %v8643, %v8675
        %v8683 = vcombine.high %v8643, %v8675
        %v8684 = vcombine.low %v8503, %v8511
        %v8685 = vcombine.high %v8503, %v8511
        %v8687 = vunpack.c.l.s4 1983009808
        %v8688 = vunpack.c.0.s8 %v8687
        %v8689 = vlaneseq
        %v8690 = vshrl.u32 %v8689, 7
        %v8691 = vsub.s32 %v8688, %v8690
        %v8692 = vrot.slane %v8684, %v8691
        %v8694 = vunpack.c.l.s4 1983009808
        %v8695 = vunpack.c.0.s8 %v8694
        %v8696 = vlaneseq
        %v8697 = vshrl.u32 %v8696, 7
        %v8698 = vsub.s32 %v8695, %v8697
        %v8699 = vrot.slane %v8685, %v8698
        %v8700 = vcombine.low %v8507, %v8515
        %v8701 = vcombine.high %v8507, %v8515
        %v8703 = vunpack.c.l.s4 1983009808
        %v8704 = vunpack.c.0.s8 %v8703
        %v8705 = vlaneseq
        %v8706 = vshrl.u32 %v8705, 7
        %v8707 = vsub.s32 %v8704, %v8706
        %v8708 = vrot.slane %v8700, %v8707
        %v8710 = vunpack.c.l.s4 1983009808
        %v8711 = vunpack.c.0.s8 %v8710
        %v8712 = vlaneseq
        %v8713 = vshrl.u32 %v8712, 7
        %v8714 = vsub.s32 %v8711, %v8713
        %v8715 = vrot.slane %v8701, %v8714
        %v8716 = vcombine.low %v8519, %v8527
        %v8717 = vcombine.high %v8519, %v8527
        %v8719 = vunpack.c.l.s4 1983009808
        %v8720 = vunpack.c.0.s8 %v8719
        %v8721 = vlaneseq
        %v8722 = vshrl.u32 %v8721, 7
        %v8723 = vsub.s32 %v8720, %v8722
        %v8724 = vrot.slane %v8716, %v8723
        %v8726 = vunpack.c.l.s4 1983009808
        %v8727 = vunpack.c.0.s8 %v8726
        %v8728 = vlaneseq
        %v8729 = vshrl.u32 %v8728, 7
        %v8730 = vsub.s32 %v8727, %v8729
        %v8731 = vrot.slane %v8717, %v8730
        %v8732 = vcombine.low %v8523, %v8531
        %v8733 = vcombine.high %v8523, %v8531
        %v8735 = vunpack.c.l.s4 1983009808
        %v8736 = vunpack.c.0.s8 %v8735
        %v8737 = vlaneseq
        %v8738 = vshrl.u32 %v8737, 7
        %v8739 = vsub.s32 %v8736, %v8738
        %v8740 = vrot.slane %v8732, %v8739
        %v8742 = vunpack.c.l.s4 1983009808
        %v8743 = vunpack.c.0.s8 %v8742
        %v8744 = vlaneseq
        %v8745 = vshrl.u32 %v8744, 7
        %v8746 = vsub.s32 %v8743, %v8745
        %v8747 = vrot.slane %v8733, %v8746
        %v8748 = vcombine.low %v8692, %v8708
        %v8749 = vcombine.high %v8692, %v8708
        %v8751 = vunpack.c.l.s4 1934713408
        %v8752 = vunpack.c.0.s8 %v8751
        %v8753 = vlaneseq
        %v8754 = vshrl.u32 %v8753, 7
        %v8755 = vsub.s32 %v8752, %v8754
        %v8756 = vrot.slane %v8748, %v8755
        %v8758 = vunpack.c.l.s4 1934713408
        %v8759 = vunpack.c.0.s8 %v8758
        %v8760 = vlaneseq
        %v8761 = vshrl.u32 %v8760, 7
        %v8762 = vsub.s32 %v8759, %v8761
        %v8763 = vrot.slane %v8749, %v8762
        %v8764 = vcombine.low %v8699, %v8715
        %v8765 = vcombine.high %v8699, %v8715
        %v8767 = vunpack.c.l.s4 1934713408
        %v8768 = vunpack.c.0.s8 %v8767
        %v8769 = vlaneseq
        %v8770 = vshrl.u32 %v8769, 7
        %v8771 = vsub.s32 %v8768, %v8770
        %v8772 = vrot.slane %v8764, %v8771
        %v8774 = vunpack.c.l.s4 1934713408
        %v8775 = vunpack.c.0.s8 %v8774
        %v8776 = vlaneseq
        %v8777 = vshrl.u32 %v8776, 7
        %v8778 = vsub.s32 %v8775, %v8777
        %v8779 = vrot.slane %v8765, %v8778
        %v8780 = vcombine.low %v8724, %v8740
        %v8781 = vcombine.high %v8724, %v8740
        %v8783 = vunpack.c.l.s4 1934713408
        %v8784 = vunpack.c.0.s8 %v8783
        %v8785 = vlaneseq
        %v8786 = vshrl.u32 %v8785, 7
        %v8787 = vsub.s32 %v8784, %v8786
        %v8788 = vrot.slane %v8780, %v8787
        %v8790 = vunpack.c.l.s4 1934713408
        %v8791 = vunpack.c.0.s8 %v8790
        %v8792 = vlaneseq
        %v8793 = vshrl.u32 %v8792, 7
        %v8794 = vsub.s32 %v8791, %v8793
        %v8795 = vrot.slane %v8781, %v8794
        %v8796 = vcombine.low %v8731, %v8747
        %v8797 = vcombine.high %v8731, %v8747
        %v8799 = vunpack.c.l.s4 1934713408
        %v8800 = vunpack.c.0.s8 %v8799
        %v8801 = vlaneseq
        %v8802 = vshrl.u32 %v8801, 7
        %v8803 = vsub.s32 %v8800, %v8802
        %v8804 = vrot.slane %v8796, %v8803
        %v8806 = vunpack.c.l.s4 1934713408
        %v8807 = vunpack.c.0.s8 %v8806
        %v8808 = vlaneseq
        %v8809 = vshrl.u32 %v8808, 7
        %v8810 = vsub.s32 %v8807, %v8809
        %v8811 = vrot.slane %v8797, %v8810
        %v8812 = vcombine.low %v8756, %v8788
        %v8813 = vcombine.high %v8756, %v8788
        %v8814 = vcombine.low %v8763, %v8795
        %v8815 = vcombine.high %v8763, %v8795
        %v8816 = vcombine.low %v8772, %v8804
        %v8817 = vcombine.high %v8772, %v8804
        %v8818 = vcombine.low %v8779, %v8811
        %v8819 = vcombine.high %v8779, %v8811
        %8821 = vrot.lane.b32.xlu0 %v8677, 16
        %v8822 = vpop.permute.xlu0 %8821
        %8825 = vrot.lane.b32.xlu0 %v8678, 32
        %v8826 = vpop.permute.xlu0 %8825
        %8829 = vrot.lane.b32.xlu0 %v8679, 48
        %v8830 = vpop.permute.xlu0 %8829
        %8833 = vrot.lane.b32.xlu0 %v8680, 64
        %v8834 = vpop.permute.xlu0 %8833
        %8837 = vrot.lane.b32.xlu0 %v8681, 80
        %v8838 = vpop.permute.xlu0 %8837
        %8841 = vrot.lane.b32.xlu0 %v8682, 96
        %v8842 = vpop.permute.xlu0 %8841
        %8845 = vrot.lane.b32.xlu0 %v8683, 112
        %v8846 = vpop.permute.xlu0 %8845
        %8849 = vrot.lane.b32.xlu0 %v8813, 16
        %v8850 = vpop.permute.xlu0 %8849
        %8853 = vrot.lane.b32.xlu0 %v8814, 32
        %v8854 = vpop.permute.xlu0 %8853
        %8857 = vrot.lane.b32.xlu0 %v8815, 48
        %v8858 = vpop.permute.xlu0 %8857
        %8861 = vrot.lane.b32.xlu0 %v8816, 64
        %v8862 = vpop.permute.xlu0 %8861
        %8865 = vrot.lane.b32.xlu0 %v8817, 80
        %v8866 = vpop.permute.xlu0 %8865
        %8869 = vrot.lane.b32.xlu0 %v8818, 96
        %v8870 = vpop.permute.xlu0 %8869
        %8873 = vrot.lane.b32.xlu0 %v8819, 112
        %v8874 = vpop.permute.xlu0 %8873
        %v8876 = vsel %vm774, %v8676, %v8822
        %v8877 = vsel %vm776, %v8876, %v8826
        %v8878 = vsel %vm778, %v8877, %v8830
        %v8879 = vsel %vm780, %v8878, %v8834
        %v8880 = vsel %vm782, %v8879, %v8838
        %v8881 = vsel %vm784, %v8880, %v8842
        %v8882 = vsel %vm786, %v8881, %v8846
        %v8883 = vsel %vm774, %v8812, %v8850
        %v8884 = vsel %vm776, %v8883, %v8854
        %v8885 = vsel %vm778, %v8884, %v8858
        %v8886 = vsel %vm780, %v8885, %v8862
        %v8887 = vsel %vm782, %v8886, %v8866
        %v8888 = vsel %vm784, %v8887, %v8870
        %v8889 = vsel %vm786, %v8888, %v8874
        %v8890 = vld [vmem:[#allocation3 + $0x2] sm:$0xff]
        %v8891 = vld [vmem:[#allocation3 + $0xa] sm:$0xff]
        %v8892 = vld [vmem:[#allocation3 + $0x1a] sm:$0xff]
        %v8893 = vld [vmem:[#allocation3 + $0x22] sm:$0xff]
        %v8894 = vld [vmem:[#allocation3 + $0x32] sm:$0xff]
        %v8895 = vld [vmem:[#allocation3 + $0x3a] sm:$0xff]
        %v8896 = vld [vmem:[#allocation3 + $0x4a] sm:$0xff]
        %v8897 = vld [vmem:[#allocation3 + $0x52] sm:$0xff]
        %v8898 = vld [vmem:[#allocation3 + $0x62] sm:$0xff]
        %v8899 = vld [vmem:[#allocation3 + $0x6a] sm:$0xff]
        %v8900 = vld [vmem:[#allocation3 + $0x7a] sm:$0xff]
        %v8901 = vld [vmem:[#allocation3 + $0x82] sm:$0xff]
        %v8902 = vld [vmem:[#allocation3 + $0x92] sm:$0xff]
        %v8903 = vld [vmem:[#allocation3 + $0x9a] sm:$0xff]
        %v8904 = vld [vmem:[#allocation3 + $0xaa] sm:$0xff]
        %v8905 = vld [vmem:[#allocation3 + $0xb2] sm:$0xff]
        %8922 = vrot.lane.b32.xlu0 %v8890, 127
        %v8923 = vpop.permute.xlu0 %8922
        %8924 = vrot.lane.b32.xlu0 %v8891, 127
        %v8925 = vpop.permute.xlu0 %8924
        %8926 = vrot.lane.b32.xlu0 %v8892, 127
        %v8927 = vpop.permute.xlu0 %8926
        %8928 = vrot.lane.b32.xlu0 %v8893, 127
        %v8929 = vpop.permute.xlu0 %8928
        %8930 = vrot.lane.b32.xlu0 %v8894, 127
        %v8931 = vpop.permute.xlu0 %8930
        %8932 = vrot.lane.b32.xlu0 %v8895, 127
        %v8933 = vpop.permute.xlu0 %8932
        %8934 = vrot.lane.b32.xlu0 %v8896, 127
        %v8935 = vpop.permute.xlu0 %8934
        %8936 = vrot.lane.b32.xlu0 %v8897, 127
        %v8937 = vpop.permute.xlu0 %8936
        %8938 = vrot.lane.b32.xlu0 %v8898, 127
        %v8939 = vpop.permute.xlu0 %8938
        %8940 = vrot.lane.b32.xlu0 %v8899, 127
        %v8941 = vpop.permute.xlu0 %8940
        %8942 = vrot.lane.b32.xlu0 %v8900, 127
        %v8943 = vpop.permute.xlu0 %8942
        %8944 = vrot.lane.b32.xlu0 %v8901, 127
        %v8945 = vpop.permute.xlu0 %8944
        %8946 = vrot.lane.b32.xlu0 %v8902, 127
        %v8947 = vpop.permute.xlu0 %8946
        %8948 = vrot.lane.b32.xlu0 %v8903, 127
        %v8949 = vpop.permute.xlu0 %8948
        %8950 = vrot.lane.b32.xlu0 %v8904, 127
        %v8951 = vpop.permute.xlu0 %8950
        %8952 = vrot.lane.b32.xlu0 %v8905, 127
        %v8953 = vpop.permute.xlu0 %8952
        %v8970 = vcombine.low %v8923, %v8931
        %v8971 = vcombine.high %v8923, %v8931
        %v8973 = vunpack.c.l.s4 1983009808
        %v8974 = vunpack.c.0.s8 %v8973
        %v8975 = vlaneseq
        %v8976 = vshrl.u32 %v8975, 7
        %v8977 = vsub.s32 %v8974, %v8976
        %v8978 = vrot.slane %v8970, %v8977
        %v8980 = vunpack.c.l.s4 1983009808
        %v8981 = vunpack.c.0.s8 %v8980
        %v8982 = vlaneseq
        %v8983 = vshrl.u32 %v8982, 7
        %v8984 = vsub.s32 %v8981, %v8983
        %v8985 = vrot.slane %v8971, %v8984
        %v8986 = vcombine.low %v8927, %v8935
        %v8987 = vcombine.high %v8927, %v8935
        %v8989 = vunpack.c.l.s4 1983009808
        %v8990 = vunpack.c.0.s8 %v8989
        %v8991 = vlaneseq
        %v8992 = vshrl.u32 %v8991, 7
        %v8993 = vsub.s32 %v8990, %v8992
        %v8994 = vrot.slane %v8986, %v8993
        %v8996 = vunpack.c.l.s4 1983009808
        %v8997 = vunpack.c.0.s8 %v8996
        %v8998 = vlaneseq
        %v8999 = vshrl.u32 %v8998, 7
        %v9000 = vsub.s32 %v8997, %v8999
        %v9001 = vrot.slane %v8987, %v9000
        %v9002 = vcombine.low %v8939, %v8947
        %v9003 = vcombine.high %v8939, %v8947
        %v9005 = vunpack.c.l.s4 1983009808
        %v9006 = vunpack.c.0.s8 %v9005
        %v9007 = vlaneseq
        %v9008 = vshrl.u32 %v9007, 7
        %v9009 = vsub.s32 %v9006, %v9008
        %v9010 = vrot.slane %v9002, %v9009
        %v9012 = vunpack.c.l.s4 1983009808
        %v9013 = vunpack.c.0.s8 %v9012
        %v9014 = vlaneseq
        %v9015 = vshrl.u32 %v9014, 7
        %v9016 = vsub.s32 %v9013, %v9015
        %v9017 = vrot.slane %v9003, %v9016
        %v9018 = vcombine.low %v8943, %v8951
        %v9019 = vcombine.high %v8943, %v8951
        %v9021 = vunpack.c.l.s4 1983009808
        %v9022 = vunpack.c.0.s8 %v9021
        %v9023 = vlaneseq
        %v9024 = vshrl.u32 %v9023, 7
        %v9025 = vsub.s32 %v9022, %v9024
        %v9026 = vrot.slane %v9018, %v9025
        %v9028 = vunpack.c.l.s4 1983009808
        %v9029 = vunpack.c.0.s8 %v9028
        %v9030 = vlaneseq
        %v9031 = vshrl.u32 %v9030, 7
        %v9032 = vsub.s32 %v9029, %v9031
        %v9033 = vrot.slane %v9019, %v9032
        %v9034 = vcombine.low %v8978, %v8994
        %v9035 = vcombine.high %v8978, %v8994
        %v9037 = vunpack.c.l.s4 1934713408
        %v9038 = vunpack.c.0.s8 %v9037
        %v9039 = vlaneseq
        %v9040 = vshrl.u32 %v9039, 7
        %v9041 = vsub.s32 %v9038, %v9040
        %v9042 = vrot.slane %v9034, %v9041
        %v9044 = vunpack.c.l.s4 1934713408
        %v9045 = vunpack.c.0.s8 %v9044
        %v9046 = vlaneseq
        %v9047 = vshrl.u32 %v9046, 7
        %v9048 = vsub.s32 %v9045, %v9047
        %v9049 = vrot.slane %v9035, %v9048
        %v9050 = vcombine.low %v8985, %v9001
        %v9051 = vcombine.high %v8985, %v9001
        %v9053 = vunpack.c.l.s4 1934713408
        %v9054 = vunpack.c.0.s8 %v9053
        %v9055 = vlaneseq
        %v9056 = vshrl.u32 %v9055, 7
        %v9057 = vsub.s32 %v9054, %v9056
        %v9058 = vrot.slane %v9050, %v9057
        %v9060 = vunpack.c.l.s4 1934713408
        %v9061 = vunpack.c.0.s8 %v9060
        %v9062 = vlaneseq
        %v9063 = vshrl.u32 %v9062, 7
        %v9064 = vsub.s32 %v9061, %v9063
        %v9065 = vrot.slane %v9051, %v9064
        %v9066 = vcombine.low %v9010, %v9026
        %v9067 = vcombine.high %v9010, %v9026
        %v9069 = vunpack.c.l.s4 1934713408
        %v9070 = vunpack.c.0.s8 %v9069
        %v9071 = vlaneseq
        %v9072 = vshrl.u32 %v9071, 7
        %v9073 = vsub.s32 %v9070, %v9072
        %v9074 = vrot.slane %v9066, %v9073
        %v9076 = vunpack.c.l.s4 1934713408
        %v9077 = vunpack.c.0.s8 %v9076
        %v9078 = vlaneseq
        %v9079 = vshrl.u32 %v9078, 7
        %v9080 = vsub.s32 %v9077, %v9079
        %v9081 = vrot.slane %v9067, %v9080
        %v9082 = vcombine.low %v9017, %v9033
        %v9083 = vcombine.high %v9017, %v9033
        %v9085 = vunpack.c.l.s4 1934713408
        %v9086 = vunpack.c.0.s8 %v9085
        %v9087 = vlaneseq
        %v9088 = vshrl.u32 %v9087, 7
        %v9089 = vsub.s32 %v9086, %v9088
        %v9090 = vrot.slane %v9082, %v9089
        %v9092 = vunpack.c.l.s4 1934713408
        %v9093 = vunpack.c.0.s8 %v9092
        %v9094 = vlaneseq
        %v9095 = vshrl.u32 %v9094, 7
        %v9096 = vsub.s32 %v9093, %v9095
        %v9097 = vrot.slane %v9083, %v9096
        %v9098 = vcombine.low %v9042, %v9074
        %v9099 = vcombine.high %v9042, %v9074
        %v9100 = vcombine.low %v9049, %v9081
        %v9101 = vcombine.high %v9049, %v9081
        %v9102 = vcombine.low %v9058, %v9090
        %v9103 = vcombine.high %v9058, %v9090
        %v9104 = vcombine.low %v9065, %v9097
        %v9105 = vcombine.high %v9065, %v9097
        %v9106 = vcombine.low %v8925, %v8933
        %v9107 = vcombine.high %v8925, %v8933
        %v9109 = vunpack.c.l.s4 1983009808
        %v9110 = vunpack.c.0.s8 %v9109
        %v9111 = vlaneseq
        %v9112 = vshrl.u32 %v9111, 7
        %v9113 = vsub.s32 %v9110, %v9112
        %v9114 = vrot.slane %v9106, %v9113
        %v9116 = vunpack.c.l.s4 1983009808
        %v9117 = vunpack.c.0.s8 %v9116
        %v9118 = vlaneseq
        %v9119 = vshrl.u32 %v9118, 7
        %v9120 = vsub.s32 %v9117, %v9119
        %v9121 = vrot.slane %v9107, %v9120
        %v9122 = vcombine.low %v8929, %v8937
        %v9123 = vcombine.high %v8929, %v8937
        %v9125 = vunpack.c.l.s4 1983009808
        %v9126 = vunpack.c.0.s8 %v9125
        %v9127 = vlaneseq
        %v9128 = vshrl.u32 %v9127, 7
        %v9129 = vsub.s32 %v9126, %v9128
        %v9130 = vrot.slane %v9122, %v9129
        %v9132 = vunpack.c.l.s4 1983009808
        %v9133 = vunpack.c.0.s8 %v9132
        %v9134 = vlaneseq
        %v9135 = vshrl.u32 %v9134, 7
        %v9136 = vsub.s32 %v9133, %v9135
        %v9137 = vrot.slane %v9123, %v9136
        %v9138 = vcombine.low %v8941, %v8949
        %v9139 = vcombine.high %v8941, %v8949
        %v9141 = vunpack.c.l.s4 1983009808
        %v9142 = vunpack.c.0.s8 %v9141
        %v9143 = vlaneseq
        %v9144 = vshrl.u32 %v9143, 7
        %v9145 = vsub.s32 %v9142, %v9144
        %v9146 = vrot.slane %v9138, %v9145
        %v9148 = vunpack.c.l.s4 1983009808
        %v9149 = vunpack.c.0.s8 %v9148
        %v9150 = vlaneseq
        %v9151 = vshrl.u32 %v9150, 7
        %v9152 = vsub.s32 %v9149, %v9151
        %v9153 = vrot.slane %v9139, %v9152
        %v9154 = vcombine.low %v8945, %v8953
        %v9155 = vcombine.high %v8945, %v8953
        %v9157 = vunpack.c.l.s4 1983009808
        %v9158 = vunpack.c.0.s8 %v9157
        %v9159 = vlaneseq
        %v9160 = vshrl.u32 %v9159, 7
        %v9161 = vsub.s32 %v9158, %v9160
        %v9162 = vrot.slane %v9154, %v9161
        %v9164 = vunpack.c.l.s4 1983009808
        %v9165 = vunpack.c.0.s8 %v9164
        %v9166 = vlaneseq
        %v9167 = vshrl.u32 %v9166, 7
        %v9168 = vsub.s32 %v9165, %v9167
        %v9169 = vrot.slane %v9155, %v9168
        %v9170 = vcombine.low %v9114, %v9130
        %v9171 = vcombine.high %v9114, %v9130
        %v9173 = vunpack.c.l.s4 1934713408
        %v9174 = vunpack.c.0.s8 %v9173
        %v9175 = vlaneseq
        %v9176 = vshrl.u32 %v9175, 7
        %v9177 = vsub.s32 %v9174, %v9176
        %v9178 = vrot.slane %v9170, %v9177
        %v9180 = vunpack.c.l.s4 1934713408
        %v9181 = vunpack.c.0.s8 %v9180
        %v9182 = vlaneseq
        %v9183 = vshrl.u32 %v9182, 7
        %v9184 = vsub.s32 %v9181, %v9183
        %v9185 = vrot.slane %v9171, %v9184
        %v9186 = vcombine.low %v9121, %v9137
        %v9187 = vcombine.high %v9121, %v9137
        %v9189 = vunpack.c.l.s4 1934713408
        %v9190 = vunpack.c.0.s8 %v9189
        %v9191 = vlaneseq
        %v9192 = vshrl.u32 %v9191, 7
        %v9193 = vsub.s32 %v9190, %v9192
        %v9194 = vrot.slane %v9186, %v9193
        %v9196 = vunpack.c.l.s4 1934713408
        %v9197 = vunpack.c.0.s8 %v9196
        %v9198 = vlaneseq
        %v9199 = vshrl.u32 %v9198, 7
        %v9200 = vsub.s32 %v9197, %v9199
        %v9201 = vrot.slane %v9187, %v9200
        %v9202 = vcombine.low %v9146, %v9162
        %v9203 = vcombine.high %v9146, %v9162
        %v9205 = vunpack.c.l.s4 1934713408
        %v9206 = vunpack.c.0.s8 %v9205
        %v9207 = vlaneseq
        %v9208 = vshrl.u32 %v9207, 7
        %v9209 = vsub.s32 %v9206, %v9208
        %v9210 = vrot.slane %v9202, %v9209
        %v9212 = vunpack.c.l.s4 1934713408
        %v9213 = vunpack.c.0.s8 %v9212
        %v9214 = vlaneseq
        %v9215 = vshrl.u32 %v9214, 7
        %v9216 = vsub.s32 %v9213, %v9215
        %v9217 = vrot.slane %v9203, %v9216
        %v9218 = vcombine.low %v9153, %v9169
        %v9219 = vcombine.high %v9153, %v9169
        %v9221 = vunpack.c.l.s4 1934713408
        %v9222 = vunpack.c.0.s8 %v9221
        %v9223 = vlaneseq
        %v9224 = vshrl.u32 %v9223, 7
        %v9225 = vsub.s32 %v9222, %v9224
        %v9226 = vrot.slane %v9218, %v9225
        %v9228 = vunpack.c.l.s4 1934713408
        %v9229 = vunpack.c.0.s8 %v9228
        %v9230 = vlaneseq
        %v9231 = vshrl.u32 %v9230, 7
        %v9232 = vsub.s32 %v9229, %v9231
        %v9233 = vrot.slane %v9219, %v9232
        %v9234 = vcombine.low %v9178, %v9210
        %v9235 = vcombine.high %v9178, %v9210
        %v9236 = vcombine.low %v9185, %v9217
        %v9237 = vcombine.high %v9185, %v9217
        %v9238 = vcombine.low %v9194, %v9226
        %v9239 = vcombine.high %v9194, %v9226
        %v9240 = vcombine.low %v9201, %v9233
        %v9241 = vcombine.high %v9201, %v9233
        %9243 = vrot.lane.b32.xlu0 %v9099, 16
        %v9244 = vpop.permute.xlu0 %9243
        %9247 = vrot.lane.b32.xlu0 %v9100, 32
        %v9248 = vpop.permute.xlu0 %9247
        %9251 = vrot.lane.b32.xlu0 %v9101, 48
        %v9252 = vpop.permute.xlu0 %9251
        %9255 = vrot.lane.b32.xlu0 %v9102, 64
        %v9256 = vpop.permute.xlu0 %9255
        %9259 = vrot.lane.b32.xlu0 %v9103, 80
        %v9260 = vpop.permute.xlu0 %9259
        %9263 = vrot.lane.b32.xlu0 %v9104, 96
        %v9264 = vpop.permute.xlu0 %9263
        %9267 = vrot.lane.b32.xlu0 %v9105, 112
        %v9268 = vpop.permute.xlu0 %9267
        %9271 = vrot.lane.b32.xlu0 %v9235, 16
        %v9272 = vpop.permute.xlu0 %9271
        %9275 = vrot.lane.b32.xlu0 %v9236, 32
        %v9276 = vpop.permute.xlu0 %9275
        %9279 = vrot.lane.b32.xlu0 %v9237, 48
        %v9280 = vpop.permute.xlu0 %9279
        %9283 = vrot.lane.b32.xlu0 %v9238, 64
        %v9284 = vpop.permute.xlu0 %9283
        %9287 = vrot.lane.b32.xlu0 %v9239, 80
        %v9288 = vpop.permute.xlu0 %9287
        %9291 = vrot.lane.b32.xlu0 %v9240, 96
        %v9292 = vpop.permute.xlu0 %9291
        %9295 = vrot.lane.b32.xlu0 %v9241, 112
        %v9296 = vpop.permute.xlu0 %9295
        %v9298 = vsel %vm774, %v9098, %v9244
        %v9299 = vsel %vm776, %v9298, %v9248
        %v9300 = vsel %vm778, %v9299, %v9252
        %v9301 = vsel %vm780, %v9300, %v9256
        %v9302 = vsel %vm782, %v9301, %v9260
        %v9303 = vsel %vm784, %v9302, %v9264
        %v9304 = vsel %vm786, %v9303, %v9268
        %v9305 = vsel %vm774, %v9234, %v9272
        %v9306 = vsel %vm776, %v9305, %v9276
        %v9307 = vsel %vm778, %v9306, %v9280
        %v9308 = vsel %vm780, %v9307, %v9284
        %v9309 = vsel %vm782, %v9308, %v9288
        %v9310 = vsel %vm784, %v9309, %v9292
        %v9311 = vsel %vm786, %v9310, %v9296
        %9312 = vrot.lane.b32.xlu0 %v8890, 126
        %v9313 = vpop.permute.xlu0 %9312
        %9314 = vrot.lane.b32.xlu0 %v8891, 126
        %v9315 = vpop.permute.xlu0 %9314
        %9316 = vrot.lane.b32.xlu0 %v8892, 126
        %v9317 = vpop.permute.xlu0 %9316
        %9318 = vrot.lane.b32.xlu0 %v8893, 126
        %v9319 = vpop.permute.xlu0 %9318
        %9320 = vrot.lane.b32.xlu0 %v8894, 126
        %v9321 = vpop.permute.xlu0 %9320
        %9322 = vrot.lane.b32.xlu0 %v8895, 126
        %v9323 = vpop.permute.xlu0 %9322
        %9324 = vrot.lane.b32.xlu0 %v8896, 126
        %v9325 = vpop.permute.xlu0 %9324
        %9326 = vrot.lane.b32.xlu0 %v8897, 126
        %v9327 = vpop.permute.xlu0 %9326
        %9328 = vrot.lane.b32.xlu0 %v8898, 126
        %v9329 = vpop.permute.xlu0 %9328
        %9330 = vrot.lane.b32.xlu0 %v8899, 126
        %v9331 = vpop.permute.xlu0 %9330
        %9332 = vrot.lane.b32.xlu0 %v8900, 126
        %v9333 = vpop.permute.xlu0 %9332
        %9334 = vrot.lane.b32.xlu0 %v8901, 126
        %v9335 = vpop.permute.xlu0 %9334
        %9336 = vrot.lane.b32.xlu0 %v8902, 126
        %v9337 = vpop.permute.xlu0 %9336
        %9338 = vrot.lane.b32.xlu0 %v8903, 126
        %v9339 = vpop.permute.xlu0 %9338
        %9340 = vrot.lane.b32.xlu0 %v8904, 126
        %v9341 = vpop.permute.xlu0 %9340
        %9342 = vrot.lane.b32.xlu0 %v8905, 126
        %v9343 = vpop.permute.xlu0 %9342
        %v9360 = vcombine.low %v9313, %v9321
        %v9361 = vcombine.high %v9313, %v9321
        %v9363 = vunpack.c.l.s4 1983009808
        %v9364 = vunpack.c.0.s8 %v9363
        %v9365 = vlaneseq
        %v9366 = vshrl.u32 %v9365, 7
        %v9367 = vsub.s32 %v9364, %v9366
        %v9368 = vrot.slane %v9360, %v9367
        %v9370 = vunpack.c.l.s4 1983009808
        %v9371 = vunpack.c.0.s8 %v9370
        %v9372 = vlaneseq
        %v9373 = vshrl.u32 %v9372, 7
        %v9374 = vsub.s32 %v9371, %v9373
        %v9375 = vrot.slane %v9361, %v9374
        %v9376 = vcombine.low %v9317, %v9325
        %v9377 = vcombine.high %v9317, %v9325
        %v9379 = vunpack.c.l.s4 1983009808
        %v9380 = vunpack.c.0.s8 %v9379
        %v9381 = vlaneseq
        %v9382 = vshrl.u32 %v9381, 7
        %v9383 = vsub.s32 %v9380, %v9382
        %v9384 = vrot.slane %v9376, %v9383
        %v9386 = vunpack.c.l.s4 1983009808
        %v9387 = vunpack.c.0.s8 %v9386
        %v9388 = vlaneseq
        %v9389 = vshrl.u32 %v9388, 7
        %v9390 = vsub.s32 %v9387, %v9389
        %v9391 = vrot.slane %v9377, %v9390
        %v9392 = vcombine.low %v9329, %v9337
        %v9393 = vcombine.high %v9329, %v9337
        %v9395 = vunpack.c.l.s4 1983009808
        %v9396 = vunpack.c.0.s8 %v9395
        %v9397 = vlaneseq
        %v9398 = vshrl.u32 %v9397, 7
        %v9399 = vsub.s32 %v9396, %v9398
        %v9400 = vrot.slane %v9392, %v9399
        %v9402 = vunpack.c.l.s4 1983009808
        %v9403 = vunpack.c.0.s8 %v9402
        %v9404 = vlaneseq
        %v9405 = vshrl.u32 %v9404, 7
        %v9406 = vsub.s32 %v9403, %v9405
        %v9407 = vrot.slane %v9393, %v9406
        %v9408 = vcombine.low %v9333, %v9341
        %v9409 = vcombine.high %v9333, %v9341
        %v9411 = vunpack.c.l.s4 1983009808
        %v9412 = vunpack.c.0.s8 %v9411
        %v9413 = vlaneseq
        %v9414 = vshrl.u32 %v9413, 7
        %v9415 = vsub.s32 %v9412, %v9414
        %v9416 = vrot.slane %v9408, %v9415
        %v9418 = vunpack.c.l.s4 1983009808
        %v9419 = vunpack.c.0.s8 %v9418
        %v9420 = vlaneseq
        %v9421 = vshrl.u32 %v9420, 7
        %v9422 = vsub.s32 %v9419, %v9421
        %v9423 = vrot.slane %v9409, %v9422
        %v9424 = vcombine.low %v9368, %v9384
        %v9425 = vcombine.high %v9368, %v9384
        %v9427 = vunpack.c.l.s4 1934713408
        %v9428 = vunpack.c.0.s8 %v9427
        %v9429 = vlaneseq
        %v9430 = vshrl.u32 %v9429, 7
        %v9431 = vsub.s32 %v9428, %v9430
        %v9432 = vrot.slane %v9424, %v9431
        %v9434 = vunpack.c.l.s4 1934713408
        %v9435 = vunpack.c.0.s8 %v9434
        %v9436 = vlaneseq
        %v9437 = vshrl.u32 %v9436, 7
        %v9438 = vsub.s32 %v9435, %v9437
        %v9439 = vrot.slane %v9425, %v9438
        %v9440 = vcombine.low %v9375, %v9391
        %v9441 = vcombine.high %v9375, %v9391
        %v9443 = vunpack.c.l.s4 1934713408
        %v9444 = vunpack.c.0.s8 %v9443
        %v9445 = vlaneseq
        %v9446 = vshrl.u32 %v9445, 7
        %v9447 = vsub.s32 %v9444, %v9446
        %v9448 = vrot.slane %v9440, %v9447
        %v9450 = vunpack.c.l.s4 1934713408
        %v9451 = vunpack.c.0.s8 %v9450
        %v9452 = vlaneseq
        %v9453 = vshrl.u32 %v9452, 7
        %v9454 = vsub.s32 %v9451, %v9453
        %v9455 = vrot.slane %v9441, %v9454
        %v9456 = vcombine.low %v9400, %v9416
        %v9457 = vcombine.high %v9400, %v9416
        %v9459 = vunpack.c.l.s4 1934713408
        %v9460 = vunpack.c.0.s8 %v9459
        %v9461 = vlaneseq
        %v9462 = vshrl.u32 %v9461, 7
        %v9463 = vsub.s32 %v9460, %v9462
        %v9464 = vrot.slane %v9456, %v9463
        %v9466 = vunpack.c.l.s4 1934713408
        %v9467 = vunpack.c.0.s8 %v9466
        %v9468 = vlaneseq
        %v9469 = vshrl.u32 %v9468, 7
        %v9470 = vsub.s32 %v9467, %v9469
        %v9471 = vrot.slane %v9457, %v9470
        %v9472 = vcombine.low %v9407, %v9423
        %v9473 = vcombine.high %v9407, %v9423
        %v9475 = vunpack.c.l.s4 1934713408
        %v9476 = vunpack.c.0.s8 %v9475
        %v9477 = vlaneseq
        %v9478 = vshrl.u32 %v9477, 7
        %v9479 = vsub.s32 %v9476, %v9478
        %v9480 = vrot.slane %v9472, %v9479
        %v9482 = vunpack.c.l.s4 1934713408
        %v9483 = vunpack.c.0.s8 %v9482
        %v9484 = vlaneseq
        %v9485 = vshrl.u32 %v9484, 7
        %v9486 = vsub.s32 %v9483, %v9485
        %v9487 = vrot.slane %v9473, %v9486
        %v9488 = vcombine.low %v9432, %v9464
        %v9489 = vcombine.high %v9432, %v9464
        %v9490 = vcombine.low %v9439, %v9471
        %v9491 = vcombine.high %v9439, %v9471
        %v9492 = vcombine.low %v9448, %v9480
        %v9493 = vcombine.high %v9448, %v9480
        %v9494 = vcombine.low %v9455, %v9487
        %v9495 = vcombine.high %v9455, %v9487
        %v9496 = vcombine.low %v9315, %v9323
        %v9497 = vcombine.high %v9315, %v9323
        %v9499 = vunpack.c.l.s4 1983009808
        %v9500 = vunpack.c.0.s8 %v9499
        %v9501 = vlaneseq
        %v9502 = vshrl.u32 %v9501, 7
        %v9503 = vsub.s32 %v9500, %v9502
        %v9504 = vrot.slane %v9496, %v9503
        %v9506 = vunpack.c.l.s4 1983009808
        %v9507 = vunpack.c.0.s8 %v9506
        %v9508 = vlaneseq
        %v9509 = vshrl.u32 %v9508, 7
        %v9510 = vsub.s32 %v9507, %v9509
        %v9511 = vrot.slane %v9497, %v9510
        %v9512 = vcombine.low %v9319, %v9327
        %v9513 = vcombine.high %v9319, %v9327
        %v9515 = vunpack.c.l.s4 1983009808
        %v9516 = vunpack.c.0.s8 %v9515
        %v9517 = vlaneseq
        %v9518 = vshrl.u32 %v9517, 7
        %v9519 = vsub.s32 %v9516, %v9518
        %v9520 = vrot.slane %v9512, %v9519
        %v9522 = vunpack.c.l.s4 1983009808
        %v9523 = vunpack.c.0.s8 %v9522
        %v9524 = vlaneseq
        %v9525 = vshrl.u32 %v9524, 7
        %v9526 = vsub.s32 %v9523, %v9525
        %v9527 = vrot.slane %v9513, %v9526
        %v9528 = vcombine.low %v9331, %v9339
        %v9529 = vcombine.high %v9331, %v9339
        %v9531 = vunpack.c.l.s4 1983009808
        %v9532 = vunpack.c.0.s8 %v9531
        %v9533 = vlaneseq
        %v9534 = vshrl.u32 %v9533, 7
        %v9535 = vsub.s32 %v9532, %v9534
        %v9536 = vrot.slane %v9528, %v9535
        %v9538 = vunpack.c.l.s4 1983009808
        %v9539 = vunpack.c.0.s8 %v9538
        %v9540 = vlaneseq
        %v9541 = vshrl.u32 %v9540, 7
        %v9542 = vsub.s32 %v9539, %v9541
        %v9543 = vrot.slane %v9529, %v9542
        %v9544 = vcombine.low %v9335, %v9343
        %v9545 = vcombine.high %v9335, %v9343
        %v9547 = vunpack.c.l.s4 1983009808
        %v9548 = vunpack.c.0.s8 %v9547
        %v9549 = vlaneseq
        %v9550 = vshrl.u32 %v9549, 7
        %v9551 = vsub.s32 %v9548, %v9550
        %v9552 = vrot.slane %v9544, %v9551
        %v9554 = vunpack.c.l.s4 1983009808
        %v9555 = vunpack.c.0.s8 %v9554
        %v9556 = vlaneseq
        %v9557 = vshrl.u32 %v9556, 7
        %v9558 = vsub.s32 %v9555, %v9557
        %v9559 = vrot.slane %v9545, %v9558
        %v9560 = vcombine.low %v9504, %v9520
        %v9561 = vcombine.high %v9504, %v9520
        %v9563 = vunpack.c.l.s4 1934713408
        %v9564 = vunpack.c.0.s8 %v9563
        %v9565 = vlaneseq
        %v9566 = vshrl.u32 %v9565, 7
        %v9567 = vsub.s32 %v9564, %v9566
        %v9568 = vrot.slane %v9560, %v9567
        %v9570 = vunpack.c.l.s4 1934713408
        %v9571 = vunpack.c.0.s8 %v9570
        %v9572 = vlaneseq
        %v9573 = vshrl.u32 %v9572, 7
        %v9574 = vsub.s32 %v9571, %v9573
        %v9575 = vrot.slane %v9561, %v9574
        %v9576 = vcombine.low %v9511, %v9527
        %v9577 = vcombine.high %v9511, %v9527
        %v9579 = vunpack.c.l.s4 1934713408
        %v9580 = vunpack.c.0.s8 %v9579
        %v9581 = vlaneseq
        %v9582 = vshrl.u32 %v9581, 7
        %v9583 = vsub.s32 %v9580, %v9582
        %v9584 = vrot.slane %v9576, %v9583
        %v9586 = vunpack.c.l.s4 1934713408
        %v9587 = vunpack.c.0.s8 %v9586
        %v9588 = vlaneseq
        %v9589 = vshrl.u32 %v9588, 7
        %v9590 = vsub.s32 %v9587, %v9589
        %v9591 = vrot.slane %v9577, %v9590
        %v9592 = vcombine.low %v9536, %v9552
        %v9593 = vcombine.high %v9536, %v9552
        %v9595 = vunpack.c.l.s4 1934713408
        %v9596 = vunpack.c.0.s8 %v9595
        %v9597 = vlaneseq
        %v9598 = vshrl.u32 %v9597, 7
        %v9599 = vsub.s32 %v9596, %v9598
        %v9600 = vrot.slane %v9592, %v9599
        %v9602 = vunpack.c.l.s4 1934713408
        %v9603 = vunpack.c.0.s8 %v9602
        %v9604 = vlaneseq
        %v9605 = vshrl.u32 %v9604, 7
        %v9606 = vsub.s32 %v9603, %v9605
        %v9607 = vrot.slane %v9593, %v9606
        %v9608 = vcombine.low %v9543, %v9559
        %v9609 = vcombine.high %v9543, %v9559
        %v9611 = vunpack.c.l.s4 1934713408
        %v9612 = vunpack.c.0.s8 %v9611
        %v9613 = vlaneseq
        %v9614 = vshrl.u32 %v9613, 7
        %v9615 = vsub.s32 %v9612, %v9614
        %v9616 = vrot.slane %v9608, %v9615
        %v9618 = vunpack.c.l.s4 1934713408
        %v9619 = vunpack.c.0.s8 %v9618
        %v9620 = vlaneseq
        %v9621 = vshrl.u32 %v9620, 7
        %v9622 = vsub.s32 %v9619, %v9621
        %v9623 = vrot.slane %v9609, %v9622
        %v9624 = vcombine.low %v9568, %v9600
        %v9625 = vcombine.high %v9568, %v9600
        %v9626 = vcombine.low %v9575, %v9607
        %v9627 = vcombine.high %v9575, %v9607
        %v9628 = vcombine.low %v9584, %v9616
        %v9629 = vcombine.high %v9584, %v9616
        %v9630 = vcombine.low %v9591, %v9623
        %v9631 = vcombine.high %v9591, %v9623
        %9633 = vrot.lane.b32.xlu0 %v9489, 16
        %v9634 = vpop.permute.xlu0 %9633
        %9637 = vrot.lane.b32.xlu0 %v9490, 32
        %v9638 = vpop.permute.xlu0 %9637
        %9641 = vrot.lane.b32.xlu0 %v9491, 48
        %v9642 = vpop.permute.xlu0 %9641
        %9645 = vrot.lane.b32.xlu0 %v9492, 64
        %v9646 = vpop.permute.xlu0 %9645
        %9649 = vrot.lane.b32.xlu0 %v9493, 80
        %v9650 = vpop.permute.xlu0 %9649
        %9653 = vrot.lane.b32.xlu0 %v9494, 96
        %v9654 = vpop.permute.xlu0 %9653
        %9657 = vrot.lane.b32.xlu0 %v9495, 112
        %v9658 = vpop.permute.xlu0 %9657
        %9661 = vrot.lane.b32.xlu0 %v9625, 16
        %v9662 = vpop.permute.xlu0 %9661
        %9665 = vrot.lane.b32.xlu0 %v9626, 32
        %v9666 = vpop.permute.xlu0 %9665
        %9669 = vrot.lane.b32.xlu0 %v9627, 48
        %v9670 = vpop.permute.xlu0 %9669
        %9673 = vrot.lane.b32.xlu0 %v9628, 64
        %v9674 = vpop.permute.xlu0 %9673
        %9677 = vrot.lane.b32.xlu0 %v9629, 80
        %v9678 = vpop.permute.xlu0 %9677
        %9681 = vrot.lane.b32.xlu0 %v9630, 96
        %v9682 = vpop.permute.xlu0 %9681
        %9685 = vrot.lane.b32.xlu0 %v9631, 112
        %v9686 = vpop.permute.xlu0 %9685
        %v9688 = vsel %vm774, %v9488, %v9634
        %v9689 = vsel %vm776, %v9688, %v9638
        %v9690 = vsel %vm778, %v9689, %v9642
        %v9691 = vsel %vm780, %v9690, %v9646
        %v9692 = vsel %vm782, %v9691, %v9650
        %v9693 = vsel %vm784, %v9692, %v9654
        %v9694 = vsel %vm786, %v9693, %v9658
        %v9695 = vsel %vm774, %v9624, %v9662
        %v9696 = vsel %vm776, %v9695, %v9666
        %v9697 = vsel %vm778, %v9696, %v9670
        %v9698 = vsel %vm780, %v9697, %v9674
        %v9699 = vsel %vm782, %v9698, %v9678
        %v9700 = vsel %vm784, %v9699, %v9682
        %v9701 = vsel %vm786, %v9700, %v9686
        %v9703 = vsel %vm776, %v8077, 0
        %9705 = vmatprep.subr.mxu0 0.0
        %9706 = vmatpush1.msra.mxu0 0.0
        %9707 = vmatprep.subr.mxu0 0.0
        %9708 = vmatpush1.msra.mxu0 0.0
        %9709 = vmatprep.subr.mxu0 0.0
        %9710 = vmatpush1.msra.mxu0 0.0
        %9711 = vmatprep.subr.mxu0 0.0
        %9712 = vmatpush1.msra.mxu0 0.0
        %9713 = vmatprep.subr.mxu0 0.0
        %9714 = vmatpush1.msra.mxu0 0.0
        %9715 = vmatprep.subr.mxu0 0.0
        %9716 = vmatpush1.msra.mxu0 0.0
        %9717 = vmatprep.subr.mxu0 0.0
        %9718 = vmatpush1.msra.mxu0 0.0
        %9719 = vmatprep.subr.mxu0 0.0
        %9720 = vmatpush1.msra.mxu0 0.0
        %9721 = vmatprep.subr.mxu0 0.0
        %9722 = vmatpush1.msra.mxu0 0.0
        %9723 = vmatprep.subr.mxu0 0.0
        %9724 = vmatpush1.msra.mxu0 0.0
        %9725 = vmatprep.subr.mxu0 0.0
        %9726 = vmatpush1.msra.mxu0 0.0
        %9727 = vmatprep.subr.mxu0 0.0
        %9728 = vmatpush1.msra.mxu0 0.0
        %9729 = vmatprep.subr.mxu0 %v9701
        %9730 = vmatpush1.msra.mxu0 %v9694
        %9731 = vmatprep.subr.mxu0 %v9311
        %9732 = vmatpush1.msra.mxu0 %v9304
        %9733 = vmatprep.subr.mxu0 %v8889
        %9734 = vmatpush1.msra.mxu0 %v8882
        %9735 = vmatprep.subr.mxu0 %v8499
        %9736 = vmatpush1.msra.mxu0 %v8492
        %9737 = vmatprep.subr.mxu0 0.0
        %9738 = vmatpush2.msra.mxu0 0.0
        %9739 = vmatprep.subr.mxu0 0.0
        %9740 = vmatpush2.msra.mxu0 0.0
        %9741 = vmatprep.subr.mxu0 0.0
        %9742 = vmatpush2.msra.mxu0 0.0
        %9743 = vmatprep.subr.mxu0 0.0
        %9744 = vmatpush2.msra.mxu0 0.0
        %9745 = vmatprep.subr.mxu0 0.0
        %9746 = vmatpush2.msra.mxu0 0.0
        %9747 = vmatprep.subr.mxu0 0.0
        %9748 = vmatpush2.msra.mxu0 0.0
        %9749 = vmatprep.subr.mxu0 0.0
        %9750 = vmatpush2.msra.mxu0 0.0
        %9751 = vmatprep.subr.mxu0 0.0
        %9752 = vmatpush2.msra.mxu0 0.0
        %9753 = vmatprep.subr.mxu0 0.0
        %9754 = vmatpush2.msra.mxu0 0.0
        %9755 = vmatprep.subr.mxu0 0.0
        %9756 = vmatpush2.msra.mxu0 0.0
        %9757 = vmatprep.subr.mxu0 0.0
        %9758 = vmatpush2.msra.mxu0 0.0
        %9759 = vmatprep.subr.mxu0 0.0
        %9760 = vmatpush2.msra.mxu0 0.0
        %9761 = vmatprep.subr.mxu0 0.0
        %9762 = vmatpush2.msra.mxu0 0.0
        %9763 = vmatprep.subr.mxu0 0.0
        %9764 = vmatpush2.msra.mxu0 0.0
        %9765 = vmatprep.subr.mxu0 0.0
        %9766 = vmatpush2.msra.mxu0 0.0
        %9767 = vmatprep.subr.mxu0 0.0
        %9768 = vmatpush2.msra.mxu0 0.0
        %9769 = vmatprep.mubr.f32.mxu0 0.0
        %9770 = vmatmul.mubr.f32.gmra.mxu0 %v9703
        %v9771 = vpop.f32.mrf.mxu0
        %v9772 = vadd.f32 %v4673, %v9771
        %v9773 = vpop.f32.mrf.mxu0
        %v9774 = vadd.f32 %v4673, %v9773
        %9775 = vdwg.mxu0
        %v9776 = vmax.f32 %v9772, 0.0
        %v9777 = vmax.f32 %v9774, 0.0
        %v9780 = vcombine.low %v9776, %v9777
        %s9782 = scalar_lea.vmem %s240, 24 [#allocation10]
        %9783 = vst [vmem:[%s9782] sm:$0xff] %v9780
        %s9784 = sand.u32 %s119, 1
        %s9785 = scalar_lea.sflag [#allocation6], %s9784
        %s9786 = sand.u32 %s119, 1
        %s9787 = smul.addr %s9786, 32
        %s9788 = scalar_lea.vmem [#allocation10], %s9787
        // Predicated region
        $region49: #{tpu_custom_call.1} parent=35 // pred_check
          %p9789 = pneg %p129
        $region50: #{tpu_custom_call.1} parent=35 // pred_check_branch
          %9791 = sbr.rel (%p9789) target = $region52
        $region51: #{tpu_custom_call.1} parent=35 // pred_region
          %s9793 = ssub.s32 512, 512
          %9794 = vsyncadd %s9785, %s9793
          %s9795 = smul.addr %s22, 8
          %s9796 = smul.addr %s9795, 64
          %s9797 = scalar_lea.hbm %s4, %s9796
          %s9798 = sshll.u32 %s9788, 4
          %s9799 = int_to_ptr.vmem [resolvable:$true] %s9798
          %9804 = dma.vmem_to_hbm [thread:$0]  %s9799, 512, %s9797, %s9785, 128, 128, 8
        $region52: #{tpu_custom_call.1} parent=35 // pred_fallthru
          _
      $region36: #{tpu_custom_call.1} parent=5 // pred_fallthru
        _
      %p9805 = scmp.le.s32.totalorder 2, %s17
      // Predicated region
      $region53: #{tpu_custom_call.1} parent=5 // pred_check
        %p9806 = pneg %p9805
      $region54: #{tpu_custom_call.1} parent=5 // pred_check_branch
        %9808 = sbr.rel (%p9806) target = $region56
      $region55: #{tpu_custom_call.1} parent=5 // pred_region
        %s9809 = ssub.s32 %s17, 2
        // Predicated region
        $region57: #{tpu_custom_call.1} parent=55 // pred_check
          %p9810 = pneg %p135
        $region58: #{tpu_custom_call.1} parent=55 // pred_check_branch
          %9812 = sbr.rel (%p9810) target = $region60
        $region59: #{tpu_custom_call.1} parent=55 // pred_region
          %s9813 = sand.u32 %s120, 1
          %s9814 = scalar_lea.sflag [#allocation6], %s9813
          %s9815 = sand.u32 %s120, 1
          %s9816 = smul.addr %s9815, 32
          %s9817 = scalar_lea.vmem [#allocation10], %s9816
          %9818 = dma.done %s9814, 512
        $region60: #{tpu_custom_call.1} parent=55 // pred_fallthru
          _
      $region56: #{tpu_custom_call.1} parent=5 // pred_fallthru
        _
    $region6: #{tpu_custom_call.1} parent=1 // loop_footer
      %s21 = sadd.s32 1, %s17
    $region7: #{tpu_custom_call.1} parent=1 // loop_footer_branch
      %16 = sbr.rel target = $region3
    $region8: #{tpu_custom_call.1} parent=1 // loop_exit
      _
    %9819 = vsyncpa [#allocation5], 1
    %s9820 = scalar_lea.sflag [#allocation5], 1
    %9821 = vsyncpa %s9820, 1
    %9822 = vsyncpa [#allocation8], 1
    %9823 = vsyncpa [#allocation6], 1
    %s9824 = scalar_lea.sflag [#allocation6], 1
    %9825 = vsyncpa %s9824, 1

</llo_original>
